<compile_context>
chip_gen: v7x
topology: tpu7x:2x2x1
jax: 0.10.0
libtpu: 0.0.40
codegen_flags: <defaults>
</compile_context>

<pallas_src>
import math

import jax
import jax.numpy as jnp
from jax.experimental import pallas as pl
from jax.experimental.pallas import tpu as pltpu


# Hidden dim (2048) of each ResBlock is streamed in tiles of this size:
# per grid step we DMA a (1024, 1024) W1 tile + (1024, 1024) W2 tile = 8 MB.
TRUNK_HID_TILE = 1024


# ----------------------------------------------------------------------------
# Encoder kernel:  relu(x @ W1 + b1) @ W2 + b2      (GELU applied by caller)
# Weights total ~1 MB -> single un-gridded call, everything resident in VMEM.
# ----------------------------------------------------------------------------
def _encoder_kernel(x_ref, w1_ref, b1_ref, w2_ref, b2_ref, o_ref):
    h = jnp.dot(x_ref[...], w1_ref[...], preferred_element_type=jnp.float32)
    h = jnp.maximum(h + b1_ref[...], 0.0)
    z = jnp.dot(h, w2_ref[...], preferred_element_type=jnp.float32) + b2_ref[...]
    o_ref[...] = z.astype(o_ref.dtype)


def encoder_linears(x, w1, b1, w2, b2):
    M = x.shape[0]
    N = w2.shape[1]
    full = lambda a: pl.BlockSpec(a.shape, lambda: (0, 0))
    return pl.pallas_call(
        _encoder_kernel,
        out_shape=jax.ShapeDtypeStruct((M, N), jnp.float32),
        in_specs=[full(x), full(w1), full(b1), full(w2), full(b2)],
        out_specs=pl.BlockSpec((M, N), lambda: (0, 0)),
    )(x, w1, b1, w2, b2)


# ----------------------------------------------------------------------------
# Fused trunk + head kernel.
#
# grid = (layer, hidden_tile); both axes sequential.
#   per step:   h_tile = relu(x_cur @ W1[:, tile] + b1[tile])
#               acc   += h_tile @ W2[tile, :]
#   last tile:  x_cur  = relu(acc + b2 + x_cur)          (ResBlock skip + outer relu)
#   very last:  out    = tanh(relu(x_cur + tem) @ Wd + bd)   (tem = trunk input)
# ----------------------------------------------------------------------------
def _trunk_head_kernel(x_ref, w1_ref, b1_ref, w2_ref, b2_ref, wd_ref, bd_ref,
                       o_ref, x_cur, acc):
    l = pl.program_id(0)
    k = pl.program_id(1)
    nl = pl.num_programs(0)
    nk = pl.num_programs(1)

    @pl.when(jnp.logical_and(l == 0, k == 0))
    def _():
        x_cur[...] = x_ref[...]          # trunk input (post-GELU encoder output)

    @pl.when(k == 0)
    def _():
        acc[...] = jnp.zeros_like(acc)

    h = jnp.dot(x_cur[...], w1_ref[0], preferred_element_type=jnp.float32)
    h = jnp.maximum(h + b1_ref[0], 0.0)
    acc[...] += jnp.dot(h, w2_ref[0], preferred_element_type=jnp.float32)

    @pl.when(k == nk - 1)
    def _():
        # ResBlock residual add + the outer torch.relu of the main forward.
        x_cur[...] = jnp.maximum(acc[...] + b2_ref[0] + x_cur[...], 0.0)

    @pl.when(jnp.logical_and(l == nl - 1, k == nk - 1))
    def _():
        # head: x = relu(x + tem); to_deep = Linear(1024, 64) -> Tanh
        xt = jnp.maximum(x_cur[...] + x_ref[...], 0.0)
        z = jnp.dot(xt, wd_ref[...], preferred_element_type=jnp.float32) + bd_ref[...]
        o_ref[...] = jnp.tanh(z).astype(o_ref.dtype)


def trunk_and_head(x, w1s, b1s, w2s, b2s, wd, bd, *, hid_tile=TRUNK_HID_TILE):
    M, D = x.shape                      # (batch, 1024)
    L, _, H = w1s.shape                 # (4, 1024, 2048)
    N = wd.shape[1]                     # 64
    assert H % hid_tile == 0
    grid = (L, H // hid_tile)

    return pl.pallas_call(
        _trunk_head_kernel,
        out_shape=jax.ShapeDtypeStruct((M, N), jnp.float32),
        grid_spec=pltpu.PrefetchScalarGridSpec(
            num_scalar_prefetch=0,
            grid=grid,
            in_specs=[
                pl.BlockSpec((M, D), lambda l, k: (0, 0)),              # x / tem, resident
                pl.BlockSpec((1, D, hid_tile), lambda l, k: (l, 0, k)),  # W1 tile
                pl.BlockSpec((1, 1, hid_tile), lambda l, k: (l, 0, k)),  # b1 tile
                pl.BlockSpec((1, hid_tile, D), lambda l, k: (l, k, 0)),  # W2 tile
                pl.BlockSpec((1, 1, D), lambda l, k: (l, 0, 0)),         # b2
                pl.BlockSpec((D, N), lambda l, k: (0, 0)),               # W_deep, resident
                pl.BlockSpec((1, N), lambda l, k: (0, 0)),               # b_deep, resident
            ],
            out_specs=pl.BlockSpec((M, N), lambda l, k: (0, 0)),
            scratch_shapes=[
                pltpu.VMEM((M, D), jnp.float32),   # x_cur: running activation
                pltpu.VMEM((M, D), jnp.float32),   # acc:   fp32 matmul accumulator
            ],
        ),
        compiler_params=pltpu.CompilerParams(
            # layer axis carries a dependency (x_cur), hidden axis is a reduction.
            dimension_semantics=("arbitrary", "arbitrary"),
            # ~16.7 MB of buffers (2 x (4MB W1 + 4MB W2) double-buffered + small);
            # raise above v5e's 16 MiB default, still within v7x's 64 MiB physical.
            vmem_limit_bytes=32 * 1024 * 1024,
        ),
    )(x, w1s, b1s, w2s, b2s, wd, bd)


# ----------------------------------------------------------------------------
# Parameter init (deterministic, torch-Linear-style uniform bounds).
# Trunk weights are stored pre-stacked as (4, in, out) for the fused kernel.
# ----------------------------------------------------------------------------
def _linear_params(key, fan_in, fan_out):
    kw, kb = jax.random.split(key)
    bound = 1.0 / math.sqrt(fan_in)
    w = jax.random.uniform(kw, (fan_in, fan_out), jnp.float32, -bound, bound)
    b = jax.random.uniform(kb, (fan_out,), jnp.float32, -bound, bound)
    return w, b


def init_params(key):
    keys = jax.random.split(key, 11)
    p = {}
    w, b = _linear_params(keys[0], 45, 256)
    p["enc1_w"], p["enc1_b"] = w, b.reshape(1, -1)
    w, b = _linear_params(keys[1], 256, 1024)
    p["enc2_w"], p["enc2_b"] = w, b.reshape(1, -1)

    w1s, b1s, w2s, b2s = [], [], [], []
    for i in range(4):
        w1, b1 = _linear_params(keys[2 + 2 * i], 1024, 2048)
        w2, b2 = _linear_params(keys[3 + 2 * i], 2048, 1024)
        w1s.append(w1); b1s.append(b1.reshape(1, -1))
        w2s.append(w2); b2s.append(b2.reshape(1, -1))
    p["res_w1"] = jnp.stack(w1s)     # (4, 1024, 2048)
    p["res_b1"] = jnp.stack(b1s)     # (4, 1, 2048)
    p["res_w2"] = jnp.stack(w2s)     # (4, 2048, 1024)
    p["res_b2"] = jnp.stack(b2s)     # (4, 1, 1024)

    w, b = _linear_params(keys[10], 1024, 64)
    p["deep_w"], p["deep_b"] = w, b.reshape(1, -1)
    return p


# ----------------------------------------------------------------------------
# Forward pass (mirrors En_net.forward)
# ----------------------------------------------------------------------------
def en_net_forward(params, x):
    # encoder: Linear(45,256) -> ReLU -> Linear(256,1024) -> GELU(exact)
    z = encoder_linears(x, params["enc1_w"], params["enc1_b"],
                        params["enc2_w"], params["enc2_b"])
    h = jax.nn.gelu(z, approximate=False)   # exact erf GELU (torch nn.GELU default)

    # tem = h.detach() is a no-op for forward values; `h` doubles as tem inside
    # the fused trunk+head kernel (it stays resident in VMEM).
    out = trunk_and_head(
        h,
        params["res_w1"], params["res_b1"], params["res_w2"], params["res_b2"],
        params["deep_w"], params["deep_b"],
    )
    return out


if __name__ == "__main__":
    key = jax.random.PRNGKey(0)
    k_x, k_p = jax.random.split(key)

    B = 8
    x = jax.random.normal(k_x, (B, 45), dtype=jnp.float32)
    params = init_params(k_p)

    fwd = jax.jit(en_net_forward)
    out = fwd(params, x)
    jax.block_until_ready(out)

    assert out.shape == (B, 64), out.shape
    assert out.dtype == jnp.float32
    print("KERNEL_OK")
</pallas_src>

<mosaic_0001>
module attributes {stable_mosaic.version = 11 : i64} {
  func.func @_trunk_head_kernel(%arg0: i32, %arg1: i32, %arg2: memref<8x1024xf32, #tpu.memory_space<vmem>>, %arg3: memref<1x1024x1024xf32, #tpu.memory_space<vmem>>, %arg4: memref<1x1x1024xf32, #tpu.memory_space<vmem>>, %arg5: memref<1x1024x1024xf32, #tpu.memory_space<vmem>>, %arg6: memref<1x1x1024xf32, #tpu.memory_space<vmem>>, %arg7: memref<1024x64xf32, #tpu.memory_space<vmem>>, %arg8: memref<1x64xf32, #tpu.memory_space<vmem>>, %arg9: memref<8x64xf32, #tpu.memory_space<vmem>>, %arg10: memref<8x1024xf32, #tpu.memory_space<vmem>>, %arg11: memref<8x1024xf32, #tpu.memory_space<vmem>>) attributes {dimension_semantics = [#tpu.dimension_semantics<arbitrary>, #tpu.dimension_semantics<arbitrary>], iteration_bounds = array<i64: 4, 2>, scalar_prefetch = 0 : i64, scratch_operands = 2 : i64, tpu.core_type = #tpu.core_type<tc>, window_params = [{pipeline_mode = #tpu.pipeline_mode<synchronous>, transform_indices = @transform_0, window_bounds = array<i64: 8, 1024>}, {transform_indices = @transform_1, window_bounds = array<i64: 1, 1024, 1024>}, {transform_indices = @transform_2, window_bounds = array<i64: 1, 1, 1024>}, {transform_indices = @transform_3, window_bounds = array<i64: 1, 1024, 1024>}, {transform_indices = @transform_4, window_bounds = array<i64: 1, 1, 1024>}, {pipeline_mode = #tpu.pipeline_mode<synchronous>, transform_indices = @transform_5, window_bounds = array<i64: 1024, 64>}, {pipeline_mode = #tpu.pipeline_mode<synchronous>, transform_indices = @transform_6, window_bounds = array<i64: 1, 64>}, {pipeline_mode = #tpu.pipeline_mode<synchronous>, transform_indices = @transform_7, window_bounds = array<i64: 8, 64>}]} {
    %c0_i32 = arith.constant 0 : i32
    %0 = arith.cmpi eq, %arg0, %c0_i32 : i32
    %c0_i32_0 = arith.constant 0 : i32
    %1 = arith.cmpi eq, %arg1, %c0_i32_0 : i32
    %2 = arith.andi %0, %1 : i1
    %3 = arith.extui %2 : i1 to i32
    %c0_i32_1 = arith.constant 0 : i32
    %4 = arith.cmpi ne, %3, %c0_i32_1 : i32
    scf.if %4 {
      %c0_23 = arith.constant 0 : index
      %c0_24 = arith.constant 0 : index
      %32 = vector.load %arg2[%c0_23, %c0_24] : memref<8x1024xf32, #tpu.memory_space<vmem>>, vector<8x1024xf32>
      %c0_25 = arith.constant 0 : index
      %c0_26 = arith.constant 0 : index
      %33 = vector.load %arg10[%c0_25, %c0_26] : memref<8x1024xf32, #tpu.memory_space<vmem>>, vector<8x1024xf32>
      tpu.vector_store %arg10[%c0_25, %c0_26], %32 {strides = array<i32>} : memref<8x1024xf32, #tpu.memory_space<vmem>>, vector<8x1024xf32>,
    } else {
    }
    %c0_i32_2 = arith.constant 0 : i32
    %5 = arith.cmpi eq, %arg1, %c0_i32_2 : i32
    %6 = arith.extui %5 : i1 to i32
    %c0_i32_3 = arith.constant 0 : i32
    %7 = arith.cmpi ne, %6, %c0_i32_3 : i32
    scf.if %7 {
      %cst_23 = arith.constant 0.000000e+00 : f32
      %32 = vector.broadcast %cst_23 : f32 to vector<8x1024xf32>
      %c0_24 = arith.constant 0 : index
      %c0_25 = arith.constant 0 : index
      %33 = vector.load %arg11[%c0_24, %c0_25] : memref<8x1024xf32, #tpu.memory_space<vmem>>, vector<8x1024xf32>
      tpu.vector_store %arg11[%c0_24, %c0_25], %32 {strides = array<i32>} : memref<8x1024xf32, #tpu.memory_space<vmem>>, vector<8x1024xf32>,
    } else {
    }
    %c0 = arith.constant 0 : index
    %c0_4 = arith.constant 0 : index
    %8 = vector.load %arg10[%c0, %c0_4] : memref<8x1024xf32, #tpu.memory_space<vmem>>, vector<8x1024xf32>
    %c0_5 = arith.constant 0 : index
    %c0_6 = arith.constant 0 : index
    %c0_7 = arith.constant 0 : index
    %9 = vector.load %arg3[%c0_5, %c0_6, %c0_7] : memref<1x1024x1024xf32, #tpu.memory_space<vmem>>, vector<1x1024x1024xf32>
    %10 = vector.shape_cast %9 : vector<1x1024x1024xf32> to vector<1024x1024xf32>
    %cst = arith.constant dense<0.000000e+00> : vector<8x1024xf32>
    %11 = tpu.matmul %8, %10, %cst {dimension_numbers = #tpu.dot_dimension_numbers<[1], [0], [0], [1], [0, 0, 1, 1], [], []>} : vector<8x1024xf32>, vector<1024x1024xf32>, vector<8x1024xf32> -> vector<8x1024xf32>
    %c0_8 = arith.constant 0 : index
    %c0_9 = arith.constant 0 : index
    %c0_10 = arith.constant 0 : index
    %12 = vector.load %arg4[%c0_8, %c0_9, %c0_10] : memref<1x1x1024xf32, #tpu.memory_space<vmem>>, vector<1x1x1024xf32>
    %13 = vector.shape_cast %12 : vector<1x1x1024xf32> to vector<1x1024xf32>
    %14 = vector.broadcast %13 : vector<1x1024xf32> to vector<8x1024xf32>
    %15 = arith.addf %11, %14 : vector<8x1024xf32>
    %cst_11 = arith.constant 0.000000e+00 : f32
    %16 = vector.broadcast %cst_11 : f32 to vector<8x1024xf32>
    %17 = arith.maximumf %15, %16 : vector<8x1024xf32>
    %c0_12 = arith.constant 0 : index
    %c0_13 = arith.constant 0 : index
    %18 = vector.load %arg11[%c0_12, %c0_13] : memref<8x1024xf32, #tpu.memory_space<vmem>>, vector<8x1024xf32>
    %c0_14 = arith.constant 0 : index
    %c0_15 = arith.constant 0 : index
    %c0_16 = arith.constant 0 : index
    %19 = vector.load %arg5[%c0_14, %c0_15, %c0_16] : memref<1x1024x1024xf32, #tpu.memory_space<vmem>>, vector<1x1024x1024xf32>
    %20 = vector.shape_cast %19 : vector<1x1024x1024xf32> to vector<1024x1024xf32>
    %cst_17 = arith.constant dense<0.000000e+00> : vector<8x1024xf32>
    %21 = tpu.matmul %17, %20, %cst_17 {dimension_numbers = #tpu.dot_dimension_numbers<[1], [0], [0], [1], [0, 0, 1, 1], [], []>} : vector<8x1024xf32>, vector<1024x1024xf32>, vector<8x1024xf32> -> vector<8x1024xf32>
    %22 = arith.addf %18, %21 : vector<8x1024xf32>
    %c0_18 = arith.constant 0 : index
    %c0_19 = arith.constant 0 : index
    %23 = vector.load %arg11[%c0_18, %c0_19] : memref<8x1024xf32, #tpu.memory_space<vmem>>, vector<8x1024xf32>
    tpu.vector_store %arg11[%c0_18, %c0_19], %22 {strides = array<i32>} : memref<8x1024xf32, #tpu.memory_space<vmem>>, vector<8x1024xf32>,
    %c1_i32 = arith.constant 1 : i32
    %24 = arith.cmpi eq, %arg1, %c1_i32 : i32
    %25 = arith.extui %24 : i1 to i32
    %c0_i32_20 = arith.constant 0 : i32
    %26 = arith.cmpi ne, %25, %c0_i32_20 : i32
    scf.if %26 {
      %c0_23 = arith.constant 0 : index
      %c0_24 = arith.constant 0 : index
      %32 = vector.load %arg11[%c0_23, %c0_24] : memref<8x1024xf32, #tpu.memory_space<vmem>>, vector<8x1024xf32>
      %c0_25 = arith.constant 0 : index
      %c0_26 = arith.constant 0 : index
      %c0_27 = arith.constant 0 : index
      %33 = vector.load %arg6[%c0_25, %c0_26, %c0_27] : memref<1x1x1024xf32, #tpu.memory_space<vmem>>, vector<1x1x1024xf32>
      %34 = vector.shape_cast %33 : vector<1x1x1024xf32> to vector<1x1024xf32>
      %35 = vector.broadcast %34 : vector<1x1024xf32> to vector<8x1024xf32>
      %36 = arith.addf %32, %35 : vector<8x1024xf32>
      %c0_28 = arith.constant 0 : index
      %c0_29 = arith.constant 0 : index
      %37 = vector.load %arg10[%c0_28, %c0_29] : memref<8x1024xf32, #tpu.memory_space<vmem>>, vector<8x1024xf32>
      %38 = arith.addf %36, %37 : vector<8x1024xf32>
      %cst_30 = arith.constant 0.000000e+00 : f32
      %39 = vector.broadcast %cst_30 : f32 to vector<8x1024xf32>
      %40 = arith.maximumf %38, %39 : vector<8x1024xf32>
      %c0_31 = arith.constant 0 : index
      %c0_32 = arith.constant 0 : index
      %41 = vector.load %arg10[%c0_31, %c0_32] : memref<8x1024xf32, #tpu.memory_space<vmem>>, vector<8x1024xf32>
      tpu.vector_store %arg10[%c0_31, %c0_32], %40 {strides = array<i32>} : memref<8x1024xf32, #tpu.memory_space<vmem>>, vector<8x1024xf32>,
    } else {
    }
    %c3_i32 = arith.constant 3 : i32
    %27 = arith.cmpi eq, %arg0, %c3_i32 : i32
    %c1_i32_21 = arith.constant 1 : i32
    %28 = arith.cmpi eq, %arg1, %c1_i32_21 : i32
    %29 = arith.andi %27, %28 : i1
    %30 = arith.extui %29 : i1 to i32
    %c0_i32_22 = arith.constant 0 : i32
    %31 = arith.cmpi ne, %30, %c0_i32_22 : i32
    scf.if %31 {
      %c0_23 = arith.constant 0 : index
      %c0_24 = arith.constant 0 : index
      %32 = vector.load %arg10[%c0_23, %c0_24] : memref<8x1024xf32, #tpu.memory_space<vmem>>, vector<8x1024xf32>
      %c0_25 = arith.constant 0 : index
      %c0_26 = arith.constant 0 : index
      %33 = vector.load %arg2[%c0_25, %c0_26] : memref<8x1024xf32, #tpu.memory_space<vmem>>, vector<8x1024xf32>
      %34 = arith.addf %32, %33 : vector<8x1024xf32>
      %cst_27 = arith.constant 0.000000e+00 : f32
      %35 = vector.broadcast %cst_27 : f32 to vector<8x1024xf32>
      %36 = arith.maximumf %34, %35 : vector<8x1024xf32>
      %c0_28 = arith.constant 0 : index
      %c0_29 = arith.constant 0 : index
      %37 = vector.load %arg7[%c0_28, %c0_29] : memref<1024x64xf32, #tpu.memory_space<vmem>>, vector<1024x64xf32>
      %cst_30 = arith.constant dense<0.000000e+00> : vector<8x64xf32>
      %38 = tpu.matmul %36, %37, %cst_30 {dimension_numbers = #tpu.dot_dimension_numbers<[1], [0], [0], [1], [0, 0, 1, 1], [], []>} : vector<8x1024xf32>, vector<1024x64xf32>, vector<8x64xf32> -> vector<8x64xf32>
      %c0_31 = arith.constant 0 : index
      %c0_32 = arith.constant 0 : index
      %39 = vector.load %arg8[%c0_31, %c0_32] : memref<1x64xf32, #tpu.memory_space<vmem>>, vector<1x64xf32>
      %40 = vector.broadcast %39 : vector<1x64xf32> to vector<8x64xf32>
      %41 = arith.addf %38, %40 : vector<8x64xf32>
      %42 = math.tanh %41 : vector<8x64xf32>
      %c0_33 = arith.constant 0 : index
      %c0_34 = arith.constant 0 : index
      %43 = vector.load %arg9[%c0_33, %c0_34] : memref<8x64xf32, #tpu.memory_space<vmem>>, vector<8x64xf32>
      tpu.vector_store %arg9[%c0_33, %c0_34], %42 {strides = array<i32>} : memref<8x64xf32, #tpu.memory_space<vmem>>, vector<8x64xf32>,
    } else {
    }
    return
  }
  func.func @transform_0(%arg0: i32, %arg1: i32) -> (i32, i32) {
    %c0_i32 = arith.constant 0 : i32
    %c0_i32_0 = arith.constant 0 : i32
    %c0_i32_1 = arith.constant 0 : i32
    return %c0_i32, %c0_i32_0 : i32, i32
  }
  func.func @transform_1(%arg0: i32, %arg1: i32) -> (i32, i32, i32) {
    %c0_i32 = arith.constant 0 : i32
    %c0_i32_0 = arith.constant 0 : i32
    return %arg0, %c0_i32, %arg1 : i32, i32, i32
  }
  func.func @transform_2(%arg0: i32, %arg1: i32) -> (i32, i32, i32) {
    %c0_i32 = arith.constant 0 : i32
    %c0_i32_0 = arith.constant 0 : i32
    return %arg0, %c0_i32, %arg1 : i32, i32, i32
  }
  func.func @transform_3(%arg0: i32, %arg1: i32) -> (i32, i32, i32) {
    %c0_i32 = arith.constant 0 : i32
    %c0_i32_0 = arith.constant 0 : i32
    return %arg0, %arg1, %c0_i32 : i32, i32, i32
  }
  func.func @transform_4(%arg0: i32, %arg1: i32) -> (i32, i32, i32) {
    %c0_i32 = arith.constant 0 : i32
    %c0_i32_0 = arith.constant 0 : i32
    %c0_i32_1 = arith.constant 0 : i32
    return %arg0, %c0_i32, %c0_i32_0 : i32, i32, i32
  }
  func.func @transform_5(%arg0: i32, %arg1: i32) -> (i32, i32) {
    %c0_i32 = arith.constant 0 : i32
    %c0_i32_0 = arith.constant 0 : i32
    %c0_i32_1 = arith.constant 0 : i32
    return %c0_i32, %c0_i32_0 : i32, i32
  }
  func.func @transform_6(%arg0: i32, %arg1: i32) -> (i32, i32) {
    %c0_i32 = arith.constant 0 : i32
    %c0_i32_0 = arith.constant 0 : i32
    %c0_i32_1 = arith.constant 0 : i32
    return %c0_i32, %c0_i32_0 : i32, i32
  }
  func.func @transform_7(%arg0: i32, %arg1: i32) -> (i32, i32) {
    %c0_i32 = arith.constant 0 : i32
    %c0_i32_0 = arith.constant 0 : i32
    %c0_i32_1 = arith.constant 0 : i32
    return %c0_i32, %c0_i32_0 : i32, i32
  }
}

module attributes {stable_mosaic.version = 11 : i64} {
  func.func @_encoder_kernel(%arg0: memref<8x45xf32, #tpu.memory_space<vmem>>, %arg1: memref<45x256xf32, #tpu.memory_space<vmem>>, %arg2: memref<1x256xf32, #tpu.memory_space<vmem>>, %arg3: memref<256x1024xf32, #tpu.memory_space<vmem>>, %arg4: memref<1x1024xf32, #tpu.memory_space<vmem>>, %arg5: memref<8x1024xf32, #tpu.memory_space<vmem>>) attributes {dimension_semantics = [], scalar_prefetch = 0 : i64, scratch_operands = 0 : i64, tpu.core_type = #tpu.core_type<tc>} {
    %c0 = arith.constant 0 : index
    %c0_0 = arith.constant 0 : index
    %0 = vector.load %arg0[%c0, %c0_0] : memref<8x45xf32, #tpu.memory_space<vmem>>, vector<8x45xf32>
    %c0_1 = arith.constant 0 : index
    %c0_2 = arith.constant 0 : index
    %1 = vector.load %arg1[%c0_1, %c0_2] : memref<45x256xf32, #tpu.memory_space<vmem>>, vector<45x256xf32>
    %cst = arith.constant dense<0.000000e+00> : vector<8x256xf32>
    %2 = tpu.matmul %0, %1, %cst {dimension_numbers = #tpu.dot_dimension_numbers<[1], [0], [0], [1], [0, 0, 1, 1], [], []>} : vector<8x45xf32>, vector<45x256xf32>, vector<8x256xf32> -> vector<8x256xf32>
    %c0_3 = arith.constant 0 : index
    %c0_4 = arith.constant 0 : index
    %3 = vector.load %arg2[%c0_3, %c0_4] : memref<1x256xf32, #tpu.memory_space<vmem>>, vector<1x256xf32>
    %4 = vector.broadcast %3 : vector<1x256xf32> to vector<8x256xf32>
    %5 = arith.addf %2, %4 : vector<8x256xf32>
    %cst_5 = arith.constant 0.000000e+00 : f32
    %6 = vector.broadcast %cst_5 : f32 to vector<8x256xf32>
    %7 = arith.maximumf %5, %6 : vector<8x256xf32>
    %c0_6 = arith.constant 0 : index
    %c0_7 = arith.constant 0 : index
    %8 = vector.load %arg3[%c0_6, %c0_7] : memref<256x1024xf32, #tpu.memory_space<vmem>>, vector<256x1024xf32>
    %cst_8 = arith.constant dense<0.000000e+00> : vector<8x1024xf32>
    %9 = tpu.matmul %7, %8, %cst_8 {dimension_numbers = #tpu.dot_dimension_numbers<[1], [0], [0], [1], [0, 0, 1, 1], [], []>} : vector<8x256xf32>, vector<256x1024xf32>, vector<8x1024xf32> -> vector<8x1024xf32>
    %c0_9 = arith.constant 0 : index
    %c0_10 = arith.constant 0 : index
    %10 = vector.load %arg4[%c0_9, %c0_10] : memref<1x1024xf32, #tpu.memory_space<vmem>>, vector<1x1024xf32>
    %11 = vector.broadcast %10 : vector<1x1024xf32> to vector<8x1024xf32>
    %12 = arith.addf %9, %11 : vector<8x1024xf32>
    %c0_11 = arith.constant 0 : index
    %c0_12 = arith.constant 0 : index
    %13 = vector.load %arg5[%c0_11, %c0_12] : memref<8x1024xf32, #tpu.memory_space<vmem>>, vector<8x1024xf32>
    tpu.vector_store %arg5[%c0_11, %c0_12], %12 {strides = array<i32>} : memref<8x1024xf32, #tpu.memory_space<vmem>>, vector<8x1024xf32>,
    return
  }
}

</mosaic_0001>

<llo_original>
// kernel: en_net_forward.2
$region0: #{en_net_forward.2}
  #allocation0 [shape = 'u32[]', space=smem, size = 0x4, offset = 0x4, fixed_abs, tag = 'smem constant byte address 0x4 - core index']
  #allocation1 [shape = 'u32[144,128]{1,0:T(1,128)}', space=vmem, size = 0x12000, scoped, tag = 'internal scratch']
  %s0 = inlined_call_operand.hbm [shape: f32[8,45], index: 0, kind: input, shape index: {}]
  %s1 = inlined_call_operand.hbm [shape: f32[45,256], index: 1, kind: input, shape index: {}]
  %s2 = inlined_call_operand.hbm [shape: f32[1,256], index: 2, kind: input, shape index: {}]
  %s3 = inlined_call_operand.hbm [shape: f32[256,1024], index: 3, kind: input, shape index: {}]
  %s4 = inlined_call_operand.hbm [shape: f32[1,1024], index: 4, kind: input, shape index: {}]
  %s5 = inlined_call_operand.vmem [shape: f32[8,1024], index: 5, kind: output, shape index: {}]
  %s6 = sld [smem:[#allocation0]]
  $region50: #{en_net_forward.2} parent=0
    _
  %s8 = ssub.s32 1, %s6
  %s9 = scalar_select 0, %s8, %s6
  $region1: #{en_net_forward.2} parent=0
    #allocation2 [shape = 'u8[4096]{0}', space=vmem, size = 0x1000, scoped, tag = 'input window, operand 0, single buffered']
    #allocation3 [shape = 's32[1]{0}', space=sflag, size = 0x4, scoped, tag = 'scoped memory for en_net_forward.2']
    #allocation4 [shape = 'u8[49152]{0}', space=vmem, size = 0xc000, scoped, tag = 'input window, operand 1, single buffered']
    #allocation5 [shape = 's32[1]{0}', space=sflag, size = 0x4, scoped, tag = 'scoped memory for en_net_forward.2']
    #allocation6 [shape = 'u8[1024]{0}', space=vmem, size = 0x400, scoped, tag = 'input window, operand 2, single buffered']
    #allocation7 [shape = 'u8[1048576]{0}', space=vmem, size = 0x100000, scoped, tag = 'input window, operand 3, single buffered']
    #allocation8 [shape = 's32[1]{0}', space=sflag, size = 0x4, scoped, tag = 'scoped memory for en_net_forward.2']
    #allocation9 [shape = 'u8[4096]{0}', space=vmem, size = 0x1000, scoped, tag = 'input window, operand 4, single buffered']
    %10 = vsyncpa [#allocation3], 0
    %11 = vsyncpa [#allocation5], 0
    %12 = vsyncpa [#allocation8], 0
    // Predicated region
    $region2: #{en_net_forward.2} parent=1 // pred_check
      _
    $region3: #{en_net_forward.2} parent=1 // pred_check_branch
      %14 = sbr.rel (0) target = $region5
    $region4: #{en_net_forward.2} parent=1 // pred_region
      %s16 = ssub.s32 128, 128
      %17 = vsyncadd [#allocation3], %s16
      %s19 = sshll.u32 [#allocation2], 4
      %s20 = int_to_ptr.vmem [resolvable:$true] %s19
      %22 = dma.hbm_to_vmem [thread:$0]  %s0, 128, %s20, [#allocation3]
    $region5: #{en_net_forward.2} parent=1 // pred_fallthru
      _
    // Predicated region
    $region6: #{en_net_forward.2} parent=1 // pred_check
      _
    $region7: #{en_net_forward.2} parent=1 // pred_check_branch
      %24 = sbr.rel (0) target = $region9
    $region8: #{en_net_forward.2} parent=1 // pred_region
      %s26 = ssub.s32 1536, 1536
      %27 = vsyncadd [#allocation5], %s26
      %s28 = sshll.u32 [#allocation4], 4
      %s29 = int_to_ptr.vmem [resolvable:$true] %s28
      %34 = dma.hbm_to_vmem [thread:$0]  %s1, 1536, %s29, [#allocation5], 256, 256, 16
    $region9: #{en_net_forward.2} parent=1 // pred_fallthru
      _
    // Predicated region
    $region10: #{en_net_forward.2} parent=1 // pred_check
      _
    $region11: #{en_net_forward.2} parent=1 // pred_check_branch
      %36 = sbr.rel (0) target = $region13
    $region12: #{en_net_forward.2} parent=1 // pred_region
      %s38 = ssub.s32 32, 32
      %39 = vsyncadd [#allocation5], %s38
      %s41 = sshll.u32 [#allocation6], 4
      %s42 = int_to_ptr.vmem [resolvable:$true] %s41
      %44 = dma.hbm_to_vmem [thread:$0]  %s2, 32, %s42, [#allocation5]
    $region13: #{en_net_forward.2} parent=1 // pred_fallthru
      _
    // Predicated region
    $region14: #{en_net_forward.2} parent=1 // pred_check
      _
    $region15: #{en_net_forward.2} parent=1 // pred_check_branch
      %46 = sbr.rel (0) target = $region17
    $region16: #{en_net_forward.2} parent=1 // pred_region
      %s48 = ssub.s32 32768, 32768
      %49 = vsyncadd [#allocation8], %s48
      %s50 = sshll.u32 [#allocation7], 4
      %s51 = int_to_ptr.vmem [resolvable:$true] %s50
      %56 = dma.hbm_to_vmem [thread:$0]  %s3, 32768, %s51, [#allocation8], 1024, 1024, 64
    $region17: #{en_net_forward.2} parent=1 // pred_fallthru
      _
    // Predicated region
    $region18: #{en_net_forward.2} parent=1 // pred_check
      _
    $region19: #{en_net_forward.2} parent=1 // pred_check_branch
      %58 = sbr.rel (0) target = $region21
    $region20: #{en_net_forward.2} parent=1 // pred_region
      %s60 = ssub.s32 128, 128
      %61 = vsyncadd [#allocation8], %s60
      %s63 = sshll.u32 [#allocation9], 4
      %s64 = int_to_ptr.vmem [resolvable:$true] %s63
      %66 = dma.hbm_to_vmem [thread:$0]  %s4, 128, %s64, [#allocation8]
    $region21: #{en_net_forward.2} parent=1 // pred_fallthru
      _
    // Predicated region
    $region22: #{en_net_forward.2} parent=1 // pred_check
      _
    $region23: #{en_net_forward.2} parent=1 // pred_check_branch
      %68 = sbr.rel (0) target = $region25
    $region24: #{en_net_forward.2} parent=1 // pred_region
      %69 = dma.done [#allocation3], 128
    $region25: #{en_net_forward.2} parent=1 // pred_fallthru
      _
    // Predicated region
    $region26: #{en_net_forward.2} parent=1 // pred_check
      _
    $region27: #{en_net_forward.2} parent=1 // pred_check_branch
      %71 = sbr.rel (0) target = $region29
    $region28: #{en_net_forward.2} parent=1 // pred_region
      %72 = dma.done [#allocation5], 1536
    $region29: #{en_net_forward.2} parent=1 // pred_fallthru
      _
    // Predicated region
    $region30: #{en_net_forward.2} parent=1 // pred_check
      _
    $region31: #{en_net_forward.2} parent=1 // pred_check_branch
      %74 = sbr.rel (0) target = $region33
    $region32: #{en_net_forward.2} parent=1 // pred_region
      %75 = dma.done [#allocation5], 32
    $region33: #{en_net_forward.2} parent=1 // pred_fallthru
      _
    // Predicated region
    $region34: #{en_net_forward.2} parent=1 // pred_check
      _
    $region35: #{en_net_forward.2} parent=1 // pred_check_branch
      %77 = sbr.rel (0) target = $region37
    $region36: #{en_net_forward.2} parent=1 // pred_region
      %78 = dma.done [#allocation8], 32768
    $region37: #{en_net_forward.2} parent=1 // pred_fallthru
      _
    // Predicated region
    $region38: #{en_net_forward.2} parent=1 // pred_check
      _
    $region39: #{en_net_forward.2} parent=1 // pred_check_branch
      %80 = sbr.rel (0) target = $region41
    $region40: #{en_net_forward.2} parent=1 // pred_region
      %81 = dma.done [#allocation8], 128
    $region41: #{en_net_forward.2} parent=1 // pred_fallthru
      _
    %v82 = vld [vmem:[#allocation2] sm:$0xff]
    %v83 = vld [vmem:[#allocation4] sm:$0xff]
    %v84 = vld [vmem:[#allocation4 + $0x8] sm:$0xff]
    %v85 = vld [vmem:[#allocation4 + $0x10] sm:$0xff]
    %v86 = vld [vmem:[#allocation4 + $0x18] sm:$0xff]
    %v87 = vld [vmem:[#allocation4 + $0x20] sm:$0xff]
    %v88 = vld [vmem:[#allocation4 + $0x28] sm:$0xff]
    %v89 = vld [vmem:[#allocation4 + $0x30] sm:$0xff]
    %v90 = vld [vmem:[#allocation4 + $0x38] sm:$0xff]
    %v91 = vld [vmem:[#allocation4 + $0x40] sm:$0xff]
    %v92 = vld [vmem:[#allocation4 + $0x48] sm:$0xff]
    %v93 = vld [vmem:[#allocation4 + $0x50] sm:$0x1f]
    %v94 = vld [vmem:[#allocation4 + $0x58] sm:$0x1f]
    %v95 = vld [vmem:[#allocation6] sm:$0x3]
    %v97 = vlaneseq
    %v98 = vshrl.u32 %v97, 7
    %v99 = vsub.s32 0, %v98
    %v100 = vrot.slane %v95, %v99
    %v101 = vlaneseq
    %v102 = vshrl.u32 %v101, 7
    %v103 = vsub.s32 1, %v102
    %v104 = vrot.slane %v95, %v103
    %vm107 = vcmask 367616
    %v109 = vsel %vm107, %v82, 0
    %vm111 = vcmask 1044480
    %v113 = vsel %vm111, %v93, 0
    %v116 = vsel %vm111, %v94, 0
    %118 = vmatprep.subr.mxu0 %v84
    %119 = vmatpush1.msra.mxu0 %v83
    %120 = vmatprep.subr.mxu0 %v86
    %121 = vmatpush1.msra.mxu0 %v85
    %122 = vmatprep.subr.mxu0 %v88
    %123 = vmatpush1.msra.mxu0 %v87
    %124 = vmatprep.subr.mxu0 %v90
    %125 = vmatpush1.msra.mxu0 %v89
    %126 = vmatprep.subr.mxu0 %v92
    %127 = vmatpush1.msra.mxu0 %v91
    %128 = vmatprep.subr.mxu0 %v116
    %129 = vmatpush1.msra.mxu0 %v113
    %130 = vmatprep.subr.mxu0 0.0
    %131 = vmatpush1.msra.mxu0 0.0
    %132 = vmatprep.subr.mxu0 0.0
    %133 = vmatpush1.msra.mxu0 0.0
    %134 = vmatprep.subr.mxu0 0.0
    %135 = vmatpush1.msra.mxu0 0.0
    %136 = vmatprep.subr.mxu0 0.0
    %137 = vmatpush1.msra.mxu0 0.0
    %138 = vmatprep.subr.mxu0 0.0
    %139 = vmatpush1.msra.mxu0 0.0
    %140 = vmatprep.subr.mxu0 0.0
    %141 = vmatpush1.msra.mxu0 0.0
    %142 = vmatprep.subr.mxu0 0.0
    %143 = vmatpush1.msra.mxu0 0.0
    %144 = vmatprep.subr.mxu0 0.0
    %145 = vmatpush1.msra.mxu0 0.0
    %146 = vmatprep.subr.mxu0 0.0
    %147 = vmatpush1.msra.mxu0 0.0
    %148 = vmatprep.subr.mxu0 0.0
    %149 = vmatpush1.msra.mxu0 0.0
    %150 = vmatprep.subr.mxu0 0.0
    %151 = vmatpush1.msra.mxu0 0.0
    %152 = vmatprep.subr.mxu0 0.0
    %153 = vmatpush1.msra.mxu0 0.0
    %154 = vmatprep.subr.mxu0 0.0
    %155 = vmatpush1.msra.mxu0 0.0
    %156 = vmatprep.subr.mxu0 0.0
    %157 = vmatpush1.msra.mxu0 0.0
    %158 = vmatprep.subr.mxu0 0.0
    %159 = vmatpush1.msra.mxu0 0.0
    %160 = vmatprep.subr.mxu0 0.0
    %161 = vmatpush1.msra.mxu0 0.0
    %162 = vmatprep.subr.mxu0 0.0
    %163 = vmatpush1.msra.mxu0 0.0
    %164 = vmatprep.subr.mxu0 0.0
    %165 = vmatpush1.msra.mxu0 0.0
    %166 = vmatprep.subr.mxu0 0.0
    %167 = vmatpush1.msra.mxu0 0.0
    %168 = vmatprep.subr.mxu0 0.0
    %169 = vmatpush1.msra.mxu0 0.0
    %170 = vmatprep.subr.mxu0 0.0
    %171 = vmatpush1.msra.mxu0 0.0
    %172 = vmatprep.subr.mxu0 0.0
    %173 = vmatpush1.msra.mxu0 0.0
    %174 = vmatprep.subr.mxu0 0.0
    %175 = vmatpush1.msra.mxu0 0.0
    %176 = vmatprep.subr.mxu0 0.0
    %177 = vmatpush1.msra.mxu0 0.0
    %178 = vmatprep.subr.mxu0 0.0
    %179 = vmatpush1.msra.mxu0 0.0
    %180 = vmatprep.subr.mxu0 0.0
    %181 = vmatpush1.msra.mxu0 0.0
    %182 = vmatprep.mubr.f32.mxu0 0.0
    %183 = vmatmul.mubr.f32.gmra.mrb[0].mxu0 %v109
    %v184 = vpop.f32.mrb[0].mxu0
    %v185 = vadd.f32 %v100, %v184
    %v186 = vpop.f32.mrb[0].mxu0
    %v187 = vadd.f32 %v104, %v186
    %188 = vdwg.mxu0
    %v189 = vmax.f32 %v185, 0.0
    %v190 = vmax.f32 %v187, 0.0
    %v191 = vld [vmem:[#allocation7] sm:$0xff]
    %v192 = vld [vmem:[#allocation7 + $0x8] sm:$0xff]
    %v193 = vld [vmem:[#allocation7 + $0x10] sm:$0xff]
    %v194 = vld [vmem:[#allocation7 + $0x18] sm:$0xff]
    %v195 = vld [vmem:[#allocation7 + $0x20] sm:$0xff]
    %v196 = vld [vmem:[#allocation7 + $0x28] sm:$0xff]
    %v197 = vld [vmem:[#allocation7 + $0x30] sm:$0xff]
    %v198 = vld [vmem:[#allocation7 + $0x38] sm:$0xff]
    %v199 = vld [vmem:[#allocation7 + $0x40] sm:$0xff]
    %v200 = vld [vmem:[#allocation7 + $0x48] sm:$0xff]
    %v201 = vld [vmem:[#allocation7 + $0x50] sm:$0xff]
    %v202 = vld [vmem:[#allocation7 + $0x58] sm:$0xff]
    %v203 = vld [vmem:[#allocation7 + $0x60] sm:$0xff]
    %v204 = vld [vmem:[#allocation7 + $0x68] sm:$0xff]
    %v205 = vld [vmem:[#allocation7 + $0x70] sm:$0xff]
    %v206 = vld [vmem:[#allocation7 + $0x78] sm:$0xff]
    %v207 = vld [vmem:[#allocation7 + $0x80] sm:$0xff]
    %v208 = vld [vmem:[#allocation7 + $0x88] sm:$0xff]
    %v209 = vld [vmem:[#allocation7 + $0x90] sm:$0xff]
    %v210 = vld [vmem:[#allocation7 + $0x98] sm:$0xff]
    %v211 = vld [vmem:[#allocation7 + $0xa0] sm:$0xff]
    %v212 = vld [vmem:[#allocation7 + $0xa8] sm:$0xff]
    %v213 = vld [vmem:[#allocation7 + $0xb0] sm:$0xff]
    %v214 = vld [vmem:[#allocation7 + $0xb8] sm:$0xff]
    %v215 = vld [vmem:[#allocation7 + $0xc0] sm:$0xff]
    %v216 = vld [vmem:[#allocation7 + $0xc8] sm:$0xff]
    %v217 = vld [vmem:[#allocation7 + $0xd0] sm:$0xff]
    %v218 = vld [vmem:[#allocation7 + $0xd8] sm:$0xff]
    %v219 = vld [vmem:[#allocation7 + $0xe0] sm:$0xff]
    %v220 = vld [vmem:[#allocation7 + $0xe8] sm:$0xff]
    %v221 = vld [vmem:[#allocation7 + $0xf0] sm:$0xff]
    %v222 = vld [vmem:[#allocation7 + $0xf8] sm:$0xff]
    %v223 = vld [vmem:[#allocation7 + $0x100] sm:$0xff]
    %v224 = vld [vmem:[#allocation7 + $0x108] sm:$0xff]
    %v225 = vld [vmem:[#allocation7 + $0x110] sm:$0xff]
    %v226 = vld [vmem:[#allocation7 + $0x118] sm:$0xff]
    %v227 = vld [vmem:[#allocation7 + $0x120] sm:$0xff]
    %v228 = vld [vmem:[#allocation7 + $0x128] sm:$0xff]
    %v229 = vld [vmem:[#allocation7 + $0x130] sm:$0xff]
    %v230 = vld [vmem:[#allocation7 + $0x138] sm:$0xff]
    %v231 = vld [vmem:[#allocation7 + $0x140] sm:$0xff]
    %v232 = vld [vmem:[#allocation7 + $0x148] sm:$0xff]
    %v233 = vld [vmem:[#allocation7 + $0x150] sm:$0xff]
    %v234 = vld [vmem:[#allocation7 + $0x158] sm:$0xff]
    %v235 = vld [vmem:[#allocation7 + $0x160] sm:$0xff]
    %v236 = vld [vmem:[#allocation7 + $0x168] sm:$0xff]
    %v237 = vld [vmem:[#allocation7 + $0x170] sm:$0xff]
    %v238 = vld [vmem:[#allocation7 + $0x178] sm:$0xff]
    %v239 = vld [vmem:[#allocation7 + $0x180] sm:$0xff]
    %v240 = vld [vmem:[#allocation7 + $0x188] sm:$0xff]
    %v241 = vld [vmem:[#allocation7 + $0x190] sm:$0xff]
    %v242 = vld [vmem:[#allocation7 + $0x198] sm:$0xff]
    %v243 = vld [vmem:[#allocation7 + $0x1a0] sm:$0xff]
    %v244 = vld [vmem:[#allocation7 + $0x1a8] sm:$0xff]
    %v245 = vld [vmem:[#allocation7 + $0x1b0] sm:$0xff]
    %v246 = vld [vmem:[#allocation7 + $0x1b8] sm:$0xff]
    %v247 = vld [vmem:[#allocation7 + $0x1c0] sm:$0xff]
    %v248 = vld [vmem:[#allocation7 + $0x1c8] sm:$0xff]
    %v249 = vld [vmem:[#allocation7 + $0x1d0] sm:$0xff]
    %v250 = vld [vmem:[#allocation7 + $0x1d8] sm:$0xff]
    %v251 = vld [vmem:[#allocation7 + $0x1e0] sm:$0xff]
    %v252 = vld [vmem:[#allocation7 + $0x1e8] sm:$0xff]
    %v253 = vld [vmem:[#allocation7 + $0x1f0] sm:$0xff]
    %v254 = vld [vmem:[#allocation7 + $0x1f8] sm:$0xff]
    %v255 = vld [vmem:[#allocation7 + $0x200] sm:$0xff]
    %v256 = vld [vmem:[#allocation7 + $0x208] sm:$0xff]
    %v257 = vld [vmem:[#allocation7 + $0x210] sm:$0xff]
    %v258 = vld [vmem:[#allocation7 + $0x218] sm:$0xff]
    %v259 = vld [vmem:[#allocation7 + $0x220] sm:$0xff]
    %v260 = vld [vmem:[#allocation7 + $0x228] sm:$0xff]
    %v261 = vld [vmem:[#allocation7 + $0x230] sm:$0xff]
    %v262 = vld [vmem:[#allocation7 + $0x238] sm:$0xff]
    %v263 = vld [vmem:[#allocation7 + $0x240] sm:$0xff]
    %v264 = vld [vmem:[#allocation7 + $0x248] sm:$0xff]
    %v265 = vld [vmem:[#allocation7 + $0x250] sm:$0xff]
    %v266 = vld [vmem:[#allocation7 + $0x258] sm:$0xff]
    %v267 = vld [vmem:[#allocation7 + $0x260] sm:$0xff]
    %v268 = vld [vmem:[#allocation7 + $0x268] sm:$0xff]
    %v269 = vld [vmem:[#allocation7 + $0x270] sm:$0xff]
    %v270 = vld [vmem:[#allocation7 + $0x278] sm:$0xff]
    %v271 = vld [vmem:[#allocation7 + $0x280] sm:$0xff]
    %v272 = vld [vmem:[#allocation7 + $0x288] sm:$0xff]
    %v273 = vld [vmem:[#allocation7 + $0x290] sm:$0xff]
    %v274 = vld [vmem:[#allocation7 + $0x298] sm:$0xff]
    %v275 = vld [vmem:[#allocation7 + $0x2a0] sm:$0xff]
    %v276 = vld [vmem:[#allocation7 + $0x2a8] sm:$0xff]
    %v277 = vld [vmem:[#allocation7 + $0x2b0] sm:$0xff]
    %v278 = vld [vmem:[#allocation7 + $0x2b8] sm:$0xff]
    %v279 = vld [vmem:[#allocation7 + $0x2c0] sm:$0xff]
    %v280 = vld [vmem:[#allocation7 + $0x2c8] sm:$0xff]
    %v281 = vld [vmem:[#allocation7 + $0x2d0] sm:$0xff]
    %v282 = vld [vmem:[#allocation7 + $0x2d8] sm:$0xff]
    %v283 = vld [vmem:[#allocation7 + $0x2e0] sm:$0xff]
    %v284 = vld [vmem:[#allocation7 + $0x2e8] sm:$0xff]
    %v285 = vld [vmem:[#allocation7 + $0x2f0] sm:$0xff]
    %v286 = vld [vmem:[#allocation7 + $0x2f8] sm:$0xff]
    %v287 = vld [vmem:[#allocation7 + $0x300] sm:$0xff]
    %v288 = vld [vmem:[#allocation7 + $0x308] sm:$0xff]
    %v289 = vld [vmem:[#allocation7 + $0x310] sm:$0xff]
    %v290 = vld [vmem:[#allocation7 + $0x318] sm:$0xff]
    %v291 = vld [vmem:[#allocation7 + $0x320] sm:$0xff]
    %v292 = vld [vmem:[#allocation7 + $0x328] sm:$0xff]
    %v293 = vld [vmem:[#allocation7 + $0x330] sm:$0xff]
    %v294 = vld [vmem:[#allocation7 + $0x338] sm:$0xff]
    %v295 = vld [vmem:[#allocation7 + $0x340] sm:$0xff]
    %v296 = vld [vmem:[#allocation7 + $0x348] sm:$0xff]
    %v297 = vld [vmem:[#allocation7 + $0x350] sm:$0xff]
    %v298 = vld [vmem:[#allocation7 + $0x358] sm:$0xff]
    %v299 = vld [vmem:[#allocation7 + $0x360] sm:$0xff]
    %v300 = vld [vmem:[#allocation7 + $0x368] sm:$0xff]
    %v301 = vld [vmem:[#allocation7 + $0x370] sm:$0xff]
    %v302 = vld [vmem:[#allocation7 + $0x378] sm:$0xff]
    %v303 = vld [vmem:[#allocation7 + $0x380] sm:$0xff]
    %v304 = vld [vmem:[#allocation7 + $0x388] sm:$0xff]
    %v305 = vld [vmem:[#allocation7 + $0x390] sm:$0xff]
    %v306 = vld [vmem:[#allocation7 + $0x398] sm:$0xff]
    %v307 = vld [vmem:[#allocation7 + $0x3a0] sm:$0xff]
    %v308 = vld [vmem:[#allocation7 + $0x3a8] sm:$0xff]
    %v309 = vld [vmem:[#allocation7 + $0x3b0] sm:$0xff]
    %v310 = vld [vmem:[#allocation7 + $0x3b8] sm:$0xff]
    %v311 = vld [vmem:[#allocation7 + $0x3c0] sm:$0xff]
    %v312 = vld [vmem:[#allocation7 + $0x3c8] sm:$0xff]
    %v313 = vld [vmem:[#allocation7 + $0x3d0] sm:$0xff]
    %v314 = vld [vmem:[#allocation7 + $0x3d8] sm:$0xff]
    %v315 = vld [vmem:[#allocation7 + $0x3e0] sm:$0xff]
    %v316 = vld [vmem:[#allocation7 + $0x3e8] sm:$0xff]
    %v317 = vld [vmem:[#allocation7 + $0x3f0] sm:$0xff]
    %v318 = vld [vmem:[#allocation7 + $0x3f8] sm:$0xff]
    %v319 = vld [vmem:[#allocation7 + $0x400] sm:$0xff]
    %v320 = vld [vmem:[#allocation7 + $0x408] sm:$0xff]
    %v321 = vld [vmem:[#allocation7 + $0x410] sm:$0xff]
    %v322 = vld [vmem:[#allocation7 + $0x418] sm:$0xff]
    %v323 = vld [vmem:[#allocation7 + $0x420] sm:$0xff]
    %v324 = vld [vmem:[#allocation7 + $0x428] sm:$0xff]
    %v325 = vld [vmem:[#allocation7 + $0x430] sm:$0xff]
    %v326 = vld [vmem:[#allocation7 + $0x438] sm:$0xff]
    %v327 = vld [vmem:[#allocation7 + $0x440] sm:$0xff]
    %v328 = vld [vmem:[#allocation7 + $0x448] sm:$0xff]
    %v329 = vld [vmem:[#allocation7 + $0x450] sm:$0xff]
    %v330 = vld [vmem:[#allocation7 + $0x458] sm:$0xff]
    %v331 = vld [vmem:[#allocation7 + $0x460] sm:$0xff]
    %v332 = vld [vmem:[#allocation7 + $0x468] sm:$0xff]
    %v333 = vld [vmem:[#allocation7 + $0x470] sm:$0xff]
    %v334 = vld [vmem:[#allocation7 + $0x478] sm:$0xff]
    %v335 = vld [vmem:[#allocation7 + $0x480] sm:$0xff]
    %v336 = vld [vmem:[#allocation7 + $0x488] sm:$0xff]
    %v337 = vld [vmem:[#allocation7 + $0x490] sm:$0xff]
    %v338 = vld [vmem:[#allocation7 + $0x498] sm:$0xff]
    %v339 = vld [vmem:[#allocation7 + $0x4a0] sm:$0xff]
    %v340 = vld [vmem:[#allocation7 + $0x4a8] sm:$0xff]
    %v341 = vld [vmem:[#allocation7 + $0x4b0] sm:$0xff]
    %v342 = vld [vmem:[#allocation7 + $0x4b8] sm:$0xff]
    %v343 = vld [vmem:[#allocation7 + $0x4c0] sm:$0xff]
    %v344 = vld [vmem:[#allocation7 + $0x4c8] sm:$0xff]
    %v345 = vld [vmem:[#allocation7 + $0x4d0] sm:$0xff]
    %v346 = vld [vmem:[#allocation7 + $0x4d8] sm:$0xff]
    %v347 = vld [vmem:[#allocation7 + $0x4e0] sm:$0xff]
    %v348 = vld [vmem:[#allocation7 + $0x4e8] sm:$0xff]
    %v349 = vld [vmem:[#allocation7 + $0x4f0] sm:$0xff]
    %v350 = vld [vmem:[#allocation7 + $0x4f8] sm:$0xff]
    %v351 = vld [vmem:[#allocation7 + $0x500] sm:$0xff]
    %v352 = vld [vmem:[#allocation7 + $0x508] sm:$0xff]
    %v353 = vld [vmem:[#allocation7 + $0x510] sm:$0xff]
    %v354 = vld [vmem:[#allocation7 + $0x518] sm:$0xff]
    %v355 = vld [vmem:[#allocation7 + $0x520] sm:$0xff]
    %v356 = vld [vmem:[#allocation7 + $0x528] sm:$0xff]
    %v357 = vld [vmem:[#allocation7 + $0x530] sm:$0xff]
    %v358 = vld [vmem:[#allocation7 + $0x538] sm:$0xff]
    %v359 = vld [vmem:[#allocation7 + $0x540] sm:$0xff]
    %v360 = vld [vmem:[#allocation7 + $0x548] sm:$0xff]
    %v361 = vld [vmem:[#allocation7 + $0x550] sm:$0xff]
    %v362 = vld [vmem:[#allocation7 + $0x558] sm:$0xff]
    %v363 = vld [vmem:[#allocation7 + $0x560] sm:$0xff]
    %v364 = vld [vmem:[#allocation7 + $0x568] sm:$0xff]
    %v365 = vld [vmem:[#allocation7 + $0x570] sm:$0xff]
    %v366 = vld [vmem:[#allocation7 + $0x578] sm:$0xff]
    %v367 = vld [vmem:[#allocation7 + $0x580] sm:$0xff]
    %v368 = vld [vmem:[#allocation7 + $0x588] sm:$0xff]
    %v369 = vld [vmem:[#allocation7 + $0x590] sm:$0xff]
    %v370 = vld [vmem:[#allocation7 + $0x598] sm:$0xff]
    %v371 = vld [vmem:[#allocation7 + $0x5a0] sm:$0xff]
    %v372 = vld [vmem:[#allocation7 + $0x5a8] sm:$0xff]
    %v373 = vld [vmem:[#allocation7 + $0x5b0] sm:$0xff]
    %v374 = vld [vmem:[#allocation7 + $0x5b8] sm:$0xff]
    %v375 = vld [vmem:[#allocation7 + $0x5c0] sm:$0xff]
    %v376 = vld [vmem:[#allocation7 + $0x5c8] sm:$0xff]
    %v377 = vld [vmem:[#allocation7 + $0x5d0] sm:$0xff]
    %v378 = vld [vmem:[#allocation7 + $0x5d8] sm:$0xff]
    %v379 = vld [vmem:[#allocation7 + $0x5e0] sm:$0xff]
    %v380 = vld [vmem:[#allocation7 + $0x5e8] sm:$0xff]
    %v381 = vld [vmem:[#allocation7 + $0x5f0] sm:$0xff]
    %v382 = vld [vmem:[#allocation7 + $0x5f8] sm:$0xff]
    %v383 = vld [vmem:[#allocation7 + $0x600] sm:$0xff]
    %v384 = vld [vmem:[#allocation7 + $0x608] sm:$0xff]
    %v385 = vld [vmem:[#allocation7 + $0x610] sm:$0xff]
    %v386 = vld [vmem:[#allocation7 + $0x618] sm:$0xff]
    %v387 = vld [vmem:[#allocation7 + $0x620] sm:$0xff]
    %v388 = vld [vmem:[#allocation7 + $0x628] sm:$0xff]
    %v389 = vld [vmem:[#allocation7 + $0x630] sm:$0xff]
    %v390 = vld [vmem:[#allocation7 + $0x638] sm:$0xff]
    %v391 = vld [vmem:[#allocation7 + $0x640] sm:$0xff]
    %v392 = vld [vmem:[#allocation7 + $0x648] sm:$0xff]
    %v393 = vld [vmem:[#allocation7 + $0x650] sm:$0xff]
    %v394 = vld [vmem:[#allocation7 + $0x658] sm:$0xff]
    %v395 = vld [vmem:[#allocation7 + $0x660] sm:$0xff]
    %v396 = vld [vmem:[#allocation7 + $0x668] sm:$0xff]
    %v397 = vld [vmem:[#allocation7 + $0x670] sm:$0xff]
    %v398 = vld [vmem:[#allocation7 + $0x678] sm:$0xff]
    %v399 = vld [vmem:[#allocation7 + $0x680] sm:$0xff]
    %v400 = vld [vmem:[#allocation7 + $0x688] sm:$0xff]
    %v401 = vld [vmem:[#allocation7 + $0x690] sm:$0xff]
    %v402 = vld [vmem:[#allocation7 + $0x698] sm:$0xff]
    %v403 = vld [vmem:[#allocation7 + $0x6a0] sm:$0xff]
    %v404 = vld [vmem:[#allocation7 + $0x6a8] sm:$0xff]
    %v405 = vld [vmem:[#allocation7 + $0x6b0] sm:$0xff]
    %v406 = vld [vmem:[#allocation7 + $0x6b8] sm:$0xff]
    %v407 = vld [vmem:[#allocation7 + $0x6c0] sm:$0xff]
    %v408 = vld [vmem:[#allocation7 + $0x6c8] sm:$0xff]
    %v409 = vld [vmem:[#allocation7 + $0x6d0] sm:$0xff]
    %v410 = vld [vmem:[#allocation7 + $0x6d8] sm:$0xff]
    %v411 = vld [vmem:[#allocation7 + $0x6e0] sm:$0xff]
    %v412 = vld [vmem:[#allocation7 + $0x6e8] sm:$0xff]
    %v413 = vld [vmem:[#allocation7 + $0x6f0] sm:$0xff]
    %v414 = vld [vmem:[#allocation7 + $0x6f8] sm:$0xff]
    %v415 = vld [vmem:[#allocation7 + $0x700] sm:$0xff]
    %v416 = vld [vmem:[#allocation7 + $0x708] sm:$0xff]
    %v417 = vld [vmem:[#allocation7 + $0x710] sm:$0xff]
    %v418 = vld [vmem:[#allocation7 + $0x718] sm:$0xff]
    %v419 = vld [vmem:[#allocation7 + $0x720] sm:$0xff]
    %v420 = vld [vmem:[#allocation7 + $0x728] sm:$0xff]
    %v421 = vld [vmem:[#allocation7 + $0x730] sm:$0xff]
    %v422 = vld [vmem:[#allocation7 + $0x738] sm:$0xff]
    %v423 = vld [vmem:[#allocation7 + $0x740] sm:$0xff]
    %v424 = vld [vmem:[#allocation7 + $0x748] sm:$0xff]
    %v425 = vld [vmem:[#allocation7 + $0x750] sm:$0xff]
    %v426 = vld [vmem:[#allocation7 + $0x758] sm:$0xff]
    %v427 = vld [vmem:[#allocation7 + $0x760] sm:$0xff]
    %v428 = vld [vmem:[#allocation7 + $0x768] sm:$0xff]
    %v429 = vld [vmem:[#allocation7 + $0x770] sm:$0xff]
    %v430 = vld [vmem:[#allocation7 + $0x778] sm:$0xff]
    %v431 = vld [vmem:[#allocation7 + $0x780] sm:$0xff]
    %v432 = vld [vmem:[#allocation7 + $0x788] sm:$0xff]
    %v433 = vld [vmem:[#allocation7 + $0x790] sm:$0xff]
    %v434 = vld [vmem:[#allocation7 + $0x798] sm:$0xff]
    %v435 = vld [vmem:[#allocation7 + $0x7a0] sm:$0xff]
    %v436 = vld [vmem:[#allocation7 + $0x7a8] sm:$0xff]
    %v437 = vld [vmem:[#allocation7 + $0x7b0] sm:$0xff]
    %v438 = vld [vmem:[#allocation7 + $0x7b8] sm:$0xff]
    %v439 = vld [vmem:[#allocation7 + $0x7c0] sm:$0xff]
    %v440 = vld [vmem:[#allocation7 + $0x7c8] sm:$0xff]
    %v441 = vld [vmem:[#allocation7 + $0x7d0] sm:$0xff]
    %v442 = vld [vmem:[#allocation7 + $0x7d8] sm:$0xff]
    %v443 = vld [vmem:[#allocation7 + $0x7e0] sm:$0xff]
    %v444 = vld [vmem:[#allocation7 + $0x7e8] sm:$0xff]
    %v445 = vld [vmem:[#allocation7 + $0x7f0] sm:$0xff]
    %v446 = vld [vmem:[#allocation7 + $0x7f8] sm:$0xff]
    %v447 = vld [vmem:[#allocation9] sm:$0xff]
    %v449 = vlaneseq
    %v450 = vshrl.u32 %v449, 7
    %v451 = vsub.s32 0, %v450
    %v452 = vrot.slane %v447, %v451
    %v453 = vlaneseq
    %v454 = vshrl.u32 %v453, 7
    %v455 = vsub.s32 1, %v454
    %v456 = vrot.slane %v447, %v455
    %v457 = vlaneseq
    %v458 = vshrl.u32 %v457, 7
    %v459 = vsub.s32 2, %v458
    %v460 = vrot.slane %v447, %v459
    %v461 = vlaneseq
    %v462 = vshrl.u32 %v461, 7
    %v463 = vsub.s32 3, %v462
    %v464 = vrot.slane %v447, %v463
    %v465 = vlaneseq
    %v466 = vshrl.u32 %v465, 7
    %v467 = vsub.s32 4, %v466
    %v468 = vrot.slane %v447, %v467
    %v469 = vlaneseq
    %v470 = vshrl.u32 %v469, 7
    %v471 = vsub.s32 5, %v470
    %v472 = vrot.slane %v447, %v471
    %v473 = vlaneseq
    %v474 = vshrl.u32 %v473, 7
    %v475 = vsub.s32 6, %v474
    %v476 = vrot.slane %v447, %v475
    %v477 = vlaneseq
    %v478 = vshrl.u32 %v477, 7
    %v479 = vsub.s32 7, %v478
    %v480 = vrot.slane %v447, %v479
    %489 = vmatprep.subr.mxu0 %v192
    %490 = vmatpush1.msra.mxu0 %v191
    %491 = vmatprep.subr.mxu0 %v200
    %492 = vmatpush1.msra.mxu0 %v199
    %493 = vmatprep.subr.mxu0 %v208
    %494 = vmatpush1.msra.mxu0 %v207
    %495 = vmatprep.subr.mxu0 %v216
    %496 = vmatpush1.msra.mxu0 %v215
    %497 = vmatprep.subr.mxu0 %v224
    %498 = vmatpush1.msra.mxu0 %v223
    %499 = vmatprep.subr.mxu0 %v232
    %500 = vmatpush1.msra.mxu0 %v231
    %501 = vmatprep.subr.mxu0 %v240
    %502 = vmatpush1.msra.mxu0 %v239
    %503 = vmatprep.subr.mxu0 %v248
    %504 = vmatpush1.msra.mxu0 %v247
    %505 = vmatprep.subr.mxu0 %v256
    %506 = vmatpush1.msra.mxu0 %v255
    %507 = vmatprep.subr.mxu0 %v264
    %508 = vmatpush1.msra.mxu0 %v263
    %509 = vmatprep.subr.mxu0 %v272
    %510 = vmatpush1.msra.mxu0 %v271
    %511 = vmatprep.subr.mxu0 %v280
    %512 = vmatpush1.msra.mxu0 %v279
    %513 = vmatprep.subr.mxu0 %v288
    %514 = vmatpush1.msra.mxu0 %v287
    %515 = vmatprep.subr.mxu0 %v296
    %516 = vmatpush1.msra.mxu0 %v295
    %517 = vmatprep.subr.mxu0 %v304
    %518 = vmatpush1.msra.mxu0 %v303
    %519 = vmatprep.subr.mxu0 %v312
    %520 = vmatpush1.msra.mxu0 %v311
    %521 = vmatprep.subr.mxu0 %v320
    %522 = vmatpush1.msra.mxu0 %v319
    %523 = vmatprep.subr.mxu0 %v328
    %524 = vmatpush1.msra.mxu0 %v327
    %525 = vmatprep.subr.mxu0 %v336
    %526 = vmatpush1.msra.mxu0 %v335
    %527 = vmatprep.subr.mxu0 %v344
    %528 = vmatpush1.msra.mxu0 %v343
    %529 = vmatprep.subr.mxu0 %v352
    %530 = vmatpush1.msra.mxu0 %v351
    %531 = vmatprep.subr.mxu0 %v360
    %532 = vmatpush1.msra.mxu0 %v359
    %533 = vmatprep.subr.mxu0 %v368
    %534 = vmatpush1.msra.mxu0 %v367
    %535 = vmatprep.subr.mxu0 %v376
    %536 = vmatpush1.msra.mxu0 %v375
    %537 = vmatprep.subr.mxu0 %v384
    %538 = vmatpush1.msra.mxu0 %v383
    %539 = vmatprep.subr.mxu0 %v392
    %540 = vmatpush1.msra.mxu0 %v391
    %541 = vmatprep.subr.mxu0 %v400
    %542 = vmatpush1.msra.mxu0 %v399
    %543 = vmatprep.subr.mxu0 %v408
    %544 = vmatpush1.msra.mxu0 %v407
    %545 = vmatprep.subr.mxu0 %v416
    %546 = vmatpush1.msra.mxu0 %v415
    %547 = vmatprep.subr.mxu0 %v424
    %548 = vmatpush1.msra.mxu0 %v423
    %549 = vmatprep.subr.mxu0 %v432
    %550 = vmatpush1.msra.mxu0 %v431
    %551 = vmatprep.subr.mxu0 %v440
    %552 = vmatpush1.msra.mxu0 %v439
    %553 = vmatprep.mubr.f32.mxu0 %v190
    %554 = vmatmul.mubr.f32.gmra.mrb[0].mxu0 %v189
    %v555 = vpop.f32.mrb[0].mxu0
    %v556 = vadd.f32 %v452, %v555
    %v557 = vpop.f32.mrb[0].mxu0
    %v558 = vadd.f32 %v456, %v557
    %559 = vdwg.mxu0
    %560 = vmatprep.subr.mxu0 %v194
    %561 = vmatpush1.msra.mxu0 %v193
    %562 = vmatprep.subr.mxu0 %v202
    %563 = vmatpush1.msra.mxu0 %v201
    %564 = vmatprep.subr.mxu0 %v210
    %565 = vmatpush1.msra.mxu0 %v209
    %566 = vmatprep.subr.mxu0 %v218
    %567 = vmatpush1.msra.mxu0 %v217
    %568 = vmatprep.subr.mxu0 %v226
    %569 = vmatpush1.msra.mxu0 %v225
    %570 = vmatprep.subr.mxu0 %v234
    %571 = vmatpush1.msra.mxu0 %v233
    %572 = vmatprep.subr.mxu0 %v242
    %573 = vmatpush1.msra.mxu0 %v241
    %574 = vmatprep.subr.mxu0 %v250
    %575 = vmatpush1.msra.mxu0 %v249
    %576 = vmatprep.subr.mxu0 %v258
    %577 = vmatpush1.msra.mxu0 %v257
    %578 = vmatprep.subr.mxu0 %v266
    %579 = vmatpush1.msra.mxu0 %v265
    %580 = vmatprep.subr.mxu0 %v274
    %581 = vmatpush1.msra.mxu0 %v273
    %582 = vmatprep.subr.mxu0 %v282
    %583 = vmatpush1.msra.mxu0 %v281
    %584 = vmatprep.subr.mxu0 %v290
    %585 = vmatpush1.msra.mxu0 %v289
    %586 = vmatprep.subr.mxu0 %v298
    %587 = vmatpush1.msra.mxu0 %v297
    %588 = vmatprep.subr.mxu0 %v306
    %589 = vmatpush1.msra.mxu0 %v305
    %590 = vmatprep.subr.mxu0 %v314
    %591 = vmatpush1.msra.mxu0 %v313
    %592 = vmatprep.subr.mxu0 %v322
    %593 = vmatpush1.msra.mxu0 %v321
    %594 = vmatprep.subr.mxu0 %v330
    %595 = vmatpush1.msra.mxu0 %v329
    %596 = vmatprep.subr.mxu0 %v338
    %597 = vmatpush1.msra.mxu0 %v337
    %598 = vmatprep.subr.mxu0 %v346
    %599 = vmatpush1.msra.mxu0 %v345
    %600 = vmatprep.subr.mxu0 %v354
    %601 = vmatpush1.msra.mxu0 %v353
    %602 = vmatprep.subr.mxu0 %v362
    %603 = vmatpush1.msra.mxu0 %v361
    %604 = vmatprep.subr.mxu0 %v370
    %605 = vmatpush1.msra.mxu0 %v369
    %606 = vmatprep.subr.mxu0 %v378
    %607 = vmatpush1.msra.mxu0 %v377
    %608 = vmatprep.subr.mxu0 %v386
    %609 = vmatpush1.msra.mxu0 %v385
    %610 = vmatprep.subr.mxu0 %v394
    %611 = vmatpush1.msra.mxu0 %v393
    %612 = vmatprep.subr.mxu0 %v402
    %613 = vmatpush1.msra.mxu0 %v401
    %614 = vmatprep.subr.mxu0 %v410
    %615 = vmatpush1.msra.mxu0 %v409
    %616 = vmatprep.subr.mxu0 %v418
    %617 = vmatpush1.msra.mxu0 %v417
    %618 = vmatprep.subr.mxu0 %v426
    %619 = vmatpush1.msra.mxu0 %v425
    %620 = vmatprep.subr.mxu0 %v434
    %621 = vmatpush1.msra.mxu0 %v433
    %622 = vmatprep.subr.mxu0 %v442
    %623 = vmatpush1.msra.mxu0 %v441
    %624 = vmatprep.mubr.f32.mxu0 %v190
    %625 = vmatmul.mubr.f32.gmra.mrb[0].mxu0 %v189
    %v626 = vpop.f32.mrb[0].mxu0
    %v627 = vadd.f32 %v460, %v626
    %v628 = vpop.f32.mrb[0].mxu0
    %v629 = vadd.f32 %v464, %v628
    %630 = vdwg.mxu0
    %631 = vmatprep.subr.mxu0 %v196
    %632 = vmatpush1.msra.mxu0 %v195
    %633 = vmatprep.subr.mxu0 %v204
    %634 = vmatpush1.msra.mxu0 %v203
    %635 = vmatprep.subr.mxu0 %v212
    %636 = vmatpush1.msra.mxu0 %v211
    %637 = vmatprep.subr.mxu0 %v220
    %638 = vmatpush1.msra.mxu0 %v219
    %639 = vmatprep.subr.mxu0 %v228
    %640 = vmatpush1.msra.mxu0 %v227
    %641 = vmatprep.subr.mxu0 %v236
    %642 = vmatpush1.msra.mxu0 %v235
    %643 = vmatprep.subr.mxu0 %v244
    %644 = vmatpush1.msra.mxu0 %v243
    %645 = vmatprep.subr.mxu0 %v252
    %646 = vmatpush1.msra.mxu0 %v251
    %647 = vmatprep.subr.mxu0 %v260
    %648 = vmatpush1.msra.mxu0 %v259
    %649 = vmatprep.subr.mxu0 %v268
    %650 = vmatpush1.msra.mxu0 %v267
    %651 = vmatprep.subr.mxu0 %v276
    %652 = vmatpush1.msra.mxu0 %v275
    %653 = vmatprep.subr.mxu0 %v284
    %654 = vmatpush1.msra.mxu0 %v283
    %655 = vmatprep.subr.mxu0 %v292
    %656 = vmatpush1.msra.mxu0 %v291
    %657 = vmatprep.subr.mxu0 %v300
    %658 = vmatpush1.msra.mxu0 %v299
    %659 = vmatprep.subr.mxu0 %v308
    %660 = vmatpush1.msra.mxu0 %v307
    %661 = vmatprep.subr.mxu0 %v316
    %662 = vmatpush1.msra.mxu0 %v315
    %663 = vmatprep.subr.mxu0 %v324
    %664 = vmatpush1.msra.mxu0 %v323
    %665 = vmatprep.subr.mxu0 %v332
    %666 = vmatpush1.msra.mxu0 %v331
    %667 = vmatprep.subr.mxu0 %v340
    %668 = vmatpush1.msra.mxu0 %v339
    %669 = vmatprep.subr.mxu0 %v348
    %670 = vmatpush1.msra.mxu0 %v347
    %671 = vmatprep.subr.mxu0 %v356
    %672 = vmatpush1.msra.mxu0 %v355
    %673 = vmatprep.subr.mxu0 %v364
    %674 = vmatpush1.msra.mxu0 %v363
    %675 = vmatprep.subr.mxu0 %v372
    %676 = vmatpush1.msra.mxu0 %v371
    %677 = vmatprep.subr.mxu0 %v380
    %678 = vmatpush1.msra.mxu0 %v379
    %679 = vmatprep.subr.mxu0 %v388
    %680 = vmatpush1.msra.mxu0 %v387
    %681 = vmatprep.subr.mxu0 %v396
    %682 = vmatpush1.msra.mxu0 %v395
    %683 = vmatprep.subr.mxu0 %v404
    %684 = vmatpush1.msra.mxu0 %v403
    %685 = vmatprep.subr.mxu0 %v412
    %686 = vmatpush1.msra.mxu0 %v411
    %687 = vmatprep.subr.mxu0 %v420
    %688 = vmatpush1.msra.mxu0 %v419
    %689 = vmatprep.subr.mxu0 %v428
    %690 = vmatpush1.msra.mxu0 %v427
    %691 = vmatprep.subr.mxu0 %v436
    %692 = vmatpush1.msra.mxu0 %v435
    %693 = vmatprep.subr.mxu0 %v444
    %694 = vmatpush1.msra.mxu0 %v443
    %695 = vmatprep.mubr.f32.mxu0 %v190
    %696 = vmatmul.mubr.f32.gmra.mrb[0].mxu0 %v189
    %v697 = vpop.f32.mrb[0].mxu0
    %v698 = vadd.f32 %v468, %v697
    %v699 = vpop.f32.mrb[0].mxu0
    %v700 = vadd.f32 %v472, %v699
    %701 = vdwg.mxu0
    %702 = vmatprep.subr.mxu0 %v198
    %703 = vmatpush1.msra.mxu0 %v197
    %704 = vmatprep.subr.mxu0 %v206
    %705 = vmatpush1.msra.mxu0 %v205
    %706 = vmatprep.subr.mxu0 %v214
    %707 = vmatpush1.msra.mxu0 %v213
    %708 = vmatprep.subr.mxu0 %v222
    %709 = vmatpush1.msra.mxu0 %v221
    %710 = vmatprep.subr.mxu0 %v230
    %711 = vmatpush1.msra.mxu0 %v229
    %712 = vmatprep.subr.mxu0 %v238
    %713 = vmatpush1.msra.mxu0 %v237
    %714 = vmatprep.subr.mxu0 %v246
    %715 = vmatpush1.msra.mxu0 %v245
    %716 = vmatprep.subr.mxu0 %v254
    %717 = vmatpush1.msra.mxu0 %v253
    %718 = vmatprep.subr.mxu0 %v262
    %719 = vmatpush1.msra.mxu0 %v261
    %720 = vmatprep.subr.mxu0 %v270
    %721 = vmatpush1.msra.mxu0 %v269
    %722 = vmatprep.subr.mxu0 %v278
    %723 = vmatpush1.msra.mxu0 %v277
    %724 = vmatprep.subr.mxu0 %v286
    %725 = vmatpush1.msra.mxu0 %v285
    %726 = vmatprep.subr.mxu0 %v294
    %727 = vmatpush1.msra.mxu0 %v293
    %728 = vmatprep.subr.mxu0 %v302
    %729 = vmatpush1.msra.mxu0 %v301
    %730 = vmatprep.subr.mxu0 %v310
    %731 = vmatpush1.msra.mxu0 %v309
    %732 = vmatprep.subr.mxu0 %v318
    %733 = vmatpush1.msra.mxu0 %v317
    %734 = vmatprep.subr.mxu0 %v326
    %735 = vmatpush1.msra.mxu0 %v325
    %736 = vmatprep.subr.mxu0 %v334
    %737 = vmatpush1.msra.mxu0 %v333
    %738 = vmatprep.subr.mxu0 %v342
    %739 = vmatpush1.msra.mxu0 %v341
    %740 = vmatprep.subr.mxu0 %v350
    %741 = vmatpush1.msra.mxu0 %v349
    %742 = vmatprep.subr.mxu0 %v358
    %743 = vmatpush1.msra.mxu0 %v357
    %744 = vmatprep.subr.mxu0 %v366
    %745 = vmatpush1.msra.mxu0 %v365
    %746 = vmatprep.subr.mxu0 %v374
    %747 = vmatpush1.msra.mxu0 %v373
    %748 = vmatprep.subr.mxu0 %v382
    %749 = vmatpush1.msra.mxu0 %v381
    %750 = vmatprep.subr.mxu0 %v390
    %751 = vmatpush1.msra.mxu0 %v389
    %752 = vmatprep.subr.mxu0 %v398
    %753 = vmatpush1.msra.mxu0 %v397
    %754 = vmatprep.subr.mxu0 %v406
    %755 = vmatpush1.msra.mxu0 %v405
    %756 = vmatprep.subr.mxu0 %v414
    %757 = vmatpush1.msra.mxu0 %v413
    %758 = vmatprep.subr.mxu0 %v422
    %759 = vmatpush1.msra.mxu0 %v421
    %760 = vmatprep.subr.mxu0 %v430
    %761 = vmatpush1.msra.mxu0 %v429
    %762 = vmatprep.subr.mxu0 %v438
    %763 = vmatpush1.msra.mxu0 %v437
    %764 = vmatprep.subr.mxu0 %v446
    %765 = vmatpush1.msra.mxu0 %v445
    %766 = vmatprep.mubr.f32.mxu0 %v190
    %767 = vmatmul.mubr.f32.gmra.mrb[0].mxu0 %v189
    %v768 = vpop.f32.mrb[0].mxu0
    %v769 = vadd.f32 %v476, %v768
    %v770 = vpop.f32.mrb[0].mxu0
    %v771 = vadd.f32 %v480, %v770
    %772 = vdwg.mxu0
    %773 = vst [vmem:[%s5] sm:$0xff] %v556
    %774 = vst [vmem:[%s5 + $0x8] sm:$0xff] %v558
    %775 = vst [vmem:[%s5 + $0x10] sm:$0xff] %v627
    %776 = vst [vmem:[%s5 + $0x18] sm:$0xff] %v629
    %777 = vst [vmem:[%s5 + $0x20] sm:$0xff] %v698
    %778 = vst [vmem:[%s5 + $0x28] sm:$0xff] %v700
    %779 = vst [vmem:[%s5 + $0x30] sm:$0xff] %v769
    %780 = vst [vmem:[%s5 + $0x38] sm:$0xff] %v771
    // Predicated region
    $region42: #{en_net_forward.2} parent=1 // pred_check
      _
    $region43: #{en_net_forward.2} parent=1 // pred_check_branch
      %782 = sbr.rel (0) target = $region45
    $region44: #{en_net_forward.2} parent=1 // pred_region
      _
    $region45: #{en_net_forward.2} parent=1 // pred_fallthru
      _
    // Predicated region
    $region46: #{en_net_forward.2} parent=1 // pred_check
      _
    $region47: #{en_net_forward.2} parent=1 // pred_check_branch
      %784 = sbr.rel (0) target = $region49
    $region48: #{en_net_forward.2} parent=1 // pred_region
      _
    $region49: #{en_net_forward.2} parent=1 // pred_fallthru
      _
    %785 = vsyncpa [#allocation3], 1
    %786 = vsyncpa [#allocation5], 1
    %787 = vsyncpa [#allocation8], 1

// kernel: en_net_forward.3
$region0: #{en_net_forward.3}
  #allocation0 [shape = 'u32[]', space=smem, size = 0x4, offset = 0x4, fixed_abs, tag = 'smem constant byte address 0x4 - core index']
  #allocation1 [shape = 'u32[144,128]{1,0:T(1,128)}', space=vmem, size = 0x12000, scoped, tag = 'internal scratch']
  #allocation2 [shape = 'f32[8,1024]{1,0:T(8,128)}', space=vmem, size = 0x8000, scoped, tag = 'scratch operand']
  #allocation3 [shape = 'f32[8,1024]{1,0:T(8,128)}', space=vmem, size = 0x8000, scoped, tag = 'scratch operand']
  %s0 = inlined_call_operand.vmem [shape: f32[8,1024], index: 0, kind: input, shape index: {}]
  %s1 = inlined_call_operand.hbm [shape: f32[4,1024,2048], index: 1, kind: input, shape index: {}]
  %s2 = inlined_call_operand.hbm [shape: f32[4,1,2048], index: 2, kind: input, shape index: {}]
  %s3 = inlined_call_operand.hbm [shape: f32[4,2048,1024], index: 3, kind: input, shape index: {}]
  %s4 = inlined_call_operand.hbm [shape: f32[4,1,1024], index: 4, kind: input, shape index: {}]
  %s5 = inlined_call_operand.vmem [shape: f32[1024,64], index: 5, kind: input, shape index: {}]
  %s6 = inlined_call_operand.hbm [shape: f32[1,64], index: 6, kind: input, shape index: {}]
  %s7 = inlined_call_operand.hbm [shape: f32[8,64], index: 7, kind: output, shape index: {}]
  %s8 = sld [smem:[#allocation0]]
  $region97: #{en_net_forward.3} parent=0
    _
  %s10 = ssub.s32 1, %s8
  %s11 = scalar_select 0, %s10, %s8
  $region1: #{en_net_forward.3} parent=0
    #allocation4 [shape = 'u8[8388608]{0}', space=vmem, size = 0x800000, scoped, tag = 'input window, operand 1']
    #allocation5 [shape = 's32[2]{0}', space=sflag, size = 0x8, scoped, tag = 'scoped memory for en_net_forward.3']
    #allocation6 [shape = 's32[2]{0}', space=sflag, size = 0x8, scoped, tag = 'scoped memory for en_net_forward.3']
    #allocation7 [shape = 'u8[8192]{0}', space=vmem, size = 0x2000, scoped, tag = 'input window, operand 2']
    #allocation8 [shape = 's32[2]{0}', space=sflag, size = 0x8, scoped, tag = 'scoped memory for en_net_forward.3']
    #allocation9 [shape = 'u8[8388608]{0}', space=vmem, size = 0x800000, scoped, tag = 'input window, operand 3']
    #allocation10 [shape = 'u8[8192]{0}', space=vmem, size = 0x2000, scoped, tag = 'input window, operand 4']
    #allocation11 [shape = 's32[2]{0}', space=sflag, size = 0x8, scoped, tag = 'scoped memory for en_net_forward.3']
    #allocation12 [shape = 'u8[512]{0}', space=vmem, size = 0x400, scoped, tag = 'input window, operand 6, single buffered']
    #allocation13 [shape = 'u8[4096]{0}', space=vmem, size = 0x1000, scoped, tag = 'output window, operand 0, single buffered']
    %12 = vsyncpa [#allocation5], 0
    %s13 = scalar_lea.sflag [#allocation5], 1
    %14 = vsyncpa %s13, 0
    %15 = vsyncpa [#allocation8], 0
    %s16 = scalar_lea.sflag [#allocation8], 1
    %17 = vsyncpa %s16, 0
    %18 = vsyncpa [#allocation11], 0
    %s19 = scalar_lea.sflag [#allocation11], 1
    %20 = vsyncpa %s19, 0
    %21 = vsyncpa [#allocation6], 0
    loop: start=0, step=1, limit=10
    $region2: #{en_net_forward.3} parent=1 // loop_pre_header
      _
    $region3: #{en_net_forward.3} parent=1 // loop_header
      %s23 = sphi 0, %s27
      %p24 = scmp.ge.s32.totalorder %s23, 10
      %s30 = sphi 0, %s42
      %s31 = sphi 0, %s38
      %s32 = sphi 0, %s30
      %s33 = sphi 0, %s31
      %s34 = sphi 0, %s32
      %s35 = sphi 0, %s33
      %s43 = sphi 0, %s43
      %s45 = sphi 0, %s43
      %s46 = sphi 0, %s45
      %s60 = sphi 0, %s46
      %s68 = sphi 0, %s70
      %s71 = sphi 0, %s68
      %s72 = sphi 0, %s71
      %s88 = sphi 0, %s72
      %s96 = sphi 0, %s98
      %s99 = sphi 0, %s96
      %s100 = sphi 0, %s99
      %s116 = sphi 0, %s100
      %s124 = sphi 0, %s126
      %s127 = sphi 0, %s124
      %s128 = sphi 0, %s127
      %s144 = sphi 0, %s128
      %s150 = sphi 0, %s152
      %s153 = sphi 0, %s150
      %s154 = sphi 0, %s153
      %s170 = sphi 0, %s154
      %s174 = sphi 0, %s174
      %s176 = sphi 0, %s174
      %s177 = sphi 0, %s176
      %s191 = sphi 0, %s177
      %s195 = sphi 0, %s195
      %s197 = sphi 0, %s195
      %s198 = sphi 0, %s197
      %s212 = sphi 0, %s198
      %s216 = sphi 0, %s216
      %s218 = sphi 0, %s216
      %s219 = sphi 0, %s218
      %s233 = sphi 0, %s219
    $region4: #{en_net_forward.3} parent=1 // loop_header_branch
      %26 = sbr.rel (%p24) target = $region8
    $region5: #{en_net_forward.3} parent=1 // loop_body
      %s28 = ssub.s32 %s23, 1
      %s29 = ssub.s32 %s23, 2
      %s36 = sadd.s32 1, %s31
      %p37 = scmp.ge.s32.totalorder %s36, 2
      %s38 = scalar_select %p37, 0, %s36
      %s39 = sadd.s32 1, %s30
      %s40 = scalar_select %p37, %s39, %s30
      %p41 = scmp.ge.s32.totalorder %s40, 4
      %s42 = scalar_select %p41, 0, %s40
      %s44 = sadd.s32 %s43, 1
      %p47 = scmp.eq.s32.totalorder %s23, 7
      %p48 = scmp.ne.s32.totalorder %s43, %s45
      %p49 = scmp.eq.s32.totalorder %s23, 0
      %p50 = por %p48, %p49
      %p51 = scmp.ne.s32.totalorder %s43, %s45
      %p52 = scmp.eq.s32.totalorder %s28, 7
      %p53 = por %p51, %p52
      %p54 = scmp.ne.s32.totalorder %s45, %s46
      %p55 = scmp.eq.s32.totalorder %s28, 0
      %p56 = por %p54, %p55
      %p57 = scmp.ne.s32.totalorder %s45, %s46
      %p58 = scmp.eq.s32.totalorder %s29, 7
      %p59 = por %p57, %p58
      %p61 = scmp.ne.s32.totalorder %s46, %s60
      %p62 = scmp.eq.s32.totalorder %s29, 0
      %p63 = por %p61, %p62
      %s64 = ssub.s32 %s30, %s42
      %s65 = ssub.s32 %s31, %s38
      %s66 = sor.u32 %s64, %s65
      %p67 = scmp.eq.s32.totalorder %s66, 0
      %s69 = sadd.s32 %s68, 1
      %s70 = scalar_select %p67, %s68, %s69
      %p73 = pneg %p67
      %p74 = scmp.eq.s32.totalorder %s23, 7
      %p75 = por %p73, %p74
      %p76 = scmp.ne.s32.totalorder %s68, %s71
      %p77 = scmp.eq.s32.totalorder %s23, 0
      %p78 = por %p76, %p77
      %p79 = scmp.ne.s32.totalorder %s68, %s71
      %p80 = scmp.eq.s32.totalorder %s28, 7
      %p81 = por %p79, %p80
      %p82 = scmp.ne.s32.totalorder %s71, %s72
      %p83 = scmp.eq.s32.totalorder %s28, 0
      %p84 = por %p82, %p83
      %p85 = scmp.ne.s32.totalorder %s71, %s72
      %p86 = scmp.eq.s32.totalorder %s29, 7
      %p87 = por %p85, %p86
      %p89 = scmp.ne.s32.totalorder %s72, %s88
      %p90 = scmp.eq.s32.totalorder %s29, 0
      %p91 = por %p89, %p90
      %s92 = ssub.s32 %s30, %s42
      %s93 = ssub.s32 %s31, %s38
      %s94 = sor.u32 %s92, %s93
      %p95 = scmp.eq.s32.totalorder %s94, 0
      %s97 = sadd.s32 %s96, 1
      %s98 = scalar_select %p95, %s96, %s97
      %p101 = pneg %p95
      %p102 = scmp.eq.s32.totalorder %s23, 7
      %p103 = por %p101, %p102
      %p104 = scmp.ne.s32.totalorder %s96, %s99
      %p105 = scmp.eq.s32.totalorder %s23, 0
      %p106 = por %p104, %p105
      %p107 = scmp.ne.s32.totalorder %s96, %s99
      %p108 = scmp.eq.s32.totalorder %s28, 7
      %p109 = por %p107, %p108
      %p110 = scmp.ne.s32.totalorder %s99, %s100
      %p111 = scmp.eq.s32.totalorder %s28, 0
      %p112 = por %p110, %p111
      %p113 = scmp.ne.s32.totalorder %s99, %s100
      %p114 = scmp.eq.s32.totalorder %s29, 7
      %p115 = por %p113, %p114
      %p117 = scmp.ne.s32.totalorder %s100, %s116
      %p118 = scmp.eq.s32.totalorder %s29, 0
      %p119 = por %p117, %p118
      %s120 = ssub.s32 %s30, %s42
      %s121 = ssub.s32 %s31, %s38
      %s122 = sor.u32 %s120, %s121
      %p123 = scmp.eq.s32.totalorder %s122, 0
      %s125 = sadd.s32 %s124, 1
      %s126 = scalar_select %p123, %s124, %s125
      %p129 = pneg %p123
      %p130 = scmp.eq.s32.totalorder %s23, 7
      %p131 = por %p129, %p130
      %p132 = scmp.ne.s32.totalorder %s124, %s127
      %p133 = scmp.eq.s32.totalorder %s23, 0
      %p134 = por %p132, %p133
      %p135 = scmp.ne.s32.totalorder %s124, %s127
      %p136 = scmp.eq.s32.totalorder %s28, 7
      %p137 = por %p135, %p136
      %p138 = scmp.ne.s32.totalorder %s127, %s128
      %p139 = scmp.eq.s32.totalorder %s28, 0
      %p140 = por %p138, %p139
      %p141 = scmp.ne.s32.totalorder %s127, %s128
      %p142 = scmp.eq.s32.totalorder %s29, 7
      %p143 = por %p141, %p142
      %p145 = scmp.ne.s32.totalorder %s128, %s144
      %p146 = scmp.eq.s32.totalorder %s29, 0
      %p147 = por %p145, %p146
      %s148 = ssub.s32 %s30, %s42
      %p149 = scmp.eq.s32.totalorder %s148, 0
      %s151 = sadd.s32 %s150, 1
      %s152 = scalar_select %p149, %s150, %s151
      %p155 = pneg %p149
      %p156 = scmp.eq.s32.totalorder %s23, 7
      %p157 = por %p155, %p156
      %p158 = scmp.ne.s32.totalorder %s150, %s153
      %p159 = scmp.eq.s32.totalorder %s23, 0
      %p160 = por %p158, %p159
      %p161 = scmp.ne.s32.totalorder %s150, %s153
      %p162 = scmp.eq.s32.totalorder %s28, 7
      %p163 = por %p161, %p162
      %p164 = scmp.ne.s32.totalorder %s153, %s154
      %p165 = scmp.eq.s32.totalorder %s28, 0
      %p166 = por %p164, %p165
      %p167 = scmp.ne.s32.totalorder %s153, %s154
      %p168 = scmp.eq.s32.totalorder %s29, 7
      %p169 = por %p167, %p168
      %p171 = scmp.ne.s32.totalorder %s154, %s170
      %p172 = scmp.eq.s32.totalorder %s29, 0
      %p173 = por %p171, %p172
      %s175 = sadd.s32 %s174, 1
      %p178 = scmp.eq.s32.totalorder %s23, 7
      %p179 = scmp.ne.s32.totalorder %s174, %s176
      %p180 = scmp.eq.s32.totalorder %s23, 0
      %p181 = por %p179, %p180
      %p182 = scmp.ne.s32.totalorder %s174, %s176
      %p183 = scmp.eq.s32.totalorder %s28, 7
      %p184 = por %p182, %p183
      %p185 = scmp.ne.s32.totalorder %s176, %s177
      %p186 = scmp.eq.s32.totalorder %s28, 0
      %p187 = por %p185, %p186
      %p188 = scmp.ne.s32.totalorder %s176, %s177
      %p189 = scmp.eq.s32.totalorder %s29, 7
      %p190 = por %p188, %p189
      %p192 = scmp.ne.s32.totalorder %s177, %s191
      %p193 = scmp.eq.s32.totalorder %s29, 0
      %p194 = por %p192, %p193
      %s196 = sadd.s32 %s195, 1
      %p199 = scmp.eq.s32.totalorder %s23, 7
      %p200 = scmp.ne.s32.totalorder %s195, %s197
      %p201 = scmp.eq.s32.totalorder %s23, 0
      %p202 = por %p200, %p201
      %p203 = scmp.ne.s32.totalorder %s195, %s197
      %p204 = scmp.eq.s32.totalorder %s28, 7
      %p205 = por %p203, %p204
      %p206 = scmp.ne.s32.totalorder %s197, %s198
      %p207 = scmp.eq.s32.totalorder %s28, 0
      %p208 = por %p206, %p207
      %p209 = scmp.ne.s32.totalorder %s197, %s198
      %p210 = scmp.eq.s32.totalorder %s29, 7
      %p211 = por %p209, %p210
      %p213 = scmp.ne.s32.totalorder %s198, %s212
      %p214 = scmp.eq.s32.totalorder %s29, 0
      %p215 = por %p213, %p214
      %s217 = sadd.s32 %s216, 1
      %p220 = scmp.eq.s32.totalorder %s23, 7
      %p221 = scmp.ne.s32.totalorder %s216, %s218
      %p222 = scmp.eq.s32.totalorder %s23, 0
      %p223 = por %p221, %p222
      %p224 = scmp.ne.s32.totalorder %s216, %s218
      %p225 = scmp.eq.s32.totalorder %s28, 7
      %p226 = por %p224, %p225
      %p227 = scmp.ne.s32.totalorder %s218, %s219
      %p228 = scmp.eq.s32.totalorder %s28, 0
      %p229 = por %p227, %p228
      %p230 = scmp.ne.s32.totalorder %s218, %s219
      %p231 = scmp.eq.s32.totalorder %s29, 7
      %p232 = por %p230, %p231
      %p234 = scmp.ne.s32.totalorder %s219, %s233
      %p235 = scmp.eq.s32.totalorder %s29, 0
      %p236 = por %p234, %p235
      %p237 = scmp.le.s32.totalorder 1, %s23
      %p238 = scmp.lt.s32.totalorder %s23, 9
      %p239 = pnand %p237, %p238
      %p240 = pneg %p239
      // Predicated region
      $region9: #{en_net_forward.3} parent=5 // pred_check
        _
      $region10: #{en_net_forward.3} parent=5 // pred_check_branch
        %242 = sbr.rel (%p239) target = $region12
      $region11: #{en_net_forward.3} parent=5 // pred_region
        %s243 = ssub.s32 %s23, 1
        // Predicated region
        $region13: #{en_net_forward.3} parent=11 // pred_check
          %p244 = pneg %p56
        $region14: #{en_net_forward.3} parent=11 // pred_check_branch
          %246 = sbr.rel (%p244) target = $region16
        $region15: #{en_net_forward.3} parent=11 // pred_region
          _
        $region16: #{en_net_forward.3} parent=11 // pred_fallthru
          _
        // Predicated region
        $region17: #{en_net_forward.3} parent=11 // pred_check
          %p247 = pneg %p187
        $region18: #{en_net_forward.3} parent=11 // pred_check_branch
          %249 = sbr.rel (%p247) target = $region20
        $region19: #{en_net_forward.3} parent=11 // pred_region
          _
        $region20: #{en_net_forward.3} parent=11 // pred_fallthru
          _
        // Predicated region
        $region21: #{en_net_forward.3} parent=11 // pred_check
          %p250 = pneg %p208
        $region22: #{en_net_forward.3} parent=11 // pred_check_branch
          %252 = sbr.rel (%p250) target = $region24
        $region23: #{en_net_forward.3} parent=11 // pred_region
          %s254 = ssub.s32 16, 16
          %255 = vsyncadd [#allocation11], %s254
          %s257 = sshll.u32 [#allocation12], 4
          %s258 = int_to_ptr.vmem [resolvable:$true] %s257
          %260 = dma.hbm_to_vmem [thread:$0]  %s6, 16, %s258, [#allocation11]
        $region24: #{en_net_forward.3} parent=11 // pred_fallthru
          _
      $region12: #{en_net_forward.3} parent=5 // pred_fallthru
        _
      %p261 = scmp.lt.s32.totalorder %s23, 8
      // Predicated region
      $region25: #{en_net_forward.3} parent=5 // pred_check
        %p262 = pneg %p261
      $region26: #{en_net_forward.3} parent=5 // pred_check_branch
        %264 = sbr.rel (%p262) target = $region28
      $region27: #{en_net_forward.3} parent=5 // pred_region
        // Predicated region
        $region29: #{en_net_forward.3} parent=27 // pred_check
          %p265 = pneg %p78
        $region30: #{en_net_forward.3} parent=27 // pred_check_branch
          %267 = sbr.rel (%p265) target = $region32
        $region31: #{en_net_forward.3} parent=27 // pred_region
          %s268 = sand.u32 %s68, 1
          %s269 = scalar_lea.sflag [#allocation5], %s268
          %s270 = sand.u32 %s68, 1
          %s271 = smul.addr %s270, 8192
          %s272 = scalar_lea.vmem [#allocation4], %s271
          %s273 = smul.u32 8, %s31
          %s275 = ssub.s32 131072, 131072
          %276 = vsyncadd %s269, %s275
          %s277 = smul.addr %s30, 2048
          %s278 = sadd.s32 %s273, %s277
          %s279 = smul.addr %s278, 128
          %s280 = scalar_lea.hbm %s1, %s279
          %s281 = sshll.u32 %s272, 4
          %s282 = int_to_ptr.vmem [resolvable:$true] %s281
          %287 = dma.hbm_to_vmem [thread:$0]  %s280, 131072, %s282, %s269, 2048, 1024, 64
        $region32: #{en_net_forward.3} parent=27 // pred_fallthru
          _
        // Predicated region
        $region33: #{en_net_forward.3} parent=27 // pred_check
          %p288 = pneg %p106
        $region34: #{en_net_forward.3} parent=27 // pred_check_branch
          %290 = sbr.rel (%p288) target = $region36
        $region35: #{en_net_forward.3} parent=27 // pred_region
          %s291 = sand.u32 %s23, 1
          %s292 = scalar_lea.sflag [#allocation8], %s291
          %s293 = sand.u32 %s96, 1
          %s294 = smul.addr %s293, 8
          %s295 = scalar_lea.vmem [#allocation7], %s294
          %s296 = smul.u32 8, %s31
          %s298 = ssub.s32 128, 128
          %299 = vsyncadd %s292, %s298
          %s300 = smul.addr %s30, 16
          %s301 = sadd.s32 %s296, %s300
          %s302 = smul.addr %s301, 16
          %s303 = scalar_lea.hbm %s2, %s302
          %s305 = sshll.u32 %s295, 4
          %s306 = int_to_ptr.vmem [resolvable:$true] %s305
          %308 = dma.hbm_to_vmem [thread:$0]  %s303, 128, %s306, %s292
        $region36: #{en_net_forward.3} parent=27 // pred_fallthru
          _
        // Predicated region
        $region37: #{en_net_forward.3} parent=27 // pred_check
          %p309 = pneg %p134
        $region38: #{en_net_forward.3} parent=27 // pred_check_branch
          %311 = sbr.rel (%p309) target = $region40
        $region39: #{en_net_forward.3} parent=27 // pred_region
          %s312 = sand.u32 %s23, 1
          %s313 = scalar_lea.sflag [#allocation8], %s312
          %s314 = sand.u32 %s124, 1
          %s315 = smul.addr %s314, 8192
          %s316 = scalar_lea.vmem [#allocation9], %s315
          %s317 = smul.u32 128, %s31
          %s319 = ssub.s32 131072, 131072
          %320 = vsyncadd %s313, %s319
          %s321 = smul.addr %s317, 8
          %s322 = smul.addr %s30, 2048
          %s323 = sadd.s32 %s321, %s322
          %s324 = smul.addr %s323, 128
          %s325 = scalar_lea.hbm %s3, %s324
          %s326 = sshll.u32 %s316, 4
          %s327 = int_to_ptr.vmem [resolvable:$true] %s326
          %332 = dma.hbm_to_vmem [thread:$0]  %s325, 131072, %s327, %s313, 1024, 1024, 64
        $region40: #{en_net_forward.3} parent=27 // pred_fallthru
          _
        // Predicated region
        $region41: #{en_net_forward.3} parent=27 // pred_check
          %p333 = pneg %p160
        $region42: #{en_net_forward.3} parent=27 // pred_check_branch
          %335 = sbr.rel (%p333) target = $region44
        $region43: #{en_net_forward.3} parent=27 // pred_region
          %s336 = sand.u32 %s23, 1
          %s337 = scalar_lea.sflag [#allocation11], %s336
          %s338 = sand.u32 %s150, 1
          %s339 = smul.addr %s338, 8
          %s340 = scalar_lea.vmem [#allocation10], %s339
          %s342 = ssub.s32 128, 128
          %343 = vsyncadd %s337, %s342
          %s344 = smul.addr %s30, 8
          %s345 = smul.addr %s344, 16
          %s346 = scalar_lea.hbm %s4, %s345
          %s348 = sshll.u32 %s340, 4
          %s349 = int_to_ptr.vmem [resolvable:$true] %s348
          %351 = dma.hbm_to_vmem [thread:$0]  %s346, 128, %s349, %s337
        $region44: #{en_net_forward.3} parent=27 // pred_fallthru
          _
      $region28: #{en_net_forward.3} parent=5 // pred_fallthru
        _
      %p352 = scmp.le.s32.totalorder 1, %s23
      %p353 = scmp.lt.s32.totalorder %s23, 9
      %p354 = pnand %p352, %p353
      %p355 = pneg %p354
      // Predicated region
      $region45: #{en_net_forward.3} parent=5 // pred_check
        _
      $region46: #{en_net_forward.3} parent=5 // pred_check_branch
        %357 = sbr.rel (%p354) target = $region48
      $region47: #{en_net_forward.3} parent=5 // pred_region
        %s358 = ssub.s32 %s23, 1
        %s359 = sand.u32 %s71, 1
        %s360 = scalar_lea.sflag [#allocation5], %s359
        %s361 = sand.u32 %s71, 1
        %s362 = smul.addr %s361, 8192
        %s363 = scalar_lea.vmem [#allocation4], %s362
        // Predicated region
        $region49: #{en_net_forward.3} parent=47 // pred_check
          %p364 = pneg %p84
        $region50: #{en_net_forward.3} parent=47 // pred_check_branch
          %366 = sbr.rel (%p364) target = $region52
        $region51: #{en_net_forward.3} parent=47 // pred_region
          %367 = dma.done %s360, 131072
        $region52: #{en_net_forward.3} parent=47 // pred_fallthru
          _
        %s368 = sand.u32 %s28, 1
        %s369 = scalar_lea.sflag [#allocation8], %s368
        %s370 = sand.u32 %s99, 1
        %s371 = smul.addr %s370, 8
        %s372 = scalar_lea.vmem [#allocation7], %s371
        // Predicated region
        $region53: #{en_net_forward.3} parent=47 // pred_check
          %p373 = pneg %p112
        $region54: #{en_net_forward.3} parent=47 // pred_check_branch
          %375 = sbr.rel (%p373) target = $region56
        $region55: #{en_net_forward.3} parent=47 // pred_region
          %376 = dma.done %s369, 128
        $region56: #{en_net_forward.3} parent=47 // pred_fallthru
          _
        %s377 = sand.u32 %s28, 1
        %s378 = scalar_lea.sflag [#allocation8], %s377
        %s379 = sand.u32 %s127, 1
        %s380 = smul.addr %s379, 8192
        %s381 = scalar_lea.vmem [#allocation9], %s380
        // Predicated region
        $region57: #{en_net_forward.3} parent=47 // pred_check
          %p382 = pneg %p140
        $region58: #{en_net_forward.3} parent=47 // pred_check_branch
          %384 = sbr.rel (%p382) target = $region60
        $region59: #{en_net_forward.3} parent=47 // pred_region
          %385 = dma.done %s378, 131072
        $region60: #{en_net_forward.3} parent=47 // pred_fallthru
          _
        %s386 = sand.u32 %s28, 1
        %s387 = scalar_lea.sflag [#allocation11], %s386
        %s388 = sand.u32 %s153, 1
        %s389 = smul.addr %s388, 8
        %s390 = scalar_lea.vmem [#allocation10], %s389
        // Predicated region
        $region61: #{en_net_forward.3} parent=47 // pred_check
          %p391 = pneg %p166
        $region62: #{en_net_forward.3} parent=47 // pred_check_branch
          %393 = sbr.rel (%p391) target = $region64
        $region63: #{en_net_forward.3} parent=47 // pred_region
          %394 = dma.done %s387, 128
        $region64: #{en_net_forward.3} parent=47 // pred_fallthru
          _
        // Predicated region
        $region65: #{en_net_forward.3} parent=47 // pred_check
          %p395 = pneg %p208
        $region66: #{en_net_forward.3} parent=47 // pred_check_branch
          %397 = sbr.rel (%p395) target = $region68
        $region67: #{en_net_forward.3} parent=47 // pred_region
          %398 = dma.done [#allocation11], 16
        $region68: #{en_net_forward.3} parent=47 // pred_fallthru
          _
        %p399 = pneg %p56
        %p400 = pneg %p53
        %s401 = sand.u32 %s71, 1
        %s402 = scalar_lea.sflag [#allocation5], %s401
        %s403 = sand.u32 %s71, 1
        %s404 = smul.addr %s403, 8192
        %s405 = scalar_lea.vmem [#allocation4], %s404
        %p406 = pneg %p84
        %p407 = pneg %p81
        %s408 = sand.u32 %s28, 1
        %s409 = scalar_lea.sflag [#allocation8], %s408
        %s410 = sand.u32 %s99, 1
        %s411 = smul.addr %s410, 8
        %s412 = scalar_lea.vmem [#allocation7], %s411
        %p413 = pneg %p112
        %p414 = pneg %p109
        %s415 = sand.u32 %s28, 1
        %s416 = scalar_lea.sflag [#allocation8], %s415
        %s417 = sand.u32 %s127, 1
        %s418 = smul.addr %s417, 8192
        %s419 = scalar_lea.vmem [#allocation9], %s418
        %p420 = pneg %p140
        %p421 = pneg %p137
        %s422 = sand.u32 %s28, 1
        %s423 = scalar_lea.sflag [#allocation11], %s422
        %s424 = sand.u32 %s153, 1
        %s425 = smul.addr %s424, 8
        %s426 = scalar_lea.vmem [#allocation10], %s425
        %p427 = pneg %p166
        %p428 = pneg %p163
        %p429 = pneg %p187
        %p430 = pneg %p184
        %p431 = pneg %p208
        %p432 = pneg %p205
        %p433 = pneg %p229
        %p434 = pneg %p226
        %s435 = smul.u32 8, %s33
        %s436 = smul.u32 8, %s33
        %s437 = smul.u32 128, %s33
        %p438 = scmp.eq.s32.totalorder %s32, 0
        %p439 = scmp.eq.s32.totalorder %s33, 0
        %p440 = pnand %p438, %p439
        %p441 = pneg %p440
        // Predicated region
        $region69: #{en_net_forward.3} parent=47 // pred_check
          _
        $region70: #{en_net_forward.3} parent=47 // pred_check_branch
          %443 = sbr.rel (%p440) target = $region72
        $region71: #{en_net_forward.3} parent=47 // pred_region
          %v444 = vld [vmem:[%s0] sm:$0xff]
          %v445 = vld [vmem:[%s0 + $0x8] sm:$0xff]
          %v446 = vld [vmem:[%s0 + $0x10] sm:$0xff]
          %v447 = vld [vmem:[%s0 + $0x18] sm:$0xff]
          %v448 = vld [vmem:[%s0 + $0x20] sm:$0xff]
          %v449 = vld [vmem:[%s0 + $0x28] sm:$0xff]
          %v450 = vld [vmem:[%s0 + $0x30] sm:$0xff]
          %v451 = vld [vmem:[%s0 + $0x38] sm:$0xff]
          %452 = vst [vmem:[#allocation2] sm:$0xff] %v444
          %453 = vst [vmem:[#allocation2 + $0x8] sm:$0xff] %v445
          %454 = vst [vmem:[#allocation2 + $0x10] sm:$0xff] %v446
          %455 = vst [vmem:[#allocation2 + $0x18] sm:$0xff] %v447
          %456 = vst [vmem:[#allocation2 + $0x20] sm:$0xff] %v448
          %457 = vst [vmem:[#allocation2 + $0x28] sm:$0xff] %v449
          %458 = vst [vmem:[#allocation2 + $0x30] sm:$0xff] %v450
          %459 = vst [vmem:[#allocation2 + $0x38] sm:$0xff] %v451
        $region72: #{en_net_forward.3} parent=47 // pred_fallthru
          _
        // Predicated region
        $region73: #{en_net_forward.3} parent=47 // pred_check
          %p460 = pneg %p439
        $region74: #{en_net_forward.3} parent=47 // pred_check_branch
          %462 = sbr.rel (%p460) target = $region76
        $region75: #{en_net_forward.3} parent=47 // pred_region
          %463 = vst [vmem:[#allocation3] sm:$0xff] 0.0
          %464 = vst [vmem:[#allocation3 + $0x8] sm:$0xff] 0.0
          %465 = vst [vmem:[#allocation3 + $0x10] sm:$0xff] 0.0
          %466 = vst [vmem:[#allocation3 + $0x18] sm:$0xff] 0.0
          %467 = vst [vmem:[#allocation3 + $0x20] sm:$0xff] 0.0
          %468 = vst [vmem:[#allocation3 + $0x28] sm:$0xff] 0.0
          %469 = vst [vmem:[#allocation3 + $0x30] sm:$0xff] 0.0
          %470 = vst [vmem:[#allocation3 + $0x38] sm:$0xff] 0.0
        $region76: #{en_net_forward.3} parent=47 // pred_fallthru
          _
        %v471 = vld [vmem:[#allocation2] sm:$0xff]
        %v472 = vld [vmem:[#allocation2 + $0x8] sm:$0xff]
        %v473 = vld [vmem:[#allocation2 + $0x10] sm:$0xff]
        %v474 = vld [vmem:[#allocation2 + $0x18] sm:$0xff]
        %v475 = vld [vmem:[#allocation2 + $0x20] sm:$0xff]
        %v476 = vld [vmem:[#allocation2 + $0x28] sm:$0xff]
        %v477 = vld [vmem:[#allocation2 + $0x30] sm:$0xff]
        %v478 = vld [vmem:[#allocation2 + $0x38] sm:$0xff]
        %v479 = vld [vmem:[%s363] sm:$0xff]
        %v480 = vld [vmem:[%s363 + $0x8] sm:$0xff]
        %v481 = vld [vmem:[%s363 + $0x10] sm:$0xff]
        %v482 = vld [vmem:[%s363 + $0x18] sm:$0xff]
        %v483 = vld [vmem:[%s363 + $0x20] sm:$0xff]
        %v484 = vld [vmem:[%s363 + $0x28] sm:$0xff]
        %v485 = vld [vmem:[%s363 + $0x30] sm:$0xff]
        %v486 = vld [vmem:[%s363 + $0x38] sm:$0xff]
        %v487 = vld [vmem:[%s363 + $0x40] sm:$0xff]
        %v488 = vld [vmem:[%s363 + $0x48] sm:$0xff]
        %v489 = vld [vmem:[%s363 + $0x50] sm:$0xff]
        %v490 = vld [vmem:[%s363 + $0x58] sm:$0xff]
        %v491 = vld [vmem:[%s363 + $0x60] sm:$0xff]
        %v492 = vld [vmem:[%s363 + $0x68] sm:$0xff]
        %v493 = vld [vmem:[%s363 + $0x70] sm:$0xff]
        %v494 = vld [vmem:[%s363 + $0x78] sm:$0xff]
        %v495 = vld [vmem:[%s363 + $0x80] sm:$0xff]
        %v496 = vld [vmem:[%s363 + $0x88] sm:$0xff]
        %v497 = vld [vmem:[%s363 + $0x90] sm:$0xff]
        %v498 = vld [vmem:[%s363 + $0x98] sm:$0xff]
        %v499 = vld [vmem:[%s363 + $0xa0] sm:$0xff]
        %v500 = vld [vmem:[%s363 + $0xa8] sm:$0xff]
        %v501 = vld [vmem:[%s363 + $0xb0] sm:$0xff]
        %v502 = vld [vmem:[%s363 + $0xb8] sm:$0xff]
        %v503 = vld [vmem:[%s363 + $0xc0] sm:$0xff]
        %v504 = vld [vmem:[%s363 + $0xc8] sm:$0xff]
        %v505 = vld [vmem:[%s363 + $0xd0] sm:$0xff]
        %v506 = vld [vmem:[%s363 + $0xd8] sm:$0xff]
        %v507 = vld [vmem:[%s363 + $0xe0] sm:$0xff]
        %v508 = vld [vmem:[%s363 + $0xe8] sm:$0xff]
        %v509 = vld [vmem:[%s363 + $0xf0] sm:$0xff]
        %v510 = vld [vmem:[%s363 + $0xf8] sm:$0xff]
        %v511 = vld [vmem:[%s363 + $0x100] sm:$0xff]
        %v512 = vld [vmem:[%s363 + $0x108] sm:$0xff]
        %v513 = vld [vmem:[%s363 + $0x110] sm:$0xff]
        %v514 = vld [vmem:[%s363 + $0x118] sm:$0xff]
        %v515 = vld [vmem:[%s363 + $0x120] sm:$0xff]
        %v516 = vld [vmem:[%s363 + $0x128] sm:$0xff]
        %v517 = vld [vmem:[%s363 + $0x130] sm:$0xff]
        %v518 = vld [vmem:[%s363 + $0x138] sm:$0xff]
        %v519 = vld [vmem:[%s363 + $0x140] sm:$0xff]
        %v520 = vld [vmem:[%s363 + $0x148] sm:$0xff]
        %v521 = vld [vmem:[%s363 + $0x150] sm:$0xff]
        %v522 = vld [vmem:[%s363 + $0x158] sm:$0xff]
        %v523 = vld [vmem:[%s363 + $0x160] sm:$0xff]
        %v524 = vld [vmem:[%s363 + $0x168] sm:$0xff]
        %v525 = vld [vmem:[%s363 + $0x170] sm:$0xff]
        %v526 = vld [vmem:[%s363 + $0x178] sm:$0xff]
        %v527 = vld [vmem:[%s363 + $0x180] sm:$0xff]
        %v528 = vld [vmem:[%s363 + $0x188] sm:$0xff]
        %v529 = vld [vmem:[%s363 + $0x190] sm:$0xff]
        %v530 = vld [vmem:[%s363 + $0x198] sm:$0xff]
        %v531 = vld [vmem:[%s363 + $0x1a0] sm:$0xff]
        %v532 = vld [vmem:[%s363 + $0x1a8] sm:$0xff]
        %v533 = vld [vmem:[%s363 + $0x1b0] sm:$0xff]
        %v534 = vld [vmem:[%s363 + $0x1b8] sm:$0xff]
        %v535 = vld [vmem:[%s363 + $0x1c0] sm:$0xff]
        %v536 = vld [vmem:[%s363 + $0x1c8] sm:$0xff]
        %v537 = vld [vmem:[%s363 + $0x1d0] sm:$0xff]
        %v538 = vld [vmem:[%s363 + $0x1d8] sm:$0xff]
        %v539 = vld [vmem:[%s363 + $0x1e0] sm:$0xff]
        %v540 = vld [vmem:[%s363 + $0x1e8] sm:$0xff]
        %v541 = vld [vmem:[%s363 + $0x1f0] sm:$0xff]
        %v542 = vld [vmem:[%s363 + $0x1f8] sm:$0xff]
        %v543 = vld [vmem:[%s363 + $0x200] sm:$0xff]
        %v544 = vld [vmem:[%s363 + $0x208] sm:$0xff]
        %v545 = vld [vmem:[%s363 + $0x210] sm:$0xff]
        %v546 = vld [vmem:[%s363 + $0x218] sm:$0xff]
        %v547 = vld [vmem:[%s363 + $0x220] sm:$0xff]
        %v548 = vld [vmem:[%s363 + $0x228] sm:$0xff]
        %v549 = vld [vmem:[%s363 + $0x230] sm:$0xff]
        %v550 = vld [vmem:[%s363 + $0x238] sm:$0xff]
        %v551 = vld [vmem:[%s363 + $0x240] sm:$0xff]
        %v552 = vld [vmem:[%s363 + $0x248] sm:$0xff]
        %v553 = vld [vmem:[%s363 + $0x250] sm:$0xff]
        %v554 = vld [vmem:[%s363 + $0x258] sm:$0xff]
        %v555 = vld [vmem:[%s363 + $0x260] sm:$0xff]
        %v556 = vld [vmem:[%s363 + $0x268] sm:$0xff]
        %v557 = vld [vmem:[%s363 + $0x270] sm:$0xff]
        %v558 = vld [vmem:[%s363 + $0x278] sm:$0xff]
        %v559 = vld [vmem:[%s363 + $0x280] sm:$0xff]
        %v560 = vld [vmem:[%s363 + $0x288] sm:$0xff]
        %v561 = vld [vmem:[%s363 + $0x290] sm:$0xff]
        %v562 = vld [vmem:[%s363 + $0x298] sm:$0xff]
        %v563 = vld [vmem:[%s363 + $0x2a0] sm:$0xff]
        %v564 = vld [vmem:[%s363 + $0x2a8] sm:$0xff]
        %v565 = vld [vmem:[%s363 + $0x2b0] sm:$0xff]
        %v566 = vld [vmem:[%s363 + $0x2b8] sm:$0xff]
        %v567 = vld [vmem:[%s363 + $0x2c0] sm:$0xff]
        %v568 = vld [vmem:[%s363 + $0x2c8] sm:$0xff]
        %v569 = vld [vmem:[%s363 + $0x2d0] sm:$0xff]
        %v570 = vld [vmem:[%s363 + $0x2d8] sm:$0xff]
        %v571 = vld [vmem:[%s363 + $0x2e0] sm:$0xff]
        %v572 = vld [vmem:[%s363 + $0x2e8] sm:$0xff]
        %v573 = vld [vmem:[%s363 + $0x2f0] sm:$0xff]
        %v574 = vld [vmem:[%s363 + $0x2f8] sm:$0xff]
        %v575 = vld [vmem:[%s363 + $0x300] sm:$0xff]
        %v576 = vld [vmem:[%s363 + $0x308] sm:$0xff]
        %v577 = vld [vmem:[%s363 + $0x310] sm:$0xff]
        %v578 = vld [vmem:[%s363 + $0x318] sm:$0xff]
        %v579 = vld [vmem:[%s363 + $0x320] sm:$0xff]
        %v580 = vld [vmem:[%s363 + $0x328] sm:$0xff]
        %v581 = vld [vmem:[%s363 + $0x330] sm:$0xff]
        %v582 = vld [vmem:[%s363 + $0x338] sm:$0xff]
        %v583 = vld [vmem:[%s363 + $0x340] sm:$0xff]
        %v584 = vld [vmem:[%s363 + $0x348] sm:$0xff]
        %v585 = vld [vmem:[%s363 + $0x350] sm:$0xff]
        %v586 = vld [vmem:[%s363 + $0x358] sm:$0xff]
        %v587 = vld [vmem:[%s363 + $0x360] sm:$0xff]
        %v588 = vld [vmem:[%s363 + $0x368] sm:$0xff]
        %v589 = vld [vmem:[%s363 + $0x370] sm:$0xff]
        %v590 = vld [vmem:[%s363 + $0x378] sm:$0xff]
        %v591 = vld [vmem:[%s363 + $0x380] sm:$0xff]
        %v592 = vld [vmem:[%s363 + $0x388] sm:$0xff]
        %v593 = vld [vmem:[%s363 + $0x390] sm:$0xff]
        %v594 = vld [vmem:[%s363 + $0x398] sm:$0xff]
        %v595 = vld [vmem:[%s363 + $0x3a0] sm:$0xff]
        %v596 = vld [vmem:[%s363 + $0x3a8] sm:$0xff]
        %v597 = vld [vmem:[%s363 + $0x3b0] sm:$0xff]
        %v598 = vld [vmem:[%s363 + $0x3b8] sm:$0xff]
        %v599 = vld [vmem:[%s363 + $0x3c0] sm:$0xff]
        %v600 = vld [vmem:[%s363 + $0x3c8] sm:$0xff]
        %v601 = vld [vmem:[%s363 + $0x3d0] sm:$0xff]
        %v602 = vld [vmem:[%s363 + $0x3d8] sm:$0xff]
        %v603 = vld [vmem:[%s363 + $0x3e0] sm:$0xff]
        %v604 = vld [vmem:[%s363 + $0x3e8] sm:$0xff]
        %v605 = vld [vmem:[%s363 + $0x3f0] sm:$0xff]
        %v606 = vld [vmem:[%s363 + $0x3f8] sm:$0xff]
        %v607 = vld [vmem:[%s363 + $0x400] sm:$0xff]
        %v608 = vld [vmem:[%s363 + $0x408] sm:$0xff]
        %v609 = vld [vmem:[%s363 + $0x410] sm:$0xff]
        %v610 = vld [vmem:[%s363 + $0x418] sm:$0xff]
        %v611 = vld [vmem:[%s363 + $0x420] sm:$0xff]
        %v612 = vld [vmem:[%s363 + $0x428] sm:$0xff]
        %v613 = vld [vmem:[%s363 + $0x430] sm:$0xff]
        %v614 = vld [vmem:[%s363 + $0x438] sm:$0xff]
        %v615 = vld [vmem:[%s363 + $0x440] sm:$0xff]
        %v616 = vld [vmem:[%s363 + $0x448] sm:$0xff]
        %v617 = vld [vmem:[%s363 + $0x450] sm:$0xff]
        %v618 = vld [vmem:[%s363 + $0x458] sm:$0xff]
        %v619 = vld [vmem:[%s363 + $0x460] sm:$0xff]
        %v620 = vld [vmem:[%s363 + $0x468] sm:$0xff]
        %v621 = vld [vmem:[%s363 + $0x470] sm:$0xff]
        %v622 = vld [vmem:[%s363 + $0x478] sm:$0xff]
        %v623 = vld [vmem:[%s363 + $0x480] sm:$0xff]
        %v624 = vld [vmem:[%s363 + $0x488] sm:$0xff]
        %v625 = vld [vmem:[%s363 + $0x490] sm:$0xff]
        %v626 = vld [vmem:[%s363 + $0x498] sm:$0xff]
        %v627 = vld [vmem:[%s363 + $0x4a0] sm:$0xff]
        %v628 = vld [vmem:[%s363 + $0x4a8] sm:$0xff]
        %v629 = vld [vmem:[%s363 + $0x4b0] sm:$0xff]
        %v630 = vld [vmem:[%s363 + $0x4b8] sm:$0xff]
        %v631 = vld [vmem:[%s363 + $0x4c0] sm:$0xff]
        %v632 = vld [vmem:[%s363 + $0x4c8] sm:$0xff]
        %v633 = vld [vmem:[%s363 + $0x4d0] sm:$0xff]
        %v634 = vld [vmem:[%s363 + $0x4d8] sm:$0xff]
        %v635 = vld [vmem:[%s363 + $0x4e0] sm:$0xff]
        %v636 = vld [vmem:[%s363 + $0x4e8] sm:$0xff]
        %v637 = vld [vmem:[%s363 + $0x4f0] sm:$0xff]
        %v638 = vld [vmem:[%s363 + $0x4f8] sm:$0xff]
        %v639 = vld [vmem:[%s363 + $0x500] sm:$0xff]
        %v640 = vld [vmem:[%s363 + $0x508] sm:$0xff]
        %v641 = vld [vmem:[%s363 + $0x510] sm:$0xff]
        %v642 = vld [vmem:[%s363 + $0x518] sm:$0xff]
        %v643 = vld [vmem:[%s363 + $0x520] sm:$0xff]
        %v644 = vld [vmem:[%s363 + $0x528] sm:$0xff]
        %v645 = vld [vmem:[%s363 + $0x530] sm:$0xff]
        %v646 = vld [vmem:[%s363 + $0x538] sm:$0xff]
        %v647 = vld [vmem:[%s363 + $0x540] sm:$0xff]
        %v648 = vld [vmem:[%s363 + $0x548] sm:$0xff]
        %v649 = vld [vmem:[%s363 + $0x550] sm:$0xff]
        %v650 = vld [vmem:[%s363 + $0x558] sm:$0xff]
        %v651 = vld [vmem:[%s363 + $0x560] sm:$0xff]
        %v652 = vld [vmem:[%s363 + $0x568] sm:$0xff]
        %v653 = vld [vmem:[%s363 + $0x570] sm:$0xff]
        %v654 = vld [vmem:[%s363 + $0x578] sm:$0xff]
        %v655 = vld [vmem:[%s363 + $0x580] sm:$0xff]
        %v656 = vld [vmem:[%s363 + $0x588] sm:$0xff]
        %v657 = vld [vmem:[%s363 + $0x590] sm:$0xff]
        %v658 = vld [vmem:[%s363 + $0x598] sm:$0xff]
        %v659 = vld [vmem:[%s363 + $0x5a0] sm:$0xff]
        %v660 = vld [vmem:[%s363 + $0x5a8] sm:$0xff]
        %v661 = vld [vmem:[%s363 + $0x5b0] sm:$0xff]
        %v662 = vld [vmem:[%s363 + $0x5b8] sm:$0xff]
        %v663 = vld [vmem:[%s363 + $0x5c0] sm:$0xff]
        %v664 = vld [vmem:[%s363 + $0x5c8] sm:$0xff]
        %v665 = vld [vmem:[%s363 + $0x5d0] sm:$0xff]
        %v666 = vld [vmem:[%s363 + $0x5d8] sm:$0xff]
        %v667 = vld [vmem:[%s363 + $0x5e0] sm:$0xff]
        %v668 = vld [vmem:[%s363 + $0x5e8] sm:$0xff]
        %v669 = vld [vmem:[%s363 + $0x5f0] sm:$0xff]
        %v670 = vld [vmem:[%s363 + $0x5f8] sm:$0xff]
        %v671 = vld [vmem:[%s363 + $0x600] sm:$0xff]
        %v672 = vld [vmem:[%s363 + $0x608] sm:$0xff]
        %v673 = vld [vmem:[%s363 + $0x610] sm:$0xff]
        %v674 = vld [vmem:[%s363 + $0x618] sm:$0xff]
        %v675 = vld [vmem:[%s363 + $0x620] sm:$0xff]
        %v676 = vld [vmem:[%s363 + $0x628] sm:$0xff]
        %v677 = vld [vmem:[%s363 + $0x630] sm:$0xff]
        %v678 = vld [vmem:[%s363 + $0x638] sm:$0xff]
        %v679 = vld [vmem:[%s363 + $0x640] sm:$0xff]
        %v680 = vld [vmem:[%s363 + $0x648] sm:$0xff]
        %v681 = vld [vmem:[%s363 + $0x650] sm:$0xff]
        %v682 = vld [vmem:[%s363 + $0x658] sm:$0xff]
        %v683 = vld [vmem:[%s363 + $0x660] sm:$0xff]
        %v684 = vld [vmem:[%s363 + $0x668] sm:$0xff]
        %v685 = vld [vmem:[%s363 + $0x670] sm:$0xff]
        %v686 = vld [vmem:[%s363 + $0x678] sm:$0xff]
        %v687 = vld [vmem:[%s363 + $0x680] sm:$0xff]
        %v688 = vld [vmem:[%s363 + $0x688] sm:$0xff]
        %v689 = vld [vmem:[%s363 + $0x690] sm:$0xff]
        %v690 = vld [vmem:[%s363 + $0x698] sm:$0xff]
        %v691 = vld [vmem:[%s363 + $0x6a0] sm:$0xff]
        %v692 = vld [vmem:[%s363 + $0x6a8] sm:$0xff]
        %v693 = vld [vmem:[%s363 + $0x6b0] sm:$0xff]
        %v694 = vld [vmem:[%s363 + $0x6b8] sm:$0xff]
        %v695 = vld [vmem:[%s363 + $0x6c0] sm:$0xff]
        %v696 = vld [vmem:[%s363 + $0x6c8] sm:$0xff]
        %v697 = vld [vmem:[%s363 + $0x6d0] sm:$0xff]
        %v698 = vld [vmem:[%s363 + $0x6d8] sm:$0xff]
        %v699 = vld [vmem:[%s363 + $0x6e0] sm:$0xff]
        %v700 = vld [vmem:[%s363 + $0x6e8] sm:$0xff]
        %v701 = vld [vmem:[%s363 + $0x6f0] sm:$0xff]
        %v702 = vld [vmem:[%s363 + $0x6f8] sm:$0xff]
        %v703 = vld [vmem:[%s363 + $0x700] sm:$0xff]
        %v704 = vld [vmem:[%s363 + $0x708] sm:$0xff]
        %v705 = vld [vmem:[%s363 + $0x710] sm:$0xff]
        %v706 = vld [vmem:[%s363 + $0x718] sm:$0xff]
        %v707 = vld [vmem:[%s363 + $0x720] sm:$0xff]
        %v708 = vld [vmem:[%s363 + $0x728] sm:$0xff]
        %v709 = vld [vmem:[%s363 + $0x730] sm:$0xff]
        %v710 = vld [vmem:[%s363 + $0x738] sm:$0xff]
        %v711 = vld [vmem:[%s363 + $0x740] sm:$0xff]
        %v712 = vld [vmem:[%s363 + $0x748] sm:$0xff]
        %v713 = vld [vmem:[%s363 + $0x750] sm:$0xff]
        %v714 = vld [vmem:[%s363 + $0x758] sm:$0xff]
        %v715 = vld [vmem:[%s363 + $0x760] sm:$0xff]
        %v716 = vld [vmem:[%s363 + $0x768] sm:$0xff]
        %v717 = vld [vmem:[%s363 + $0x770] sm:$0xff]
        %v718 = vld [vmem:[%s363 + $0x778] sm:$0xff]
        %v719 = vld [vmem:[%s363 + $0x780] sm:$0xff]
        %v720 = vld [vmem:[%s363 + $0x788] sm:$0xff]
        %v721 = vld [vmem:[%s363 + $0x790] sm:$0xff]
        %v722 = vld [vmem:[%s363 + $0x798] sm:$0xff]
        %v723 = vld [vmem:[%s363 + $0x7a0] sm:$0xff]
        %v724 = vld [vmem:[%s363 + $0x7a8] sm:$0xff]
        %v725 = vld [vmem:[%s363 + $0x7b0] sm:$0xff]
        %v726 = vld [vmem:[%s363 + $0x7b8] sm:$0xff]
        %v727 = vld [vmem:[%s363 + $0x7c0] sm:$0xff]
        %v728 = vld [vmem:[%s363 + $0x7c8] sm:$0xff]
        %v729 = vld [vmem:[%s363 + $0x7d0] sm:$0xff]
        %v730 = vld [vmem:[%s363 + $0x7d8] sm:$0xff]
        %v731 = vld [vmem:[%s363 + $0x7e0] sm:$0xff]
        %v732 = vld [vmem:[%s363 + $0x7e8] sm:$0xff]
        %v733 = vld [vmem:[%s363 + $0x7f0] sm:$0xff]
        %v734 = vld [vmem:[%s363 + $0x7f8] sm:$0xff]
        %v735 = vld [vmem:[%s363 + $0x800] sm:$0xff]
        %v736 = vld [vmem:[%s363 + $0x808] sm:$0xff]
        %v737 = vld [vmem:[%s363 + $0x810] sm:$0xff]
        %v738 = vld [vmem:[%s363 + $0x818] sm:$0xff]
        %v739 = vld [vmem:[%s363 + $0x820] sm:$0xff]
        %v740 = vld [vmem:[%s363 + $0x828] sm:$0xff]
        %v741 = vld [vmem:[%s363 + $0x830] sm:$0xff]
        %v742 = vld [vmem:[%s363 + $0x838] sm:$0xff]
        %v743 = vld [vmem:[%s363 + $0x840] sm:$0xff]
        %v744 = vld [vmem:[%s363 + $0x848] sm:$0xff]
        %v745 = vld [vmem:[%s363 + $0x850] sm:$0xff]
        %v746 = vld [vmem:[%s363 + $0x858] sm:$0xff]
        %v747 = vld [vmem:[%s363 + $0x860] sm:$0xff]
        %v748 = vld [vmem:[%s363 + $0x868] sm:$0xff]
        %v749 = vld [vmem:[%s363 + $0x870] sm:$0xff]
        %v750 = vld [vmem:[%s363 + $0x878] sm:$0xff]
        %v751 = vld [vmem:[%s363 + $0x880] sm:$0xff]
        %v752 = vld [vmem:[%s363 + $0x888] sm:$0xff]
        %v753 = vld [vmem:[%s363 + $0x890] sm:$0xff]
        %v754 = vld [vmem:[%s363 + $0x898] sm:$0xff]
        %v755 = vld [vmem:[%s363 + $0x8a0] sm:$0xff]
        %v756 = vld [vmem:[%s363 + $0x8a8] sm:$0xff]
        %v757 = vld [vmem:[%s363 + $0x8b0] sm:$0xff]
        %v758 = vld [vmem:[%s363 + $0x8b8] sm:$0xff]
        %v759 = vld [vmem:[%s363 + $0x8c0] sm:$0xff]
        %v760 = vld [vmem:[%s363 + $0x8c8] sm:$0xff]
        %v761 = vld [vmem:[%s363 + $0x8d0] sm:$0xff]
        %v762 = vld [vmem:[%s363 + $0x8d8] sm:$0xff]
        %v763 = vld [vmem:[%s363 + $0x8e0] sm:$0xff]
        %v764 = vld [vmem:[%s363 + $0x8e8] sm:$0xff]
        %v765 = vld [vmem:[%s363 + $0x8f0] sm:$0xff]
        %v766 = vld [vmem:[%s363 + $0x8f8] sm:$0xff]
        %v767 = vld [vmem:[%s363 + $0x900] sm:$0xff]
        %v768 = vld [vmem:[%s363 + $0x908] sm:$0xff]
        %v769 = vld [vmem:[%s363 + $0x910] sm:$0xff]
        %v770 = vld [vmem:[%s363 + $0x918] sm:$0xff]
        %v771 = vld [vmem:[%s363 + $0x920] sm:$0xff]
        %v772 = vld [vmem:[%s363 + $0x928] sm:$0xff]
        %v773 = vld [vmem:[%s363 + $0x930] sm:$0xff]
        %v774 = vld [vmem:[%s363 + $0x938] sm:$0xff]
        %v775 = vld [vmem:[%s363 + $0x940] sm:$0xff]
        %v776 = vld [vmem:[%s363 + $0x948] sm:$0xff]
        %v777 = vld [vmem:[%s363 + $0x950] sm:$0xff]
        %v778 = vld [vmem:[%s363 + $0x958] sm:$0xff]
        %v779 = vld [vmem:[%s363 + $0x960] sm:$0xff]
        %v780 = vld [vmem:[%s363 + $0x968] sm:$0xff]
        %v781 = vld [vmem:[%s363 + $0x970] sm:$0xff]
        %v782 = vld [vmem:[%s363 + $0x978] sm:$0xff]
        %v783 = vld [vmem:[%s363 + $0x980] sm:$0xff]
        %v784 = vld [vmem:[%s363 + $0x988] sm:$0xff]
        %v785 = vld [vmem:[%s363 + $0x990] sm:$0xff]
        %v786 = vld [vmem:[%s363 + $0x998] sm:$0xff]
        %v787 = vld [vmem:[%s363 + $0x9a0] sm:$0xff]
        %v788 = vld [vmem:[%s363 + $0x9a8] sm:$0xff]
        %v789 = vld [vmem:[%s363 + $0x9b0] sm:$0xff]
        %v790 = vld [vmem:[%s363 + $0x9b8] sm:$0xff]
        %v791 = vld [vmem:[%s363 + $0x9c0] sm:$0xff]
        %v792 = vld [vmem:[%s363 + $0x9c8] sm:$0xff]
        %v793 = vld [vmem:[%s363 + $0x9d0] sm:$0xff]
        %v794 = vld [vmem:[%s363 + $0x9d8] sm:$0xff]
        %v795 = vld [vmem:[%s363 + $0x9e0] sm:$0xff]
        %v796 = vld [vmem:[%s363 + $0x9e8] sm:$0xff]
        %v797 = vld [vmem:[%s363 + $0x9f0] sm:$0xff]
        %v798 = vld [vmem:[%s363 + $0x9f8] sm:$0xff]
        %v799 = vld [vmem:[%s363 + $0xa00] sm:$0xff]
        %v800 = vld [vmem:[%s363 + $0xa08] sm:$0xff]
        %v801 = vld [vmem:[%s363 + $0xa10] sm:$0xff]
        %v802 = vld [vmem:[%s363 + $0xa18] sm:$0xff]
        %v803 = vld [vmem:[%s363 + $0xa20] sm:$0xff]
        %v804 = vld [vmem:[%s363 + $0xa28] sm:$0xff]
        %v805 = vld [vmem:[%s363 + $0xa30] sm:$0xff]
        %v806 = vld [vmem:[%s363 + $0xa38] sm:$0xff]
        %v807 = vld [vmem:[%s363 + $0xa40] sm:$0xff]
        %v808 = vld [vmem:[%s363 + $0xa48] sm:$0xff]
        %v809 = vld [vmem:[%s363 + $0xa50] sm:$0xff]
        %v810 = vld [vmem:[%s363 + $0xa58] sm:$0xff]
        %v811 = vld [vmem:[%s363 + $0xa60] sm:$0xff]
        %v812 = vld [vmem:[%s363 + $0xa68] sm:$0xff]
        %v813 = vld [vmem:[%s363 + $0xa70] sm:$0xff]
        %v814 = vld [vmem:[%s363 + $0xa78] sm:$0xff]
        %v815 = vld [vmem:[%s363 + $0xa80] sm:$0xff]
        %v816 = vld [vmem:[%s363 + $0xa88] sm:$0xff]
        %v817 = vld [vmem:[%s363 + $0xa90] sm:$0xff]
        %v818 = vld [vmem:[%s363 + $0xa98] sm:$0xff]
        %v819 = vld [vmem:[%s363 + $0xaa0] sm:$0xff]
        %v820 = vld [vmem:[%s363 + $0xaa8] sm:$0xff]
        %v821 = vld [vmem:[%s363 + $0xab0] sm:$0xff]
        %v822 = vld [vmem:[%s363 + $0xab8] sm:$0xff]
        %v823 = vld [vmem:[%s363 + $0xac0] sm:$0xff]
        %v824 = vld [vmem:[%s363 + $0xac8] sm:$0xff]
        %v825 = vld [vmem:[%s363 + $0xad0] sm:$0xff]
        %v826 = vld [vmem:[%s363 + $0xad8] sm:$0xff]
        %v827 = vld [vmem:[%s363 + $0xae0] sm:$0xff]
        %v828 = vld [vmem:[%s363 + $0xae8] sm:$0xff]
        %v829 = vld [vmem:[%s363 + $0xaf0] sm:$0xff]
        %v830 = vld [vmem:[%s363 + $0xaf8] sm:$0xff]
        %v831 = vld [vmem:[%s363 + $0xb00] sm:$0xff]
        %v832 = vld [vmem:[%s363 + $0xb08] sm:$0xff]
        %v833 = vld [vmem:[%s363 + $0xb10] sm:$0xff]
        %v834 = vld [vmem:[%s363 + $0xb18] sm:$0xff]
        %v835 = vld [vmem:[%s363 + $0xb20] sm:$0xff]
        %v836 = vld [vmem:[%s363 + $0xb28] sm:$0xff]
        %v837 = vld [vmem:[%s363 + $0xb30] sm:$0xff]
        %v838 = vld [vmem:[%s363 + $0xb38] sm:$0xff]
        %v839 = vld [vmem:[%s363 + $0xb40] sm:$0xff]
        %v840 = vld [vmem:[%s363 + $0xb48] sm:$0xff]
        %v841 = vld [vmem:[%s363 + $0xb50] sm:$0xff]
        %v842 = vld [vmem:[%s363 + $0xb58] sm:$0xff]
        %v843 = vld [vmem:[%s363 + $0xb60] sm:$0xff]
        %v844 = vld [vmem:[%s363 + $0xb68] sm:$0xff]
        %v845 = vld [vmem:[%s363 + $0xb70] sm:$0xff]
        %v846 = vld [vmem:[%s363 + $0xb78] sm:$0xff]
        %v847 = vld [vmem:[%s363 + $0xb80] sm:$0xff]
        %v848 = vld [vmem:[%s363 + $0xb88] sm:$0xff]
        %v849 = vld [vmem:[%s363 + $0xb90] sm:$0xff]
        %v850 = vld [vmem:[%s363 + $0xb98] sm:$0xff]
        %v851 = vld [vmem:[%s363 + $0xba0] sm:$0xff]
        %v852 = vld [vmem:[%s363 + $0xba8] sm:$0xff]
        %v853 = vld [vmem:[%s363 + $0xbb0] sm:$0xff]
        %v854 = vld [vmem:[%s363 + $0xbb8] sm:$0xff]
        %v855 = vld [vmem:[%s363 + $0xbc0] sm:$0xff]
        %v856 = vld [vmem:[%s363 + $0xbc8] sm:$0xff]
        %v857 = vld [vmem:[%s363 + $0xbd0] sm:$0xff]
        %v858 = vld [vmem:[%s363 + $0xbd8] sm:$0xff]
        %v859 = vld [vmem:[%s363 + $0xbe0] sm:$0xff]
        %v860 = vld [vmem:[%s363 + $0xbe8] sm:$0xff]
        %v861 = vld [vmem:[%s363 + $0xbf0] sm:$0xff]
        %v862 = vld [vmem:[%s363 + $0xbf8] sm:$0xff]
        %v863 = vld [vmem:[%s363 + $0xc00] sm:$0xff]
        %v864 = vld [vmem:[%s363 + $0xc08] sm:$0xff]
        %v865 = vld [vmem:[%s363 + $0xc10] sm:$0xff]
        %v866 = vld [vmem:[%s363 + $0xc18] sm:$0xff]
        %v867 = vld [vmem:[%s363 + $0xc20] sm:$0xff]
        %v868 = vld [vmem:[%s363 + $0xc28] sm:$0xff]
        %v869 = vld [vmem:[%s363 + $0xc30] sm:$0xff]
        %v870 = vld [vmem:[%s363 + $0xc38] sm:$0xff]
        %v871 = vld [vmem:[%s363 + $0xc40] sm:$0xff]
        %v872 = vld [vmem:[%s363 + $0xc48] sm:$0xff]
        %v873 = vld [vmem:[%s363 + $0xc50] sm:$0xff]
        %v874 = vld [vmem:[%s363 + $0xc58] sm:$0xff]
        %v875 = vld [vmem:[%s363 + $0xc60] sm:$0xff]
        %v876 = vld [vmem:[%s363 + $0xc68] sm:$0xff]
        %v877 = vld [vmem:[%s363 + $0xc70] sm:$0xff]
        %v878 = vld [vmem:[%s363 + $0xc78] sm:$0xff]
        %v879 = vld [vmem:[%s363 + $0xc80] sm:$0xff]
        %v880 = vld [vmem:[%s363 + $0xc88] sm:$0xff]
        %v881 = vld [vmem:[%s363 + $0xc90] sm:$0xff]
        %v882 = vld [vmem:[%s363 + $0xc98] sm:$0xff]
        %v883 = vld [vmem:[%s363 + $0xca0] sm:$0xff]
        %v884 = vld [vmem:[%s363 + $0xca8] sm:$0xff]
        %v885 = vld [vmem:[%s363 + $0xcb0] sm:$0xff]
        %v886 = vld [vmem:[%s363 + $0xcb8] sm:$0xff]
        %v887 = vld [vmem:[%s363 + $0xcc0] sm:$0xff]
        %v888 = vld [vmem:[%s363 + $0xcc8] sm:$0xff]
        %v889 = vld [vmem:[%s363 + $0xcd0] sm:$0xff]
        %v890 = vld [vmem:[%s363 + $0xcd8] sm:$0xff]
        %v891 = vld [vmem:[%s363 + $0xce0] sm:$0xff]
        %v892 = vld [vmem:[%s363 + $0xce8] sm:$0xff]
        %v893 = vld [vmem:[%s363 + $0xcf0] sm:$0xff]
        %v894 = vld [vmem:[%s363 + $0xcf8] sm:$0xff]
        %v895 = vld [vmem:[%s363 + $0xd00] sm:$0xff]
        %v896 = vld [vmem:[%s363 + $0xd08] sm:$0xff]
        %v897 = vld [vmem:[%s363 + $0xd10] sm:$0xff]
        %v898 = vld [vmem:[%s363 + $0xd18] sm:$0xff]
        %v899 = vld [vmem:[%s363 + $0xd20] sm:$0xff]
        %v900 = vld [vmem:[%s363 + $0xd28] sm:$0xff]
        %v901 = vld [vmem:[%s363 + $0xd30] sm:$0xff]
        %v902 = vld [vmem:[%s363 + $0xd38] sm:$0xff]
        %v903 = vld [vmem:[%s363 + $0xd40] sm:$0xff]
        %v904 = vld [vmem:[%s363 + $0xd48] sm:$0xff]
        %v905 = vld [vmem:[%s363 + $0xd50] sm:$0xff]
        %v906 = vld [vmem:[%s363 + $0xd58] sm:$0xff]
        %v907 = vld [vmem:[%s363 + $0xd60] sm:$0xff]
        %v908 = vld [vmem:[%s363 + $0xd68] sm:$0xff]
        %v909 = vld [vmem:[%s363 + $0xd70] sm:$0xff]
        %v910 = vld [vmem:[%s363 + $0xd78] sm:$0xff]
        %v911 = vld [vmem:[%s363 + $0xd80] sm:$0xff]
        %v912 = vld [vmem:[%s363 + $0xd88] sm:$0xff]
        %v913 = vld [vmem:[%s363 + $0xd90] sm:$0xff]
        %v914 = vld [vmem:[%s363 + $0xd98] sm:$0xff]
        %v915 = vld [vmem:[%s363 + $0xda0] sm:$0xff]
        %v916 = vld [vmem:[%s363 + $0xda8] sm:$0xff]
        %v917 = vld [vmem:[%s363 + $0xdb0] sm:$0xff]
        %v918 = vld [vmem:[%s363 + $0xdb8] sm:$0xff]
        %v919 = vld [vmem:[%s363 + $0xdc0] sm:$0xff]
        %v920 = vld [vmem:[%s363 + $0xdc8] sm:$0xff]
        %v921 = vld [vmem:[%s363 + $0xdd0] sm:$0xff]
        %v922 = vld [vmem:[%s363 + $0xdd8] sm:$0xff]
        %v923 = vld [vmem:[%s363 + $0xde0] sm:$0xff]
        %v924 = vld [vmem:[%s363 + $0xde8] sm:$0xff]
        %v925 = vld [vmem:[%s363 + $0xdf0] sm:$0xff]
        %v926 = vld [vmem:[%s363 + $0xdf8] sm:$0xff]
        %v927 = vld [vmem:[%s363 + $0xe00] sm:$0xff]
        %v928 = vld [vmem:[%s363 + $0xe08] sm:$0xff]
        %v929 = vld [vmem:[%s363 + $0xe10] sm:$0xff]
        %v930 = vld [vmem:[%s363 + $0xe18] sm:$0xff]
        %v931 = vld [vmem:[%s363 + $0xe20] sm:$0xff]
        %v932 = vld [vmem:[%s363 + $0xe28] sm:$0xff]
        %v933 = vld [vmem:[%s363 + $0xe30] sm:$0xff]
        %v934 = vld [vmem:[%s363 + $0xe38] sm:$0xff]
        %v935 = vld [vmem:[%s363 + $0xe40] sm:$0xff]
        %v936 = vld [vmem:[%s363 + $0xe48] sm:$0xff]
        %v937 = vld [vmem:[%s363 + $0xe50] sm:$0xff]
        %v938 = vld [vmem:[%s363 + $0xe58] sm:$0xff]
        %v939 = vld [vmem:[%s363 + $0xe60] sm:$0xff]
        %v940 = vld [vmem:[%s363 + $0xe68] sm:$0xff]
        %v941 = vld [vmem:[%s363 + $0xe70] sm:$0xff]
        %v942 = vld [vmem:[%s363 + $0xe78] sm:$0xff]
        %v943 = vld [vmem:[%s363 + $0xe80] sm:$0xff]
        %v944 = vld [vmem:[%s363 + $0xe88] sm:$0xff]
        %v945 = vld [vmem:[%s363 + $0xe90] sm:$0xff]
        %v946 = vld [vmem:[%s363 + $0xe98] sm:$0xff]
        %v947 = vld [vmem:[%s363 + $0xea0] sm:$0xff]
        %v948 = vld [vmem:[%s363 + $0xea8] sm:$0xff]
        %v949 = vld [vmem:[%s363 + $0xeb0] sm:$0xff]
        %v950 = vld [vmem:[%s363 + $0xeb8] sm:$0xff]
        %v951 = vld [vmem:[%s363 + $0xec0] sm:$0xff]
        %v952 = vld [vmem:[%s363 + $0xec8] sm:$0xff]
        %v953 = vld [vmem:[%s363 + $0xed0] sm:$0xff]
        %v954 = vld [vmem:[%s363 + $0xed8] sm:$0xff]
        %v955 = vld [vmem:[%s363 + $0xee0] sm:$0xff]
        %v956 = vld [vmem:[%s363 + $0xee8] sm:$0xff]
        %v957 = vld [vmem:[%s363 + $0xef0] sm:$0xff]
        %v958 = vld [vmem:[%s363 + $0xef8] sm:$0xff]
        %v959 = vld [vmem:[%s363 + $0xf00] sm:$0xff]
        %v960 = vld [vmem:[%s363 + $0xf08] sm:$0xff]
        %v961 = vld [vmem:[%s363 + $0xf10] sm:$0xff]
        %v962 = vld [vmem:[%s363 + $0xf18] sm:$0xff]
        %v963 = vld [vmem:[%s363 + $0xf20] sm:$0xff]
        %v964 = vld [vmem:[%s363 + $0xf28] sm:$0xff]
        %v965 = vld [vmem:[%s363 + $0xf30] sm:$0xff]
        %v966 = vld [vmem:[%s363 + $0xf38] sm:$0xff]
        %v967 = vld [vmem:[%s363 + $0xf40] sm:$0xff]
        %v968 = vld [vmem:[%s363 + $0xf48] sm:$0xff]
        %v969 = vld [vmem:[%s363 + $0xf50] sm:$0xff]
        %v970 = vld [vmem:[%s363 + $0xf58] sm:$0xff]
        %v971 = vld [vmem:[%s363 + $0xf60] sm:$0xff]
        %v972 = vld [vmem:[%s363 + $0xf68] sm:$0xff]
        %v973 = vld [vmem:[%s363 + $0xf70] sm:$0xff]
        %v974 = vld [vmem:[%s363 + $0xf78] sm:$0xff]
        %v975 = vld [vmem:[%s363 + $0xf80] sm:$0xff]
        %v976 = vld [vmem:[%s363 + $0xf88] sm:$0xff]
        %v977 = vld [vmem:[%s363 + $0xf90] sm:$0xff]
        %v978 = vld [vmem:[%s363 + $0xf98] sm:$0xff]
        %v979 = vld [vmem:[%s363 + $0xfa0] sm:$0xff]
        %v980 = vld [vmem:[%s363 + $0xfa8] sm:$0xff]
        %v981 = vld [vmem:[%s363 + $0xfb0] sm:$0xff]
        %v982 = vld [vmem:[%s363 + $0xfb8] sm:$0xff]
        %v983 = vld [vmem:[%s363 + $0xfc0] sm:$0xff]
        %v984 = vld [vmem:[%s363 + $0xfc8] sm:$0xff]
        %v985 = vld [vmem:[%s363 + $0xfd0] sm:$0xff]
        %v986 = vld [vmem:[%s363 + $0xfd8] sm:$0xff]
        %v987 = vld [vmem:[%s363 + $0xfe0] sm:$0xff]
        %v988 = vld [vmem:[%s363 + $0xfe8] sm:$0xff]
        %v989 = vld [vmem:[%s363 + $0xff0] sm:$0xff]
        %v990 = vld [vmem:[%s363 + $0xff8] sm:$0xff]
        %v991 = vld [vmem:[%s363 + $0x1000] sm:$0xff]
        %v992 = vld [vmem:[%s363 + $0x1008] sm:$0xff]
        %v993 = vld [vmem:[%s363 + $0x1010] sm:$0xff]
        %v994 = vld [vmem:[%s363 + $0x1018] sm:$0xff]
        %v995 = vld [vmem:[%s363 + $0x1020] sm:$0xff]
        %v996 = vld [vmem:[%s363 + $0x1028] sm:$0xff]
        %v997 = vld [vmem:[%s363 + $0x1030] sm:$0xff]
        %v998 = vld [vmem:[%s363 + $0x1038] sm:$0xff]
        %v999 = vld [vmem:[%s363 + $0x1040] sm:$0xff]
        %v1000 = vld [vmem:[%s363 + $0x1048] sm:$0xff]
        %v1001 = vld [vmem:[%s363 + $0x1050] sm:$0xff]
        %v1002 = vld [vmem:[%s363 + $0x1058] sm:$0xff]
        %v1003 = vld [vmem:[%s363 + $0x1060] sm:$0xff]
        %v1004 = vld [vmem:[%s363 + $0x1068] sm:$0xff]
        %v1005 = vld [vmem:[%s363 + $0x1070] sm:$0xff]
        %v1006 = vld [vmem:[%s363 + $0x1078] sm:$0xff]
        %v1007 = vld [vmem:[%s363 + $0x1080] sm:$0xff]
        %v1008 = vld [vmem:[%s363 + $0x1088] sm:$0xff]
        %v1009 = vld [vmem:[%s363 + $0x1090] sm:$0xff]
        %v1010 = vld [vmem:[%s363 + $0x1098] sm:$0xff]
        %v1011 = vld [vmem:[%s363 + $0x10a0] sm:$0xff]
        %v1012 = vld [vmem:[%s363 + $0x10a8] sm:$0xff]
        %v1013 = vld [vmem:[%s363 + $0x10b0] sm:$0xff]
        %v1014 = vld [vmem:[%s363 + $0x10b8] sm:$0xff]
        %v1015 = vld [vmem:[%s363 + $0x10c0] sm:$0xff]
        %v1016 = vld [vmem:[%s363 + $0x10c8] sm:$0xff]
        %v1017 = vld [vmem:[%s363 + $0x10d0] sm:$0xff]
        %v1018 = vld [vmem:[%s363 + $0x10d8] sm:$0xff]
        %v1019 = vld [vmem:[%s363 + $0x10e0] sm:$0xff]
        %v1020 = vld [vmem:[%s363 + $0x10e8] sm:$0xff]
        %v1021 = vld [vmem:[%s363 + $0x10f0] sm:$0xff]
        %v1022 = vld [vmem:[%s363 + $0x10f8] sm:$0xff]
        %v1023 = vld [vmem:[%s363 + $0x1100] sm:$0xff]
        %v1024 = vld [vmem:[%s363 + $0x1108] sm:$0xff]
        %v1025 = vld [vmem:[%s363 + $0x1110] sm:$0xff]
        %v1026 = vld [vmem:[%s363 + $0x1118] sm:$0xff]
        %v1027 = vld [vmem:[%s363 + $0x1120] sm:$0xff]
        %v1028 = vld [vmem:[%s363 + $0x1128] sm:$0xff]
        %v1029 = vld [vmem:[%s363 + $0x1130] sm:$0xff]
        %v1030 = vld [vmem:[%s363 + $0x1138] sm:$0xff]
        %v1031 = vld [vmem:[%s363 + $0x1140] sm:$0xff]
        %v1032 = vld [vmem:[%s363 + $0x1148] sm:$0xff]
        %v1033 = vld [vmem:[%s363 + $0x1150] sm:$0xff]
        %v1034 = vld [vmem:[%s363 + $0x1158] sm:$0xff]
        %v1035 = vld [vmem:[%s363 + $0x1160] sm:$0xff]
        %v1036 = vld [vmem:[%s363 + $0x1168] sm:$0xff]
        %v1037 = vld [vmem:[%s363 + $0x1170] sm:$0xff]
        %v1038 = vld [vmem:[%s363 + $0x1178] sm:$0xff]
        %v1039 = vld [vmem:[%s363 + $0x1180] sm:$0xff]
        %v1040 = vld [vmem:[%s363 + $0x1188] sm:$0xff]
        %v1041 = vld [vmem:[%s363 + $0x1190] sm:$0xff]
        %v1042 = vld [vmem:[%s363 + $0x1198] sm:$0xff]
        %v1043 = vld [vmem:[%s363 + $0x11a0] sm:$0xff]
        %v1044 = vld [vmem:[%s363 + $0x11a8] sm:$0xff]
        %v1045 = vld [vmem:[%s363 + $0x11b0] sm:$0xff]
        %v1046 = vld [vmem:[%s363 + $0x11b8] sm:$0xff]
        %v1047 = vld [vmem:[%s363 + $0x11c0] sm:$0xff]
        %v1048 = vld [vmem:[%s363 + $0x11c8] sm:$0xff]
        %v1049 = vld [vmem:[%s363 + $0x11d0] sm:$0xff]
        %v1050 = vld [vmem:[%s363 + $0x11d8] sm:$0xff]
        %v1051 = vld [vmem:[%s363 + $0x11e0] sm:$0xff]
        %v1052 = vld [vmem:[%s363 + $0x11e8] sm:$0xff]
        %v1053 = vld [vmem:[%s363 + $0x11f0] sm:$0xff]
        %v1054 = vld [vmem:[%s363 + $0x11f8] sm:$0xff]
        %v1055 = vld [vmem:[%s363 + $0x1200] sm:$0xff]
        %v1056 = vld [vmem:[%s363 + $0x1208] sm:$0xff]
        %v1057 = vld [vmem:[%s363 + $0x1210] sm:$0xff]
        %v1058 = vld [vmem:[%s363 + $0x1218] sm:$0xff]
        %v1059 = vld [vmem:[%s363 + $0x1220] sm:$0xff]
        %v1060 = vld [vmem:[%s363 + $0x1228] sm:$0xff]
        %v1061 = vld [vmem:[%s363 + $0x1230] sm:$0xff]
        %v1062 = vld [vmem:[%s363 + $0x1238] sm:$0xff]
        %v1063 = vld [vmem:[%s363 + $0x1240] sm:$0xff]
        %v1064 = vld [vmem:[%s363 + $0x1248] sm:$0xff]
        %v1065 = vld [vmem:[%s363 + $0x1250] sm:$0xff]
        %v1066 = vld [vmem:[%s363 + $0x1258] sm:$0xff]
        %v1067 = vld [vmem:[%s363 + $0x1260] sm:$0xff]
        %v1068 = vld [vmem:[%s363 + $0x1268] sm:$0xff]
        %v1069 = vld [vmem:[%s363 + $0x1270] sm:$0xff]
        %v1070 = vld [vmem:[%s363 + $0x1278] sm:$0xff]
        %v1071 = vld [vmem:[%s363 + $0x1280] sm:$0xff]
        %v1072 = vld [vmem:[%s363 + $0x1288] sm:$0xff]
        %v1073 = vld [vmem:[%s363 + $0x1290] sm:$0xff]
        %v1074 = vld [vmem:[%s363 + $0x1298] sm:$0xff]
        %v1075 = vld [vmem:[%s363 + $0x12a0] sm:$0xff]
        %v1076 = vld [vmem:[%s363 + $0x12a8] sm:$0xff]
        %v1077 = vld [vmem:[%s363 + $0x12b0] sm:$0xff]
        %v1078 = vld [vmem:[%s363 + $0x12b8] sm:$0xff]
        %v1079 = vld [vmem:[%s363 + $0x12c0] sm:$0xff]
        %v1080 = vld [vmem:[%s363 + $0x12c8] sm:$0xff]
        %v1081 = vld [vmem:[%s363 + $0x12d0] sm:$0xff]
        %v1082 = vld [vmem:[%s363 + $0x12d8] sm:$0xff]
        %v1083 = vld [vmem:[%s363 + $0x12e0] sm:$0xff]
        %v1084 = vld [vmem:[%s363 + $0x12e8] sm:$0xff]
        %v1085 = vld [vmem:[%s363 + $0x12f0] sm:$0xff]
        %v1086 = vld [vmem:[%s363 + $0x12f8] sm:$0xff]
        %v1087 = vld [vmem:[%s363 + $0x1300] sm:$0xff]
        %v1088 = vld [vmem:[%s363 + $0x1308] sm:$0xff]
        %v1089 = vld [vmem:[%s363 + $0x1310] sm:$0xff]
        %v1090 = vld [vmem:[%s363 + $0x1318] sm:$0xff]
        %v1091 = vld [vmem:[%s363 + $0x1320] sm:$0xff]
        %v1092 = vld [vmem:[%s363 + $0x1328] sm:$0xff]
        %v1093 = vld [vmem:[%s363 + $0x1330] sm:$0xff]
        %v1094 = vld [vmem:[%s363 + $0x1338] sm:$0xff]
        %v1095 = vld [vmem:[%s363 + $0x1340] sm:$0xff]
        %v1096 = vld [vmem:[%s363 + $0x1348] sm:$0xff]
        %v1097 = vld [vmem:[%s363 + $0x1350] sm:$0xff]
        %v1098 = vld [vmem:[%s363 + $0x1358] sm:$0xff]
        %v1099 = vld [vmem:[%s363 + $0x1360] sm:$0xff]
        %v1100 = vld [vmem:[%s363 + $0x1368] sm:$0xff]
        %v1101 = vld [vmem:[%s363 + $0x1370] sm:$0xff]
        %v1102 = vld [vmem:[%s363 + $0x1378] sm:$0xff]
        %v1103 = vld [vmem:[%s363 + $0x1380] sm:$0xff]
        %v1104 = vld [vmem:[%s363 + $0x1388] sm:$0xff]
        %v1105 = vld [vmem:[%s363 + $0x1390] sm:$0xff]
        %v1106 = vld [vmem:[%s363 + $0x1398] sm:$0xff]
        %v1107 = vld [vmem:[%s363 + $0x13a0] sm:$0xff]
        %v1108 = vld [vmem:[%s363 + $0x13a8] sm:$0xff]
        %v1109 = vld [vmem:[%s363 + $0x13b0] sm:$0xff]
        %v1110 = vld [vmem:[%s363 + $0x13b8] sm:$0xff]
        %v1111 = vld [vmem:[%s363 + $0x13c0] sm:$0xff]
        %v1112 = vld [vmem:[%s363 + $0x13c8] sm:$0xff]
        %v1113 = vld [vmem:[%s363 + $0x13d0] sm:$0xff]
        %v1114 = vld [vmem:[%s363 + $0x13d8] sm:$0xff]
        %v1115 = vld [vmem:[%s363 + $0x13e0] sm:$0xff]
        %v1116 = vld [vmem:[%s363 + $0x13e8] sm:$0xff]
        %v1117 = vld [vmem:[%s363 + $0x13f0] sm:$0xff]
        %v1118 = vld [vmem:[%s363 + $0x13f8] sm:$0xff]
        %v1119 = vld [vmem:[%s363 + $0x1400] sm:$0xff]
        %v1120 = vld [vmem:[%s363 + $0x1408] sm:$0xff]
        %v1121 = vld [vmem:[%s363 + $0x1410] sm:$0xff]
        %v1122 = vld [vmem:[%s363 + $0x1418] sm:$0xff]
        %v1123 = vld [vmem:[%s363 + $0x1420] sm:$0xff]
        %v1124 = vld [vmem:[%s363 + $0x1428] sm:$0xff]
        %v1125 = vld [vmem:[%s363 + $0x1430] sm:$0xff]
        %v1126 = vld [vmem:[%s363 + $0x1438] sm:$0xff]
        %v1127 = vld [vmem:[%s363 + $0x1440] sm:$0xff]
        %v1128 = vld [vmem:[%s363 + $0x1448] sm:$0xff]
        %v1129 = vld [vmem:[%s363 + $0x1450] sm:$0xff]
        %v1130 = vld [vmem:[%s363 + $0x1458] sm:$0xff]
        %v1131 = vld [vmem:[%s363 + $0x1460] sm:$0xff]
        %v1132 = vld [vmem:[%s363 + $0x1468] sm:$0xff]
        %v1133 = vld [vmem:[%s363 + $0x1470] sm:$0xff]
        %v1134 = vld [vmem:[%s363 + $0x1478] sm:$0xff]
        %v1135 = vld [vmem:[%s363 + $0x1480] sm:$0xff]
        %v1136 = vld [vmem:[%s363 + $0x1488] sm:$0xff]
        %v1137 = vld [vmem:[%s363 + $0x1490] sm:$0xff]
        %v1138 = vld [vmem:[%s363 + $0x1498] sm:$0xff]
        %v1139 = vld [vmem:[%s363 + $0x14a0] sm:$0xff]
        %v1140 = vld [vmem:[%s363 + $0x14a8] sm:$0xff]
        %v1141 = vld [vmem:[%s363 + $0x14b0] sm:$0xff]
        %v1142 = vld [vmem:[%s363 + $0x14b8] sm:$0xff]
        %v1143 = vld [vmem:[%s363 + $0x14c0] sm:$0xff]
        %v1144 = vld [vmem:[%s363 + $0x14c8] sm:$0xff]
        %v1145 = vld [vmem:[%s363 + $0x14d0] sm:$0xff]
        %v1146 = vld [vmem:[%s363 + $0x14d8] sm:$0xff]
        %v1147 = vld [vmem:[%s363 + $0x14e0] sm:$0xff]
        %v1148 = vld [vmem:[%s363 + $0x14e8] sm:$0xff]
        %v1149 = vld [vmem:[%s363 + $0x14f0] sm:$0xff]
        %v1150 = vld [vmem:[%s363 + $0x14f8] sm:$0xff]
        %v1151 = vld [vmem:[%s363 + $0x1500] sm:$0xff]
        %v1152 = vld [vmem:[%s363 + $0x1508] sm:$0xff]
        %v1153 = vld [vmem:[%s363 + $0x1510] sm:$0xff]
        %v1154 = vld [vmem:[%s363 + $0x1518] sm:$0xff]
        %v1155 = vld [vmem:[%s363 + $0x1520] sm:$0xff]
        %v1156 = vld [vmem:[%s363 + $0x1528] sm:$0xff]
        %v1157 = vld [vmem:[%s363 + $0x1530] sm:$0xff]
        %v1158 = vld [vmem:[%s363 + $0x1538] sm:$0xff]
        %v1159 = vld [vmem:[%s363 + $0x1540] sm:$0xff]
        %v1160 = vld [vmem:[%s363 + $0x1548] sm:$0xff]
        %v1161 = vld [vmem:[%s363 + $0x1550] sm:$0xff]
        %v1162 = vld [vmem:[%s363 + $0x1558] sm:$0xff]
        %v1163 = vld [vmem:[%s363 + $0x1560] sm:$0xff]
        %v1164 = vld [vmem:[%s363 + $0x1568] sm:$0xff]
        %v1165 = vld [vmem:[%s363 + $0x1570] sm:$0xff]
        %v1166 = vld [vmem:[%s363 + $0x1578] sm:$0xff]
        %v1167 = vld [vmem:[%s363 + $0x1580] sm:$0xff]
        %v1168 = vld [vmem:[%s363 + $0x1588] sm:$0xff]
        %v1169 = vld [vmem:[%s363 + $0x1590] sm:$0xff]
        %v1170 = vld [vmem:[%s363 + $0x1598] sm:$0xff]
        %v1171 = vld [vmem:[%s363 + $0x15a0] sm:$0xff]
        %v1172 = vld [vmem:[%s363 + $0x15a8] sm:$0xff]
        %v1173 = vld [vmem:[%s363 + $0x15b0] sm:$0xff]
        %v1174 = vld [vmem:[%s363 + $0x15b8] sm:$0xff]
        %v1175 = vld [vmem:[%s363 + $0x15c0] sm:$0xff]
        %v1176 = vld [vmem:[%s363 + $0x15c8] sm:$0xff]
        %v1177 = vld [vmem:[%s363 + $0x15d0] sm:$0xff]
        %v1178 = vld [vmem:[%s363 + $0x15d8] sm:$0xff]
        %v1179 = vld [vmem:[%s363 + $0x15e0] sm:$0xff]
        %v1180 = vld [vmem:[%s363 + $0x15e8] sm:$0xff]
        %v1181 = vld [vmem:[%s363 + $0x15f0] sm:$0xff]
        %v1182 = vld [vmem:[%s363 + $0x15f8] sm:$0xff]
        %v1183 = vld [vmem:[%s363 + $0x1600] sm:$0xff]
        %v1184 = vld [vmem:[%s363 + $0x1608] sm:$0xff]
        %v1185 = vld [vmem:[%s363 + $0x1610] sm:$0xff]
        %v1186 = vld [vmem:[%s363 + $0x1618] sm:$0xff]
        %v1187 = vld [vmem:[%s363 + $0x1620] sm:$0xff]
        %v1188 = vld [vmem:[%s363 + $0x1628] sm:$0xff]
        %v1189 = vld [vmem:[%s363 + $0x1630] sm:$0xff]
        %v1190 = vld [vmem:[%s363 + $0x1638] sm:$0xff]
        %v1191 = vld [vmem:[%s363 + $0x1640] sm:$0xff]
        %v1192 = vld [vmem:[%s363 + $0x1648] sm:$0xff]
        %v1193 = vld [vmem:[%s363 + $0x1650] sm:$0xff]
        %v1194 = vld [vmem:[%s363 + $0x1658] sm:$0xff]
        %v1195 = vld [vmem:[%s363 + $0x1660] sm:$0xff]
        %v1196 = vld [vmem:[%s363 + $0x1668] sm:$0xff]
        %v1197 = vld [vmem:[%s363 + $0x1670] sm:$0xff]
        %v1198 = vld [vmem:[%s363 + $0x1678] sm:$0xff]
        %v1199 = vld [vmem:[%s363 + $0x1680] sm:$0xff]
        %v1200 = vld [vmem:[%s363 + $0x1688] sm:$0xff]
        %v1201 = vld [vmem:[%s363 + $0x1690] sm:$0xff]
        %v1202 = vld [vmem:[%s363 + $0x1698] sm:$0xff]
        %v1203 = vld [vmem:[%s363 + $0x16a0] sm:$0xff]
        %v1204 = vld [vmem:[%s363 + $0x16a8] sm:$0xff]
        %v1205 = vld [vmem:[%s363 + $0x16b0] sm:$0xff]
        %v1206 = vld [vmem:[%s363 + $0x16b8] sm:$0xff]
        %v1207 = vld [vmem:[%s363 + $0x16c0] sm:$0xff]
        %v1208 = vld [vmem:[%s363 + $0x16c8] sm:$0xff]
        %v1209 = vld [vmem:[%s363 + $0x16d0] sm:$0xff]
        %v1210 = vld [vmem:[%s363 + $0x16d8] sm:$0xff]
        %v1211 = vld [vmem:[%s363 + $0x16e0] sm:$0xff]
        %v1212 = vld [vmem:[%s363 + $0x16e8] sm:$0xff]
        %v1213 = vld [vmem:[%s363 + $0x16f0] sm:$0xff]
        %v1214 = vld [vmem:[%s363 + $0x16f8] sm:$0xff]
        %v1215 = vld [vmem:[%s363 + $0x1700] sm:$0xff]
        %v1216 = vld [vmem:[%s363 + $0x1708] sm:$0xff]
        %v1217 = vld [vmem:[%s363 + $0x1710] sm:$0xff]
        %v1218 = vld [vmem:[%s363 + $0x1718] sm:$0xff]
        %v1219 = vld [vmem:[%s363 + $0x1720] sm:$0xff]
        %v1220 = vld [vmem:[%s363 + $0x1728] sm:$0xff]
        %v1221 = vld [vmem:[%s363 + $0x1730] sm:$0xff]
        %v1222 = vld [vmem:[%s363 + $0x1738] sm:$0xff]
        %v1223 = vld [vmem:[%s363 + $0x1740] sm:$0xff]
        %v1224 = vld [vmem:[%s363 + $0x1748] sm:$0xff]
        %v1225 = vld [vmem:[%s363 + $0x1750] sm:$0xff]
        %v1226 = vld [vmem:[%s363 + $0x1758] sm:$0xff]
        %v1227 = vld [vmem:[%s363 + $0x1760] sm:$0xff]
        %v1228 = vld [vmem:[%s363 + $0x1768] sm:$0xff]
        %v1229 = vld [vmem:[%s363 + $0x1770] sm:$0xff]
        %v1230 = vld [vmem:[%s363 + $0x1778] sm:$0xff]
        %v1231 = vld [vmem:[%s363 + $0x1780] sm:$0xff]
        %v1232 = vld [vmem:[%s363 + $0x1788] sm:$0xff]
        %v1233 = vld [vmem:[%s363 + $0x1790] sm:$0xff]
        %v1234 = vld [vmem:[%s363 + $0x1798] sm:$0xff]
        %v1235 = vld [vmem:[%s363 + $0x17a0] sm:$0xff]
        %v1236 = vld [vmem:[%s363 + $0x17a8] sm:$0xff]
        %v1237 = vld [vmem:[%s363 + $0x17b0] sm:$0xff]
        %v1238 = vld [vmem:[%s363 + $0x17b8] sm:$0xff]
        %v1239 = vld [vmem:[%s363 + $0x17c0] sm:$0xff]
        %v1240 = vld [vmem:[%s363 + $0x17c8] sm:$0xff]
        %v1241 = vld [vmem:[%s363 + $0x17d0] sm:$0xff]
        %v1242 = vld [vmem:[%s363 + $0x17d8] sm:$0xff]
        %v1243 = vld [vmem:[%s363 + $0x17e0] sm:$0xff]
        %v1244 = vld [vmem:[%s363 + $0x17e8] sm:$0xff]
        %v1245 = vld [vmem:[%s363 + $0x17f0] sm:$0xff]
        %v1246 = vld [vmem:[%s363 + $0x17f8] sm:$0xff]
        %v1247 = vld [vmem:[%s363 + $0x1800] sm:$0xff]
        %v1248 = vld [vmem:[%s363 + $0x1808] sm:$0xff]
        %v1249 = vld [vmem:[%s363 + $0x1810] sm:$0xff]
        %v1250 = vld [vmem:[%s363 + $0x1818] sm:$0xff]
        %v1251 = vld [vmem:[%s363 + $0x1820] sm:$0xff]
        %v1252 = vld [vmem:[%s363 + $0x1828] sm:$0xff]
        %v1253 = vld [vmem:[%s363 + $0x1830] sm:$0xff]
        %v1254 = vld [vmem:[%s363 + $0x1838] sm:$0xff]
        %v1255 = vld [vmem:[%s363 + $0x1840] sm:$0xff]
        %v1256 = vld [vmem:[%s363 + $0x1848] sm:$0xff]
        %v1257 = vld [vmem:[%s363 + $0x1850] sm:$0xff]
        %v1258 = vld [vmem:[%s363 + $0x1858] sm:$0xff]
        %v1259 = vld [vmem:[%s363 + $0x1860] sm:$0xff]
        %v1260 = vld [vmem:[%s363 + $0x1868] sm:$0xff]
        %v1261 = vld [vmem:[%s363 + $0x1870] sm:$0xff]
        %v1262 = vld [vmem:[%s363 + $0x1878] sm:$0xff]
        %v1263 = vld [vmem:[%s363 + $0x1880] sm:$0xff]
        %v1264 = vld [vmem:[%s363 + $0x1888] sm:$0xff]
        %v1265 = vld [vmem:[%s363 + $0x1890] sm:$0xff]
        %v1266 = vld [vmem:[%s363 + $0x1898] sm:$0xff]
        %v1267 = vld [vmem:[%s363 + $0x18a0] sm:$0xff]
        %v1268 = vld [vmem:[%s363 + $0x18a8] sm:$0xff]
        %v1269 = vld [vmem:[%s363 + $0x18b0] sm:$0xff]
        %v1270 = vld [vmem:[%s363 + $0x18b8] sm:$0xff]
        %v1271 = vld [vmem:[%s363 + $0x18c0] sm:$0xff]
        %v1272 = vld [vmem:[%s363 + $0x18c8] sm:$0xff]
        %v1273 = vld [vmem:[%s363 + $0x18d0] sm:$0xff]
        %v1274 = vld [vmem:[%s363 + $0x18d8] sm:$0xff]
        %v1275 = vld [vmem:[%s363 + $0x18e0] sm:$0xff]
        %v1276 = vld [vmem:[%s363 + $0x18e8] sm:$0xff]
        %v1277 = vld [vmem:[%s363 + $0x18f0] sm:$0xff]
        %v1278 = vld [vmem:[%s363 + $0x18f8] sm:$0xff]
        %v1279 = vld [vmem:[%s363 + $0x1900] sm:$0xff]
        %v1280 = vld [vmem:[%s363 + $0x1908] sm:$0xff]
        %v1281 = vld [vmem:[%s363 + $0x1910] sm:$0xff]
        %v1282 = vld [vmem:[%s363 + $0x1918] sm:$0xff]
        %v1283 = vld [vmem:[%s363 + $0x1920] sm:$0xff]
        %v1284 = vld [vmem:[%s363 + $0x1928] sm:$0xff]
        %v1285 = vld [vmem:[%s363 + $0x1930] sm:$0xff]
        %v1286 = vld [vmem:[%s363 + $0x1938] sm:$0xff]
        %v1287 = vld [vmem:[%s363 + $0x1940] sm:$0xff]
        %v1288 = vld [vmem:[%s363 + $0x1948] sm:$0xff]
        %v1289 = vld [vmem:[%s363 + $0x1950] sm:$0xff]
        %v1290 = vld [vmem:[%s363 + $0x1958] sm:$0xff]
        %v1291 = vld [vmem:[%s363 + $0x1960] sm:$0xff]
        %v1292 = vld [vmem:[%s363 + $0x1968] sm:$0xff]
        %v1293 = vld [vmem:[%s363 + $0x1970] sm:$0xff]
        %v1294 = vld [vmem:[%s363 + $0x1978] sm:$0xff]
        %v1295 = vld [vmem:[%s363 + $0x1980] sm:$0xff]
        %v1296 = vld [vmem:[%s363 + $0x1988] sm:$0xff]
        %v1297 = vld [vmem:[%s363 + $0x1990] sm:$0xff]
        %v1298 = vld [vmem:[%s363 + $0x1998] sm:$0xff]
        %v1299 = vld [vmem:[%s363 + $0x19a0] sm:$0xff]
        %v1300 = vld [vmem:[%s363 + $0x19a8] sm:$0xff]
        %v1301 = vld [vmem:[%s363 + $0x19b0] sm:$0xff]
        %v1302 = vld [vmem:[%s363 + $0x19b8] sm:$0xff]
        %v1303 = vld [vmem:[%s363 + $0x19c0] sm:$0xff]
        %v1304 = vld [vmem:[%s363 + $0x19c8] sm:$0xff]
        %v1305 = vld [vmem:[%s363 + $0x19d0] sm:$0xff]
        %v1306 = vld [vmem:[%s363 + $0x19d8] sm:$0xff]
        %v1307 = vld [vmem:[%s363 + $0x19e0] sm:$0xff]
        %v1308 = vld [vmem:[%s363 + $0x19e8] sm:$0xff]
        %v1309 = vld [vmem:[%s363 + $0x19f0] sm:$0xff]
        %v1310 = vld [vmem:[%s363 + $0x19f8] sm:$0xff]
        %v1311 = vld [vmem:[%s363 + $0x1a00] sm:$0xff]
        %v1312 = vld [vmem:[%s363 + $0x1a08] sm:$0xff]
        %v1313 = vld [vmem:[%s363 + $0x1a10] sm:$0xff]
        %v1314 = vld [vmem:[%s363 + $0x1a18] sm:$0xff]
        %v1315 = vld [vmem:[%s363 + $0x1a20] sm:$0xff]
        %v1316 = vld [vmem:[%s363 + $0x1a28] sm:$0xff]
        %v1317 = vld [vmem:[%s363 + $0x1a30] sm:$0xff]
        %v1318 = vld [vmem:[%s363 + $0x1a38] sm:$0xff]
        %v1319 = vld [vmem:[%s363 + $0x1a40] sm:$0xff]
        %v1320 = vld [vmem:[%s363 + $0x1a48] sm:$0xff]
        %v1321 = vld [vmem:[%s363 + $0x1a50] sm:$0xff]
        %v1322 = vld [vmem:[%s363 + $0x1a58] sm:$0xff]
        %v1323 = vld [vmem:[%s363 + $0x1a60] sm:$0xff]
        %v1324 = vld [vmem:[%s363 + $0x1a68] sm:$0xff]
        %v1325 = vld [vmem:[%s363 + $0x1a70] sm:$0xff]
        %v1326 = vld [vmem:[%s363 + $0x1a78] sm:$0xff]
        %v1327 = vld [vmem:[%s363 + $0x1a80] sm:$0xff]
        %v1328 = vld [vmem:[%s363 + $0x1a88] sm:$0xff]
        %v1329 = vld [vmem:[%s363 + $0x1a90] sm:$0xff]
        %v1330 = vld [vmem:[%s363 + $0x1a98] sm:$0xff]
        %v1331 = vld [vmem:[%s363 + $0x1aa0] sm:$0xff]
        %v1332 = vld [vmem:[%s363 + $0x1aa8] sm:$0xff]
        %v1333 = vld [vmem:[%s363 + $0x1ab0] sm:$0xff]
        %v1334 = vld [vmem:[%s363 + $0x1ab8] sm:$0xff]
        %v1335 = vld [vmem:[%s363 + $0x1ac0] sm:$0xff]
        %v1336 = vld [vmem:[%s363 + $0x1ac8] sm:$0xff]
        %v1337 = vld [vmem:[%s363 + $0x1ad0] sm:$0xff]
        %v1338 = vld [vmem:[%s363 + $0x1ad8] sm:$0xff]
        %v1339 = vld [vmem:[%s363 + $0x1ae0] sm:$0xff]
        %v1340 = vld [vmem:[%s363 + $0x1ae8] sm:$0xff]
        %v1341 = vld [vmem:[%s363 + $0x1af0] sm:$0xff]
        %v1342 = vld [vmem:[%s363 + $0x1af8] sm:$0xff]
        %v1343 = vld [vmem:[%s363 + $0x1b00] sm:$0xff]
        %v1344 = vld [vmem:[%s363 + $0x1b08] sm:$0xff]
        %v1345 = vld [vmem:[%s363 + $0x1b10] sm:$0xff]
        %v1346 = vld [vmem:[%s363 + $0x1b18] sm:$0xff]
        %v1347 = vld [vmem:[%s363 + $0x1b20] sm:$0xff]
        %v1348 = vld [vmem:[%s363 + $0x1b28] sm:$0xff]
        %v1349 = vld [vmem:[%s363 + $0x1b30] sm:$0xff]
        %v1350 = vld [vmem:[%s363 + $0x1b38] sm:$0xff]
        %v1351 = vld [vmem:[%s363 + $0x1b40] sm:$0xff]
        %v1352 = vld [vmem:[%s363 + $0x1b48] sm:$0xff]
        %v1353 = vld [vmem:[%s363 + $0x1b50] sm:$0xff]
        %v1354 = vld [vmem:[%s363 + $0x1b58] sm:$0xff]
        %v1355 = vld [vmem:[%s363 + $0x1b60] sm:$0xff]
        %v1356 = vld [vmem:[%s363 + $0x1b68] sm:$0xff]
        %v1357 = vld [vmem:[%s363 + $0x1b70] sm:$0xff]
        %v1358 = vld [vmem:[%s363 + $0x1b78] sm:$0xff]
        %v1359 = vld [vmem:[%s363 + $0x1b80] sm:$0xff]
        %v1360 = vld [vmem:[%s363 + $0x1b88] sm:$0xff]
        %v1361 = vld [vmem:[%s363 + $0x1b90] sm:$0xff]
        %v1362 = vld [vmem:[%s363 + $0x1b98] sm:$0xff]
        %v1363 = vld [vmem:[%s363 + $0x1ba0] sm:$0xff]
        %v1364 = vld [vmem:[%s363 + $0x1ba8] sm:$0xff]
        %v1365 = vld [vmem:[%s363 + $0x1bb0] sm:$0xff]
        %v1366 = vld [vmem:[%s363 + $0x1bb8] sm:$0xff]
        %v1367 = vld [vmem:[%s363 + $0x1bc0] sm:$0xff]
        %v1368 = vld [vmem:[%s363 + $0x1bc8] sm:$0xff]
        %v1369 = vld [vmem:[%s363 + $0x1bd0] sm:$0xff]
        %v1370 = vld [vmem:[%s363 + $0x1bd8] sm:$0xff]
        %v1371 = vld [vmem:[%s363 + $0x1be0] sm:$0xff]
        %v1372 = vld [vmem:[%s363 + $0x1be8] sm:$0xff]
        %v1373 = vld [vmem:[%s363 + $0x1bf0] sm:$0xff]
        %v1374 = vld [vmem:[%s363 + $0x1bf8] sm:$0xff]
        %v1375 = vld [vmem:[%s363 + $0x1c00] sm:$0xff]
        %v1376 = vld [vmem:[%s363 + $0x1c08] sm:$0xff]
        %v1377 = vld [vmem:[%s363 + $0x1c10] sm:$0xff]
        %v1378 = vld [vmem:[%s363 + $0x1c18] sm:$0xff]
        %v1379 = vld [vmem:[%s363 + $0x1c20] sm:$0xff]
        %v1380 = vld [vmem:[%s363 + $0x1c28] sm:$0xff]
        %v1381 = vld [vmem:[%s363 + $0x1c30] sm:$0xff]
        %v1382 = vld [vmem:[%s363 + $0x1c38] sm:$0xff]
        %v1383 = vld [vmem:[%s363 + $0x1c40] sm:$0xff]
        %v1384 = vld [vmem:[%s363 + $0x1c48] sm:$0xff]
        %v1385 = vld [vmem:[%s363 + $0x1c50] sm:$0xff]
        %v1386 = vld [vmem:[%s363 + $0x1c58] sm:$0xff]
        %v1387 = vld [vmem:[%s363 + $0x1c60] sm:$0xff]
        %v1388 = vld [vmem:[%s363 + $0x1c68] sm:$0xff]
        %v1389 = vld [vmem:[%s363 + $0x1c70] sm:$0xff]
        %v1390 = vld [vmem:[%s363 + $0x1c78] sm:$0xff]
        %v1391 = vld [vmem:[%s363 + $0x1c80] sm:$0xff]
        %v1392 = vld [vmem:[%s363 + $0x1c88] sm:$0xff]
        %v1393 = vld [vmem:[%s363 + $0x1c90] sm:$0xff]
        %v1394 = vld [vmem:[%s363 + $0x1c98] sm:$0xff]
        %v1395 = vld [vmem:[%s363 + $0x1ca0] sm:$0xff]
        %v1396 = vld [vmem:[%s363 + $0x1ca8] sm:$0xff]
        %v1397 = vld [vmem:[%s363 + $0x1cb0] sm:$0xff]
        %v1398 = vld [vmem:[%s363 + $0x1cb8] sm:$0xff]
        %v1399 = vld [vmem:[%s363 + $0x1cc0] sm:$0xff]
        %v1400 = vld [vmem:[%s363 + $0x1cc8] sm:$0xff]
        %v1401 = vld [vmem:[%s363 + $0x1cd0] sm:$0xff]
        %v1402 = vld [vmem:[%s363 + $0x1cd8] sm:$0xff]
        %v1403 = vld [vmem:[%s363 + $0x1ce0] sm:$0xff]
        %v1404 = vld [vmem:[%s363 + $0x1ce8] sm:$0xff]
        %v1405 = vld [vmem:[%s363 + $0x1cf0] sm:$0xff]
        %v1406 = vld [vmem:[%s363 + $0x1cf8] sm:$0xff]
        %v1407 = vld [vmem:[%s363 + $0x1d00] sm:$0xff]
        %v1408 = vld [vmem:[%s363 + $0x1d08] sm:$0xff]
        %v1409 = vld [vmem:[%s363 + $0x1d10] sm:$0xff]
        %v1410 = vld [vmem:[%s363 + $0x1d18] sm:$0xff]
        %v1411 = vld [vmem:[%s363 + $0x1d20] sm:$0xff]
        %v1412 = vld [vmem:[%s363 + $0x1d28] sm:$0xff]
        %v1413 = vld [vmem:[%s363 + $0x1d30] sm:$0xff]
        %v1414 = vld [vmem:[%s363 + $0x1d38] sm:$0xff]
        %v1415 = vld [vmem:[%s363 + $0x1d40] sm:$0xff]
        %v1416 = vld [vmem:[%s363 + $0x1d48] sm:$0xff]
        %v1417 = vld [vmem:[%s363 + $0x1d50] sm:$0xff]
        %v1418 = vld [vmem:[%s363 + $0x1d58] sm:$0xff]
        %v1419 = vld [vmem:[%s363 + $0x1d60] sm:$0xff]
        %v1420 = vld [vmem:[%s363 + $0x1d68] sm:$0xff]
        %v1421 = vld [vmem:[%s363 + $0x1d70] sm:$0xff]
        %v1422 = vld [vmem:[%s363 + $0x1d78] sm:$0xff]
        %v1423 = vld [vmem:[%s363 + $0x1d80] sm:$0xff]
        %v1424 = vld [vmem:[%s363 + $0x1d88] sm:$0xff]
        %v1425 = vld [vmem:[%s363 + $0x1d90] sm:$0xff]
        %v1426 = vld [vmem:[%s363 + $0x1d98] sm:$0xff]
        %v1427 = vld [vmem:[%s363 + $0x1da0] sm:$0xff]
        %v1428 = vld [vmem:[%s363 + $0x1da8] sm:$0xff]
        %v1429 = vld [vmem:[%s363 + $0x1db0] sm:$0xff]
        %v1430 = vld [vmem:[%s363 + $0x1db8] sm:$0xff]
        %v1431 = vld [vmem:[%s363 + $0x1dc0] sm:$0xff]
        %v1432 = vld [vmem:[%s363 + $0x1dc8] sm:$0xff]
        %v1433 = vld [vmem:[%s363 + $0x1dd0] sm:$0xff]
        %v1434 = vld [vmem:[%s363 + $0x1dd8] sm:$0xff]
        %v1435 = vld [vmem:[%s363 + $0x1de0] sm:$0xff]
        %v1436 = vld [vmem:[%s363 + $0x1de8] sm:$0xff]
        %v1437 = vld [vmem:[%s363 + $0x1df0] sm:$0xff]
        %v1438 = vld [vmem:[%s363 + $0x1df8] sm:$0xff]
        %v1439 = vld [vmem:[%s363 + $0x1e00] sm:$0xff]
        %v1440 = vld [vmem:[%s363 + $0x1e08] sm:$0xff]
        %v1441 = vld [vmem:[%s363 + $0x1e10] sm:$0xff]
        %v1442 = vld [vmem:[%s363 + $0x1e18] sm:$0xff]
        %v1443 = vld [vmem:[%s363 + $0x1e20] sm:$0xff]
        %v1444 = vld [vmem:[%s363 + $0x1e28] sm:$0xff]
        %v1445 = vld [vmem:[%s363 + $0x1e30] sm:$0xff]
        %v1446 = vld [vmem:[%s363 + $0x1e38] sm:$0xff]
        %v1447 = vld [vmem:[%s363 + $0x1e40] sm:$0xff]
        %v1448 = vld [vmem:[%s363 + $0x1e48] sm:$0xff]
        %v1449 = vld [vmem:[%s363 + $0x1e50] sm:$0xff]
        %v1450 = vld [vmem:[%s363 + $0x1e58] sm:$0xff]
        %v1451 = vld [vmem:[%s363 + $0x1e60] sm:$0xff]
        %v1452 = vld [vmem:[%s363 + $0x1e68] sm:$0xff]
        %v1453 = vld [vmem:[%s363 + $0x1e70] sm:$0xff]
        %v1454 = vld [vmem:[%s363 + $0x1e78] sm:$0xff]
        %v1455 = vld [vmem:[%s363 + $0x1e80] sm:$0xff]
        %v1456 = vld [vmem:[%s363 + $0x1e88] sm:$0xff]
        %v1457 = vld [vmem:[%s363 + $0x1e90] sm:$0xff]
        %v1458 = vld [vmem:[%s363 + $0x1e98] sm:$0xff]
        %v1459 = vld [vmem:[%s363 + $0x1ea0] sm:$0xff]
        %v1460 = vld [vmem:[%s363 + $0x1ea8] sm:$0xff]
        %v1461 = vld [vmem:[%s363 + $0x1eb0] sm:$0xff]
        %v1462 = vld [vmem:[%s363 + $0x1eb8] sm:$0xff]
        %v1463 = vld [vmem:[%s363 + $0x1ec0] sm:$0xff]
        %v1464 = vld [vmem:[%s363 + $0x1ec8] sm:$0xff]
        %v1465 = vld [vmem:[%s363 + $0x1ed0] sm:$0xff]
        %v1466 = vld [vmem:[%s363 + $0x1ed8] sm:$0xff]
        %v1467 = vld [vmem:[%s363 + $0x1ee0] sm:$0xff]
        %v1468 = vld [vmem:[%s363 + $0x1ee8] sm:$0xff]
        %v1469 = vld [vmem:[%s363 + $0x1ef0] sm:$0xff]
        %v1470 = vld [vmem:[%s363 + $0x1ef8] sm:$0xff]
        %v1471 = vld [vmem:[%s363 + $0x1f00] sm:$0xff]
        %v1472 = vld [vmem:[%s363 + $0x1f08] sm:$0xff]
        %v1473 = vld [vmem:[%s363 + $0x1f10] sm:$0xff]
        %v1474 = vld [vmem:[%s363 + $0x1f18] sm:$0xff]
        %v1475 = vld [vmem:[%s363 + $0x1f20] sm:$0xff]
        %v1476 = vld [vmem:[%s363 + $0x1f28] sm:$0xff]
        %v1477 = vld [vmem:[%s363 + $0x1f30] sm:$0xff]
        %v1478 = vld [vmem:[%s363 + $0x1f38] sm:$0xff]
        %v1479 = vld [vmem:[%s363 + $0x1f40] sm:$0xff]
        %v1480 = vld [vmem:[%s363 + $0x1f48] sm:$0xff]
        %v1481 = vld [vmem:[%s363 + $0x1f50] sm:$0xff]
        %v1482 = vld [vmem:[%s363 + $0x1f58] sm:$0xff]
        %v1483 = vld [vmem:[%s363 + $0x1f60] sm:$0xff]
        %v1484 = vld [vmem:[%s363 + $0x1f68] sm:$0xff]
        %v1485 = vld [vmem:[%s363 + $0x1f70] sm:$0xff]
        %v1486 = vld [vmem:[%s363 + $0x1f78] sm:$0xff]
        %v1487 = vld [vmem:[%s363 + $0x1f80] sm:$0xff]
        %v1488 = vld [vmem:[%s363 + $0x1f88] sm:$0xff]
        %v1489 = vld [vmem:[%s363 + $0x1f90] sm:$0xff]
        %v1490 = vld [vmem:[%s363 + $0x1f98] sm:$0xff]
        %v1491 = vld [vmem:[%s363 + $0x1fa0] sm:$0xff]
        %v1492 = vld [vmem:[%s363 + $0x1fa8] sm:$0xff]
        %v1493 = vld [vmem:[%s363 + $0x1fb0] sm:$0xff]
        %v1494 = vld [vmem:[%s363 + $0x1fb8] sm:$0xff]
        %v1495 = vld [vmem:[%s363 + $0x1fc0] sm:$0xff]
        %v1496 = vld [vmem:[%s363 + $0x1fc8] sm:$0xff]
        %v1497 = vld [vmem:[%s363 + $0x1fd0] sm:$0xff]
        %v1498 = vld [vmem:[%s363 + $0x1fd8] sm:$0xff]
        %v1499 = vld [vmem:[%s363 + $0x1fe0] sm:$0xff]
        %v1500 = vld [vmem:[%s363 + $0x1fe8] sm:$0xff]
        %v1501 = vld [vmem:[%s363 + $0x1ff0] sm:$0xff]
        %v1502 = vld [vmem:[%s363 + $0x1ff8] sm:$0xff]
        %v1503 = vld [vmem:[%s372] sm:$0xff]
        %v1505 = vlaneseq
        %v1506 = vshrl.u32 %v1505, 7
        %v1507 = vsub.s32 0, %v1506
        %v1508 = vrot.slane %v1503, %v1507
        %v1509 = vlaneseq
        %v1510 = vshrl.u32 %v1509, 7
        %v1511 = vsub.s32 1, %v1510
        %v1512 = vrot.slane %v1503, %v1511
        %v1513 = vlaneseq
        %v1514 = vshrl.u32 %v1513, 7
        %v1515 = vsub.s32 2, %v1514
        %v1516 = vrot.slane %v1503, %v1515
        %v1517 = vlaneseq
        %v1518 = vshrl.u32 %v1517, 7
        %v1519 = vsub.s32 3, %v1518
        %v1520 = vrot.slane %v1503, %v1519
        %v1521 = vlaneseq
        %v1522 = vshrl.u32 %v1521, 7
        %v1523 = vsub.s32 4, %v1522
        %v1524 = vrot.slane %v1503, %v1523
        %v1525 = vlaneseq
        %v1526 = vshrl.u32 %v1525, 7
        %v1527 = vsub.s32 5, %v1526
        %v1528 = vrot.slane %v1503, %v1527
        %v1529 = vlaneseq
        %v1530 = vshrl.u32 %v1529, 7
        %v1531 = vsub.s32 6, %v1530
        %v1532 = vrot.slane %v1503, %v1531
        %v1533 = vlaneseq
        %v1534 = vshrl.u32 %v1533, 7
        %v1535 = vsub.s32 7, %v1534
        %v1536 = vrot.slane %v1503, %v1535
        %1545 = vmatprep.subr.mxu0 %v480
        %1546 = vmatpush1.msra.mxu0 %v479
        %1547 = vmatprep.subr.mxu0 %v488
        %1548 = vmatpush1.msra.mxu0 %v487
        %1549 = vmatprep.subr.mxu0 %v496
        %1550 = vmatpush1.msra.mxu0 %v495
        %1551 = vmatprep.subr.mxu0 %v504
        %1552 = vmatpush1.msra.mxu0 %v503
        %1553 = vmatprep.subr.mxu0 %v512
        %1554 = vmatpush1.msra.mxu0 %v511
        %1555 = vmatprep.subr.mxu0 %v520
        %1556 = vmatpush1.msra.mxu0 %v519
        %1557 = vmatprep.subr.mxu0 %v528
        %1558 = vmatpush1.msra.mxu0 %v527
        %1559 = vmatprep.subr.mxu0 %v536
        %1560 = vmatpush1.msra.mxu0 %v535
        %1561 = vmatprep.subr.mxu0 %v544
        %1562 = vmatpush1.msra.mxu0 %v543
        %1563 = vmatprep.subr.mxu0 %v552
        %1564 = vmatpush1.msra.mxu0 %v551
        %1565 = vmatprep.subr.mxu0 %v560
        %1566 = vmatpush1.msra.mxu0 %v559
        %1567 = vmatprep.subr.mxu0 %v568
        %1568 = vmatpush1.msra.mxu0 %v567
        %1569 = vmatprep.subr.mxu0 %v576
        %1570 = vmatpush1.msra.mxu0 %v575
        %1571 = vmatprep.subr.mxu0 %v584
        %1572 = vmatpush1.msra.mxu0 %v583
        %1573 = vmatprep.subr.mxu0 %v592
        %1574 = vmatpush1.msra.mxu0 %v591
        %1575 = vmatprep.subr.mxu0 %v600
        %1576 = vmatpush1.msra.mxu0 %v599
        %1577 = vmatprep.subr.mxu0 %v608
        %1578 = vmatpush1.msra.mxu0 %v607
        %1579 = vmatprep.subr.mxu0 %v616
        %1580 = vmatpush1.msra.mxu0 %v615
        %1581 = vmatprep.subr.mxu0 %v624
        %1582 = vmatpush1.msra.mxu0 %v623
        %1583 = vmatprep.subr.mxu0 %v632
        %1584 = vmatpush1.msra.mxu0 %v631
        %1585 = vmatprep.subr.mxu0 %v640
        %1586 = vmatpush1.msra.mxu0 %v639
        %1587 = vmatprep.subr.mxu0 %v648
        %1588 = vmatpush1.msra.mxu0 %v647
        %1589 = vmatprep.subr.mxu0 %v656
        %1590 = vmatpush1.msra.mxu0 %v655
        %1591 = vmatprep.subr.mxu0 %v664
        %1592 = vmatpush1.msra.mxu0 %v663
        %1593 = vmatprep.subr.mxu0 %v672
        %1594 = vmatpush1.msra.mxu0 %v671
        %1595 = vmatprep.subr.mxu0 %v680
        %1596 = vmatpush1.msra.mxu0 %v679
        %1597 = vmatprep.subr.mxu0 %v688
        %1598 = vmatpush1.msra.mxu0 %v687
        %1599 = vmatprep.subr.mxu0 %v696
        %1600 = vmatpush1.msra.mxu0 %v695
        %1601 = vmatprep.subr.mxu0 %v704
        %1602 = vmatpush1.msra.mxu0 %v703
        %1603 = vmatprep.subr.mxu0 %v712
        %1604 = vmatpush1.msra.mxu0 %v711
        %1605 = vmatprep.subr.mxu0 %v720
        %1606 = vmatpush1.msra.mxu0 %v719
        %1607 = vmatprep.subr.mxu0 %v728
        %1608 = vmatpush1.msra.mxu0 %v727
        %1609 = vmatprep.mubr.f32.mxu0 %v472
        %1610 = vmatmul.mubr.f32.gmra.mrb[0].mxu0 %v471
        %v1611 = vpop.f32.mrb[0].mxu0
        %v1612 = vadd.f32 %v1508, %v1611
        %v1613 = vpop.f32.mrb[0].mxu0
        %v1614 = vadd.f32 %v1512, %v1613
        %1615 = vdwg.mxu0
        %1616 = vmatprep.subr.mxu0 %v736
        %1617 = vmatpush1.msra.mxu0 %v735
        %1618 = vmatprep.subr.mxu0 %v744
        %1619 = vmatpush1.msra.mxu0 %v743
        %1620 = vmatprep.subr.mxu0 %v752
        %1621 = vmatpush1.msra.mxu0 %v751
        %1622 = vmatprep.subr.mxu0 %v760
        %1623 = vmatpush1.msra.mxu0 %v759
        %1624 = vmatprep.subr.mxu0 %v768
        %1625 = vmatpush1.msra.mxu0 %v767
        %1626 = vmatprep.subr.mxu0 %v776
        %1627 = vmatpush1.msra.mxu0 %v775
        %1628 = vmatprep.subr.mxu0 %v784
        %1629 = vmatpush1.msra.mxu0 %v783
        %1630 = vmatprep.subr.mxu0 %v792
        %1631 = vmatpush1.msra.mxu0 %v791
        %1632 = vmatprep.subr.mxu0 %v800
        %1633 = vmatpush1.msra.mxu0 %v799
        %1634 = vmatprep.subr.mxu0 %v808
        %1635 = vmatpush1.msra.mxu0 %v807
        %1636 = vmatprep.subr.mxu0 %v816
        %1637 = vmatpush1.msra.mxu0 %v815
        %1638 = vmatprep.subr.mxu0 %v824
        %1639 = vmatpush1.msra.mxu0 %v823
        %1640 = vmatprep.subr.mxu0 %v832
        %1641 = vmatpush1.msra.mxu0 %v831
        %1642 = vmatprep.subr.mxu0 %v840
        %1643 = vmatpush1.msra.mxu0 %v839
        %1644 = vmatprep.subr.mxu0 %v848
        %1645 = vmatpush1.msra.mxu0 %v847
        %1646 = vmatprep.subr.mxu0 %v856
        %1647 = vmatpush1.msra.mxu0 %v855
        %1648 = vmatprep.subr.mxu0 %v864
        %1649 = vmatpush1.msra.mxu0 %v863
        %1650 = vmatprep.subr.mxu0 %v872
        %1651 = vmatpush1.msra.mxu0 %v871
        %1652 = vmatprep.subr.mxu0 %v880
        %1653 = vmatpush1.msra.mxu0 %v879
        %1654 = vmatprep.subr.mxu0 %v888
        %1655 = vmatpush1.msra.mxu0 %v887
        %1656 = vmatprep.subr.mxu0 %v896
        %1657 = vmatpush1.msra.mxu0 %v895
        %1658 = vmatprep.subr.mxu0 %v904
        %1659 = vmatpush1.msra.mxu0 %v903
        %1660 = vmatprep.subr.mxu0 %v912
        %1661 = vmatpush1.msra.mxu0 %v911
        %1662 = vmatprep.subr.mxu0 %v920
        %1663 = vmatpush1.msra.mxu0 %v919
        %1664 = vmatprep.subr.mxu0 %v928
        %1665 = vmatpush1.msra.mxu0 %v927
        %1666 = vmatprep.subr.mxu0 %v936
        %1667 = vmatpush1.msra.mxu0 %v935
        %1668 = vmatprep.subr.mxu0 %v944
        %1669 = vmatpush1.msra.mxu0 %v943
        %1670 = vmatprep.subr.mxu0 %v952
        %1671 = vmatpush1.msra.mxu0 %v951
        %1672 = vmatprep.subr.mxu0 %v960
        %1673 = vmatpush1.msra.mxu0 %v959
        %1674 = vmatprep.subr.mxu0 %v968
        %1675 = vmatpush1.msra.mxu0 %v967
        %1676 = vmatprep.subr.mxu0 %v976
        %1677 = vmatpush1.msra.mxu0 %v975
        %1678 = vmatprep.subr.mxu0 %v984
        %1679 = vmatpush1.msra.mxu0 %v983
        %1680 = vmatprep.mubr.f32.mxu0 %v474
        %1681 = vmatmul.mubr.f32.gmra.mrb[0].mxu0 %v473
        %v1682 = vpop.f32.mrb[0].mxu0
        %v1683 = vadd.f32 %v1612, %v1682
        %v1684 = vpop.f32.mrb[0].mxu0
        %v1685 = vadd.f32 %v1614, %v1684
        %1686 = vdwg.mxu0
        %1687 = vmatprep.subr.mxu0 %v992
        %1688 = vmatpush1.msra.mxu0 %v991
        %1689 = vmatprep.subr.mxu0 %v1000
        %1690 = vmatpush1.msra.mxu0 %v999
        %1691 = vmatprep.subr.mxu0 %v1008
        %1692 = vmatpush1.msra.mxu0 %v1007
        %1693 = vmatprep.subr.mxu0 %v1016
        %1694 = vmatpush1.msra.mxu0 %v1015
        %1695 = vmatprep.subr.mxu0 %v1024
        %1696 = vmatpush1.msra.mxu0 %v1023
        %1697 = vmatprep.subr.mxu0 %v1032
        %1698 = vmatpush1.msra.mxu0 %v1031
        %1699 = vmatprep.subr.mxu0 %v1040
        %1700 = vmatpush1.msra.mxu0 %v1039
        %1701 = vmatprep.subr.mxu0 %v1048
        %1702 = vmatpush1.msra.mxu0 %v1047
        %1703 = vmatprep.subr.mxu0 %v1056
        %1704 = vmatpush1.msra.mxu0 %v1055
        %1705 = vmatprep.subr.mxu0 %v1064
        %1706 = vmatpush1.msra.mxu0 %v1063
        %1707 = vmatprep.subr.mxu0 %v1072
        %1708 = vmatpush1.msra.mxu0 %v1071
        %1709 = vmatprep.subr.mxu0 %v1080
        %1710 = vmatpush1.msra.mxu0 %v1079
        %1711 = vmatprep.subr.mxu0 %v1088
        %1712 = vmatpush1.msra.mxu0 %v1087
        %1713 = vmatprep.subr.mxu0 %v1096
        %1714 = vmatpush1.msra.mxu0 %v1095
        %1715 = vmatprep.subr.mxu0 %v1104
        %1716 = vmatpush1.msra.mxu0 %v1103
        %1717 = vmatprep.subr.mxu0 %v1112
        %1718 = vmatpush1.msra.mxu0 %v1111
        %1719 = vmatprep.subr.mxu0 %v1120
        %1720 = vmatpush1.msra.mxu0 %v1119
        %1721 = vmatprep.subr.mxu0 %v1128
        %1722 = vmatpush1.msra.mxu0 %v1127
        %1723 = vmatprep.subr.mxu0 %v1136
        %1724 = vmatpush1.msra.mxu0 %v1135
        %1725 = vmatprep.subr.mxu0 %v1144
        %1726 = vmatpush1.msra.mxu0 %v1143
        %1727 = vmatprep.subr.mxu0 %v1152
        %1728 = vmatpush1.msra.mxu0 %v1151
        %1729 = vmatprep.subr.mxu0 %v1160
        %1730 = vmatpush1.msra.mxu0 %v1159
        %1731 = vmatprep.subr.mxu0 %v1168
        %1732 = vmatpush1.msra.mxu0 %v1167
        %1733 = vmatprep.subr.mxu0 %v1176
        %1734 = vmatpush1.msra.mxu0 %v1175
        %1735 = vmatprep.subr.mxu0 %v1184
        %1736 = vmatpush1.msra.mxu0 %v1183
        %1737 = vmatprep.subr.mxu0 %v1192
        %1738 = vmatpush1.msra.mxu0 %v1191
        %1739 = vmatprep.subr.mxu0 %v1200
        %1740 = vmatpush1.msra.mxu0 %v1199
        %1741 = vmatprep.subr.mxu0 %v1208
        %1742 = vmatpush1.msra.mxu0 %v1207
        %1743 = vmatprep.subr.mxu0 %v1216
        %1744 = vmatpush1.msra.mxu0 %v1215
        %1745 = vmatprep.subr.mxu0 %v1224
        %1746 = vmatpush1.msra.mxu0 %v1223
        %1747 = vmatprep.subr.mxu0 %v1232
        %1748 = vmatpush1.msra.mxu0 %v1231
        %1749 = vmatprep.subr.mxu0 %v1240
        %1750 = vmatpush1.msra.mxu0 %v1239
        %1751 = vmatprep.mubr.f32.mxu0 %v476
        %1752 = vmatmul.mubr.f32.gmra.mrb[0].mxu0 %v475
        %v1753 = vpop.f32.mrb[0].mxu0
        %v1754 = vadd.f32 %v1683, %v1753
        %v1755 = vpop.f32.mrb[0].mxu0
        %v1756 = vadd.f32 %v1685, %v1755
        %1757 = vdwg.mxu0
        %1758 = vmatprep.subr.mxu0 %v1248
        %1759 = vmatpush1.msra.mxu0 %v1247
        %1760 = vmatprep.subr.mxu0 %v1256
        %1761 = vmatpush1.msra.mxu0 %v1255
        %1762 = vmatprep.subr.mxu0 %v1264
        %1763 = vmatpush1.msra.mxu0 %v1263
        %1764 = vmatprep.subr.mxu0 %v1272
        %1765 = vmatpush1.msra.mxu0 %v1271
        %1766 = vmatprep.subr.mxu0 %v1280
        %1767 = vmatpush1.msra.mxu0 %v1279
        %1768 = vmatprep.subr.mxu0 %v1288
        %1769 = vmatpush1.msra.mxu0 %v1287
        %1770 = vmatprep.subr.mxu0 %v1296
        %1771 = vmatpush1.msra.mxu0 %v1295
        %1772 = vmatprep.subr.mxu0 %v1304
        %1773 = vmatpush1.msra.mxu0 %v1303
        %1774 = vmatprep.subr.mxu0 %v1312
        %1775 = vmatpush1.msra.mxu0 %v1311
        %1776 = vmatprep.subr.mxu0 %v1320
        %1777 = vmatpush1.msra.mxu0 %v1319
        %1778 = vmatprep.subr.mxu0 %v1328
        %1779 = vmatpush1.msra.mxu0 %v1327
        %1780 = vmatprep.subr.mxu0 %v1336
        %1781 = vmatpush1.msra.mxu0 %v1335
        %1782 = vmatprep.subr.mxu0 %v1344
        %1783 = vmatpush1.msra.mxu0 %v1343
        %1784 = vmatprep.subr.mxu0 %v1352
        %1785 = vmatpush1.msra.mxu0 %v1351
        %1786 = vmatprep.subr.mxu0 %v1360
        %1787 = vmatpush1.msra.mxu0 %v1359
        %1788 = vmatprep.subr.mxu0 %v1368
        %1789 = vmatpush1.msra.mxu0 %v1367
        %1790 = vmatprep.subr.mxu0 %v1376
        %1791 = vmatpush1.msra.mxu0 %v1375
        %1792 = vmatprep.subr.mxu0 %v1384
        %1793 = vmatpush1.msra.mxu0 %v1383
        %1794 = vmatprep.subr.mxu0 %v1392
        %1795 = vmatpush1.msra.mxu0 %v1391
        %1796 = vmatprep.subr.mxu0 %v1400
        %1797 = vmatpush1.msra.mxu0 %v1399
        %1798 = vmatprep.subr.mxu0 %v1408
        %1799 = vmatpush1.msra.mxu0 %v1407
        %1800 = vmatprep.subr.mxu0 %v1416
        %1801 = vmatpush1.msra.mxu0 %v1415
        %1802 = vmatprep.subr.mxu0 %v1424
        %1803 = vmatpush1.msra.mxu0 %v1423
        %1804 = vmatprep.subr.mxu0 %v1432
        %1805 = vmatpush1.msra.mxu0 %v1431
        %1806 = vmatprep.subr.mxu0 %v1440
        %1807 = vmatpush1.msra.mxu0 %v1439
        %1808 = vmatprep.subr.mxu0 %v1448
        %1809 = vmatpush1.msra.mxu0 %v1447
        %1810 = vmatprep.subr.mxu0 %v1456
        %1811 = vmatpush1.msra.mxu0 %v1455
        %1812 = vmatprep.subr.mxu0 %v1464
        %1813 = vmatpush1.msra.mxu0 %v1463
        %1814 = vmatprep.subr.mxu0 %v1472
        %1815 = vmatpush1.msra.mxu0 %v1471
        %1816 = vmatprep.subr.mxu0 %v1480
        %1817 = vmatpush1.msra.mxu0 %v1479
        %1818 = vmatprep.subr.mxu0 %v1488
        %1819 = vmatpush1.msra.mxu0 %v1487
        %1820 = vmatprep.subr.mxu0 %v1496
        %1821 = vmatpush1.msra.mxu0 %v1495
        %1822 = vmatprep.mubr.f32.mxu0 %v478
        %1823 = vmatmul.mubr.f32.gmra.mrb[0].mxu0 %v477
        %v1824 = vpop.f32.mrb[0].mxu0
        %v1825 = vadd.f32 %v1754, %v1824
        %v1826 = vpop.f32.mrb[0].mxu0
        %v1827 = vadd.f32 %v1756, %v1826
        %1828 = vdwg.mxu0
        %1829 = vmatprep.subr.mxu0 %v482
        %1830 = vmatpush1.msra.mxu0 %v481
        %1831 = vmatprep.subr.mxu0 %v490
        %1832 = vmatpush1.msra.mxu0 %v489
        %1833 = vmatprep.subr.mxu0 %v498
        %1834 = vmatpush1.msra.mxu0 %v497
        %1835 = vmatprep.subr.mxu0 %v506
        %1836 = vmatpush1.msra.mxu0 %v505
        %1837 = vmatprep.subr.mxu0 %v514
        %1838 = vmatpush1.msra.mxu0 %v513
        %1839 = vmatprep.subr.mxu0 %v522
        %1840 = vmatpush1.msra.mxu0 %v521
        %1841 = vmatprep.subr.mxu0 %v530
        %1842 = vmatpush1.msra.mxu0 %v529
        %1843 = vmatprep.subr.mxu0 %v538
        %1844 = vmatpush1.msra.mxu0 %v537
        %1845 = vmatprep.subr.mxu0 %v546
        %1846 = vmatpush1.msra.mxu0 %v545
        %1847 = vmatprep.subr.mxu0 %v554
        %1848 = vmatpush1.msra.mxu0 %v553
        %1849 = vmatprep.subr.mxu0 %v562
        %1850 = vmatpush1.msra.mxu0 %v561
        %1851 = vmatprep.subr.mxu0 %v570
        %1852 = vmatpush1.msra.mxu0 %v569
        %1853 = vmatprep.subr.mxu0 %v578
        %1854 = vmatpush1.msra.mxu0 %v577
        %1855 = vmatprep.subr.mxu0 %v586
        %1856 = vmatpush1.msra.mxu0 %v585
        %1857 = vmatprep.subr.mxu0 %v594
        %1858 = vmatpush1.msra.mxu0 %v593
        %1859 = vmatprep.subr.mxu0 %v602
        %1860 = vmatpush1.msra.mxu0 %v601
        %1861 = vmatprep.subr.mxu0 %v610
        %1862 = vmatpush1.msra.mxu0 %v609
        %1863 = vmatprep.subr.mxu0 %v618
        %1864 = vmatpush1.msra.mxu0 %v617
        %1865 = vmatprep.subr.mxu0 %v626
        %1866 = vmatpush1.msra.mxu0 %v625
        %1867 = vmatprep.subr.mxu0 %v634
        %1868 = vmatpush1.msra.mxu0 %v633
        %1869 = vmatprep.subr.mxu0 %v642
        %1870 = vmatpush1.msra.mxu0 %v641
        %1871 = vmatprep.subr.mxu0 %v650
        %1872 = vmatpush1.msra.mxu0 %v649
        %1873 = vmatprep.subr.mxu0 %v658
        %1874 = vmatpush1.msra.mxu0 %v657
        %1875 = vmatprep.subr.mxu0 %v666
        %1876 = vmatpush1.msra.mxu0 %v665
        %1877 = vmatprep.subr.mxu0 %v674
        %1878 = vmatpush1.msra.mxu0 %v673
        %1879 = vmatprep.subr.mxu0 %v682
        %1880 = vmatpush1.msra.mxu0 %v681
        %1881 = vmatprep.subr.mxu0 %v690
        %1882 = vmatpush1.msra.mxu0 %v689
        %1883 = vmatprep.subr.mxu0 %v698
        %1884 = vmatpush1.msra.mxu0 %v697
        %1885 = vmatprep.subr.mxu0 %v706
        %1886 = vmatpush1.msra.mxu0 %v705
        %1887 = vmatprep.subr.mxu0 %v714
        %1888 = vmatpush1.msra.mxu0 %v713
        %1889 = vmatprep.subr.mxu0 %v722
        %1890 = vmatpush1.msra.mxu0 %v721
        %1891 = vmatprep.subr.mxu0 %v730
        %1892 = vmatpush1.msra.mxu0 %v729
        %1893 = vmatprep.mubr.f32.mxu0 %v472
        %1894 = vmatmul.mubr.f32.gmra.mrb[0].mxu0 %v471
        %v1895 = vpop.f32.mrb[0].mxu0
        %v1896 = vadd.f32 %v1516, %v1895
        %v1897 = vpop.f32.mrb[0].mxu0
        %v1898 = vadd.f32 %v1520, %v1897
        %1899 = vdwg.mxu0
        %1900 = vmatprep.subr.mxu0 %v738
        %1901 = vmatpush1.msra.mxu0 %v737
        %1902 = vmatprep.subr.mxu0 %v746
        %1903 = vmatpush1.msra.mxu0 %v745
        %1904 = vmatprep.subr.mxu0 %v754
        %1905 = vmatpush1.msra.mxu0 %v753
        %1906 = vmatprep.subr.mxu0 %v762
        %1907 = vmatpush1.msra.mxu0 %v761
        %1908 = vmatprep.subr.mxu0 %v770
        %1909 = vmatpush1.msra.mxu0 %v769
        %1910 = vmatprep.subr.mxu0 %v778
        %1911 = vmatpush1.msra.mxu0 %v777
        %1912 = vmatprep.subr.mxu0 %v786
        %1913 = vmatpush1.msra.mxu0 %v785
        %1914 = vmatprep.subr.mxu0 %v794
        %1915 = vmatpush1.msra.mxu0 %v793
        %1916 = vmatprep.subr.mxu0 %v802
        %1917 = vmatpush1.msra.mxu0 %v801
        %1918 = vmatprep.subr.mxu0 %v810
        %1919 = vmatpush1.msra.mxu0 %v809
        %1920 = vmatprep.subr.mxu0 %v818
        %1921 = vmatpush1.msra.mxu0 %v817
        %1922 = vmatprep.subr.mxu0 %v826
        %1923 = vmatpush1.msra.mxu0 %v825
        %1924 = vmatprep.subr.mxu0 %v834
        %1925 = vmatpush1.msra.mxu0 %v833
        %1926 = vmatprep.subr.mxu0 %v842
        %1927 = vmatpush1.msra.mxu0 %v841
        %1928 = vmatprep.subr.mxu0 %v850
        %1929 = vmatpush1.msra.mxu0 %v849
        %1930 = vmatprep.subr.mxu0 %v858
        %1931 = vmatpush1.msra.mxu0 %v857
        %1932 = vmatprep.subr.mxu0 %v866
        %1933 = vmatpush1.msra.mxu0 %v865
        %1934 = vmatprep.subr.mxu0 %v874
        %1935 = vmatpush1.msra.mxu0 %v873
        %1936 = vmatprep.subr.mxu0 %v882
        %1937 = vmatpush1.msra.mxu0 %v881
        %1938 = vmatprep.subr.mxu0 %v890
        %1939 = vmatpush1.msra.mxu0 %v889
        %1940 = vmatprep.subr.mxu0 %v898
        %1941 = vmatpush1.msra.mxu0 %v897
        %1942 = vmatprep.subr.mxu0 %v906
        %1943 = vmatpush1.msra.mxu0 %v905
        %1944 = vmatprep.subr.mxu0 %v914
        %1945 = vmatpush1.msra.mxu0 %v913
        %1946 = vmatprep.subr.mxu0 %v922
        %1947 = vmatpush1.msra.mxu0 %v921
        %1948 = vmatprep.subr.mxu0 %v930
        %1949 = vmatpush1.msra.mxu0 %v929
        %1950 = vmatprep.subr.mxu0 %v938
        %1951 = vmatpush1.msra.mxu0 %v937
        %1952 = vmatprep.subr.mxu0 %v946
        %1953 = vmatpush1.msra.mxu0 %v945
        %1954 = vmatprep.subr.mxu0 %v954
        %1955 = vmatpush1.msra.mxu0 %v953
        %1956 = vmatprep.subr.mxu0 %v962
        %1957 = vmatpush1.msra.mxu0 %v961
        %1958 = vmatprep.subr.mxu0 %v970
        %1959 = vmatpush1.msra.mxu0 %v969
        %1960 = vmatprep.subr.mxu0 %v978
        %1961 = vmatpush1.msra.mxu0 %v977
        %1962 = vmatprep.subr.mxu0 %v986
        %1963 = vmatpush1.msra.mxu0 %v985
        %1964 = vmatprep.mubr.f32.mxu0 %v474
        %1965 = vmatmul.mubr.f32.gmra.mrb[0].mxu0 %v473
        %v1966 = vpop.f32.mrb[0].mxu0
        %v1967 = vadd.f32 %v1896, %v1966
        %v1968 = vpop.f32.mrb[0].mxu0
        %v1969 = vadd.f32 %v1898, %v1968
        %1970 = vdwg.mxu0
        %1971 = vmatprep.subr.mxu0 %v994
        %1972 = vmatpush1.msra.mxu0 %v993
        %1973 = vmatprep.subr.mxu0 %v1002
        %1974 = vmatpush1.msra.mxu0 %v1001
        %1975 = vmatprep.subr.mxu0 %v1010
        %1976 = vmatpush1.msra.mxu0 %v1009
        %1977 = vmatprep.subr.mxu0 %v1018
        %1978 = vmatpush1.msra.mxu0 %v1017
        %1979 = vmatprep.subr.mxu0 %v1026
        %1980 = vmatpush1.msra.mxu0 %v1025
        %1981 = vmatprep.subr.mxu0 %v1034
        %1982 = vmatpush1.msra.mxu0 %v1033
        %1983 = vmatprep.subr.mxu0 %v1042
        %1984 = vmatpush1.msra.mxu0 %v1041
        %1985 = vmatprep.subr.mxu0 %v1050
        %1986 = vmatpush1.msra.mxu0 %v1049
        %1987 = vmatprep.subr.mxu0 %v1058
        %1988 = vmatpush1.msra.mxu0 %v1057
        %1989 = vmatprep.subr.mxu0 %v1066
        %1990 = vmatpush1.msra.mxu0 %v1065
        %1991 = vmatprep.subr.mxu0 %v1074
        %1992 = vmatpush1.msra.mxu0 %v1073
        %1993 = vmatprep.subr.mxu0 %v1082
        %1994 = vmatpush1.msra.mxu0 %v1081
        %1995 = vmatprep.subr.mxu0 %v1090
        %1996 = vmatpush1.msra.mxu0 %v1089
        %1997 = vmatprep.subr.mxu0 %v1098
        %1998 = vmatpush1.msra.mxu0 %v1097
        %1999 = vmatprep.subr.mxu0 %v1106
        %2000 = vmatpush1.msra.mxu0 %v1105
        %2001 = vmatprep.subr.mxu0 %v1114
        %2002 = vmatpush1.msra.mxu0 %v1113
        %2003 = vmatprep.subr.mxu0 %v1122
        %2004 = vmatpush1.msra.mxu0 %v1121
        %2005 = vmatprep.subr.mxu0 %v1130
        %2006 = vmatpush1.msra.mxu0 %v1129
        %2007 = vmatprep.subr.mxu0 %v1138
        %2008 = vmatpush1.msra.mxu0 %v1137
        %2009 = vmatprep.subr.mxu0 %v1146
        %2010 = vmatpush1.msra.mxu0 %v1145
        %2011 = vmatprep.subr.mxu0 %v1154
        %2012 = vmatpush1.msra.mxu0 %v1153
        %2013 = vmatprep.subr.mxu0 %v1162
        %2014 = vmatpush1.msra.mxu0 %v1161
        %2015 = vmatprep.subr.mxu0 %v1170
        %2016 = vmatpush1.msra.mxu0 %v1169
        %2017 = vmatprep.subr.mxu0 %v1178
        %2018 = vmatpush1.msra.mxu0 %v1177
        %2019 = vmatprep.subr.mxu0 %v1186
        %2020 = vmatpush1.msra.mxu0 %v1185
        %2021 = vmatprep.subr.mxu0 %v1194
        %2022 = vmatpush1.msra.mxu0 %v1193
        %2023 = vmatprep.subr.mxu0 %v1202
        %2024 = vmatpush1.msra.mxu0 %v1201
        %2025 = vmatprep.subr.mxu0 %v1210
        %2026 = vmatpush1.msra.mxu0 %v1209
        %2027 = vmatprep.subr.mxu0 %v1218
        %2028 = vmatpush1.msra.mxu0 %v1217
        %2029 = vmatprep.subr.mxu0 %v1226
        %2030 = vmatpush1.msra.mxu0 %v1225
        %2031 = vmatprep.subr.mxu0 %v1234
        %2032 = vmatpush1.msra.mxu0 %v1233
        %2033 = vmatprep.subr.mxu0 %v1242
        %2034 = vmatpush1.msra.mxu0 %v1241
        %2035 = vmatprep.mubr.f32.mxu0 %v476
        %2036 = vmatmul.mubr.f32.gmra.mrb[0].mxu0 %v475
        %v2037 = vpop.f32.mrb[0].mxu0
        %v2038 = vadd.f32 %v1967, %v2037
        %v2039 = vpop.f32.mrb[0].mxu0
        %v2040 = vadd.f32 %v1969, %v2039
        %2041 = vdwg.mxu0
        %2042 = vmatprep.subr.mxu0 %v1250
        %2043 = vmatpush1.msra.mxu0 %v1249
        %2044 = vmatprep.subr.mxu0 %v1258
        %2045 = vmatpush1.msra.mxu0 %v1257
        %2046 = vmatprep.subr.mxu0 %v1266
        %2047 = vmatpush1.msra.mxu0 %v1265
        %2048 = vmatprep.subr.mxu0 %v1274
        %2049 = vmatpush1.msra.mxu0 %v1273
        %2050 = vmatprep.subr.mxu0 %v1282
        %2051 = vmatpush1.msra.mxu0 %v1281
        %2052 = vmatprep.subr.mxu0 %v1290
        %2053 = vmatpush1.msra.mxu0 %v1289
        %2054 = vmatprep.subr.mxu0 %v1298
        %2055 = vmatpush1.msra.mxu0 %v1297
        %2056 = vmatprep.subr.mxu0 %v1306
        %2057 = vmatpush1.msra.mxu0 %v1305
        %2058 = vmatprep.subr.mxu0 %v1314
        %2059 = vmatpush1.msra.mxu0 %v1313
        %2060 = vmatprep.subr.mxu0 %v1322
        %2061 = vmatpush1.msra.mxu0 %v1321
        %2062 = vmatprep.subr.mxu0 %v1330
        %2063 = vmatpush1.msra.mxu0 %v1329
        %2064 = vmatprep.subr.mxu0 %v1338
        %2065 = vmatpush1.msra.mxu0 %v1337
        %2066 = vmatprep.subr.mxu0 %v1346
        %2067 = vmatpush1.msra.mxu0 %v1345
        %2068 = vmatprep.subr.mxu0 %v1354
        %2069 = vmatpush1.msra.mxu0 %v1353
        %2070 = vmatprep.subr.mxu0 %v1362
        %2071 = vmatpush1.msra.mxu0 %v1361
        %2072 = vmatprep.subr.mxu0 %v1370
        %2073 = vmatpush1.msra.mxu0 %v1369
        %2074 = vmatprep.subr.mxu0 %v1378
        %2075 = vmatpush1.msra.mxu0 %v1377
        %2076 = vmatprep.subr.mxu0 %v1386
        %2077 = vmatpush1.msra.mxu0 %v1385
        %2078 = vmatprep.subr.mxu0 %v1394
        %2079 = vmatpush1.msra.mxu0 %v1393
        %2080 = vmatprep.subr.mxu0 %v1402
        %2081 = vmatpush1.msra.mxu0 %v1401
        %2082 = vmatprep.subr.mxu0 %v1410
        %2083 = vmatpush1.msra.mxu0 %v1409
        %2084 = vmatprep.subr.mxu0 %v1418
        %2085 = vmatpush1.msra.mxu0 %v1417
        %2086 = vmatprep.subr.mxu0 %v1426
        %2087 = vmatpush1.msra.mxu0 %v1425
        %2088 = vmatprep.subr.mxu0 %v1434
        %2089 = vmatpush1.msra.mxu0 %v1433
        %2090 = vmatprep.subr.mxu0 %v1442
        %2091 = vmatpush1.msra.mxu0 %v1441
        %2092 = vmatprep.subr.mxu0 %v1450
        %2093 = vmatpush1.msra.mxu0 %v1449
        %2094 = vmatprep.subr.mxu0 %v1458
        %2095 = vmatpush1.msra.mxu0 %v1457
        %2096 = vmatprep.subr.mxu0 %v1466
        %2097 = vmatpush1.msra.mxu0 %v1465
        %2098 = vmatprep.subr.mxu0 %v1474
        %2099 = vmatpush1.msra.mxu0 %v1473
        %2100 = vmatprep.subr.mxu0 %v1482
        %2101 = vmatpush1.msra.mxu0 %v1481
        %2102 = vmatprep.subr.mxu0 %v1490
        %2103 = vmatpush1.msra.mxu0 %v1489
        %2104 = vmatprep.subr.mxu0 %v1498
        %2105 = vmatpush1.msra.mxu0 %v1497
        %2106 = vmatprep.mubr.f32.mxu0 %v478
        %2107 = vmatmul.mubr.f32.gmra.mrb[0].mxu0 %v477
        %v2108 = vpop.f32.mrb[0].mxu0
        %v2109 = vadd.f32 %v2038, %v2108
        %v2110 = vpop.f32.mrb[0].mxu0
        %v2111 = vadd.f32 %v2040, %v2110
        %2112 = vdwg.mxu0
        %2113 = vmatprep.subr.mxu0 %v484
        %2114 = vmatpush1.msra.mxu0 %v483
        %2115 = vmatprep.subr.mxu0 %v492
        %2116 = vmatpush1.msra.mxu0 %v491
        %2117 = vmatprep.subr.mxu0 %v500
        %2118 = vmatpush1.msra.mxu0 %v499
        %2119 = vmatprep.subr.mxu0 %v508
        %2120 = vmatpush1.msra.mxu0 %v507
        %2121 = vmatprep.subr.mxu0 %v516
        %2122 = vmatpush1.msra.mxu0 %v515
        %2123 = vmatprep.subr.mxu0 %v524
        %2124 = vmatpush1.msra.mxu0 %v523
        %2125 = vmatprep.subr.mxu0 %v532
        %2126 = vmatpush1.msra.mxu0 %v531
        %2127 = vmatprep.subr.mxu0 %v540
        %2128 = vmatpush1.msra.mxu0 %v539
        %2129 = vmatprep.subr.mxu0 %v548
        %2130 = vmatpush1.msra.mxu0 %v547
        %2131 = vmatprep.subr.mxu0 %v556
        %2132 = vmatpush1.msra.mxu0 %v555
        %2133 = vmatprep.subr.mxu0 %v564
        %2134 = vmatpush1.msra.mxu0 %v563
        %2135 = vmatprep.subr.mxu0 %v572
        %2136 = vmatpush1.msra.mxu0 %v571
        %2137 = vmatprep.subr.mxu0 %v580
        %2138 = vmatpush1.msra.mxu0 %v579
        %2139 = vmatprep.subr.mxu0 %v588
        %2140 = vmatpush1.msra.mxu0 %v587
        %2141 = vmatprep.subr.mxu0 %v596
        %2142 = vmatpush1.msra.mxu0 %v595
        %2143 = vmatprep.subr.mxu0 %v604
        %2144 = vmatpush1.msra.mxu0 %v603
        %2145 = vmatprep.subr.mxu0 %v612
        %2146 = vmatpush1.msra.mxu0 %v611
        %2147 = vmatprep.subr.mxu0 %v620
        %2148 = vmatpush1.msra.mxu0 %v619
        %2149 = vmatprep.subr.mxu0 %v628
        %2150 = vmatpush1.msra.mxu0 %v627
        %2151 = vmatprep.subr.mxu0 %v636
        %2152 = vmatpush1.msra.mxu0 %v635
        %2153 = vmatprep.subr.mxu0 %v644
        %2154 = vmatpush1.msra.mxu0 %v643
        %2155 = vmatprep.subr.mxu0 %v652
        %2156 = vmatpush1.msra.mxu0 %v651
        %2157 = vmatprep.subr.mxu0 %v660
        %2158 = vmatpush1.msra.mxu0 %v659
        %2159 = vmatprep.subr.mxu0 %v668
        %2160 = vmatpush1.msra.mxu0 %v667
        %2161 = vmatprep.subr.mxu0 %v676
        %2162 = vmatpush1.msra.mxu0 %v675
        %2163 = vmatprep.subr.mxu0 %v684
        %2164 = vmatpush1.msra.mxu0 %v683
        %2165 = vmatprep.subr.mxu0 %v692
        %2166 = vmatpush1.msra.mxu0 %v691
        %2167 = vmatprep.subr.mxu0 %v700
        %2168 = vmatpush1.msra.mxu0 %v699
        %2169 = vmatprep.subr.mxu0 %v708
        %2170 = vmatpush1.msra.mxu0 %v707
        %2171 = vmatprep.subr.mxu0 %v716
        %2172 = vmatpush1.msra.mxu0 %v715
        %2173 = vmatprep.subr.mxu0 %v724
        %2174 = vmatpush1.msra.mxu0 %v723
        %2175 = vmatprep.subr.mxu0 %v732
        %2176 = vmatpush1.msra.mxu0 %v731
        %2177 = vmatprep.mubr.f32.mxu0 %v472
        %2178 = vmatmul.mubr.f32.gmra.mrb[0].mxu0 %v471
        %v2179 = vpop.f32.mrb[0].mxu0
        %v2180 = vadd.f32 %v1524, %v2179
        %v2181 = vpop.f32.mrb[0].mxu0
        %v2182 = vadd.f32 %v1528, %v2181
        %2183 = vdwg.mxu0
        %2184 = vmatprep.subr.mxu0 %v740
        %2185 = vmatpush1.msra.mxu0 %v739
        %2186 = vmatprep.subr.mxu0 %v748
        %2187 = vmatpush1.msra.mxu0 %v747
        %2188 = vmatprep.subr.mxu0 %v756
        %2189 = vmatpush1.msra.mxu0 %v755
        %2190 = vmatprep.subr.mxu0 %v764
        %2191 = vmatpush1.msra.mxu0 %v763
        %2192 = vmatprep.subr.mxu0 %v772
        %2193 = vmatpush1.msra.mxu0 %v771
        %2194 = vmatprep.subr.mxu0 %v780
        %2195 = vmatpush1.msra.mxu0 %v779
        %2196 = vmatprep.subr.mxu0 %v788
        %2197 = vmatpush1.msra.mxu0 %v787
        %2198 = vmatprep.subr.mxu0 %v796
        %2199 = vmatpush1.msra.mxu0 %v795
        %2200 = vmatprep.subr.mxu0 %v804
        %2201 = vmatpush1.msra.mxu0 %v803
        %2202 = vmatprep.subr.mxu0 %v812
        %2203 = vmatpush1.msra.mxu0 %v811
        %2204 = vmatprep.subr.mxu0 %v820
        %2205 = vmatpush1.msra.mxu0 %v819
        %2206 = vmatprep.subr.mxu0 %v828
        %2207 = vmatpush1.msra.mxu0 %v827
        %2208 = vmatprep.subr.mxu0 %v836
        %2209 = vmatpush1.msra.mxu0 %v835
        %2210 = vmatprep.subr.mxu0 %v844
        %2211 = vmatpush1.msra.mxu0 %v843
        %2212 = vmatprep.subr.mxu0 %v852
        %2213 = vmatpush1.msra.mxu0 %v851
        %2214 = vmatprep.subr.mxu0 %v860
        %2215 = vmatpush1.msra.mxu0 %v859
        %2216 = vmatprep.subr.mxu0 %v868
        %2217 = vmatpush1.msra.mxu0 %v867
        %2218 = vmatprep.subr.mxu0 %v876
        %2219 = vmatpush1.msra.mxu0 %v875
        %2220 = vmatprep.subr.mxu0 %v884
        %2221 = vmatpush1.msra.mxu0 %v883
        %2222 = vmatprep.subr.mxu0 %v892
        %2223 = vmatpush1.msra.mxu0 %v891
        %2224 = vmatprep.subr.mxu0 %v900
        %2225 = vmatpush1.msra.mxu0 %v899
        %2226 = vmatprep.subr.mxu0 %v908
        %2227 = vmatpush1.msra.mxu0 %v907
        %2228 = vmatprep.subr.mxu0 %v916
        %2229 = vmatpush1.msra.mxu0 %v915
        %2230 = vmatprep.subr.mxu0 %v924
        %2231 = vmatpush1.msra.mxu0 %v923
        %2232 = vmatprep.subr.mxu0 %v932
        %2233 = vmatpush1.msra.mxu0 %v931
        %2234 = vmatprep.subr.mxu0 %v940
        %2235 = vmatpush1.msra.mxu0 %v939
        %2236 = vmatprep.subr.mxu0 %v948
        %2237 = vmatpush1.msra.mxu0 %v947
        %2238 = vmatprep.subr.mxu0 %v956
        %2239 = vmatpush1.msra.mxu0 %v955
        %2240 = vmatprep.subr.mxu0 %v964
        %2241 = vmatpush1.msra.mxu0 %v963
        %2242 = vmatprep.subr.mxu0 %v972
        %2243 = vmatpush1.msra.mxu0 %v971
        %2244 = vmatprep.subr.mxu0 %v980
        %2245 = vmatpush1.msra.mxu0 %v979
        %2246 = vmatprep.subr.mxu0 %v988
        %2247 = vmatpush1.msra.mxu0 %v987
        %2248 = vmatprep.mubr.f32.mxu0 %v474
        %2249 = vmatmul.mubr.f32.gmra.mrb[0].mxu0 %v473
        %v2250 = vpop.f32.mrb[0].mxu0
        %v2251 = vadd.f32 %v2180, %v2250
        %v2252 = vpop.f32.mrb[0].mxu0
        %v2253 = vadd.f32 %v2182, %v2252
        %2254 = vdwg.mxu0
        %2255 = vmatprep.subr.mxu0 %v996
        %2256 = vmatpush1.msra.mxu0 %v995
        %2257 = vmatprep.subr.mxu0 %v1004
        %2258 = vmatpush1.msra.mxu0 %v1003
        %2259 = vmatprep.subr.mxu0 %v1012
        %2260 = vmatpush1.msra.mxu0 %v1011
        %2261 = vmatprep.subr.mxu0 %v1020
        %2262 = vmatpush1.msra.mxu0 %v1019
        %2263 = vmatprep.subr.mxu0 %v1028
        %2264 = vmatpush1.msra.mxu0 %v1027
        %2265 = vmatprep.subr.mxu0 %v1036
        %2266 = vmatpush1.msra.mxu0 %v1035
        %2267 = vmatprep.subr.mxu0 %v1044
        %2268 = vmatpush1.msra.mxu0 %v1043
        %2269 = vmatprep.subr.mxu0 %v1052
        %2270 = vmatpush1.msra.mxu0 %v1051
        %2271 = vmatprep.subr.mxu0 %v1060
        %2272 = vmatpush1.msra.mxu0 %v1059
        %2273 = vmatprep.subr.mxu0 %v1068
        %2274 = vmatpush1.msra.mxu0 %v1067
        %2275 = vmatprep.subr.mxu0 %v1076
        %2276 = vmatpush1.msra.mxu0 %v1075
        %2277 = vmatprep.subr.mxu0 %v1084
        %2278 = vmatpush1.msra.mxu0 %v1083
        %2279 = vmatprep.subr.mxu0 %v1092
        %2280 = vmatpush1.msra.mxu0 %v1091
        %2281 = vmatprep.subr.mxu0 %v1100
        %2282 = vmatpush1.msra.mxu0 %v1099
        %2283 = vmatprep.subr.mxu0 %v1108
        %2284 = vmatpush1.msra.mxu0 %v1107
        %2285 = vmatprep.subr.mxu0 %v1116
        %2286 = vmatpush1.msra.mxu0 %v1115
        %2287 = vmatprep.subr.mxu0 %v1124
        %2288 = vmatpush1.msra.mxu0 %v1123
        %2289 = vmatprep.subr.mxu0 %v1132
        %2290 = vmatpush1.msra.mxu0 %v1131
        %2291 = vmatprep.subr.mxu0 %v1140
        %2292 = vmatpush1.msra.mxu0 %v1139
        %2293 = vmatprep.subr.mxu0 %v1148
        %2294 = vmatpush1.msra.mxu0 %v1147
        %2295 = vmatprep.subr.mxu0 %v1156
        %2296 = vmatpush1.msra.mxu0 %v1155
        %2297 = vmatprep.subr.mxu0 %v1164
        %2298 = vmatpush1.msra.mxu0 %v1163
        %2299 = vmatprep.subr.mxu0 %v1172
        %2300 = vmatpush1.msra.mxu0 %v1171
        %2301 = vmatprep.subr.mxu0 %v1180
        %2302 = vmatpush1.msra.mxu0 %v1179
        %2303 = vmatprep.subr.mxu0 %v1188
        %2304 = vmatpush1.msra.mxu0 %v1187
        %2305 = vmatprep.subr.mxu0 %v1196
        %2306 = vmatpush1.msra.mxu0 %v1195
        %2307 = vmatprep.subr.mxu0 %v1204
        %2308 = vmatpush1.msra.mxu0 %v1203
        %2309 = vmatprep.subr.mxu0 %v1212
        %2310 = vmatpush1.msra.mxu0 %v1211
        %2311 = vmatprep.subr.mxu0 %v1220
        %2312 = vmatpush1.msra.mxu0 %v1219
        %2313 = vmatprep.subr.mxu0 %v1228
        %2314 = vmatpush1.msra.mxu0 %v1227
        %2315 = vmatprep.subr.mxu0 %v1236
        %2316 = vmatpush1.msra.mxu0 %v1235
        %2317 = vmatprep.subr.mxu0 %v1244
        %2318 = vmatpush1.msra.mxu0 %v1243
        %2319 = vmatprep.mubr.f32.mxu0 %v476
        %2320 = vmatmul.mubr.f32.gmra.mrb[0].mxu0 %v475
        %v2321 = vpop.f32.mrb[0].mxu0
        %v2322 = vadd.f32 %v2251, %v2321
        %v2323 = vpop.f32.mrb[0].mxu0
        %v2324 = vadd.f32 %v2253, %v2323
        %2325 = vdwg.mxu0
        %2326 = vmatprep.subr.mxu0 %v1252
        %2327 = vmatpush1.msra.mxu0 %v1251
        %2328 = vmatprep.subr.mxu0 %v1260
        %2329 = vmatpush1.msra.mxu0 %v1259
        %2330 = vmatprep.subr.mxu0 %v1268
        %2331 = vmatpush1.msra.mxu0 %v1267
        %2332 = vmatprep.subr.mxu0 %v1276
        %2333 = vmatpush1.msra.mxu0 %v1275
        %2334 = vmatprep.subr.mxu0 %v1284
        %2335 = vmatpush1.msra.mxu0 %v1283
        %2336 = vmatprep.subr.mxu0 %v1292
        %2337 = vmatpush1.msra.mxu0 %v1291
        %2338 = vmatprep.subr.mxu0 %v1300
        %2339 = vmatpush1.msra.mxu0 %v1299
        %2340 = vmatprep.subr.mxu0 %v1308
        %2341 = vmatpush1.msra.mxu0 %v1307
        %2342 = vmatprep.subr.mxu0 %v1316
        %2343 = vmatpush1.msra.mxu0 %v1315
        %2344 = vmatprep.subr.mxu0 %v1324
        %2345 = vmatpush1.msra.mxu0 %v1323
        %2346 = vmatprep.subr.mxu0 %v1332
        %2347 = vmatpush1.msra.mxu0 %v1331
        %2348 = vmatprep.subr.mxu0 %v1340
        %2349 = vmatpush1.msra.mxu0 %v1339
        %2350 = vmatprep.subr.mxu0 %v1348
        %2351 = vmatpush1.msra.mxu0 %v1347
        %2352 = vmatprep.subr.mxu0 %v1356
        %2353 = vmatpush1.msra.mxu0 %v1355
        %2354 = vmatprep.subr.mxu0 %v1364
        %2355 = vmatpush1.msra.mxu0 %v1363
        %2356 = vmatprep.subr.mxu0 %v1372
        %2357 = vmatpush1.msra.mxu0 %v1371
        %2358 = vmatprep.subr.mxu0 %v1380
        %2359 = vmatpush1.msra.mxu0 %v1379
        %2360 = vmatprep.subr.mxu0 %v1388
        %2361 = vmatpush1.msra.mxu0 %v1387
        %2362 = vmatprep.subr.mxu0 %v1396
        %2363 = vmatpush1.msra.mxu0 %v1395
        %2364 = vmatprep.subr.mxu0 %v1404
        %2365 = vmatpush1.msra.mxu0 %v1403
        %2366 = vmatprep.subr.mxu0 %v1412
        %2367 = vmatpush1.msra.mxu0 %v1411
        %2368 = vmatprep.subr.mxu0 %v1420
        %2369 = vmatpush1.msra.mxu0 %v1419
        %2370 = vmatprep.subr.mxu0 %v1428
        %2371 = vmatpush1.msra.mxu0 %v1427
        %2372 = vmatprep.subr.mxu0 %v1436
        %2373 = vmatpush1.msra.mxu0 %v1435
        %2374 = vmatprep.subr.mxu0 %v1444
        %2375 = vmatpush1.msra.mxu0 %v1443
        %2376 = vmatprep.subr.mxu0 %v1452
        %2377 = vmatpush1.msra.mxu0 %v1451
        %2378 = vmatprep.subr.mxu0 %v1460
        %2379 = vmatpush1.msra.mxu0 %v1459
        %2380 = vmatprep.subr.mxu0 %v1468
        %2381 = vmatpush1.msra.mxu0 %v1467
        %2382 = vmatprep.subr.mxu0 %v1476
        %2383 = vmatpush1.msra.mxu0 %v1475
        %2384 = vmatprep.subr.mxu0 %v1484
        %2385 = vmatpush1.msra.mxu0 %v1483
        %2386 = vmatprep.subr.mxu0 %v1492
        %2387 = vmatpush1.msra.mxu0 %v1491
        %2388 = vmatprep.subr.mxu0 %v1500
        %2389 = vmatpush1.msra.mxu0 %v1499
        %2390 = vmatprep.mubr.f32.mxu0 %v478
        %2391 = vmatmul.mubr.f32.gmra.mrb[0].mxu0 %v477
        %v2392 = vpop.f32.mrb[0].mxu0
        %v2393 = vadd.f32 %v2322, %v2392
        %v2394 = vpop.f32.mrb[0].mxu0
        %v2395 = vadd.f32 %v2324, %v2394
        %2396 = vdwg.mxu0
        %2397 = vmatprep.subr.mxu0 %v486
        %2398 = vmatpush1.msra.mxu0 %v485
        %2399 = vmatprep.subr.mxu0 %v494
        %2400 = vmatpush1.msra.mxu0 %v493
        %2401 = vmatprep.subr.mxu0 %v502
        %2402 = vmatpush1.msra.mxu0 %v501
        %2403 = vmatprep.subr.mxu0 %v510
        %2404 = vmatpush1.msra.mxu0 %v509
        %2405 = vmatprep.subr.mxu0 %v518
        %2406 = vmatpush1.msra.mxu0 %v517
        %2407 = vmatprep.subr.mxu0 %v526
        %2408 = vmatpush1.msra.mxu0 %v525
        %2409 = vmatprep.subr.mxu0 %v534
        %2410 = vmatpush1.msra.mxu0 %v533
        %2411 = vmatprep.subr.mxu0 %v542
        %2412 = vmatpush1.msra.mxu0 %v541
        %2413 = vmatprep.subr.mxu0 %v550
        %2414 = vmatpush1.msra.mxu0 %v549
        %2415 = vmatprep.subr.mxu0 %v558
        %2416 = vmatpush1.msra.mxu0 %v557
        %2417 = vmatprep.subr.mxu0 %v566
        %2418 = vmatpush1.msra.mxu0 %v565
        %2419 = vmatprep.subr.mxu0 %v574
        %2420 = vmatpush1.msra.mxu0 %v573
        %2421 = vmatprep.subr.mxu0 %v582
        %2422 = vmatpush1.msra.mxu0 %v581
        %2423 = vmatprep.subr.mxu0 %v590
        %2424 = vmatpush1.msra.mxu0 %v589
        %2425 = vmatprep.subr.mxu0 %v598
        %2426 = vmatpush1.msra.mxu0 %v597
        %2427 = vmatprep.subr.mxu0 %v606
        %2428 = vmatpush1.msra.mxu0 %v605
        %2429 = vmatprep.subr.mxu0 %v614
        %2430 = vmatpush1.msra.mxu0 %v613
        %2431 = vmatprep.subr.mxu0 %v622
        %2432 = vmatpush1.msra.mxu0 %v621
        %2433 = vmatprep.subr.mxu0 %v630
        %2434 = vmatpush1.msra.mxu0 %v629
        %2435 = vmatprep.subr.mxu0 %v638
        %2436 = vmatpush1.msra.mxu0 %v637
        %2437 = vmatprep.subr.mxu0 %v646
        %2438 = vmatpush1.msra.mxu0 %v645
        %2439 = vmatprep.subr.mxu0 %v654
        %2440 = vmatpush1.msra.mxu0 %v653
        %2441 = vmatprep.subr.mxu0 %v662
        %2442 = vmatpush1.msra.mxu0 %v661
        %2443 = vmatprep.subr.mxu0 %v670
        %2444 = vmatpush1.msra.mxu0 %v669
        %2445 = vmatprep.subr.mxu0 %v678
        %2446 = vmatpush1.msra.mxu0 %v677
        %2447 = vmatprep.subr.mxu0 %v686
        %2448 = vmatpush1.msra.mxu0 %v685
        %2449 = vmatprep.subr.mxu0 %v694
        %2450 = vmatpush1.msra.mxu0 %v693
        %2451 = vmatprep.subr.mxu0 %v702
        %2452 = vmatpush1.msra.mxu0 %v701
        %2453 = vmatprep.subr.mxu0 %v710
        %2454 = vmatpush1.msra.mxu0 %v709
        %2455 = vmatprep.subr.mxu0 %v718
        %2456 = vmatpush1.msra.mxu0 %v717
        %2457 = vmatprep.subr.mxu0 %v726
        %2458 = vmatpush1.msra.mxu0 %v725
        %2459 = vmatprep.subr.mxu0 %v734
        %2460 = vmatpush1.msra.mxu0 %v733
        %2461 = vmatprep.mubr.f32.mxu0 %v472
        %2462 = vmatmul.mubr.f32.gmra.mrb[0].mxu0 %v471
        %v2463 = vpop.f32.mrb[0].mxu0
        %v2464 = vadd.f32 %v1532, %v2463
        %v2465 = vpop.f32.mrb[0].mxu0
        %v2466 = vadd.f32 %v1536, %v2465
        %2467 = vdwg.mxu0
        %2468 = vmatprep.subr.mxu0 %v742
        %2469 = vmatpush1.msra.mxu0 %v741
        %2470 = vmatprep.subr.mxu0 %v750
        %2471 = vmatpush1.msra.mxu0 %v749
        %2472 = vmatprep.subr.mxu0 %v758
        %2473 = vmatpush1.msra.mxu0 %v757
        %2474 = vmatprep.subr.mxu0 %v766
        %2475 = vmatpush1.msra.mxu0 %v765
        %2476 = vmatprep.subr.mxu0 %v774
        %2477 = vmatpush1.msra.mxu0 %v773
        %2478 = vmatprep.subr.mxu0 %v782
        %2479 = vmatpush1.msra.mxu0 %v781
        %2480 = vmatprep.subr.mxu0 %v790
        %2481 = vmatpush1.msra.mxu0 %v789
        %2482 = vmatprep.subr.mxu0 %v798
        %2483 = vmatpush1.msra.mxu0 %v797
        %2484 = vmatprep.subr.mxu0 %v806
        %2485 = vmatpush1.msra.mxu0 %v805
        %2486 = vmatprep.subr.mxu0 %v814
        %2487 = vmatpush1.msra.mxu0 %v813
        %2488 = vmatprep.subr.mxu0 %v822
        %2489 = vmatpush1.msra.mxu0 %v821
        %2490 = vmatprep.subr.mxu0 %v830
        %2491 = vmatpush1.msra.mxu0 %v829
        %2492 = vmatprep.subr.mxu0 %v838
        %2493 = vmatpush1.msra.mxu0 %v837
        %2494 = vmatprep.subr.mxu0 %v846
        %2495 = vmatpush1.msra.mxu0 %v845
        %2496 = vmatprep.subr.mxu0 %v854
        %2497 = vmatpush1.msra.mxu0 %v853
        %2498 = vmatprep.subr.mxu0 %v862
        %2499 = vmatpush1.msra.mxu0 %v861
        %2500 = vmatprep.subr.mxu0 %v870
        %2501 = vmatpush1.msra.mxu0 %v869
        %2502 = vmatprep.subr.mxu0 %v878
        %2503 = vmatpush1.msra.mxu0 %v877
        %2504 = vmatprep.subr.mxu0 %v886
        %2505 = vmatpush1.msra.mxu0 %v885
        %2506 = vmatprep.subr.mxu0 %v894
        %2507 = vmatpush1.msra.mxu0 %v893
        %2508 = vmatprep.subr.mxu0 %v902
        %2509 = vmatpush1.msra.mxu0 %v901
        %2510 = vmatprep.subr.mxu0 %v910
        %2511 = vmatpush1.msra.mxu0 %v909
        %2512 = vmatprep.subr.mxu0 %v918
        %2513 = vmatpush1.msra.mxu0 %v917
        %2514 = vmatprep.subr.mxu0 %v926
        %2515 = vmatpush1.msra.mxu0 %v925
        %2516 = vmatprep.subr.mxu0 %v934
        %2517 = vmatpush1.msra.mxu0 %v933
        %2518 = vmatprep.subr.mxu0 %v942
        %2519 = vmatpush1.msra.mxu0 %v941
        %2520 = vmatprep.subr.mxu0 %v950
        %2521 = vmatpush1.msra.mxu0 %v949
        %2522 = vmatprep.subr.mxu0 %v958
        %2523 = vmatpush1.msra.mxu0 %v957
        %2524 = vmatprep.subr.mxu0 %v966
        %2525 = vmatpush1.msra.mxu0 %v965
        %2526 = vmatprep.subr.mxu0 %v974
        %2527 = vmatpush1.msra.mxu0 %v973
        %2528 = vmatprep.subr.mxu0 %v982
        %2529 = vmatpush1.msra.mxu0 %v981
        %2530 = vmatprep.subr.mxu0 %v990
        %2531 = vmatpush1.msra.mxu0 %v989
        %2532 = vmatprep.mubr.f32.mxu0 %v474
        %2533 = vmatmul.mubr.f32.gmra.mrb[0].mxu0 %v473
        %v2534 = vpop.f32.mrb[0].mxu0
        %v2535 = vadd.f32 %v2464, %v2534
        %v2536 = vpop.f32.mrb[0].mxu0
        %v2537 = vadd.f32 %v2466, %v2536
        %2538 = vdwg.mxu0
        %2539 = vmatprep.subr.mxu0 %v998
        %2540 = vmatpush1.msra.mxu0 %v997
        %2541 = vmatprep.subr.mxu0 %v1006
        %2542 = vmatpush1.msra.mxu0 %v1005
        %2543 = vmatprep.subr.mxu0 %v1014
        %2544 = vmatpush1.msra.mxu0 %v1013
        %2545 = vmatprep.subr.mxu0 %v1022
        %2546 = vmatpush1.msra.mxu0 %v1021
        %2547 = vmatprep.subr.mxu0 %v1030
        %2548 = vmatpush1.msra.mxu0 %v1029
        %2549 = vmatprep.subr.mxu0 %v1038
        %2550 = vmatpush1.msra.mxu0 %v1037
        %2551 = vmatprep.subr.mxu0 %v1046
        %2552 = vmatpush1.msra.mxu0 %v1045
        %2553 = vmatprep.subr.mxu0 %v1054
        %2554 = vmatpush1.msra.mxu0 %v1053
        %2555 = vmatprep.subr.mxu0 %v1062
        %2556 = vmatpush1.msra.mxu0 %v1061
        %2557 = vmatprep.subr.mxu0 %v1070
        %2558 = vmatpush1.msra.mxu0 %v1069
        %2559 = vmatprep.subr.mxu0 %v1078
        %2560 = vmatpush1.msra.mxu0 %v1077
        %2561 = vmatprep.subr.mxu0 %v1086
        %2562 = vmatpush1.msra.mxu0 %v1085
        %2563 = vmatprep.subr.mxu0 %v1094
        %2564 = vmatpush1.msra.mxu0 %v1093
        %2565 = vmatprep.subr.mxu0 %v1102
        %2566 = vmatpush1.msra.mxu0 %v1101
        %2567 = vmatprep.subr.mxu0 %v1110
        %2568 = vmatpush1.msra.mxu0 %v1109
        %2569 = vmatprep.subr.mxu0 %v1118
        %2570 = vmatpush1.msra.mxu0 %v1117
        %2571 = vmatprep.subr.mxu0 %v1126
        %2572 = vmatpush1.msra.mxu0 %v1125
        %2573 = vmatprep.subr.mxu0 %v1134
        %2574 = vmatpush1.msra.mxu0 %v1133
        %2575 = vmatprep.subr.mxu0 %v1142
        %2576 = vmatpush1.msra.mxu0 %v1141
        %2577 = vmatprep.subr.mxu0 %v1150
        %2578 = vmatpush1.msra.mxu0 %v1149
        %2579 = vmatprep.subr.mxu0 %v1158
        %2580 = vmatpush1.msra.mxu0 %v1157
        %2581 = vmatprep.subr.mxu0 %v1166
        %2582 = vmatpush1.msra.mxu0 %v1165
        %2583 = vmatprep.subr.mxu0 %v1174
        %2584 = vmatpush1.msra.mxu0 %v1173
        %2585 = vmatprep.subr.mxu0 %v1182
        %2586 = vmatpush1.msra.mxu0 %v1181
        %2587 = vmatprep.subr.mxu0 %v1190
        %2588 = vmatpush1.msra.mxu0 %v1189
        %2589 = vmatprep.subr.mxu0 %v1198
        %2590 = vmatpush1.msra.mxu0 %v1197
        %2591 = vmatprep.subr.mxu0 %v1206
        %2592 = vmatpush1.msra.mxu0 %v1205
        %2593 = vmatprep.subr.mxu0 %v1214
        %2594 = vmatpush1.msra.mxu0 %v1213
        %2595 = vmatprep.subr.mxu0 %v1222
        %2596 = vmatpush1.msra.mxu0 %v1221
        %2597 = vmatprep.subr.mxu0 %v1230
        %2598 = vmatpush1.msra.mxu0 %v1229
        %2599 = vmatprep.subr.mxu0 %v1238
        %2600 = vmatpush1.msra.mxu0 %v1237
        %2601 = vmatprep.subr.mxu0 %v1246
        %2602 = vmatpush1.msra.mxu0 %v1245
        %2603 = vmatprep.mubr.f32.mxu0 %v476
        %2604 = vmatmul.mubr.f32.gmra.mrb[0].mxu0 %v475
        %v2605 = vpop.f32.mrb[0].mxu0
        %v2606 = vadd.f32 %v2535, %v2605
        %v2607 = vpop.f32.mrb[0].mxu0
        %v2608 = vadd.f32 %v2537, %v2607
        %2609 = vdwg.mxu0
        %2610 = vmatprep.subr.mxu0 %v1254
        %2611 = vmatpush1.msra.mxu0 %v1253
        %2612 = vmatprep.subr.mxu0 %v1262
        %2613 = vmatpush1.msra.mxu0 %v1261
        %2614 = vmatprep.subr.mxu0 %v1270
        %2615 = vmatpush1.msra.mxu0 %v1269
        %2616 = vmatprep.subr.mxu0 %v1278
        %2617 = vmatpush1.msra.mxu0 %v1277
        %2618 = vmatprep.subr.mxu0 %v1286
        %2619 = vmatpush1.msra.mxu0 %v1285
        %2620 = vmatprep.subr.mxu0 %v1294
        %2621 = vmatpush1.msra.mxu0 %v1293
        %2622 = vmatprep.subr.mxu0 %v1302
        %2623 = vmatpush1.msra.mxu0 %v1301
        %2624 = vmatprep.subr.mxu0 %v1310
        %2625 = vmatpush1.msra.mxu0 %v1309
        %2626 = vmatprep.subr.mxu0 %v1318
        %2627 = vmatpush1.msra.mxu0 %v1317
        %2628 = vmatprep.subr.mxu0 %v1326
        %2629 = vmatpush1.msra.mxu0 %v1325
        %2630 = vmatprep.subr.mxu0 %v1334
        %2631 = vmatpush1.msra.mxu0 %v1333
        %2632 = vmatprep.subr.mxu0 %v1342
        %2633 = vmatpush1.msra.mxu0 %v1341
        %2634 = vmatprep.subr.mxu0 %v1350
        %2635 = vmatpush1.msra.mxu0 %v1349
        %2636 = vmatprep.subr.mxu0 %v1358
        %2637 = vmatpush1.msra.mxu0 %v1357
        %2638 = vmatprep.subr.mxu0 %v1366
        %2639 = vmatpush1.msra.mxu0 %v1365
        %2640 = vmatprep.subr.mxu0 %v1374
        %2641 = vmatpush1.msra.mxu0 %v1373
        %2642 = vmatprep.subr.mxu0 %v1382
        %2643 = vmatpush1.msra.mxu0 %v1381
        %2644 = vmatprep.subr.mxu0 %v1390
        %2645 = vmatpush1.msra.mxu0 %v1389
        %2646 = vmatprep.subr.mxu0 %v1398
        %2647 = vmatpush1.msra.mxu0 %v1397
        %2648 = vmatprep.subr.mxu0 %v1406
        %2649 = vmatpush1.msra.mxu0 %v1405
        %2650 = vmatprep.subr.mxu0 %v1414
        %2651 = vmatpush1.msra.mxu0 %v1413
        %2652 = vmatprep.subr.mxu0 %v1422
        %2653 = vmatpush1.msra.mxu0 %v1421
        %2654 = vmatprep.subr.mxu0 %v1430
        %2655 = vmatpush1.msra.mxu0 %v1429
        %2656 = vmatprep.subr.mxu0 %v1438
        %2657 = vmatpush1.msra.mxu0 %v1437
        %2658 = vmatprep.subr.mxu0 %v1446
        %2659 = vmatpush1.msra.mxu0 %v1445
        %2660 = vmatprep.subr.mxu0 %v1454
        %2661 = vmatpush1.msra.mxu0 %v1453
        %2662 = vmatprep.subr.mxu0 %v1462
        %2663 = vmatpush1.msra.mxu0 %v1461
        %2664 = vmatprep.subr.mxu0 %v1470
        %2665 = vmatpush1.msra.mxu0 %v1469
        %2666 = vmatprep.subr.mxu0 %v1478
        %2667 = vmatpush1.msra.mxu0 %v1477
        %2668 = vmatprep.subr.mxu0 %v1486
        %2669 = vmatpush1.msra.mxu0 %v1485
        %2670 = vmatprep.subr.mxu0 %v1494
        %2671 = vmatpush1.msra.mxu0 %v1493
        %2672 = vmatprep.subr.mxu0 %v1502
        %2673 = vmatpush1.msra.mxu0 %v1501
        %2674 = vmatprep.mubr.f32.mxu0 %v478
        %2675 = vmatmul.mubr.f32.gmra.mrb[0].mxu0 %v477
        %v2676 = vpop.f32.mrb[0].mxu0
        %v2677 = vadd.f32 %v2606, %v2676
        %v2678 = vpop.f32.mrb[0].mxu0
        %v2679 = vadd.f32 %v2608, %v2678
        %2680 = vdwg.mxu0
        %v2681 = vmax.f32 %v1825, 0.0
        %v2682 = vmax.f32 %v1827, 0.0
        %v2683 = vmax.f32 %v2109, 0.0
        %v2684 = vmax.f32 %v2111, 0.0
        %v2685 = vmax.f32 %v2393, 0.0
        %v2686 = vmax.f32 %v2395, 0.0
        %v2687 = vmax.f32 %v2677, 0.0
        %v2688 = vmax.f32 %v2679, 0.0
        %v2689 = vld [vmem:[#allocation3] sm:$0xff]
        %v2690 = vld [vmem:[#allocation3 + $0x8] sm:$0xff]
        %v2691 = vld [vmem:[#allocation3 + $0x10] sm:$0xff]
        %v2692 = vld [vmem:[#allocation3 + $0x18] sm:$0xff]
        %v2693 = vld [vmem:[#allocation3 + $0x20] sm:$0xff]
        %v2694 = vld [vmem:[#allocation3 + $0x28] sm:$0xff]
        %v2695 = vld [vmem:[#allocation3 + $0x30] sm:$0xff]
        %v2696 = vld [vmem:[#allocation3 + $0x38] sm:$0xff]
        %v2697 = vld [vmem:[%s381] sm:$0xff]
        %v2698 = vld [vmem:[%s381 + $0x8] sm:$0xff]
        %v2699 = vld [vmem:[%s381 + $0x10] sm:$0xff]
        %v2700 = vld [vmem:[%s381 + $0x18] sm:$0xff]
        %v2701 = vld [vmem:[%s381 + $0x20] sm:$0xff]
        %v2702 = vld [vmem:[%s381 + $0x28] sm:$0xff]
        %v2703 = vld [vmem:[%s381 + $0x30] sm:$0xff]
        %v2704 = vld [vmem:[%s381 + $0x38] sm:$0xff]
        %v2705 = vld [vmem:[%s381 + $0x40] sm:$0xff]
        %v2706 = vld [vmem:[%s381 + $0x48] sm:$0xff]
        %v2707 = vld [vmem:[%s381 + $0x50] sm:$0xff]
        %v2708 = vld [vmem:[%s381 + $0x58] sm:$0xff]
        %v2709 = vld [vmem:[%s381 + $0x60] sm:$0xff]
        %v2710 = vld [vmem:[%s381 + $0x68] sm:$0xff]
        %v2711 = vld [vmem:[%s381 + $0x70] sm:$0xff]
        %v2712 = vld [vmem:[%s381 + $0x78] sm:$0xff]
        %v2713 = vld [vmem:[%s381 + $0x80] sm:$0xff]
        %v2714 = vld [vmem:[%s381 + $0x88] sm:$0xff]
        %v2715 = vld [vmem:[%s381 + $0x90] sm:$0xff]
        %v2716 = vld [vmem:[%s381 + $0x98] sm:$0xff]
        %v2717 = vld [vmem:[%s381 + $0xa0] sm:$0xff]
        %v2718 = vld [vmem:[%s381 + $0xa8] sm:$0xff]
        %v2719 = vld [vmem:[%s381 + $0xb0] sm:$0xff]
        %v2720 = vld [vmem:[%s381 + $0xb8] sm:$0xff]
        %v2721 = vld [vmem:[%s381 + $0xc0] sm:$0xff]
        %v2722 = vld [vmem:[%s381 + $0xc8] sm:$0xff]
        %v2723 = vld [vmem:[%s381 + $0xd0] sm:$0xff]
        %v2724 = vld [vmem:[%s381 + $0xd8] sm:$0xff]
        %v2725 = vld [vmem:[%s381 + $0xe0] sm:$0xff]
        %v2726 = vld [vmem:[%s381 + $0xe8] sm:$0xff]
        %v2727 = vld [vmem:[%s381 + $0xf0] sm:$0xff]
        %v2728 = vld [vmem:[%s381 + $0xf8] sm:$0xff]
        %v2729 = vld [vmem:[%s381 + $0x100] sm:$0xff]
        %v2730 = vld [vmem:[%s381 + $0x108] sm:$0xff]
        %v2731 = vld [vmem:[%s381 + $0x110] sm:$0xff]
        %v2732 = vld [vmem:[%s381 + $0x118] sm:$0xff]
        %v2733 = vld [vmem:[%s381 + $0x120] sm:$0xff]
        %v2734 = vld [vmem:[%s381 + $0x128] sm:$0xff]
        %v2735 = vld [vmem:[%s381 + $0x130] sm:$0xff]
        %v2736 = vld [vmem:[%s381 + $0x138] sm:$0xff]
        %v2737 = vld [vmem:[%s381 + $0x140] sm:$0xff]
        %v2738 = vld [vmem:[%s381 + $0x148] sm:$0xff]
        %v2739 = vld [vmem:[%s381 + $0x150] sm:$0xff]
        %v2740 = vld [vmem:[%s381 + $0x158] sm:$0xff]
        %v2741 = vld [vmem:[%s381 + $0x160] sm:$0xff]
        %v2742 = vld [vmem:[%s381 + $0x168] sm:$0xff]
        %v2743 = vld [vmem:[%s381 + $0x170] sm:$0xff]
        %v2744 = vld [vmem:[%s381 + $0x178] sm:$0xff]
        %v2745 = vld [vmem:[%s381 + $0x180] sm:$0xff]
        %v2746 = vld [vmem:[%s381 + $0x188] sm:$0xff]
        %v2747 = vld [vmem:[%s381 + $0x190] sm:$0xff]
        %v2748 = vld [vmem:[%s381 + $0x198] sm:$0xff]
        %v2749 = vld [vmem:[%s381 + $0x1a0] sm:$0xff]
        %v2750 = vld [vmem:[%s381 + $0x1a8] sm:$0xff]
        %v2751 = vld [vmem:[%s381 + $0x1b0] sm:$0xff]
        %v2752 = vld [vmem:[%s381 + $0x1b8] sm:$0xff]
        %v2753 = vld [vmem:[%s381 + $0x1c0] sm:$0xff]
        %v2754 = vld [vmem:[%s381 + $0x1c8] sm:$0xff]
        %v2755 = vld [vmem:[%s381 + $0x1d0] sm:$0xff]
        %v2756 = vld [vmem:[%s381 + $0x1d8] sm:$0xff]
        %v2757 = vld [vmem:[%s381 + $0x1e0] sm:$0xff]
        %v2758 = vld [vmem:[%s381 + $0x1e8] sm:$0xff]
        %v2759 = vld [vmem:[%s381 + $0x1f0] sm:$0xff]
        %v2760 = vld [vmem:[%s381 + $0x1f8] sm:$0xff]
        %v2761 = vld [vmem:[%s381 + $0x200] sm:$0xff]
        %v2762 = vld [vmem:[%s381 + $0x208] sm:$0xff]
        %v2763 = vld [vmem:[%s381 + $0x210] sm:$0xff]
        %v2764 = vld [vmem:[%s381 + $0x218] sm:$0xff]
        %v2765 = vld [vmem:[%s381 + $0x220] sm:$0xff]
        %v2766 = vld [vmem:[%s381 + $0x228] sm:$0xff]
        %v2767 = vld [vmem:[%s381 + $0x230] sm:$0xff]
        %v2768 = vld [vmem:[%s381 + $0x238] sm:$0xff]
        %v2769 = vld [vmem:[%s381 + $0x240] sm:$0xff]
        %v2770 = vld [vmem:[%s381 + $0x248] sm:$0xff]
        %v2771 = vld [vmem:[%s381 + $0x250] sm:$0xff]
        %v2772 = vld [vmem:[%s381 + $0x258] sm:$0xff]
        %v2773 = vld [vmem:[%s381 + $0x260] sm:$0xff]
        %v2774 = vld [vmem:[%s381 + $0x268] sm:$0xff]
        %v2775 = vld [vmem:[%s381 + $0x270] sm:$0xff]
        %v2776 = vld [vmem:[%s381 + $0x278] sm:$0xff]
        %v2777 = vld [vmem:[%s381 + $0x280] sm:$0xff]
        %v2778 = vld [vmem:[%s381 + $0x288] sm:$0xff]
        %v2779 = vld [vmem:[%s381 + $0x290] sm:$0xff]
        %v2780 = vld [vmem:[%s381 + $0x298] sm:$0xff]
        %v2781 = vld [vmem:[%s381 + $0x2a0] sm:$0xff]
        %v2782 = vld [vmem:[%s381 + $0x2a8] sm:$0xff]
        %v2783 = vld [vmem:[%s381 + $0x2b0] sm:$0xff]
        %v2784 = vld [vmem:[%s381 + $0x2b8] sm:$0xff]
        %v2785 = vld [vmem:[%s381 + $0x2c0] sm:$0xff]
        %v2786 = vld [vmem:[%s381 + $0x2c8] sm:$0xff]
        %v2787 = vld [vmem:[%s381 + $0x2d0] sm:$0xff]
        %v2788 = vld [vmem:[%s381 + $0x2d8] sm:$0xff]
        %v2789 = vld [vmem:[%s381 + $0x2e0] sm:$0xff]
        %v2790 = vld [vmem:[%s381 + $0x2e8] sm:$0xff]
        %v2791 = vld [vmem:[%s381 + $0x2f0] sm:$0xff]
        %v2792 = vld [vmem:[%s381 + $0x2f8] sm:$0xff]
        %v2793 = vld [vmem:[%s381 + $0x300] sm:$0xff]
        %v2794 = vld [vmem:[%s381 + $0x308] sm:$0xff]
        %v2795 = vld [vmem:[%s381 + $0x310] sm:$0xff]
        %v2796 = vld [vmem:[%s381 + $0x318] sm:$0xff]
        %v2797 = vld [vmem:[%s381 + $0x320] sm:$0xff]
        %v2798 = vld [vmem:[%s381 + $0x328] sm:$0xff]
        %v2799 = vld [vmem:[%s381 + $0x330] sm:$0xff]
        %v2800 = vld [vmem:[%s381 + $0x338] sm:$0xff]
        %v2801 = vld [vmem:[%s381 + $0x340] sm:$0xff]
        %v2802 = vld [vmem:[%s381 + $0x348] sm:$0xff]
        %v2803 = vld [vmem:[%s381 + $0x350] sm:$0xff]
        %v2804 = vld [vmem:[%s381 + $0x358] sm:$0xff]
        %v2805 = vld [vmem:[%s381 + $0x360] sm:$0xff]
        %v2806 = vld [vmem:[%s381 + $0x368] sm:$0xff]
        %v2807 = vld [vmem:[%s381 + $0x370] sm:$0xff]
        %v2808 = vld [vmem:[%s381 + $0x378] sm:$0xff]
        %v2809 = vld [vmem:[%s381 + $0x380] sm:$0xff]
        %v2810 = vld [vmem:[%s381 + $0x388] sm:$0xff]
        %v2811 = vld [vmem:[%s381 + $0x390] sm:$0xff]
        %v2812 = vld [vmem:[%s381 + $0x398] sm:$0xff]
        %v2813 = vld [vmem:[%s381 + $0x3a0] sm:$0xff]
        %v2814 = vld [vmem:[%s381 + $0x3a8] sm:$0xff]
        %v2815 = vld [vmem:[%s381 + $0x3b0] sm:$0xff]
        %v2816 = vld [vmem:[%s381 + $0x3b8] sm:$0xff]
        %v2817 = vld [vmem:[%s381 + $0x3c0] sm:$0xff]
        %v2818 = vld [vmem:[%s381 + $0x3c8] sm:$0xff]
        %v2819 = vld [vmem:[%s381 + $0x3d0] sm:$0xff]
        %v2820 = vld [vmem:[%s381 + $0x3d8] sm:$0xff]
        %v2821 = vld [vmem:[%s381 + $0x3e0] sm:$0xff]
        %v2822 = vld [vmem:[%s381 + $0x3e8] sm:$0xff]
        %v2823 = vld [vmem:[%s381 + $0x3f0] sm:$0xff]
        %v2824 = vld [vmem:[%s381 + $0x3f8] sm:$0xff]
        %v2825 = vld [vmem:[%s381 + $0x400] sm:$0xff]
        %v2826 = vld [vmem:[%s381 + $0x408] sm:$0xff]
        %v2827 = vld [vmem:[%s381 + $0x410] sm:$0xff]
        %v2828 = vld [vmem:[%s381 + $0x418] sm:$0xff]
        %v2829 = vld [vmem:[%s381 + $0x420] sm:$0xff]
        %v2830 = vld [vmem:[%s381 + $0x428] sm:$0xff]
        %v2831 = vld [vmem:[%s381 + $0x430] sm:$0xff]
        %v2832 = vld [vmem:[%s381 + $0x438] sm:$0xff]
        %v2833 = vld [vmem:[%s381 + $0x440] sm:$0xff]
        %v2834 = vld [vmem:[%s381 + $0x448] sm:$0xff]
        %v2835 = vld [vmem:[%s381 + $0x450] sm:$0xff]
        %v2836 = vld [vmem:[%s381 + $0x458] sm:$0xff]
        %v2837 = vld [vmem:[%s381 + $0x460] sm:$0xff]
        %v2838 = vld [vmem:[%s381 + $0x468] sm:$0xff]
        %v2839 = vld [vmem:[%s381 + $0x470] sm:$0xff]
        %v2840 = vld [vmem:[%s381 + $0x478] sm:$0xff]
        %v2841 = vld [vmem:[%s381 + $0x480] sm:$0xff]
        %v2842 = vld [vmem:[%s381 + $0x488] sm:$0xff]
        %v2843 = vld [vmem:[%s381 + $0x490] sm:$0xff]
        %v2844 = vld [vmem:[%s381 + $0x498] sm:$0xff]
        %v2845 = vld [vmem:[%s381 + $0x4a0] sm:$0xff]
        %v2846 = vld [vmem:[%s381 + $0x4a8] sm:$0xff]
        %v2847 = vld [vmem:[%s381 + $0x4b0] sm:$0xff]
        %v2848 = vld [vmem:[%s381 + $0x4b8] sm:$0xff]
        %v2849 = vld [vmem:[%s381 + $0x4c0] sm:$0xff]
        %v2850 = vld [vmem:[%s381 + $0x4c8] sm:$0xff]
        %v2851 = vld [vmem:[%s381 + $0x4d0] sm:$0xff]
        %v2852 = vld [vmem:[%s381 + $0x4d8] sm:$0xff]
        %v2853 = vld [vmem:[%s381 + $0x4e0] sm:$0xff]
        %v2854 = vld [vmem:[%s381 + $0x4e8] sm:$0xff]
        %v2855 = vld [vmem:[%s381 + $0x4f0] sm:$0xff]
        %v2856 = vld [vmem:[%s381 + $0x4f8] sm:$0xff]
        %v2857 = vld [vmem:[%s381 + $0x500] sm:$0xff]
        %v2858 = vld [vmem:[%s381 + $0x508] sm:$0xff]
        %v2859 = vld [vmem:[%s381 + $0x510] sm:$0xff]
        %v2860 = vld [vmem:[%s381 + $0x518] sm:$0xff]
        %v2861 = vld [vmem:[%s381 + $0x520] sm:$0xff]
        %v2862 = vld [vmem:[%s381 + $0x528] sm:$0xff]
        %v2863 = vld [vmem:[%s381 + $0x530] sm:$0xff]
        %v2864 = vld [vmem:[%s381 + $0x538] sm:$0xff]
        %v2865 = vld [vmem:[%s381 + $0x540] sm:$0xff]
        %v2866 = vld [vmem:[%s381 + $0x548] sm:$0xff]
        %v2867 = vld [vmem:[%s381 + $0x550] sm:$0xff]
        %v2868 = vld [vmem:[%s381 + $0x558] sm:$0xff]
        %v2869 = vld [vmem:[%s381 + $0x560] sm:$0xff]
        %v2870 = vld [vmem:[%s381 + $0x568] sm:$0xff]
        %v2871 = vld [vmem:[%s381 + $0x570] sm:$0xff]
        %v2872 = vld [vmem:[%s381 + $0x578] sm:$0xff]
        %v2873 = vld [vmem:[%s381 + $0x580] sm:$0xff]
        %v2874 = vld [vmem:[%s381 + $0x588] sm:$0xff]
        %v2875 = vld [vmem:[%s381 + $0x590] sm:$0xff]
        %v2876 = vld [vmem:[%s381 + $0x598] sm:$0xff]
        %v2877 = vld [vmem:[%s381 + $0x5a0] sm:$0xff]
        %v2878 = vld [vmem:[%s381 + $0x5a8] sm:$0xff]
        %v2879 = vld [vmem:[%s381 + $0x5b0] sm:$0xff]
        %v2880 = vld [vmem:[%s381 + $0x5b8] sm:$0xff]
        %v2881 = vld [vmem:[%s381 + $0x5c0] sm:$0xff]
        %v2882 = vld [vmem:[%s381 + $0x5c8] sm:$0xff]
        %v2883 = vld [vmem:[%s381 + $0x5d0] sm:$0xff]
        %v2884 = vld [vmem:[%s381 + $0x5d8] sm:$0xff]
        %v2885 = vld [vmem:[%s381 + $0x5e0] sm:$0xff]
        %v2886 = vld [vmem:[%s381 + $0x5e8] sm:$0xff]
        %v2887 = vld [vmem:[%s381 + $0x5f0] sm:$0xff]
        %v2888 = vld [vmem:[%s381 + $0x5f8] sm:$0xff]
        %v2889 = vld [vmem:[%s381 + $0x600] sm:$0xff]
        %v2890 = vld [vmem:[%s381 + $0x608] sm:$0xff]
        %v2891 = vld [vmem:[%s381 + $0x610] sm:$0xff]
        %v2892 = vld [vmem:[%s381 + $0x618] sm:$0xff]
        %v2893 = vld [vmem:[%s381 + $0x620] sm:$0xff]
        %v2894 = vld [vmem:[%s381 + $0x628] sm:$0xff]
        %v2895 = vld [vmem:[%s381 + $0x630] sm:$0xff]
        %v2896 = vld [vmem:[%s381 + $0x638] sm:$0xff]
        %v2897 = vld [vmem:[%s381 + $0x640] sm:$0xff]
        %v2898 = vld [vmem:[%s381 + $0x648] sm:$0xff]
        %v2899 = vld [vmem:[%s381 + $0x650] sm:$0xff]
        %v2900 = vld [vmem:[%s381 + $0x658] sm:$0xff]
        %v2901 = vld [vmem:[%s381 + $0x660] sm:$0xff]
        %v2902 = vld [vmem:[%s381 + $0x668] sm:$0xff]
        %v2903 = vld [vmem:[%s381 + $0x670] sm:$0xff]
        %v2904 = vld [vmem:[%s381 + $0x678] sm:$0xff]
        %v2905 = vld [vmem:[%s381 + $0x680] sm:$0xff]
        %v2906 = vld [vmem:[%s381 + $0x688] sm:$0xff]
        %v2907 = vld [vmem:[%s381 + $0x690] sm:$0xff]
        %v2908 = vld [vmem:[%s381 + $0x698] sm:$0xff]
        %v2909 = vld [vmem:[%s381 + $0x6a0] sm:$0xff]
        %v2910 = vld [vmem:[%s381 + $0x6a8] sm:$0xff]
        %v2911 = vld [vmem:[%s381 + $0x6b0] sm:$0xff]
        %v2912 = vld [vmem:[%s381 + $0x6b8] sm:$0xff]
        %v2913 = vld [vmem:[%s381 + $0x6c0] sm:$0xff]
        %v2914 = vld [vmem:[%s381 + $0x6c8] sm:$0xff]
        %v2915 = vld [vmem:[%s381 + $0x6d0] sm:$0xff]
        %v2916 = vld [vmem:[%s381 + $0x6d8] sm:$0xff]
        %v2917 = vld [vmem:[%s381 + $0x6e0] sm:$0xff]
        %v2918 = vld [vmem:[%s381 + $0x6e8] sm:$0xff]
        %v2919 = vld [vmem:[%s381 + $0x6f0] sm:$0xff]
        %v2920 = vld [vmem:[%s381 + $0x6f8] sm:$0xff]
        %v2921 = vld [vmem:[%s381 + $0x700] sm:$0xff]
        %v2922 = vld [vmem:[%s381 + $0x708] sm:$0xff]
        %v2923 = vld [vmem:[%s381 + $0x710] sm:$0xff]
        %v2924 = vld [vmem:[%s381 + $0x718] sm:$0xff]
        %v2925 = vld [vmem:[%s381 + $0x720] sm:$0xff]
        %v2926 = vld [vmem:[%s381 + $0x728] sm:$0xff]
        %v2927 = vld [vmem:[%s381 + $0x730] sm:$0xff]
        %v2928 = vld [vmem:[%s381 + $0x738] sm:$0xff]
        %v2929 = vld [vmem:[%s381 + $0x740] sm:$0xff]
        %v2930 = vld [vmem:[%s381 + $0x748] sm:$0xff]
        %v2931 = vld [vmem:[%s381 + $0x750] sm:$0xff]
        %v2932 = vld [vmem:[%s381 + $0x758] sm:$0xff]
        %v2933 = vld [vmem:[%s381 + $0x760] sm:$0xff]
        %v2934 = vld [vmem:[%s381 + $0x768] sm:$0xff]
        %v2935 = vld [vmem:[%s381 + $0x770] sm:$0xff]
        %v2936 = vld [vmem:[%s381 + $0x778] sm:$0xff]
        %v2937 = vld [vmem:[%s381 + $0x780] sm:$0xff]
        %v2938 = vld [vmem:[%s381 + $0x788] sm:$0xff]
        %v2939 = vld [vmem:[%s381 + $0x790] sm:$0xff]
        %v2940 = vld [vmem:[%s381 + $0x798] sm:$0xff]
        %v2941 = vld [vmem:[%s381 + $0x7a0] sm:$0xff]
        %v2942 = vld [vmem:[%s381 + $0x7a8] sm:$0xff]
        %v2943 = vld [vmem:[%s381 + $0x7b0] sm:$0xff]
        %v2944 = vld [vmem:[%s381 + $0x7b8] sm:$0xff]
        %v2945 = vld [vmem:[%s381 + $0x7c0] sm:$0xff]
        %v2946 = vld [vmem:[%s381 + $0x7c8] sm:$0xff]
        %v2947 = vld [vmem:[%s381 + $0x7d0] sm:$0xff]
        %v2948 = vld [vmem:[%s381 + $0x7d8] sm:$0xff]
        %v2949 = vld [vmem:[%s381 + $0x7e0] sm:$0xff]
        %v2950 = vld [vmem:[%s381 + $0x7e8] sm:$0xff]
        %v2951 = vld [vmem:[%s381 + $0x7f0] sm:$0xff]
        %v2952 = vld [vmem:[%s381 + $0x7f8] sm:$0xff]
        %v2953 = vld [vmem:[%s381 + $0x800] sm:$0xff]
        %v2954 = vld [vmem:[%s381 + $0x808] sm:$0xff]
        %v2955 = vld [vmem:[%s381 + $0x810] sm:$0xff]
        %v2956 = vld [vmem:[%s381 + $0x818] sm:$0xff]
        %v2957 = vld [vmem:[%s381 + $0x820] sm:$0xff]
        %v2958 = vld [vmem:[%s381 + $0x828] sm:$0xff]
        %v2959 = vld [vmem:[%s381 + $0x830] sm:$0xff]
        %v2960 = vld [vmem:[%s381 + $0x838] sm:$0xff]
        %v2961 = vld [vmem:[%s381 + $0x840] sm:$0xff]
        %v2962 = vld [vmem:[%s381 + $0x848] sm:$0xff]
        %v2963 = vld [vmem:[%s381 + $0x850] sm:$0xff]
        %v2964 = vld [vmem:[%s381 + $0x858] sm:$0xff]
        %v2965 = vld [vmem:[%s381 + $0x860] sm:$0xff]
        %v2966 = vld [vmem:[%s381 + $0x868] sm:$0xff]
        %v2967 = vld [vmem:[%s381 + $0x870] sm:$0xff]
        %v2968 = vld [vmem:[%s381 + $0x878] sm:$0xff]
        %v2969 = vld [vmem:[%s381 + $0x880] sm:$0xff]
        %v2970 = vld [vmem:[%s381 + $0x888] sm:$0xff]
        %v2971 = vld [vmem:[%s381 + $0x890] sm:$0xff]
        %v2972 = vld [vmem:[%s381 + $0x898] sm:$0xff]
        %v2973 = vld [vmem:[%s381 + $0x8a0] sm:$0xff]
        %v2974 = vld [vmem:[%s381 + $0x8a8] sm:$0xff]
        %v2975 = vld [vmem:[%s381 + $0x8b0] sm:$0xff]
        %v2976 = vld [vmem:[%s381 + $0x8b8] sm:$0xff]
        %v2977 = vld [vmem:[%s381 + $0x8c0] sm:$0xff]
        %v2978 = vld [vmem:[%s381 + $0x8c8] sm:$0xff]
        %v2979 = vld [vmem:[%s381 + $0x8d0] sm:$0xff]
        %v2980 = vld [vmem:[%s381 + $0x8d8] sm:$0xff]
        %v2981 = vld [vmem:[%s381 + $0x8e0] sm:$0xff]
        %v2982 = vld [vmem:[%s381 + $0x8e8] sm:$0xff]
        %v2983 = vld [vmem:[%s381 + $0x8f0] sm:$0xff]
        %v2984 = vld [vmem:[%s381 + $0x8f8] sm:$0xff]
        %v2985 = vld [vmem:[%s381 + $0x900] sm:$0xff]
        %v2986 = vld [vmem:[%s381 + $0x908] sm:$0xff]
        %v2987 = vld [vmem:[%s381 + $0x910] sm:$0xff]
        %v2988 = vld [vmem:[%s381 + $0x918] sm:$0xff]
        %v2989 = vld [vmem:[%s381 + $0x920] sm:$0xff]
        %v2990 = vld [vmem:[%s381 + $0x928] sm:$0xff]
        %v2991 = vld [vmem:[%s381 + $0x930] sm:$0xff]
        %v2992 = vld [vmem:[%s381 + $0x938] sm:$0xff]
        %v2993 = vld [vmem:[%s381 + $0x940] sm:$0xff]
        %v2994 = vld [vmem:[%s381 + $0x948] sm:$0xff]
        %v2995 = vld [vmem:[%s381 + $0x950] sm:$0xff]
        %v2996 = vld [vmem:[%s381 + $0x958] sm:$0xff]
        %v2997 = vld [vmem:[%s381 + $0x960] sm:$0xff]
        %v2998 = vld [vmem:[%s381 + $0x968] sm:$0xff]
        %v2999 = vld [vmem:[%s381 + $0x970] sm:$0xff]
        %v3000 = vld [vmem:[%s381 + $0x978] sm:$0xff]
        %v3001 = vld [vmem:[%s381 + $0x980] sm:$0xff]
        %v3002 = vld [vmem:[%s381 + $0x988] sm:$0xff]
        %v3003 = vld [vmem:[%s381 + $0x990] sm:$0xff]
        %v3004 = vld [vmem:[%s381 + $0x998] sm:$0xff]
        %v3005 = vld [vmem:[%s381 + $0x9a0] sm:$0xff]
        %v3006 = vld [vmem:[%s381 + $0x9a8] sm:$0xff]
        %v3007 = vld [vmem:[%s381 + $0x9b0] sm:$0xff]
        %v3008 = vld [vmem:[%s381 + $0x9b8] sm:$0xff]
        %v3009 = vld [vmem:[%s381 + $0x9c0] sm:$0xff]
        %v3010 = vld [vmem:[%s381 + $0x9c8] sm:$0xff]
        %v3011 = vld [vmem:[%s381 + $0x9d0] sm:$0xff]
        %v3012 = vld [vmem:[%s381 + $0x9d8] sm:$0xff]
        %v3013 = vld [vmem:[%s381 + $0x9e0] sm:$0xff]
        %v3014 = vld [vmem:[%s381 + $0x9e8] sm:$0xff]
        %v3015 = vld [vmem:[%s381 + $0x9f0] sm:$0xff]
        %v3016 = vld [vmem:[%s381 + $0x9f8] sm:$0xff]
        %v3017 = vld [vmem:[%s381 + $0xa00] sm:$0xff]
        %v3018 = vld [vmem:[%s381 + $0xa08] sm:$0xff]
        %v3019 = vld [vmem:[%s381 + $0xa10] sm:$0xff]
        %v3020 = vld [vmem:[%s381 + $0xa18] sm:$0xff]
        %v3021 = vld [vmem:[%s381 + $0xa20] sm:$0xff]
        %v3022 = vld [vmem:[%s381 + $0xa28] sm:$0xff]
        %v3023 = vld [vmem:[%s381 + $0xa30] sm:$0xff]
        %v3024 = vld [vmem:[%s381 + $0xa38] sm:$0xff]
        %v3025 = vld [vmem:[%s381 + $0xa40] sm:$0xff]
        %v3026 = vld [vmem:[%s381 + $0xa48] sm:$0xff]
        %v3027 = vld [vmem:[%s381 + $0xa50] sm:$0xff]
        %v3028 = vld [vmem:[%s381 + $0xa58] sm:$0xff]
        %v3029 = vld [vmem:[%s381 + $0xa60] sm:$0xff]
        %v3030 = vld [vmem:[%s381 + $0xa68] sm:$0xff]
        %v3031 = vld [vmem:[%s381 + $0xa70] sm:$0xff]
        %v3032 = vld [vmem:[%s381 + $0xa78] sm:$0xff]
        %v3033 = vld [vmem:[%s381 + $0xa80] sm:$0xff]
        %v3034 = vld [vmem:[%s381 + $0xa88] sm:$0xff]
        %v3035 = vld [vmem:[%s381 + $0xa90] sm:$0xff]
        %v3036 = vld [vmem:[%s381 + $0xa98] sm:$0xff]
        %v3037 = vld [vmem:[%s381 + $0xaa0] sm:$0xff]
        %v3038 = vld [vmem:[%s381 + $0xaa8] sm:$0xff]
        %v3039 = vld [vmem:[%s381 + $0xab0] sm:$0xff]
        %v3040 = vld [vmem:[%s381 + $0xab8] sm:$0xff]
        %v3041 = vld [vmem:[%s381 + $0xac0] sm:$0xff]
        %v3042 = vld [vmem:[%s381 + $0xac8] sm:$0xff]
        %v3043 = vld [vmem:[%s381 + $0xad0] sm:$0xff]
        %v3044 = vld [vmem:[%s381 + $0xad8] sm:$0xff]
        %v3045 = vld [vmem:[%s381 + $0xae0] sm:$0xff]
        %v3046 = vld [vmem:[%s381 + $0xae8] sm:$0xff]
        %v3047 = vld [vmem:[%s381 + $0xaf0] sm:$0xff]
        %v3048 = vld [vmem:[%s381 + $0xaf8] sm:$0xff]
        %v3049 = vld [vmem:[%s381 + $0xb00] sm:$0xff]
        %v3050 = vld [vmem:[%s381 + $0xb08] sm:$0xff]
        %v3051 = vld [vmem:[%s381 + $0xb10] sm:$0xff]
        %v3052 = vld [vmem:[%s381 + $0xb18] sm:$0xff]
        %v3053 = vld [vmem:[%s381 + $0xb20] sm:$0xff]
        %v3054 = vld [vmem:[%s381 + $0xb28] sm:$0xff]
        %v3055 = vld [vmem:[%s381 + $0xb30] sm:$0xff]
        %v3056 = vld [vmem:[%s381 + $0xb38] sm:$0xff]
        %v3057 = vld [vmem:[%s381 + $0xb40] sm:$0xff]
        %v3058 = vld [vmem:[%s381 + $0xb48] sm:$0xff]
        %v3059 = vld [vmem:[%s381 + $0xb50] sm:$0xff]
        %v3060 = vld [vmem:[%s381 + $0xb58] sm:$0xff]
        %v3061 = vld [vmem:[%s381 + $0xb60] sm:$0xff]
        %v3062 = vld [vmem:[%s381 + $0xb68] sm:$0xff]
        %v3063 = vld [vmem:[%s381 + $0xb70] sm:$0xff]
        %v3064 = vld [vmem:[%s381 + $0xb78] sm:$0xff]
        %v3065 = vld [vmem:[%s381 + $0xb80] sm:$0xff]
        %v3066 = vld [vmem:[%s381 + $0xb88] sm:$0xff]
        %v3067 = vld [vmem:[%s381 + $0xb90] sm:$0xff]
        %v3068 = vld [vmem:[%s381 + $0xb98] sm:$0xff]
        %v3069 = vld [vmem:[%s381 + $0xba0] sm:$0xff]
        %v3070 = vld [vmem:[%s381 + $0xba8] sm:$0xff]
        %v3071 = vld [vmem:[%s381 + $0xbb0] sm:$0xff]
        %v3072 = vld [vmem:[%s381 + $0xbb8] sm:$0xff]
        %v3073 = vld [vmem:[%s381 + $0xbc0] sm:$0xff]
        %v3074 = vld [vmem:[%s381 + $0xbc8] sm:$0xff]
        %v3075 = vld [vmem:[%s381 + $0xbd0] sm:$0xff]
        %v3076 = vld [vmem:[%s381 + $0xbd8] sm:$0xff]
        %v3077 = vld [vmem:[%s381 + $0xbe0] sm:$0xff]
        %v3078 = vld [vmem:[%s381 + $0xbe8] sm:$0xff]
        %v3079 = vld [vmem:[%s381 + $0xbf0] sm:$0xff]
        %v3080 = vld [vmem:[%s381 + $0xbf8] sm:$0xff]
        %v3081 = vld [vmem:[%s381 + $0xc00] sm:$0xff]
        %v3082 = vld [vmem:[%s381 + $0xc08] sm:$0xff]
        %v3083 = vld [vmem:[%s381 + $0xc10] sm:$0xff]
        %v3084 = vld [vmem:[%s381 + $0xc18] sm:$0xff]
        %v3085 = vld [vmem:[%s381 + $0xc20] sm:$0xff]
        %v3086 = vld [vmem:[%s381 + $0xc28] sm:$0xff]
        %v3087 = vld [vmem:[%s381 + $0xc30] sm:$0xff]
        %v3088 = vld [vmem:[%s381 + $0xc38] sm:$0xff]
        %v3089 = vld [vmem:[%s381 + $0xc40] sm:$0xff]
        %v3090 = vld [vmem:[%s381 + $0xc48] sm:$0xff]
        %v3091 = vld [vmem:[%s381 + $0xc50] sm:$0xff]
        %v3092 = vld [vmem:[%s381 + $0xc58] sm:$0xff]
        %v3093 = vld [vmem:[%s381 + $0xc60] sm:$0xff]
        %v3094 = vld [vmem:[%s381 + $0xc68] sm:$0xff]
        %v3095 = vld [vmem:[%s381 + $0xc70] sm:$0xff]
        %v3096 = vld [vmem:[%s381 + $0xc78] sm:$0xff]
        %v3097 = vld [vmem:[%s381 + $0xc80] sm:$0xff]
        %v3098 = vld [vmem:[%s381 + $0xc88] sm:$0xff]
        %v3099 = vld [vmem:[%s381 + $0xc90] sm:$0xff]
        %v3100 = vld [vmem:[%s381 + $0xc98] sm:$0xff]
        %v3101 = vld [vmem:[%s381 + $0xca0] sm:$0xff]
        %v3102 = vld [vmem:[%s381 + $0xca8] sm:$0xff]
        %v3103 = vld [vmem:[%s381 + $0xcb0] sm:$0xff]
        %v3104 = vld [vmem:[%s381 + $0xcb8] sm:$0xff]
        %v3105 = vld [vmem:[%s381 + $0xcc0] sm:$0xff]
        %v3106 = vld [vmem:[%s381 + $0xcc8] sm:$0xff]
        %v3107 = vld [vmem:[%s381 + $0xcd0] sm:$0xff]
        %v3108 = vld [vmem:[%s381 + $0xcd8] sm:$0xff]
        %v3109 = vld [vmem:[%s381 + $0xce0] sm:$0xff]
        %v3110 = vld [vmem:[%s381 + $0xce8] sm:$0xff]
        %v3111 = vld [vmem:[%s381 + $0xcf0] sm:$0xff]
        %v3112 = vld [vmem:[%s381 + $0xcf8] sm:$0xff]
        %v3113 = vld [vmem:[%s381 + $0xd00] sm:$0xff]
        %v3114 = vld [vmem:[%s381 + $0xd08] sm:$0xff]
        %v3115 = vld [vmem:[%s381 + $0xd10] sm:$0xff]
        %v3116 = vld [vmem:[%s381 + $0xd18] sm:$0xff]
        %v3117 = vld [vmem:[%s381 + $0xd20] sm:$0xff]
        %v3118 = vld [vmem:[%s381 + $0xd28] sm:$0xff]
        %v3119 = vld [vmem:[%s381 + $0xd30] sm:$0xff]
        %v3120 = vld [vmem:[%s381 + $0xd38] sm:$0xff]
        %v3121 = vld [vmem:[%s381 + $0xd40] sm:$0xff]
        %v3122 = vld [vmem:[%s381 + $0xd48] sm:$0xff]
        %v3123 = vld [vmem:[%s381 + $0xd50] sm:$0xff]
        %v3124 = vld [vmem:[%s381 + $0xd58] sm:$0xff]
        %v3125 = vld [vmem:[%s381 + $0xd60] sm:$0xff]
        %v3126 = vld [vmem:[%s381 + $0xd68] sm:$0xff]
        %v3127 = vld [vmem:[%s381 + $0xd70] sm:$0xff]
        %v3128 = vld [vmem:[%s381 + $0xd78] sm:$0xff]
        %v3129 = vld [vmem:[%s381 + $0xd80] sm:$0xff]
        %v3130 = vld [vmem:[%s381 + $0xd88] sm:$0xff]
        %v3131 = vld [vmem:[%s381 + $0xd90] sm:$0xff]
        %v3132 = vld [vmem:[%s381 + $0xd98] sm:$0xff]
        %v3133 = vld [vmem:[%s381 + $0xda0] sm:$0xff]
        %v3134 = vld [vmem:[%s381 + $0xda8] sm:$0xff]
        %v3135 = vld [vmem:[%s381 + $0xdb0] sm:$0xff]
        %v3136 = vld [vmem:[%s381 + $0xdb8] sm:$0xff]
        %v3137 = vld [vmem:[%s381 + $0xdc0] sm:$0xff]
        %v3138 = vld [vmem:[%s381 + $0xdc8] sm:$0xff]
        %v3139 = vld [vmem:[%s381 + $0xdd0] sm:$0xff]
        %v3140 = vld [vmem:[%s381 + $0xdd8] sm:$0xff]
        %v3141 = vld [vmem:[%s381 + $0xde0] sm:$0xff]
        %v3142 = vld [vmem:[%s381 + $0xde8] sm:$0xff]
        %v3143 = vld [vmem:[%s381 + $0xdf0] sm:$0xff]
        %v3144 = vld [vmem:[%s381 + $0xdf8] sm:$0xff]
        %v3145 = vld [vmem:[%s381 + $0xe00] sm:$0xff]
        %v3146 = vld [vmem:[%s381 + $0xe08] sm:$0xff]
        %v3147 = vld [vmem:[%s381 + $0xe10] sm:$0xff]
        %v3148 = vld [vmem:[%s381 + $0xe18] sm:$0xff]
        %v3149 = vld [vmem:[%s381 + $0xe20] sm:$0xff]
        %v3150 = vld [vmem:[%s381 + $0xe28] sm:$0xff]
        %v3151 = vld [vmem:[%s381 + $0xe30] sm:$0xff]
        %v3152 = vld [vmem:[%s381 + $0xe38] sm:$0xff]
        %v3153 = vld [vmem:[%s381 + $0xe40] sm:$0xff]
        %v3154 = vld [vmem:[%s381 + $0xe48] sm:$0xff]
        %v3155 = vld [vmem:[%s381 + $0xe50] sm:$0xff]
        %v3156 = vld [vmem:[%s381 + $0xe58] sm:$0xff]
        %v3157 = vld [vmem:[%s381 + $0xe60] sm:$0xff]
        %v3158 = vld [vmem:[%s381 + $0xe68] sm:$0xff]
        %v3159 = vld [vmem:[%s381 + $0xe70] sm:$0xff]
        %v3160 = vld [vmem:[%s381 + $0xe78] sm:$0xff]
        %v3161 = vld [vmem:[%s381 + $0xe80] sm:$0xff]
        %v3162 = vld [vmem:[%s381 + $0xe88] sm:$0xff]
        %v3163 = vld [vmem:[%s381 + $0xe90] sm:$0xff]
        %v3164 = vld [vmem:[%s381 + $0xe98] sm:$0xff]
        %v3165 = vld [vmem:[%s381 + $0xea0] sm:$0xff]
        %v3166 = vld [vmem:[%s381 + $0xea8] sm:$0xff]
        %v3167 = vld [vmem:[%s381 + $0xeb0] sm:$0xff]
        %v3168 = vld [vmem:[%s381 + $0xeb8] sm:$0xff]
        %v3169 = vld [vmem:[%s381 + $0xec0] sm:$0xff]
        %v3170 = vld [vmem:[%s381 + $0xec8] sm:$0xff]
        %v3171 = vld [vmem:[%s381 + $0xed0] sm:$0xff]
        %v3172 = vld [vmem:[%s381 + $0xed8] sm:$0xff]
        %v3173 = vld [vmem:[%s381 + $0xee0] sm:$0xff]
        %v3174 = vld [vmem:[%s381 + $0xee8] sm:$0xff]
        %v3175 = vld [vmem:[%s381 + $0xef0] sm:$0xff]
        %v3176 = vld [vmem:[%s381 + $0xef8] sm:$0xff]
        %v3177 = vld [vmem:[%s381 + $0xf00] sm:$0xff]
        %v3178 = vld [vmem:[%s381 + $0xf08] sm:$0xff]
        %v3179 = vld [vmem:[%s381 + $0xf10] sm:$0xff]
        %v3180 = vld [vmem:[%s381 + $0xf18] sm:$0xff]
        %v3181 = vld [vmem:[%s381 + $0xf20] sm:$0xff]
        %v3182 = vld [vmem:[%s381 + $0xf28] sm:$0xff]
        %v3183 = vld [vmem:[%s381 + $0xf30] sm:$0xff]
        %v3184 = vld [vmem:[%s381 + $0xf38] sm:$0xff]
        %v3185 = vld [vmem:[%s381 + $0xf40] sm:$0xff]
        %v3186 = vld [vmem:[%s381 + $0xf48] sm:$0xff]
        %v3187 = vld [vmem:[%s381 + $0xf50] sm:$0xff]
        %v3188 = vld [vmem:[%s381 + $0xf58] sm:$0xff]
        %v3189 = vld [vmem:[%s381 + $0xf60] sm:$0xff]
        %v3190 = vld [vmem:[%s381 + $0xf68] sm:$0xff]
        %v3191 = vld [vmem:[%s381 + $0xf70] sm:$0xff]
        %v3192 = vld [vmem:[%s381 + $0xf78] sm:$0xff]
        %v3193 = vld [vmem:[%s381 + $0xf80] sm:$0xff]
        %v3194 = vld [vmem:[%s381 + $0xf88] sm:$0xff]
        %v3195 = vld [vmem:[%s381 + $0xf90] sm:$0xff]
        %v3196 = vld [vmem:[%s381 + $0xf98] sm:$0xff]
        %v3197 = vld [vmem:[%s381 + $0xfa0] sm:$0xff]
        %v3198 = vld [vmem:[%s381 + $0xfa8] sm:$0xff]
        %v3199 = vld [vmem:[%s381 + $0xfb0] sm:$0xff]
        %v3200 = vld [vmem:[%s381 + $0xfb8] sm:$0xff]
        %v3201 = vld [vmem:[%s381 + $0xfc0] sm:$0xff]
        %v3202 = vld [vmem:[%s381 + $0xfc8] sm:$0xff]
        %v3203 = vld [vmem:[%s381 + $0xfd0] sm:$0xff]
        %v3204 = vld [vmem:[%s381 + $0xfd8] sm:$0xff]
        %v3205 = vld [vmem:[%s381 + $0xfe0] sm:$0xff]
        %v3206 = vld [vmem:[%s381 + $0xfe8] sm:$0xff]
        %v3207 = vld [vmem:[%s381 + $0xff0] sm:$0xff]
        %v3208 = vld [vmem:[%s381 + $0xff8] sm:$0xff]
        %v3209 = vld [vmem:[%s381 + $0x1000] sm:$0xff]
        %v3210 = vld [vmem:[%s381 + $0x1008] sm:$0xff]
        %v3211 = vld [vmem:[%s381 + $0x1010] sm:$0xff]
        %v3212 = vld [vmem:[%s381 + $0x1018] sm:$0xff]
        %v3213 = vld [vmem:[%s381 + $0x1020] sm:$0xff]
        %v3214 = vld [vmem:[%s381 + $0x1028] sm:$0xff]
        %v3215 = vld [vmem:[%s381 + $0x1030] sm:$0xff]
        %v3216 = vld [vmem:[%s381 + $0x1038] sm:$0xff]
        %v3217 = vld [vmem:[%s381 + $0x1040] sm:$0xff]
        %v3218 = vld [vmem:[%s381 + $0x1048] sm:$0xff]
        %v3219 = vld [vmem:[%s381 + $0x1050] sm:$0xff]
        %v3220 = vld [vmem:[%s381 + $0x1058] sm:$0xff]
        %v3221 = vld [vmem:[%s381 + $0x1060] sm:$0xff]
        %v3222 = vld [vmem:[%s381 + $0x1068] sm:$0xff]
        %v3223 = vld [vmem:[%s381 + $0x1070] sm:$0xff]
        %v3224 = vld [vmem:[%s381 + $0x1078] sm:$0xff]
        %v3225 = vld [vmem:[%s381 + $0x1080] sm:$0xff]
        %v3226 = vld [vmem:[%s381 + $0x1088] sm:$0xff]
        %v3227 = vld [vmem:[%s381 + $0x1090] sm:$0xff]
        %v3228 = vld [vmem:[%s381 + $0x1098] sm:$0xff]
        %v3229 = vld [vmem:[%s381 + $0x10a0] sm:$0xff]
        %v3230 = vld [vmem:[%s381 + $0x10a8] sm:$0xff]
        %v3231 = vld [vmem:[%s381 + $0x10b0] sm:$0xff]
        %v3232 = vld [vmem:[%s381 + $0x10b8] sm:$0xff]
        %v3233 = vld [vmem:[%s381 + $0x10c0] sm:$0xff]
        %v3234 = vld [vmem:[%s381 + $0x10c8] sm:$0xff]
        %v3235 = vld [vmem:[%s381 + $0x10d0] sm:$0xff]
        %v3236 = vld [vmem:[%s381 + $0x10d8] sm:$0xff]
        %v3237 = vld [vmem:[%s381 + $0x10e0] sm:$0xff]
        %v3238 = vld [vmem:[%s381 + $0x10e8] sm:$0xff]
        %v3239 = vld [vmem:[%s381 + $0x10f0] sm:$0xff]
        %v3240 = vld [vmem:[%s381 + $0x10f8] sm:$0xff]
        %v3241 = vld [vmem:[%s381 + $0x1100] sm:$0xff]
        %v3242 = vld [vmem:[%s381 + $0x1108] sm:$0xff]
        %v3243 = vld [vmem:[%s381 + $0x1110] sm:$0xff]
        %v3244 = vld [vmem:[%s381 + $0x1118] sm:$0xff]
        %v3245 = vld [vmem:[%s381 + $0x1120] sm:$0xff]
        %v3246 = vld [vmem:[%s381 + $0x1128] sm:$0xff]
        %v3247 = vld [vmem:[%s381 + $0x1130] sm:$0xff]
        %v3248 = vld [vmem:[%s381 + $0x1138] sm:$0xff]
        %v3249 = vld [vmem:[%s381 + $0x1140] sm:$0xff]
        %v3250 = vld [vmem:[%s381 + $0x1148] sm:$0xff]
        %v3251 = vld [vmem:[%s381 + $0x1150] sm:$0xff]
        %v3252 = vld [vmem:[%s381 + $0x1158] sm:$0xff]
        %v3253 = vld [vmem:[%s381 + $0x1160] sm:$0xff]
        %v3254 = vld [vmem:[%s381 + $0x1168] sm:$0xff]
        %v3255 = vld [vmem:[%s381 + $0x1170] sm:$0xff]
        %v3256 = vld [vmem:[%s381 + $0x1178] sm:$0xff]
        %v3257 = vld [vmem:[%s381 + $0x1180] sm:$0xff]
        %v3258 = vld [vmem:[%s381 + $0x1188] sm:$0xff]
        %v3259 = vld [vmem:[%s381 + $0x1190] sm:$0xff]
        %v3260 = vld [vmem:[%s381 + $0x1198] sm:$0xff]
        %v3261 = vld [vmem:[%s381 + $0x11a0] sm:$0xff]
        %v3262 = vld [vmem:[%s381 + $0x11a8] sm:$0xff]
        %v3263 = vld [vmem:[%s381 + $0x11b0] sm:$0xff]
        %v3264 = vld [vmem:[%s381 + $0x11b8] sm:$0xff]
        %v3265 = vld [vmem:[%s381 + $0x11c0] sm:$0xff]
        %v3266 = vld [vmem:[%s381 + $0x11c8] sm:$0xff]
        %v3267 = vld [vmem:[%s381 + $0x11d0] sm:$0xff]
        %v3268 = vld [vmem:[%s381 + $0x11d8] sm:$0xff]
        %v3269 = vld [vmem:[%s381 + $0x11e0] sm:$0xff]
        %v3270 = vld [vmem:[%s381 + $0x11e8] sm:$0xff]
        %v3271 = vld [vmem:[%s381 + $0x11f0] sm:$0xff]
        %v3272 = vld [vmem:[%s381 + $0x11f8] sm:$0xff]
        %v3273 = vld [vmem:[%s381 + $0x1200] sm:$0xff]
        %v3274 = vld [vmem:[%s381 + $0x1208] sm:$0xff]
        %v3275 = vld [vmem:[%s381 + $0x1210] sm:$0xff]
        %v3276 = vld [vmem:[%s381 + $0x1218] sm:$0xff]
        %v3277 = vld [vmem:[%s381 + $0x1220] sm:$0xff]
        %v3278 = vld [vmem:[%s381 + $0x1228] sm:$0xff]
        %v3279 = vld [vmem:[%s381 + $0x1230] sm:$0xff]
        %v3280 = vld [vmem:[%s381 + $0x1238] sm:$0xff]
        %v3281 = vld [vmem:[%s381 + $0x1240] sm:$0xff]
        %v3282 = vld [vmem:[%s381 + $0x1248] sm:$0xff]
        %v3283 = vld [vmem:[%s381 + $0x1250] sm:$0xff]
        %v3284 = vld [vmem:[%s381 + $0x1258] sm:$0xff]
        %v3285 = vld [vmem:[%s381 + $0x1260] sm:$0xff]
        %v3286 = vld [vmem:[%s381 + $0x1268] sm:$0xff]
        %v3287 = vld [vmem:[%s381 + $0x1270] sm:$0xff]
        %v3288 = vld [vmem:[%s381 + $0x1278] sm:$0xff]
        %v3289 = vld [vmem:[%s381 + $0x1280] sm:$0xff]
        %v3290 = vld [vmem:[%s381 + $0x1288] sm:$0xff]
        %v3291 = vld [vmem:[%s381 + $0x1290] sm:$0xff]
        %v3292 = vld [vmem:[%s381 + $0x1298] sm:$0xff]
        %v3293 = vld [vmem:[%s381 + $0x12a0] sm:$0xff]
        %v3294 = vld [vmem:[%s381 + $0x12a8] sm:$0xff]
        %v3295 = vld [vmem:[%s381 + $0x12b0] sm:$0xff]
        %v3296 = vld [vmem:[%s381 + $0x12b8] sm:$0xff]
        %v3297 = vld [vmem:[%s381 + $0x12c0] sm:$0xff]
        %v3298 = vld [vmem:[%s381 + $0x12c8] sm:$0xff]
        %v3299 = vld [vmem:[%s381 + $0x12d0] sm:$0xff]
        %v3300 = vld [vmem:[%s381 + $0x12d8] sm:$0xff]
        %v3301 = vld [vmem:[%s381 + $0x12e0] sm:$0xff]
        %v3302 = vld [vmem:[%s381 + $0x12e8] sm:$0xff]
        %v3303 = vld [vmem:[%s381 + $0x12f0] sm:$0xff]
        %v3304 = vld [vmem:[%s381 + $0x12f8] sm:$0xff]
        %v3305 = vld [vmem:[%s381 + $0x1300] sm:$0xff]
        %v3306 = vld [vmem:[%s381 + $0x1308] sm:$0xff]
        %v3307 = vld [vmem:[%s381 + $0x1310] sm:$0xff]
        %v3308 = vld [vmem:[%s381 + $0x1318] sm:$0xff]
        %v3309 = vld [vmem:[%s381 + $0x1320] sm:$0xff]
        %v3310 = vld [vmem:[%s381 + $0x1328] sm:$0xff]
        %v3311 = vld [vmem:[%s381 + $0x1330] sm:$0xff]
        %v3312 = vld [vmem:[%s381 + $0x1338] sm:$0xff]
        %v3313 = vld [vmem:[%s381 + $0x1340] sm:$0xff]
        %v3314 = vld [vmem:[%s381 + $0x1348] sm:$0xff]
        %v3315 = vld [vmem:[%s381 + $0x1350] sm:$0xff]
        %v3316 = vld [vmem:[%s381 + $0x1358] sm:$0xff]
        %v3317 = vld [vmem:[%s381 + $0x1360] sm:$0xff]
        %v3318 = vld [vmem:[%s381 + $0x1368] sm:$0xff]
        %v3319 = vld [vmem:[%s381 + $0x1370] sm:$0xff]
        %v3320 = vld [vmem:[%s381 + $0x1378] sm:$0xff]
        %v3321 = vld [vmem:[%s381 + $0x1380] sm:$0xff]
        %v3322 = vld [vmem:[%s381 + $0x1388] sm:$0xff]
        %v3323 = vld [vmem:[%s381 + $0x1390] sm:$0xff]
        %v3324 = vld [vmem:[%s381 + $0x1398] sm:$0xff]
        %v3325 = vld [vmem:[%s381 + $0x13a0] sm:$0xff]
        %v3326 = vld [vmem:[%s381 + $0x13a8] sm:$0xff]
        %v3327 = vld [vmem:[%s381 + $0x13b0] sm:$0xff]
        %v3328 = vld [vmem:[%s381 + $0x13b8] sm:$0xff]
        %v3329 = vld [vmem:[%s381 + $0x13c0] sm:$0xff]
        %v3330 = vld [vmem:[%s381 + $0x13c8] sm:$0xff]
        %v3331 = vld [vmem:[%s381 + $0x13d0] sm:$0xff]
        %v3332 = vld [vmem:[%s381 + $0x13d8] sm:$0xff]
        %v3333 = vld [vmem:[%s381 + $0x13e0] sm:$0xff]
        %v3334 = vld [vmem:[%s381 + $0x13e8] sm:$0xff]
        %v3335 = vld [vmem:[%s381 + $0x13f0] sm:$0xff]
        %v3336 = vld [vmem:[%s381 + $0x13f8] sm:$0xff]
        %v3337 = vld [vmem:[%s381 + $0x1400] sm:$0xff]
        %v3338 = vld [vmem:[%s381 + $0x1408] sm:$0xff]
        %v3339 = vld [vmem:[%s381 + $0x1410] sm:$0xff]
        %v3340 = vld [vmem:[%s381 + $0x1418] sm:$0xff]
        %v3341 = vld [vmem:[%s381 + $0x1420] sm:$0xff]
        %v3342 = vld [vmem:[%s381 + $0x1428] sm:$0xff]
        %v3343 = vld [vmem:[%s381 + $0x1430] sm:$0xff]
        %v3344 = vld [vmem:[%s381 + $0x1438] sm:$0xff]
        %v3345 = vld [vmem:[%s381 + $0x1440] sm:$0xff]
        %v3346 = vld [vmem:[%s381 + $0x1448] sm:$0xff]
        %v3347 = vld [vmem:[%s381 + $0x1450] sm:$0xff]
        %v3348 = vld [vmem:[%s381 + $0x1458] sm:$0xff]
        %v3349 = vld [vmem:[%s381 + $0x1460] sm:$0xff]
        %v3350 = vld [vmem:[%s381 + $0x1468] sm:$0xff]
        %v3351 = vld [vmem:[%s381 + $0x1470] sm:$0xff]
        %v3352 = vld [vmem:[%s381 + $0x1478] sm:$0xff]
        %v3353 = vld [vmem:[%s381 + $0x1480] sm:$0xff]
        %v3354 = vld [vmem:[%s381 + $0x1488] sm:$0xff]
        %v3355 = vld [vmem:[%s381 + $0x1490] sm:$0xff]
        %v3356 = vld [vmem:[%s381 + $0x1498] sm:$0xff]
        %v3357 = vld [vmem:[%s381 + $0x14a0] sm:$0xff]
        %v3358 = vld [vmem:[%s381 + $0x14a8] sm:$0xff]
        %v3359 = vld [vmem:[%s381 + $0x14b0] sm:$0xff]
        %v3360 = vld [vmem:[%s381 + $0x14b8] sm:$0xff]
        %v3361 = vld [vmem:[%s381 + $0x14c0] sm:$0xff]
        %v3362 = vld [vmem:[%s381 + $0x14c8] sm:$0xff]
        %v3363 = vld [vmem:[%s381 + $0x14d0] sm:$0xff]
        %v3364 = vld [vmem:[%s381 + $0x14d8] sm:$0xff]
        %v3365 = vld [vmem:[%s381 + $0x14e0] sm:$0xff]
        %v3366 = vld [vmem:[%s381 + $0x14e8] sm:$0xff]
        %v3367 = vld [vmem:[%s381 + $0x14f0] sm:$0xff]
        %v3368 = vld [vmem:[%s381 + $0x14f8] sm:$0xff]
        %v3369 = vld [vmem:[%s381 + $0x1500] sm:$0xff]
        %v3370 = vld [vmem:[%s381 + $0x1508] sm:$0xff]
        %v3371 = vld [vmem:[%s381 + $0x1510] sm:$0xff]
        %v3372 = vld [vmem:[%s381 + $0x1518] sm:$0xff]
        %v3373 = vld [vmem:[%s381 + $0x1520] sm:$0xff]
        %v3374 = vld [vmem:[%s381 + $0x1528] sm:$0xff]
        %v3375 = vld [vmem:[%s381 + $0x1530] sm:$0xff]
        %v3376 = vld [vmem:[%s381 + $0x1538] sm:$0xff]
        %v3377 = vld [vmem:[%s381 + $0x1540] sm:$0xff]
        %v3378 = vld [vmem:[%s381 + $0x1548] sm:$0xff]
        %v3379 = vld [vmem:[%s381 + $0x1550] sm:$0xff]
        %v3380 = vld [vmem:[%s381 + $0x1558] sm:$0xff]
        %v3381 = vld [vmem:[%s381 + $0x1560] sm:$0xff]
        %v3382 = vld [vmem:[%s381 + $0x1568] sm:$0xff]
        %v3383 = vld [vmem:[%s381 + $0x1570] sm:$0xff]
        %v3384 = vld [vmem:[%s381 + $0x1578] sm:$0xff]
        %v3385 = vld [vmem:[%s381 + $0x1580] sm:$0xff]
        %v3386 = vld [vmem:[%s381 + $0x1588] sm:$0xff]
        %v3387 = vld [vmem:[%s381 + $0x1590] sm:$0xff]
        %v3388 = vld [vmem:[%s381 + $0x1598] sm:$0xff]
        %v3389 = vld [vmem:[%s381 + $0x15a0] sm:$0xff]
        %v3390 = vld [vmem:[%s381 + $0x15a8] sm:$0xff]
        %v3391 = vld [vmem:[%s381 + $0x15b0] sm:$0xff]
        %v3392 = vld [vmem:[%s381 + $0x15b8] sm:$0xff]
        %v3393 = vld [vmem:[%s381 + $0x15c0] sm:$0xff]
        %v3394 = vld [vmem:[%s381 + $0x15c8] sm:$0xff]
        %v3395 = vld [vmem:[%s381 + $0x15d0] sm:$0xff]
        %v3396 = vld [vmem:[%s381 + $0x15d8] sm:$0xff]
        %v3397 = vld [vmem:[%s381 + $0x15e0] sm:$0xff]
        %v3398 = vld [vmem:[%s381 + $0x15e8] sm:$0xff]
        %v3399 = vld [vmem:[%s381 + $0x15f0] sm:$0xff]
        %v3400 = vld [vmem:[%s381 + $0x15f8] sm:$0xff]
        %v3401 = vld [vmem:[%s381 + $0x1600] sm:$0xff]
        %v3402 = vld [vmem:[%s381 + $0x1608] sm:$0xff]
        %v3403 = vld [vmem:[%s381 + $0x1610] sm:$0xff]
        %v3404 = vld [vmem:[%s381 + $0x1618] sm:$0xff]
        %v3405 = vld [vmem:[%s381 + $0x1620] sm:$0xff]
        %v3406 = vld [vmem:[%s381 + $0x1628] sm:$0xff]
        %v3407 = vld [vmem:[%s381 + $0x1630] sm:$0xff]
        %v3408 = vld [vmem:[%s381 + $0x1638] sm:$0xff]
        %v3409 = vld [vmem:[%s381 + $0x1640] sm:$0xff]
        %v3410 = vld [vmem:[%s381 + $0x1648] sm:$0xff]
        %v3411 = vld [vmem:[%s381 + $0x1650] sm:$0xff]
        %v3412 = vld [vmem:[%s381 + $0x1658] sm:$0xff]
        %v3413 = vld [vmem:[%s381 + $0x1660] sm:$0xff]
        %v3414 = vld [vmem:[%s381 + $0x1668] sm:$0xff]
        %v3415 = vld [vmem:[%s381 + $0x1670] sm:$0xff]
        %v3416 = vld [vmem:[%s381 + $0x1678] sm:$0xff]
        %v3417 = vld [vmem:[%s381 + $0x1680] sm:$0xff]
        %v3418 = vld [vmem:[%s381 + $0x1688] sm:$0xff]
        %v3419 = vld [vmem:[%s381 + $0x1690] sm:$0xff]
        %v3420 = vld [vmem:[%s381 + $0x1698] sm:$0xff]
        %v3421 = vld [vmem:[%s381 + $0x16a0] sm:$0xff]
        %v3422 = vld [vmem:[%s381 + $0x16a8] sm:$0xff]
        %v3423 = vld [vmem:[%s381 + $0x16b0] sm:$0xff]
        %v3424 = vld [vmem:[%s381 + $0x16b8] sm:$0xff]
        %v3425 = vld [vmem:[%s381 + $0x16c0] sm:$0xff]
        %v3426 = vld [vmem:[%s381 + $0x16c8] sm:$0xff]
        %v3427 = vld [vmem:[%s381 + $0x16d0] sm:$0xff]
        %v3428 = vld [vmem:[%s381 + $0x16d8] sm:$0xff]
        %v3429 = vld [vmem:[%s381 + $0x16e0] sm:$0xff]
        %v3430 = vld [vmem:[%s381 + $0x16e8] sm:$0xff]
        %v3431 = vld [vmem:[%s381 + $0x16f0] sm:$0xff]
        %v3432 = vld [vmem:[%s381 + $0x16f8] sm:$0xff]
        %v3433 = vld [vmem:[%s381 + $0x1700] sm:$0xff]
        %v3434 = vld [vmem:[%s381 + $0x1708] sm:$0xff]
        %v3435 = vld [vmem:[%s381 + $0x1710] sm:$0xff]
        %v3436 = vld [vmem:[%s381 + $0x1718] sm:$0xff]
        %v3437 = vld [vmem:[%s381 + $0x1720] sm:$0xff]
        %v3438 = vld [vmem:[%s381 + $0x1728] sm:$0xff]
        %v3439 = vld [vmem:[%s381 + $0x1730] sm:$0xff]
        %v3440 = vld [vmem:[%s381 + $0x1738] sm:$0xff]
        %v3441 = vld [vmem:[%s381 + $0x1740] sm:$0xff]
        %v3442 = vld [vmem:[%s381 + $0x1748] sm:$0xff]
        %v3443 = vld [vmem:[%s381 + $0x1750] sm:$0xff]
        %v3444 = vld [vmem:[%s381 + $0x1758] sm:$0xff]
        %v3445 = vld [vmem:[%s381 + $0x1760] sm:$0xff]
        %v3446 = vld [vmem:[%s381 + $0x1768] sm:$0xff]
        %v3447 = vld [vmem:[%s381 + $0x1770] sm:$0xff]
        %v3448 = vld [vmem:[%s381 + $0x1778] sm:$0xff]
        %v3449 = vld [vmem:[%s381 + $0x1780] sm:$0xff]
        %v3450 = vld [vmem:[%s381 + $0x1788] sm:$0xff]
        %v3451 = vld [vmem:[%s381 + $0x1790] sm:$0xff]
        %v3452 = vld [vmem:[%s381 + $0x1798] sm:$0xff]
        %v3453 = vld [vmem:[%s381 + $0x17a0] sm:$0xff]
        %v3454 = vld [vmem:[%s381 + $0x17a8] sm:$0xff]
        %v3455 = vld [vmem:[%s381 + $0x17b0] sm:$0xff]
        %v3456 = vld [vmem:[%s381 + $0x17b8] sm:$0xff]
        %v3457 = vld [vmem:[%s381 + $0x17c0] sm:$0xff]
        %v3458 = vld [vmem:[%s381 + $0x17c8] sm:$0xff]
        %v3459 = vld [vmem:[%s381 + $0x17d0] sm:$0xff]
        %v3460 = vld [vmem:[%s381 + $0x17d8] sm:$0xff]
        %v3461 = vld [vmem:[%s381 + $0x17e0] sm:$0xff]
        %v3462 = vld [vmem:[%s381 + $0x17e8] sm:$0xff]
        %v3463 = vld [vmem:[%s381 + $0x17f0] sm:$0xff]
        %v3464 = vld [vmem:[%s381 + $0x17f8] sm:$0xff]
        %v3465 = vld [vmem:[%s381 + $0x1800] sm:$0xff]
        %v3466 = vld [vmem:[%s381 + $0x1808] sm:$0xff]
        %v3467 = vld [vmem:[%s381 + $0x1810] sm:$0xff]
        %v3468 = vld [vmem:[%s381 + $0x1818] sm:$0xff]
        %v3469 = vld [vmem:[%s381 + $0x1820] sm:$0xff]
        %v3470 = vld [vmem:[%s381 + $0x1828] sm:$0xff]
        %v3471 = vld [vmem:[%s381 + $0x1830] sm:$0xff]
        %v3472 = vld [vmem:[%s381 + $0x1838] sm:$0xff]
        %v3473 = vld [vmem:[%s381 + $0x1840] sm:$0xff]
        %v3474 = vld [vmem:[%s381 + $0x1848] sm:$0xff]
        %v3475 = vld [vmem:[%s381 + $0x1850] sm:$0xff]
        %v3476 = vld [vmem:[%s381 + $0x1858] sm:$0xff]
        %v3477 = vld [vmem:[%s381 + $0x1860] sm:$0xff]
        %v3478 = vld [vmem:[%s381 + $0x1868] sm:$0xff]
        %v3479 = vld [vmem:[%s381 + $0x1870] sm:$0xff]
        %v3480 = vld [vmem:[%s381 + $0x1878] sm:$0xff]
        %v3481 = vld [vmem:[%s381 + $0x1880] sm:$0xff]
        %v3482 = vld [vmem:[%s381 + $0x1888] sm:$0xff]
        %v3483 = vld [vmem:[%s381 + $0x1890] sm:$0xff]
        %v3484 = vld [vmem:[%s381 + $0x1898] sm:$0xff]
        %v3485 = vld [vmem:[%s381 + $0x18a0] sm:$0xff]
        %v3486 = vld [vmem:[%s381 + $0x18a8] sm:$0xff]
        %v3487 = vld [vmem:[%s381 + $0x18b0] sm:$0xff]
        %v3488 = vld [vmem:[%s381 + $0x18b8] sm:$0xff]
        %v3489 = vld [vmem:[%s381 + $0x18c0] sm:$0xff]
        %v3490 = vld [vmem:[%s381 + $0x18c8] sm:$0xff]
        %v3491 = vld [vmem:[%s381 + $0x18d0] sm:$0xff]
        %v3492 = vld [vmem:[%s381 + $0x18d8] sm:$0xff]
        %v3493 = vld [vmem:[%s381 + $0x18e0] sm:$0xff]
        %v3494 = vld [vmem:[%s381 + $0x18e8] sm:$0xff]
        %v3495 = vld [vmem:[%s381 + $0x18f0] sm:$0xff]
        %v3496 = vld [vmem:[%s381 + $0x18f8] sm:$0xff]
        %v3497 = vld [vmem:[%s381 + $0x1900] sm:$0xff]
        %v3498 = vld [vmem:[%s381 + $0x1908] sm:$0xff]
        %v3499 = vld [vmem:[%s381 + $0x1910] sm:$0xff]
        %v3500 = vld [vmem:[%s381 + $0x1918] sm:$0xff]
        %v3501 = vld [vmem:[%s381 + $0x1920] sm:$0xff]
        %v3502 = vld [vmem:[%s381 + $0x1928] sm:$0xff]
        %v3503 = vld [vmem:[%s381 + $0x1930] sm:$0xff]
        %v3504 = vld [vmem:[%s381 + $0x1938] sm:$0xff]
        %v3505 = vld [vmem:[%s381 + $0x1940] sm:$0xff]
        %v3506 = vld [vmem:[%s381 + $0x1948] sm:$0xff]
        %v3507 = vld [vmem:[%s381 + $0x1950] sm:$0xff]
        %v3508 = vld [vmem:[%s381 + $0x1958] sm:$0xff]
        %v3509 = vld [vmem:[%s381 + $0x1960] sm:$0xff]
        %v3510 = vld [vmem:[%s381 + $0x1968] sm:$0xff]
        %v3511 = vld [vmem:[%s381 + $0x1970] sm:$0xff]
        %v3512 = vld [vmem:[%s381 + $0x1978] sm:$0xff]
        %v3513 = vld [vmem:[%s381 + $0x1980] sm:$0xff]
        %v3514 = vld [vmem:[%s381 + $0x1988] sm:$0xff]
        %v3515 = vld [vmem:[%s381 + $0x1990] sm:$0xff]
        %v3516 = vld [vmem:[%s381 + $0x1998] sm:$0xff]
        %v3517 = vld [vmem:[%s381 + $0x19a0] sm:$0xff]
        %v3518 = vld [vmem:[%s381 + $0x19a8] sm:$0xff]
        %v3519 = vld [vmem:[%s381 + $0x19b0] sm:$0xff]
        %v3520 = vld [vmem:[%s381 + $0x19b8] sm:$0xff]
        %v3521 = vld [vmem:[%s381 + $0x19c0] sm:$0xff]
        %v3522 = vld [vmem:[%s381 + $0x19c8] sm:$0xff]
        %v3523 = vld [vmem:[%s381 + $0x19d0] sm:$0xff]
        %v3524 = vld [vmem:[%s381 + $0x19d8] sm:$0xff]
        %v3525 = vld [vmem:[%s381 + $0x19e0] sm:$0xff]
        %v3526 = vld [vmem:[%s381 + $0x19e8] sm:$0xff]
        %v3527 = vld [vmem:[%s381 + $0x19f0] sm:$0xff]
        %v3528 = vld [vmem:[%s381 + $0x19f8] sm:$0xff]
        %v3529 = vld [vmem:[%s381 + $0x1a00] sm:$0xff]
        %v3530 = vld [vmem:[%s381 + $0x1a08] sm:$0xff]
        %v3531 = vld [vmem:[%s381 + $0x1a10] sm:$0xff]
        %v3532 = vld [vmem:[%s381 + $0x1a18] sm:$0xff]
        %v3533 = vld [vmem:[%s381 + $0x1a20] sm:$0xff]
        %v3534 = vld [vmem:[%s381 + $0x1a28] sm:$0xff]
        %v3535 = vld [vmem:[%s381 + $0x1a30] sm:$0xff]
        %v3536 = vld [vmem:[%s381 + $0x1a38] sm:$0xff]
        %v3537 = vld [vmem:[%s381 + $0x1a40] sm:$0xff]
        %v3538 = vld [vmem:[%s381 + $0x1a48] sm:$0xff]
        %v3539 = vld [vmem:[%s381 + $0x1a50] sm:$0xff]
        %v3540 = vld [vmem:[%s381 + $0x1a58] sm:$0xff]
        %v3541 = vld [vmem:[%s381 + $0x1a60] sm:$0xff]
        %v3542 = vld [vmem:[%s381 + $0x1a68] sm:$0xff]
        %v3543 = vld [vmem:[%s381 + $0x1a70] sm:$0xff]
        %v3544 = vld [vmem:[%s381 + $0x1a78] sm:$0xff]
        %v3545 = vld [vmem:[%s381 + $0x1a80] sm:$0xff]
        %v3546 = vld [vmem:[%s381 + $0x1a88] sm:$0xff]
        %v3547 = vld [vmem:[%s381 + $0x1a90] sm:$0xff]
        %v3548 = vld [vmem:[%s381 + $0x1a98] sm:$0xff]
        %v3549 = vld [vmem:[%s381 + $0x1aa0] sm:$0xff]
        %v3550 = vld [vmem:[%s381 + $0x1aa8] sm:$0xff]
        %v3551 = vld [vmem:[%s381 + $0x1ab0] sm:$0xff]
        %v3552 = vld [vmem:[%s381 + $0x1ab8] sm:$0xff]
        %v3553 = vld [vmem:[%s381 + $0x1ac0] sm:$0xff]
        %v3554 = vld [vmem:[%s381 + $0x1ac8] sm:$0xff]
        %v3555 = vld [vmem:[%s381 + $0x1ad0] sm:$0xff]
        %v3556 = vld [vmem:[%s381 + $0x1ad8] sm:$0xff]
        %v3557 = vld [vmem:[%s381 + $0x1ae0] sm:$0xff]
        %v3558 = vld [vmem:[%s381 + $0x1ae8] sm:$0xff]
        %v3559 = vld [vmem:[%s381 + $0x1af0] sm:$0xff]
        %v3560 = vld [vmem:[%s381 + $0x1af8] sm:$0xff]
        %v3561 = vld [vmem:[%s381 + $0x1b00] sm:$0xff]
        %v3562 = vld [vmem:[%s381 + $0x1b08] sm:$0xff]
        %v3563 = vld [vmem:[%s381 + $0x1b10] sm:$0xff]
        %v3564 = vld [vmem:[%s381 + $0x1b18] sm:$0xff]
        %v3565 = vld [vmem:[%s381 + $0x1b20] sm:$0xff]
        %v3566 = vld [vmem:[%s381 + $0x1b28] sm:$0xff]
        %v3567 = vld [vmem:[%s381 + $0x1b30] sm:$0xff]
        %v3568 = vld [vmem:[%s381 + $0x1b38] sm:$0xff]
        %v3569 = vld [vmem:[%s381 + $0x1b40] sm:$0xff]
        %v3570 = vld [vmem:[%s381 + $0x1b48] sm:$0xff]
        %v3571 = vld [vmem:[%s381 + $0x1b50] sm:$0xff]
        %v3572 = vld [vmem:[%s381 + $0x1b58] sm:$0xff]
        %v3573 = vld [vmem:[%s381 + $0x1b60] sm:$0xff]
        %v3574 = vld [vmem:[%s381 + $0x1b68] sm:$0xff]
        %v3575 = vld [vmem:[%s381 + $0x1b70] sm:$0xff]
        %v3576 = vld [vmem:[%s381 + $0x1b78] sm:$0xff]
        %v3577 = vld [vmem:[%s381 + $0x1b80] sm:$0xff]
        %v3578 = vld [vmem:[%s381 + $0x1b88] sm:$0xff]
        %v3579 = vld [vmem:[%s381 + $0x1b90] sm:$0xff]
        %v3580 = vld [vmem:[%s381 + $0x1b98] sm:$0xff]
        %v3581 = vld [vmem:[%s381 + $0x1ba0] sm:$0xff]
        %v3582 = vld [vmem:[%s381 + $0x1ba8] sm:$0xff]
        %v3583 = vld [vmem:[%s381 + $0x1bb0] sm:$0xff]
        %v3584 = vld [vmem:[%s381 + $0x1bb8] sm:$0xff]
        %v3585 = vld [vmem:[%s381 + $0x1bc0] sm:$0xff]
        %v3586 = vld [vmem:[%s381 + $0x1bc8] sm:$0xff]
        %v3587 = vld [vmem:[%s381 + $0x1bd0] sm:$0xff]
        %v3588 = vld [vmem:[%s381 + $0x1bd8] sm:$0xff]
        %v3589 = vld [vmem:[%s381 + $0x1be0] sm:$0xff]
        %v3590 = vld [vmem:[%s381 + $0x1be8] sm:$0xff]
        %v3591 = vld [vmem:[%s381 + $0x1bf0] sm:$0xff]
        %v3592 = vld [vmem:[%s381 + $0x1bf8] sm:$0xff]
        %v3593 = vld [vmem:[%s381 + $0x1c00] sm:$0xff]
        %v3594 = vld [vmem:[%s381 + $0x1c08] sm:$0xff]
        %v3595 = vld [vmem:[%s381 + $0x1c10] sm:$0xff]
        %v3596 = vld [vmem:[%s381 + $0x1c18] sm:$0xff]
        %v3597 = vld [vmem:[%s381 + $0x1c20] sm:$0xff]
        %v3598 = vld [vmem:[%s381 + $0x1c28] sm:$0xff]
        %v3599 = vld [vmem:[%s381 + $0x1c30] sm:$0xff]
        %v3600 = vld [vmem:[%s381 + $0x1c38] sm:$0xff]
        %v3601 = vld [vmem:[%s381 + $0x1c40] sm:$0xff]
        %v3602 = vld [vmem:[%s381 + $0x1c48] sm:$0xff]
        %v3603 = vld [vmem:[%s381 + $0x1c50] sm:$0xff]
        %v3604 = vld [vmem:[%s381 + $0x1c58] sm:$0xff]
        %v3605 = vld [vmem:[%s381 + $0x1c60] sm:$0xff]
        %v3606 = vld [vmem:[%s381 + $0x1c68] sm:$0xff]
        %v3607 = vld [vmem:[%s381 + $0x1c70] sm:$0xff]
        %v3608 = vld [vmem:[%s381 + $0x1c78] sm:$0xff]
        %v3609 = vld [vmem:[%s381 + $0x1c80] sm:$0xff]
        %v3610 = vld [vmem:[%s381 + $0x1c88] sm:$0xff]
        %v3611 = vld [vmem:[%s381 + $0x1c90] sm:$0xff]
        %v3612 = vld [vmem:[%s381 + $0x1c98] sm:$0xff]
        %v3613 = vld [vmem:[%s381 + $0x1ca0] sm:$0xff]
        %v3614 = vld [vmem:[%s381 + $0x1ca8] sm:$0xff]
        %v3615 = vld [vmem:[%s381 + $0x1cb0] sm:$0xff]
        %v3616 = vld [vmem:[%s381 + $0x1cb8] sm:$0xff]
        %v3617 = vld [vmem:[%s381 + $0x1cc0] sm:$0xff]
        %v3618 = vld [vmem:[%s381 + $0x1cc8] sm:$0xff]
        %v3619 = vld [vmem:[%s381 + $0x1cd0] sm:$0xff]
        %v3620 = vld [vmem:[%s381 + $0x1cd8] sm:$0xff]
        %v3621 = vld [vmem:[%s381 + $0x1ce0] sm:$0xff]
        %v3622 = vld [vmem:[%s381 + $0x1ce8] sm:$0xff]
        %v3623 = vld [vmem:[%s381 + $0x1cf0] sm:$0xff]
        %v3624 = vld [vmem:[%s381 + $0x1cf8] sm:$0xff]
        %v3625 = vld [vmem:[%s381 + $0x1d00] sm:$0xff]
        %v3626 = vld [vmem:[%s381 + $0x1d08] sm:$0xff]
        %v3627 = vld [vmem:[%s381 + $0x1d10] sm:$0xff]
        %v3628 = vld [vmem:[%s381 + $0x1d18] sm:$0xff]
        %v3629 = vld [vmem:[%s381 + $0x1d20] sm:$0xff]
        %v3630 = vld [vmem:[%s381 + $0x1d28] sm:$0xff]
        %v3631 = vld [vmem:[%s381 + $0x1d30] sm:$0xff]
        %v3632 = vld [vmem:[%s381 + $0x1d38] sm:$0xff]
        %v3633 = vld [vmem:[%s381 + $0x1d40] sm:$0xff]
        %v3634 = vld [vmem:[%s381 + $0x1d48] sm:$0xff]
        %v3635 = vld [vmem:[%s381 + $0x1d50] sm:$0xff]
        %v3636 = vld [vmem:[%s381 + $0x1d58] sm:$0xff]
        %v3637 = vld [vmem:[%s381 + $0x1d60] sm:$0xff]
        %v3638 = vld [vmem:[%s381 + $0x1d68] sm:$0xff]
        %v3639 = vld [vmem:[%s381 + $0x1d70] sm:$0xff]
        %v3640 = vld [vmem:[%s381 + $0x1d78] sm:$0xff]
        %v3641 = vld [vmem:[%s381 + $0x1d80] sm:$0xff]
        %v3642 = vld [vmem:[%s381 + $0x1d88] sm:$0xff]
        %v3643 = vld [vmem:[%s381 + $0x1d90] sm:$0xff]
        %v3644 = vld [vmem:[%s381 + $0x1d98] sm:$0xff]
        %v3645 = vld [vmem:[%s381 + $0x1da0] sm:$0xff]
        %v3646 = vld [vmem:[%s381 + $0x1da8] sm:$0xff]
        %v3647 = vld [vmem:[%s381 + $0x1db0] sm:$0xff]
        %v3648 = vld [vmem:[%s381 + $0x1db8] sm:$0xff]
        %v3649 = vld [vmem:[%s381 + $0x1dc0] sm:$0xff]
        %v3650 = vld [vmem:[%s381 + $0x1dc8] sm:$0xff]
        %v3651 = vld [vmem:[%s381 + $0x1dd0] sm:$0xff]
        %v3652 = vld [vmem:[%s381 + $0x1dd8] sm:$0xff]
        %v3653 = vld [vmem:[%s381 + $0x1de0] sm:$0xff]
        %v3654 = vld [vmem:[%s381 + $0x1de8] sm:$0xff]
        %v3655 = vld [vmem:[%s381 + $0x1df0] sm:$0xff]
        %v3656 = vld [vmem:[%s381 + $0x1df8] sm:$0xff]
        %v3657 = vld [vmem:[%s381 + $0x1e00] sm:$0xff]
        %v3658 = vld [vmem:[%s381 + $0x1e08] sm:$0xff]
        %v3659 = vld [vmem:[%s381 + $0x1e10] sm:$0xff]
        %v3660 = vld [vmem:[%s381 + $0x1e18] sm:$0xff]
        %v3661 = vld [vmem:[%s381 + $0x1e20] sm:$0xff]
        %v3662 = vld [vmem:[%s381 + $0x1e28] sm:$0xff]
        %v3663 = vld [vmem:[%s381 + $0x1e30] sm:$0xff]
        %v3664 = vld [vmem:[%s381 + $0x1e38] sm:$0xff]
        %v3665 = vld [vmem:[%s381 + $0x1e40] sm:$0xff]
        %v3666 = vld [vmem:[%s381 + $0x1e48] sm:$0xff]
        %v3667 = vld [vmem:[%s381 + $0x1e50] sm:$0xff]
        %v3668 = vld [vmem:[%s381 + $0x1e58] sm:$0xff]
        %v3669 = vld [vmem:[%s381 + $0x1e60] sm:$0xff]
        %v3670 = vld [vmem:[%s381 + $0x1e68] sm:$0xff]
        %v3671 = vld [vmem:[%s381 + $0x1e70] sm:$0xff]
        %v3672 = vld [vmem:[%s381 + $0x1e78] sm:$0xff]
        %v3673 = vld [vmem:[%s381 + $0x1e80] sm:$0xff]
        %v3674 = vld [vmem:[%s381 + $0x1e88] sm:$0xff]
        %v3675 = vld [vmem:[%s381 + $0x1e90] sm:$0xff]
        %v3676 = vld [vmem:[%s381 + $0x1e98] sm:$0xff]
        %v3677 = vld [vmem:[%s381 + $0x1ea0] sm:$0xff]
        %v3678 = vld [vmem:[%s381 + $0x1ea8] sm:$0xff]
        %v3679 = vld [vmem:[%s381 + $0x1eb0] sm:$0xff]
        %v3680 = vld [vmem:[%s381 + $0x1eb8] sm:$0xff]
        %v3681 = vld [vmem:[%s381 + $0x1ec0] sm:$0xff]
        %v3682 = vld [vmem:[%s381 + $0x1ec8] sm:$0xff]
        %v3683 = vld [vmem:[%s381 + $0x1ed0] sm:$0xff]
        %v3684 = vld [vmem:[%s381 + $0x1ed8] sm:$0xff]
        %v3685 = vld [vmem:[%s381 + $0x1ee0] sm:$0xff]
        %v3686 = vld [vmem:[%s381 + $0x1ee8] sm:$0xff]
        %v3687 = vld [vmem:[%s381 + $0x1ef0] sm:$0xff]
        %v3688 = vld [vmem:[%s381 + $0x1ef8] sm:$0xff]
        %v3689 = vld [vmem:[%s381 + $0x1f00] sm:$0xff]
        %v3690 = vld [vmem:[%s381 + $0x1f08] sm:$0xff]
        %v3691 = vld [vmem:[%s381 + $0x1f10] sm:$0xff]
        %v3692 = vld [vmem:[%s381 + $0x1f18] sm:$0xff]
        %v3693 = vld [vmem:[%s381 + $0x1f20] sm:$0xff]
        %v3694 = vld [vmem:[%s381 + $0x1f28] sm:$0xff]
        %v3695 = vld [vmem:[%s381 + $0x1f30] sm:$0xff]
        %v3696 = vld [vmem:[%s381 + $0x1f38] sm:$0xff]
        %v3697 = vld [vmem:[%s381 + $0x1f40] sm:$0xff]
        %v3698 = vld [vmem:[%s381 + $0x1f48] sm:$0xff]
        %v3699 = vld [vmem:[%s381 + $0x1f50] sm:$0xff]
        %v3700 = vld [vmem:[%s381 + $0x1f58] sm:$0xff]
        %v3701 = vld [vmem:[%s381 + $0x1f60] sm:$0xff]
        %v3702 = vld [vmem:[%s381 + $0x1f68] sm:$0xff]
        %v3703 = vld [vmem:[%s381 + $0x1f70] sm:$0xff]
        %v3704 = vld [vmem:[%s381 + $0x1f78] sm:$0xff]
        %v3705 = vld [vmem:[%s381 + $0x1f80] sm:$0xff]
        %v3706 = vld [vmem:[%s381 + $0x1f88] sm:$0xff]
        %v3707 = vld [vmem:[%s381 + $0x1f90] sm:$0xff]
        %v3708 = vld [vmem:[%s381 + $0x1f98] sm:$0xff]
        %v3709 = vld [vmem:[%s381 + $0x1fa0] sm:$0xff]
        %v3710 = vld [vmem:[%s381 + $0x1fa8] sm:$0xff]
        %v3711 = vld [vmem:[%s381 + $0x1fb0] sm:$0xff]
        %v3712 = vld [vmem:[%s381 + $0x1fb8] sm:$0xff]
        %v3713 = vld [vmem:[%s381 + $0x1fc0] sm:$0xff]
        %v3714 = vld [vmem:[%s381 + $0x1fc8] sm:$0xff]
        %v3715 = vld [vmem:[%s381 + $0x1fd0] sm:$0xff]
        %v3716 = vld [vmem:[%s381 + $0x1fd8] sm:$0xff]
        %v3717 = vld [vmem:[%s381 + $0x1fe0] sm:$0xff]
        %v3718 = vld [vmem:[%s381 + $0x1fe8] sm:$0xff]
        %v3719 = vld [vmem:[%s381 + $0x1ff0] sm:$0xff]
        %v3720 = vld [vmem:[%s381 + $0x1ff8] sm:$0xff]
        %3721 = vmatprep.subr.mxu0 %v2698
        %3722 = vmatpush1.msra.mxu0 %v2697
        %3723 = vmatprep.subr.mxu0 %v2706
        %3724 = vmatpush1.msra.mxu0 %v2705
        %3725 = vmatprep.subr.mxu0 %v2714
        %3726 = vmatpush1.msra.mxu0 %v2713
        %3727 = vmatprep.subr.mxu0 %v2722
        %3728 = vmatpush1.msra.mxu0 %v2721
        %3729 = vmatprep.subr.mxu0 %v2730
        %3730 = vmatpush1.msra.mxu0 %v2729
        %3731 = vmatprep.subr.mxu0 %v2738
        %3732 = vmatpush1.msra.mxu0 %v2737
        %3733 = vmatprep.subr.mxu0 %v2746
        %3734 = vmatpush1.msra.mxu0 %v2745
        %3735 = vmatprep.subr.mxu0 %v2754
        %3736 = vmatpush1.msra.mxu0 %v2753
        %3737 = vmatprep.subr.mxu0 %v2762
        %3738 = vmatpush1.msra.mxu0 %v2761
        %3739 = vmatprep.subr.mxu0 %v2770
        %3740 = vmatpush1.msra.mxu0 %v2769
        %3741 = vmatprep.subr.mxu0 %v2778
        %3742 = vmatpush1.msra.mxu0 %v2777
        %3743 = vmatprep.subr.mxu0 %v2786
        %3744 = vmatpush1.msra.mxu0 %v2785
        %3745 = vmatprep.subr.mxu0 %v2794
        %3746 = vmatpush1.msra.mxu0 %v2793
        %3747 = vmatprep.subr.mxu0 %v2802
        %3748 = vmatpush1.msra.mxu0 %v2801
        %3749 = vmatprep.subr.mxu0 %v2810
        %3750 = vmatpush1.msra.mxu0 %v2809
        %3751 = vmatprep.subr.mxu0 %v2818
        %3752 = vmatpush1.msra.mxu0 %v2817
        %3753 = vmatprep.subr.mxu0 %v2826
        %3754 = vmatpush1.msra.mxu0 %v2825
        %3755 = vmatprep.subr.mxu0 %v2834
        %3756 = vmatpush1.msra.mxu0 %v2833
        %3757 = vmatprep.subr.mxu0 %v2842
        %3758 = vmatpush1.msra.mxu0 %v2841
        %3759 = vmatprep.subr.mxu0 %v2850
        %3760 = vmatpush1.msra.mxu0 %v2849
        %3761 = vmatprep.subr.mxu0 %v2858
        %3762 = vmatpush1.msra.mxu0 %v2857
        %3763 = vmatprep.subr.mxu0 %v2866
        %3764 = vmatpush1.msra.mxu0 %v2865
        %3765 = vmatprep.subr.mxu0 %v2874
        %3766 = vmatpush1.msra.mxu0 %v2873
        %3767 = vmatprep.subr.mxu0 %v2882
        %3768 = vmatpush1.msra.mxu0 %v2881
        %3769 = vmatprep.subr.mxu0 %v2890
        %3770 = vmatpush1.msra.mxu0 %v2889
        %3771 = vmatprep.subr.mxu0 %v2898
        %3772 = vmatpush1.msra.mxu0 %v2897
        %3773 = vmatprep.subr.mxu0 %v2906
        %3774 = vmatpush1.msra.mxu0 %v2905
        %3775 = vmatprep.subr.mxu0 %v2914
        %3776 = vmatpush1.msra.mxu0 %v2913
        %3777 = vmatprep.subr.mxu0 %v2922
        %3778 = vmatpush1.msra.mxu0 %v2921
        %3779 = vmatprep.subr.mxu0 %v2930
        %3780 = vmatpush1.msra.mxu0 %v2929
        %3781 = vmatprep.subr.mxu0 %v2938
        %3782 = vmatpush1.msra.mxu0 %v2937
        %3783 = vmatprep.subr.mxu0 %v2946
        %3784 = vmatpush1.msra.mxu0 %v2945
        %3785 = vmatprep.mubr.f32.mxu0 %v2682
        %3786 = vmatmul.mubr.f32.gmra.mrb[0].mxu0 %v2681
        %v3787 = vpop.f32.mrb[0].mxu0
        %v3788 = vadd.f32 0.0, %v3787
        %v3789 = vpop.f32.mrb[0].mxu0
        %v3790 = vadd.f32 0.0, %v3789
        %3791 = vdwg.mxu0
        %3792 = vmatprep.subr.mxu0 %v2954
        %3793 = vmatpush1.msra.mxu0 %v2953
        %3794 = vmatprep.subr.mxu0 %v2962
        %3795 = vmatpush1.msra.mxu0 %v2961
        %3796 = vmatprep.subr.mxu0 %v2970
        %3797 = vmatpush1.msra.mxu0 %v2969
        %3798 = vmatprep.subr.mxu0 %v2978
        %3799 = vmatpush1.msra.mxu0 %v2977
        %3800 = vmatprep.subr.mxu0 %v2986
        %3801 = vmatpush1.msra.mxu0 %v2985
        %3802 = vmatprep.subr.mxu0 %v2994
        %3803 = vmatpush1.msra.mxu0 %v2993
        %3804 = vmatprep.subr.mxu0 %v3002
        %3805 = vmatpush1.msra.mxu0 %v3001
        %3806 = vmatprep.subr.mxu0 %v3010
        %3807 = vmatpush1.msra.mxu0 %v3009
        %3808 = vmatprep.subr.mxu0 %v3018
        %3809 = vmatpush1.msra.mxu0 %v3017
        %3810 = vmatprep.subr.mxu0 %v3026
        %3811 = vmatpush1.msra.mxu0 %v3025
        %3812 = vmatprep.subr.mxu0 %v3034
        %3813 = vmatpush1.msra.mxu0 %v3033
        %3814 = vmatprep.subr.mxu0 %v3042
        %3815 = vmatpush1.msra.mxu0 %v3041
        %3816 = vmatprep.subr.mxu0 %v3050
        %3817 = vmatpush1.msra.mxu0 %v3049
        %3818 = vmatprep.subr.mxu0 %v3058
        %3819 = vmatpush1.msra.mxu0 %v3057
        %3820 = vmatprep.subr.mxu0 %v3066
        %3821 = vmatpush1.msra.mxu0 %v3065
        %3822 = vmatprep.subr.mxu0 %v3074
        %3823 = vmatpush1.msra.mxu0 %v3073
        %3824 = vmatprep.subr.mxu0 %v3082
        %3825 = vmatpush1.msra.mxu0 %v3081
        %3826 = vmatprep.subr.mxu0 %v3090
        %3827 = vmatpush1.msra.mxu0 %v3089
        %3828 = vmatprep.subr.mxu0 %v3098
        %3829 = vmatpush1.msra.mxu0 %v3097
        %3830 = vmatprep.subr.mxu0 %v3106
        %3831 = vmatpush1.msra.mxu0 %v3105
        %3832 = vmatprep.subr.mxu0 %v3114
        %3833 = vmatpush1.msra.mxu0 %v3113
        %3834 = vmatprep.subr.mxu0 %v3122
        %3835 = vmatpush1.msra.mxu0 %v3121
        %3836 = vmatprep.subr.mxu0 %v3130
        %3837 = vmatpush1.msra.mxu0 %v3129
        %3838 = vmatprep.subr.mxu0 %v3138
        %3839 = vmatpush1.msra.mxu0 %v3137
        %3840 = vmatprep.subr.mxu0 %v3146
        %3841 = vmatpush1.msra.mxu0 %v3145
        %3842 = vmatprep.subr.mxu0 %v3154
        %3843 = vmatpush1.msra.mxu0 %v3153
        %3844 = vmatprep.subr.mxu0 %v3162
        %3845 = vmatpush1.msra.mxu0 %v3161
        %3846 = vmatprep.subr.mxu0 %v3170
        %3847 = vmatpush1.msra.mxu0 %v3169
        %3848 = vmatprep.subr.mxu0 %v3178
        %3849 = vmatpush1.msra.mxu0 %v3177
        %3850 = vmatprep.subr.mxu0 %v3186
        %3851 = vmatpush1.msra.mxu0 %v3185
        %3852 = vmatprep.subr.mxu0 %v3194
        %3853 = vmatpush1.msra.mxu0 %v3193
        %3854 = vmatprep.subr.mxu0 %v3202
        %3855 = vmatpush1.msra.mxu0 %v3201
        %3856 = vmatprep.mubr.f32.mxu0 %v2684
        %3857 = vmatmul.mubr.f32.gmra.mrb[0].mxu0 %v2683
        %v3858 = vpop.f32.mrb[0].mxu0
        %v3859 = vadd.f32 %v3788, %v3858
        %v3860 = vpop.f32.mrb[0].mxu0
        %v3861 = vadd.f32 %v3790, %v3860
        %3862 = vdwg.mxu0
        %3863 = vmatprep.subr.mxu0 %v3210
        %3864 = vmatpush1.msra.mxu0 %v3209
        %3865 = vmatprep.subr.mxu0 %v3218
        %3866 = vmatpush1.msra.mxu0 %v3217
        %3867 = vmatprep.subr.mxu0 %v3226
        %3868 = vmatpush1.msra.mxu0 %v3225
        %3869 = vmatprep.subr.mxu0 %v3234
        %3870 = vmatpush1.msra.mxu0 %v3233
        %3871 = vmatprep.subr.mxu0 %v3242
        %3872 = vmatpush1.msra.mxu0 %v3241
        %3873 = vmatprep.subr.mxu0 %v3250
        %3874 = vmatpush1.msra.mxu0 %v3249
        %3875 = vmatprep.subr.mxu0 %v3258
        %3876 = vmatpush1.msra.mxu0 %v3257
        %3877 = vmatprep.subr.mxu0 %v3266
        %3878 = vmatpush1.msra.mxu0 %v3265
        %3879 = vmatprep.subr.mxu0 %v3274
        %3880 = vmatpush1.msra.mxu0 %v3273
        %3881 = vmatprep.subr.mxu0 %v3282
        %3882 = vmatpush1.msra.mxu0 %v3281
        %3883 = vmatprep.subr.mxu0 %v3290
        %3884 = vmatpush1.msra.mxu0 %v3289
        %3885 = vmatprep.subr.mxu0 %v3298
        %3886 = vmatpush1.msra.mxu0 %v3297
        %3887 = vmatprep.subr.mxu0 %v3306
        %3888 = vmatpush1.msra.mxu0 %v3305
        %3889 = vmatprep.subr.mxu0 %v3314
        %3890 = vmatpush1.msra.mxu0 %v3313
        %3891 = vmatprep.subr.mxu0 %v3322
        %3892 = vmatpush1.msra.mxu0 %v3321
        %3893 = vmatprep.subr.mxu0 %v3330
        %3894 = vmatpush1.msra.mxu0 %v3329
        %3895 = vmatprep.subr.mxu0 %v3338
        %3896 = vmatpush1.msra.mxu0 %v3337
        %3897 = vmatprep.subr.mxu0 %v3346
        %3898 = vmatpush1.msra.mxu0 %v3345
        %3899 = vmatprep.subr.mxu0 %v3354
        %3900 = vmatpush1.msra.mxu0 %v3353
        %3901 = vmatprep.subr.mxu0 %v3362
        %3902 = vmatpush1.msra.mxu0 %v3361
        %3903 = vmatprep.subr.mxu0 %v3370
        %3904 = vmatpush1.msra.mxu0 %v3369
        %3905 = vmatprep.subr.mxu0 %v3378
        %3906 = vmatpush1.msra.mxu0 %v3377
        %3907 = vmatprep.subr.mxu0 %v3386
        %3908 = vmatpush1.msra.mxu0 %v3385
        %3909 = vmatprep.subr.mxu0 %v3394
        %3910 = vmatpush1.msra.mxu0 %v3393
        %3911 = vmatprep.subr.mxu0 %v3402
        %3912 = vmatpush1.msra.mxu0 %v3401
        %3913 = vmatprep.subr.mxu0 %v3410
        %3914 = vmatpush1.msra.mxu0 %v3409
        %3915 = vmatprep.subr.mxu0 %v3418
        %3916 = vmatpush1.msra.mxu0 %v3417
        %3917 = vmatprep.subr.mxu0 %v3426
        %3918 = vmatpush1.msra.mxu0 %v3425
        %3919 = vmatprep.subr.mxu0 %v3434
        %3920 = vmatpush1.msra.mxu0 %v3433
        %3921 = vmatprep.subr.mxu0 %v3442
        %3922 = vmatpush1.msra.mxu0 %v3441
        %3923 = vmatprep.subr.mxu0 %v3450
        %3924 = vmatpush1.msra.mxu0 %v3449
        %3925 = vmatprep.subr.mxu0 %v3458
        %3926 = vmatpush1.msra.mxu0 %v3457
        %3927 = vmatprep.mubr.f32.mxu0 %v2686
        %3928 = vmatmul.mubr.f32.gmra.mrb[0].mxu0 %v2685
        %v3929 = vpop.f32.mrb[0].mxu0
        %v3930 = vadd.f32 %v3859, %v3929
        %v3931 = vpop.f32.mrb[0].mxu0
        %v3932 = vadd.f32 %v3861, %v3931
        %3933 = vdwg.mxu0
        %3934 = vmatprep.subr.mxu0 %v3466
        %3935 = vmatpush1.msra.mxu0 %v3465
        %3936 = vmatprep.subr.mxu0 %v3474
        %3937 = vmatpush1.msra.mxu0 %v3473
        %3938 = vmatprep.subr.mxu0 %v3482
        %3939 = vmatpush1.msra.mxu0 %v3481
        %3940 = vmatprep.subr.mxu0 %v3490
        %3941 = vmatpush1.msra.mxu0 %v3489
        %3942 = vmatprep.subr.mxu0 %v3498
        %3943 = vmatpush1.msra.mxu0 %v3497
        %3944 = vmatprep.subr.mxu0 %v3506
        %3945 = vmatpush1.msra.mxu0 %v3505
        %3946 = vmatprep.subr.mxu0 %v3514
        %3947 = vmatpush1.msra.mxu0 %v3513
        %3948 = vmatprep.subr.mxu0 %v3522
        %3949 = vmatpush1.msra.mxu0 %v3521
        %3950 = vmatprep.subr.mxu0 %v3530
        %3951 = vmatpush1.msra.mxu0 %v3529
        %3952 = vmatprep.subr.mxu0 %v3538
        %3953 = vmatpush1.msra.mxu0 %v3537
        %3954 = vmatprep.subr.mxu0 %v3546
        %3955 = vmatpush1.msra.mxu0 %v3545
        %3956 = vmatprep.subr.mxu0 %v3554
        %3957 = vmatpush1.msra.mxu0 %v3553
        %3958 = vmatprep.subr.mxu0 %v3562
        %3959 = vmatpush1.msra.mxu0 %v3561
        %3960 = vmatprep.subr.mxu0 %v3570
        %3961 = vmatpush1.msra.mxu0 %v3569
        %3962 = vmatprep.subr.mxu0 %v3578
        %3963 = vmatpush1.msra.mxu0 %v3577
        %3964 = vmatprep.subr.mxu0 %v3586
        %3965 = vmatpush1.msra.mxu0 %v3585
        %3966 = vmatprep.subr.mxu0 %v3594
        %3967 = vmatpush1.msra.mxu0 %v3593
        %3968 = vmatprep.subr.mxu0 %v3602
        %3969 = vmatpush1.msra.mxu0 %v3601
        %3970 = vmatprep.subr.mxu0 %v3610
        %3971 = vmatpush1.msra.mxu0 %v3609
        %3972 = vmatprep.subr.mxu0 %v3618
        %3973 = vmatpush1.msra.mxu0 %v3617
        %3974 = vmatprep.subr.mxu0 %v3626
        %3975 = vmatpush1.msra.mxu0 %v3625
        %3976 = vmatprep.subr.mxu0 %v3634
        %3977 = vmatpush1.msra.mxu0 %v3633
        %3978 = vmatprep.subr.mxu0 %v3642
        %3979 = vmatpush1.msra.mxu0 %v3641
        %3980 = vmatprep.subr.mxu0 %v3650
        %3981 = vmatpush1.msra.mxu0 %v3649
        %3982 = vmatprep.subr.mxu0 %v3658
        %3983 = vmatpush1.msra.mxu0 %v3657
        %3984 = vmatprep.subr.mxu0 %v3666
        %3985 = vmatpush1.msra.mxu0 %v3665
        %3986 = vmatprep.subr.mxu0 %v3674
        %3987 = vmatpush1.msra.mxu0 %v3673
        %3988 = vmatprep.subr.mxu0 %v3682
        %3989 = vmatpush1.msra.mxu0 %v3681
        %3990 = vmatprep.subr.mxu0 %v3690
        %3991 = vmatpush1.msra.mxu0 %v3689
        %3992 = vmatprep.subr.mxu0 %v3698
        %3993 = vmatpush1.msra.mxu0 %v3697
        %3994 = vmatprep.subr.mxu0 %v3706
        %3995 = vmatpush1.msra.mxu0 %v3705
        %3996 = vmatprep.subr.mxu0 %v3714
        %3997 = vmatpush1.msra.mxu0 %v3713
        %3998 = vmatprep.mubr.f32.mxu0 %v2688
        %3999 = vmatmul.mubr.f32.gmra.mrb[0].mxu0 %v2687
        %v4000 = vpop.f32.mrb[0].mxu0
        %v4001 = vadd.f32 %v3930, %v4000
        %v4002 = vpop.f32.mrb[0].mxu0
        %v4003 = vadd.f32 %v3932, %v4002
        %4004 = vdwg.mxu0
        %4005 = vmatprep.subr.mxu0 %v2700
        %4006 = vmatpush1.msra.mxu0 %v2699
        %4007 = vmatprep.subr.mxu0 %v2708
        %4008 = vmatpush1.msra.mxu0 %v2707
        %4009 = vmatprep.subr.mxu0 %v2716
        %4010 = vmatpush1.msra.mxu0 %v2715
        %4011 = vmatprep.subr.mxu0 %v2724
        %4012 = vmatpush1.msra.mxu0 %v2723
        %4013 = vmatprep.subr.mxu0 %v2732
        %4014 = vmatpush1.msra.mxu0 %v2731
        %4015 = vmatprep.subr.mxu0 %v2740
        %4016 = vmatpush1.msra.mxu0 %v2739
        %4017 = vmatprep.subr.mxu0 %v2748
        %4018 = vmatpush1.msra.mxu0 %v2747
        %4019 = vmatprep.subr.mxu0 %v2756
        %4020 = vmatpush1.msra.mxu0 %v2755
        %4021 = vmatprep.subr.mxu0 %v2764
        %4022 = vmatpush1.msra.mxu0 %v2763
        %4023 = vmatprep.subr.mxu0 %v2772
        %4024 = vmatpush1.msra.mxu0 %v2771
        %4025 = vmatprep.subr.mxu0 %v2780
        %4026 = vmatpush1.msra.mxu0 %v2779
        %4027 = vmatprep.subr.mxu0 %v2788
        %4028 = vmatpush1.msra.mxu0 %v2787
        %4029 = vmatprep.subr.mxu0 %v2796
        %4030 = vmatpush1.msra.mxu0 %v2795
        %4031 = vmatprep.subr.mxu0 %v2804
        %4032 = vmatpush1.msra.mxu0 %v2803
        %4033 = vmatprep.subr.mxu0 %v2812
        %4034 = vmatpush1.msra.mxu0 %v2811
        %4035 = vmatprep.subr.mxu0 %v2820
        %4036 = vmatpush1.msra.mxu0 %v2819
        %4037 = vmatprep.subr.mxu0 %v2828
        %4038 = vmatpush1.msra.mxu0 %v2827
        %4039 = vmatprep.subr.mxu0 %v2836
        %4040 = vmatpush1.msra.mxu0 %v2835
        %4041 = vmatprep.subr.mxu0 %v2844
        %4042 = vmatpush1.msra.mxu0 %v2843
        %4043 = vmatprep.subr.mxu0 %v2852
        %4044 = vmatpush1.msra.mxu0 %v2851
        %4045 = vmatprep.subr.mxu0 %v2860
        %4046 = vmatpush1.msra.mxu0 %v2859
        %4047 = vmatprep.subr.mxu0 %v2868
        %4048 = vmatpush1.msra.mxu0 %v2867
        %4049 = vmatprep.subr.mxu0 %v2876
        %4050 = vmatpush1.msra.mxu0 %v2875
        %4051 = vmatprep.subr.mxu0 %v2884
        %4052 = vmatpush1.msra.mxu0 %v2883
        %4053 = vmatprep.subr.mxu0 %v2892
        %4054 = vmatpush1.msra.mxu0 %v2891
        %4055 = vmatprep.subr.mxu0 %v2900
        %4056 = vmatpush1.msra.mxu0 %v2899
        %4057 = vmatprep.subr.mxu0 %v2908
        %4058 = vmatpush1.msra.mxu0 %v2907
        %4059 = vmatprep.subr.mxu0 %v2916
        %4060 = vmatpush1.msra.mxu0 %v2915
        %4061 = vmatprep.subr.mxu0 %v2924
        %4062 = vmatpush1.msra.mxu0 %v2923
        %4063 = vmatprep.subr.mxu0 %v2932
        %4064 = vmatpush1.msra.mxu0 %v2931
        %4065 = vmatprep.subr.mxu0 %v2940
        %4066 = vmatpush1.msra.mxu0 %v2939
        %4067 = vmatprep.subr.mxu0 %v2948
        %4068 = vmatpush1.msra.mxu0 %v2947
        %4069 = vmatprep.mubr.f32.mxu0 %v2682
        %4070 = vmatmul.mubr.f32.gmra.mrb[0].mxu0 %v2681
        %v4071 = vpop.f32.mrb[0].mxu0
        %v4072 = vadd.f32 0.0, %v4071
        %v4073 = vpop.f32.mrb[0].mxu0
        %v4074 = vadd.f32 0.0, %v4073
        %4075 = vdwg.mxu0
        %4076 = vmatprep.subr.mxu0 %v2956
        %4077 = vmatpush1.msra.mxu0 %v2955
        %4078 = vmatprep.subr.mxu0 %v2964
        %4079 = vmatpush1.msra.mxu0 %v2963
        %4080 = vmatprep.subr.mxu0 %v2972
        %4081 = vmatpush1.msra.mxu0 %v2971
        %4082 = vmatprep.subr.mxu0 %v2980
        %4083 = vmatpush1.msra.mxu0 %v2979
        %4084 = vmatprep.subr.mxu0 %v2988
        %4085 = vmatpush1.msra.mxu0 %v2987
        %4086 = vmatprep.subr.mxu0 %v2996
        %4087 = vmatpush1.msra.mxu0 %v2995
        %4088 = vmatprep.subr.mxu0 %v3004
        %4089 = vmatpush1.msra.mxu0 %v3003
        %4090 = vmatprep.subr.mxu0 %v3012
        %4091 = vmatpush1.msra.mxu0 %v3011
        %4092 = vmatprep.subr.mxu0 %v3020
        %4093 = vmatpush1.msra.mxu0 %v3019
        %4094 = vmatprep.subr.mxu0 %v3028
        %4095 = vmatpush1.msra.mxu0 %v3027
        %4096 = vmatprep.subr.mxu0 %v3036
        %4097 = vmatpush1.msra.mxu0 %v3035
        %4098 = vmatprep.subr.mxu0 %v3044
        %4099 = vmatpush1.msra.mxu0 %v3043
        %4100 = vmatprep.subr.mxu0 %v3052
        %4101 = vmatpush1.msra.mxu0 %v3051
        %4102 = vmatprep.subr.mxu0 %v3060
        %4103 = vmatpush1.msra.mxu0 %v3059
        %4104 = vmatprep.subr.mxu0 %v3068
        %4105 = vmatpush1.msra.mxu0 %v3067
        %4106 = vmatprep.subr.mxu0 %v3076
        %4107 = vmatpush1.msra.mxu0 %v3075
        %4108 = vmatprep.subr.mxu0 %v3084
        %4109 = vmatpush1.msra.mxu0 %v3083
        %4110 = vmatprep.subr.mxu0 %v3092
        %4111 = vmatpush1.msra.mxu0 %v3091
        %4112 = vmatprep.subr.mxu0 %v3100
        %4113 = vmatpush1.msra.mxu0 %v3099
        %4114 = vmatprep.subr.mxu0 %v3108
        %4115 = vmatpush1.msra.mxu0 %v3107
        %4116 = vmatprep.subr.mxu0 %v3116
        %4117 = vmatpush1.msra.mxu0 %v3115
        %4118 = vmatprep.subr.mxu0 %v3124
        %4119 = vmatpush1.msra.mxu0 %v3123
        %4120 = vmatprep.subr.mxu0 %v3132
        %4121 = vmatpush1.msra.mxu0 %v3131
        %4122 = vmatprep.subr.mxu0 %v3140
        %4123 = vmatpush1.msra.mxu0 %v3139
        %4124 = vmatprep.subr.mxu0 %v3148
        %4125 = vmatpush1.msra.mxu0 %v3147
        %4126 = vmatprep.subr.mxu0 %v3156
        %4127 = vmatpush1.msra.mxu0 %v3155
        %4128 = vmatprep.subr.mxu0 %v3164
        %4129 = vmatpush1.msra.mxu0 %v3163
        %4130 = vmatprep.subr.mxu0 %v3172
        %4131 = vmatpush1.msra.mxu0 %v3171
        %4132 = vmatprep.subr.mxu0 %v3180
        %4133 = vmatpush1.msra.mxu0 %v3179
        %4134 = vmatprep.subr.mxu0 %v3188
        %4135 = vmatpush1.msra.mxu0 %v3187
        %4136 = vmatprep.subr.mxu0 %v3196
        %4137 = vmatpush1.msra.mxu0 %v3195
        %4138 = vmatprep.subr.mxu0 %v3204
        %4139 = vmatpush1.msra.mxu0 %v3203
        %4140 = vmatprep.mubr.f32.mxu0 %v2684
        %4141 = vmatmul.mubr.f32.gmra.mrb[0].mxu0 %v2683
        %v4142 = vpop.f32.mrb[0].mxu0
        %v4143 = vadd.f32 %v4072, %v4142
        %v4144 = vpop.f32.mrb[0].mxu0
        %v4145 = vadd.f32 %v4074, %v4144
        %4146 = vdwg.mxu0
        %4147 = vmatprep.subr.mxu0 %v3212
        %4148 = vmatpush1.msra.mxu0 %v3211
        %4149 = vmatprep.subr.mxu0 %v3220
        %4150 = vmatpush1.msra.mxu0 %v3219
        %4151 = vmatprep.subr.mxu0 %v3228
        %4152 = vmatpush1.msra.mxu0 %v3227
        %4153 = vmatprep.subr.mxu0 %v3236
        %4154 = vmatpush1.msra.mxu0 %v3235
        %4155 = vmatprep.subr.mxu0 %v3244
        %4156 = vmatpush1.msra.mxu0 %v3243
        %4157 = vmatprep.subr.mxu0 %v3252
        %4158 = vmatpush1.msra.mxu0 %v3251
        %4159 = vmatprep.subr.mxu0 %v3260
        %4160 = vmatpush1.msra.mxu0 %v3259
        %4161 = vmatprep.subr.mxu0 %v3268
        %4162 = vmatpush1.msra.mxu0 %v3267
        %4163 = vmatprep.subr.mxu0 %v3276
        %4164 = vmatpush1.msra.mxu0 %v3275
        %4165 = vmatprep.subr.mxu0 %v3284
        %4166 = vmatpush1.msra.mxu0 %v3283
        %4167 = vmatprep.subr.mxu0 %v3292
        %4168 = vmatpush1.msra.mxu0 %v3291
        %4169 = vmatprep.subr.mxu0 %v3300
        %4170 = vmatpush1.msra.mxu0 %v3299
        %4171 = vmatprep.subr.mxu0 %v3308
        %4172 = vmatpush1.msra.mxu0 %v3307
        %4173 = vmatprep.subr.mxu0 %v3316
        %4174 = vmatpush1.msra.mxu0 %v3315
        %4175 = vmatprep.subr.mxu0 %v3324
        %4176 = vmatpush1.msra.mxu0 %v3323
        %4177 = vmatprep.subr.mxu0 %v3332
        %4178 = vmatpush1.msra.mxu0 %v3331
        %4179 = vmatprep.subr.mxu0 %v3340
        %4180 = vmatpush1.msra.mxu0 %v3339
        %4181 = vmatprep.subr.mxu0 %v3348
        %4182 = vmatpush1.msra.mxu0 %v3347
        %4183 = vmatprep.subr.mxu0 %v3356
        %4184 = vmatpush1.msra.mxu0 %v3355
        %4185 = vmatprep.subr.mxu0 %v3364
        %4186 = vmatpush1.msra.mxu0 %v3363
        %4187 = vmatprep.subr.mxu0 %v3372
        %4188 = vmatpush1.msra.mxu0 %v3371
        %4189 = vmatprep.subr.mxu0 %v3380
        %4190 = vmatpush1.msra.mxu0 %v3379
        %4191 = vmatprep.subr.mxu0 %v3388
        %4192 = vmatpush1.msra.mxu0 %v3387
        %4193 = vmatprep.subr.mxu0 %v3396
        %4194 = vmatpush1.msra.mxu0 %v3395
        %4195 = vmatprep.subr.mxu0 %v3404
        %4196 = vmatpush1.msra.mxu0 %v3403
        %4197 = vmatprep.subr.mxu0 %v3412
        %4198 = vmatpush1.msra.mxu0 %v3411
        %4199 = vmatprep.subr.mxu0 %v3420
        %4200 = vmatpush1.msra.mxu0 %v3419
        %4201 = vmatprep.subr.mxu0 %v3428
        %4202 = vmatpush1.msra.mxu0 %v3427
        %4203 = vmatprep.subr.mxu0 %v3436
        %4204 = vmatpush1.msra.mxu0 %v3435
        %4205 = vmatprep.subr.mxu0 %v3444
        %4206 = vmatpush1.msra.mxu0 %v3443
        %4207 = vmatprep.subr.mxu0 %v3452
        %4208 = vmatpush1.msra.mxu0 %v3451
        %4209 = vmatprep.subr.mxu0 %v3460
        %4210 = vmatpush1.msra.mxu0 %v3459
        %4211 = vmatprep.mubr.f32.mxu0 %v2686
        %4212 = vmatmul.mubr.f32.gmra.mrb[0].mxu0 %v2685
        %v4213 = vpop.f32.mrb[0].mxu0
        %v4214 = vadd.f32 %v4143, %v4213
        %v4215 = vpop.f32.mrb[0].mxu0
        %v4216 = vadd.f32 %v4145, %v4215
        %4217 = vdwg.mxu0
        %4218 = vmatprep.subr.mxu0 %v3468
        %4219 = vmatpush1.msra.mxu0 %v3467
        %4220 = vmatprep.subr.mxu0 %v3476
        %4221 = vmatpush1.msra.mxu0 %v3475
        %4222 = vmatprep.subr.mxu0 %v3484
        %4223 = vmatpush1.msra.mxu0 %v3483
        %4224 = vmatprep.subr.mxu0 %v3492
        %4225 = vmatpush1.msra.mxu0 %v3491
        %4226 = vmatprep.subr.mxu0 %v3500
        %4227 = vmatpush1.msra.mxu0 %v3499
        %4228 = vmatprep.subr.mxu0 %v3508
        %4229 = vmatpush1.msra.mxu0 %v3507
        %4230 = vmatprep.subr.mxu0 %v3516
        %4231 = vmatpush1.msra.mxu0 %v3515
        %4232 = vmatprep.subr.mxu0 %v3524
        %4233 = vmatpush1.msra.mxu0 %v3523
        %4234 = vmatprep.subr.mxu0 %v3532
        %4235 = vmatpush1.msra.mxu0 %v3531
        %4236 = vmatprep.subr.mxu0 %v3540
        %4237 = vmatpush1.msra.mxu0 %v3539
        %4238 = vmatprep.subr.mxu0 %v3548
        %4239 = vmatpush1.msra.mxu0 %v3547
        %4240 = vmatprep.subr.mxu0 %v3556
        %4241 = vmatpush1.msra.mxu0 %v3555
        %4242 = vmatprep.subr.mxu0 %v3564
        %4243 = vmatpush1.msra.mxu0 %v3563
        %4244 = vmatprep.subr.mxu0 %v3572
        %4245 = vmatpush1.msra.mxu0 %v3571
        %4246 = vmatprep.subr.mxu0 %v3580
        %4247 = vmatpush1.msra.mxu0 %v3579
        %4248 = vmatprep.subr.mxu0 %v3588
        %4249 = vmatpush1.msra.mxu0 %v3587
        %4250 = vmatprep.subr.mxu0 %v3596
        %4251 = vmatpush1.msra.mxu0 %v3595
        %4252 = vmatprep.subr.mxu0 %v3604
        %4253 = vmatpush1.msra.mxu0 %v3603
        %4254 = vmatprep.subr.mxu0 %v3612
        %4255 = vmatpush1.msra.mxu0 %v3611
        %4256 = vmatprep.subr.mxu0 %v3620
        %4257 = vmatpush1.msra.mxu0 %v3619
        %4258 = vmatprep.subr.mxu0 %v3628
        %4259 = vmatpush1.msra.mxu0 %v3627
        %4260 = vmatprep.subr.mxu0 %v3636
        %4261 = vmatpush1.msra.mxu0 %v3635
        %4262 = vmatprep.subr.mxu0 %v3644
        %4263 = vmatpush1.msra.mxu0 %v3643
        %4264 = vmatprep.subr.mxu0 %v3652
        %4265 = vmatpush1.msra.mxu0 %v3651
        %4266 = vmatprep.subr.mxu0 %v3660
        %4267 = vmatpush1.msra.mxu0 %v3659
        %4268 = vmatprep.subr.mxu0 %v3668
        %4269 = vmatpush1.msra.mxu0 %v3667
        %4270 = vmatprep.subr.mxu0 %v3676
        %4271 = vmatpush1.msra.mxu0 %v3675
        %4272 = vmatprep.subr.mxu0 %v3684
        %4273 = vmatpush1.msra.mxu0 %v3683
        %4274 = vmatprep.subr.mxu0 %v3692
        %4275 = vmatpush1.msra.mxu0 %v3691
        %4276 = vmatprep.subr.mxu0 %v3700
        %4277 = vmatpush1.msra.mxu0 %v3699
        %4278 = vmatprep.subr.mxu0 %v3708
        %4279 = vmatpush1.msra.mxu0 %v3707
        %4280 = vmatprep.subr.mxu0 %v3716
        %4281 = vmatpush1.msra.mxu0 %v3715
        %4282 = vmatprep.mubr.f32.mxu0 %v2688
        %4283 = vmatmul.mubr.f32.gmra.mrb[0].mxu0 %v2687
        %v4284 = vpop.f32.mrb[0].mxu0
        %v4285 = vadd.f32 %v4214, %v4284
        %v4286 = vpop.f32.mrb[0].mxu0
        %v4287 = vadd.f32 %v4216, %v4286
        %4288 = vdwg.mxu0
        %4289 = vmatprep.subr.mxu0 %v2702
        %4290 = vmatpush1.msra.mxu0 %v2701
        %4291 = vmatprep.subr.mxu0 %v2710
        %4292 = vmatpush1.msra.mxu0 %v2709
        %4293 = vmatprep.subr.mxu0 %v2718
        %4294 = vmatpush1.msra.mxu0 %v2717
        %4295 = vmatprep.subr.mxu0 %v2726
        %4296 = vmatpush1.msra.mxu0 %v2725
        %4297 = vmatprep.subr.mxu0 %v2734
        %4298 = vmatpush1.msra.mxu0 %v2733
        %4299 = vmatprep.subr.mxu0 %v2742
        %4300 = vmatpush1.msra.mxu0 %v2741
        %4301 = vmatprep.subr.mxu0 %v2750
        %4302 = vmatpush1.msra.mxu0 %v2749
        %4303 = vmatprep.subr.mxu0 %v2758
        %4304 = vmatpush1.msra.mxu0 %v2757
        %4305 = vmatprep.subr.mxu0 %v2766
        %4306 = vmatpush1.msra.mxu0 %v2765
        %4307 = vmatprep.subr.mxu0 %v2774
        %4308 = vmatpush1.msra.mxu0 %v2773
        %4309 = vmatprep.subr.mxu0 %v2782
        %4310 = vmatpush1.msra.mxu0 %v2781
        %4311 = vmatprep.subr.mxu0 %v2790
        %4312 = vmatpush1.msra.mxu0 %v2789
        %4313 = vmatprep.subr.mxu0 %v2798
        %4314 = vmatpush1.msra.mxu0 %v2797
        %4315 = vmatprep.subr.mxu0 %v2806
        %4316 = vmatpush1.msra.mxu0 %v2805
        %4317 = vmatprep.subr.mxu0 %v2814
        %4318 = vmatpush1.msra.mxu0 %v2813
        %4319 = vmatprep.subr.mxu0 %v2822
        %4320 = vmatpush1.msra.mxu0 %v2821
        %4321 = vmatprep.subr.mxu0 %v2830
        %4322 = vmatpush1.msra.mxu0 %v2829
        %4323 = vmatprep.subr.mxu0 %v2838
        %4324 = vmatpush1.msra.mxu0 %v2837
        %4325 = vmatprep.subr.mxu0 %v2846
        %4326 = vmatpush1.msra.mxu0 %v2845
        %4327 = vmatprep.subr.mxu0 %v2854
        %4328 = vmatpush1.msra.mxu0 %v2853
        %4329 = vmatprep.subr.mxu0 %v2862
        %4330 = vmatpush1.msra.mxu0 %v2861
        %4331 = vmatprep.subr.mxu0 %v2870
        %4332 = vmatpush1.msra.mxu0 %v2869
        %4333 = vmatprep.subr.mxu0 %v2878
        %4334 = vmatpush1.msra.mxu0 %v2877
        %4335 = vmatprep.subr.mxu0 %v2886
        %4336 = vmatpush1.msra.mxu0 %v2885
        %4337 = vmatprep.subr.mxu0 %v2894
        %4338 = vmatpush1.msra.mxu0 %v2893
        %4339 = vmatprep.subr.mxu0 %v2902
        %4340 = vmatpush1.msra.mxu0 %v2901
        %4341 = vmatprep.subr.mxu0 %v2910
        %4342 = vmatpush1.msra.mxu0 %v2909
        %4343 = vmatprep.subr.mxu0 %v2918
        %4344 = vmatpush1.msra.mxu0 %v2917
        %4345 = vmatprep.subr.mxu0 %v2926
        %4346 = vmatpush1.msra.mxu0 %v2925
        %4347 = vmatprep.subr.mxu0 %v2934
        %4348 = vmatpush1.msra.mxu0 %v2933
        %4349 = vmatprep.subr.mxu0 %v2942
        %4350 = vmatpush1.msra.mxu0 %v2941
        %4351 = vmatprep.subr.mxu0 %v2950
        %4352 = vmatpush1.msra.mxu0 %v2949
        %4353 = vmatprep.mubr.f32.mxu0 %v2682
        %4354 = vmatmul.mubr.f32.gmra.mrb[0].mxu0 %v2681
        %v4355 = vpop.f32.mrb[0].mxu0
        %v4356 = vadd.f32 0.0, %v4355
        %v4357 = vpop.f32.mrb[0].mxu0
        %v4358 = vadd.f32 0.0, %v4357
        %4359 = vdwg.mxu0
        %4360 = vmatprep.subr.mxu0 %v2958
        %4361 = vmatpush1.msra.mxu0 %v2957
        %4362 = vmatprep.subr.mxu0 %v2966
        %4363 = vmatpush1.msra.mxu0 %v2965
        %4364 = vmatprep.subr.mxu0 %v2974
        %4365 = vmatpush1.msra.mxu0 %v2973
        %4366 = vmatprep.subr.mxu0 %v2982
        %4367 = vmatpush1.msra.mxu0 %v2981
        %4368 = vmatprep.subr.mxu0 %v2990
        %4369 = vmatpush1.msra.mxu0 %v2989
        %4370 = vmatprep.subr.mxu0 %v2998
        %4371 = vmatpush1.msra.mxu0 %v2997
        %4372 = vmatprep.subr.mxu0 %v3006
        %4373 = vmatpush1.msra.mxu0 %v3005
        %4374 = vmatprep.subr.mxu0 %v3014
        %4375 = vmatpush1.msra.mxu0 %v3013
        %4376 = vmatprep.subr.mxu0 %v3022
        %4377 = vmatpush1.msra.mxu0 %v3021
        %4378 = vmatprep.subr.mxu0 %v3030
        %4379 = vmatpush1.msra.mxu0 %v3029
        %4380 = vmatprep.subr.mxu0 %v3038
        %4381 = vmatpush1.msra.mxu0 %v3037
        %4382 = vmatprep.subr.mxu0 %v3046
        %4383 = vmatpush1.msra.mxu0 %v3045
        %4384 = vmatprep.subr.mxu0 %v3054
        %4385 = vmatpush1.msra.mxu0 %v3053
        %4386 = vmatprep.subr.mxu0 %v3062
        %4387 = vmatpush1.msra.mxu0 %v3061
        %4388 = vmatprep.subr.mxu0 %v3070
        %4389 = vmatpush1.msra.mxu0 %v3069
        %4390 = vmatprep.subr.mxu0 %v3078
        %4391 = vmatpush1.msra.mxu0 %v3077
        %4392 = vmatprep.subr.mxu0 %v3086
        %4393 = vmatpush1.msra.mxu0 %v3085
        %4394 = vmatprep.subr.mxu0 %v3094
        %4395 = vmatpush1.msra.mxu0 %v3093
        %4396 = vmatprep.subr.mxu0 %v3102
        %4397 = vmatpush1.msra.mxu0 %v3101
        %4398 = vmatprep.subr.mxu0 %v3110
        %4399 = vmatpush1.msra.mxu0 %v3109
        %4400 = vmatprep.subr.mxu0 %v3118
        %4401 = vmatpush1.msra.mxu0 %v3117
        %4402 = vmatprep.subr.mxu0 %v3126
        %4403 = vmatpush1.msra.mxu0 %v3125
        %4404 = vmatprep.subr.mxu0 %v3134
        %4405 = vmatpush1.msra.mxu0 %v3133
        %4406 = vmatprep.subr.mxu0 %v3142
        %4407 = vmatpush1.msra.mxu0 %v3141
        %4408 = vmatprep.subr.mxu0 %v3150
        %4409 = vmatpush1.msra.mxu0 %v3149
        %4410 = vmatprep.subr.mxu0 %v3158
        %4411 = vmatpush1.msra.mxu0 %v3157
        %4412 = vmatprep.subr.mxu0 %v3166
        %4413 = vmatpush1.msra.mxu0 %v3165
        %4414 = vmatprep.subr.mxu0 %v3174
        %4415 = vmatpush1.msra.mxu0 %v3173
        %4416 = vmatprep.subr.mxu0 %v3182
        %4417 = vmatpush1.msra.mxu0 %v3181
        %4418 = vmatprep.subr.mxu0 %v3190
        %4419 = vmatpush1.msra.mxu0 %v3189
        %4420 = vmatprep.subr.mxu0 %v3198
        %4421 = vmatpush1.msra.mxu0 %v3197
        %4422 = vmatprep.subr.mxu0 %v3206
        %4423 = vmatpush1.msra.mxu0 %v3205
        %4424 = vmatprep.mubr.f32.mxu0 %v2684
        %4425 = vmatmul.mubr.f32.gmra.mrb[0].mxu0 %v2683
        %v4426 = vpop.f32.mrb[0].mxu0
        %v4427 = vadd.f32 %v4356, %v4426
        %v4428 = vpop.f32.mrb[0].mxu0
        %v4429 = vadd.f32 %v4358, %v4428
        %4430 = vdwg.mxu0
        %4431 = vmatprep.subr.mxu0 %v3214
        %4432 = vmatpush1.msra.mxu0 %v3213
        %4433 = vmatprep.subr.mxu0 %v3222
        %4434 = vmatpush1.msra.mxu0 %v3221
        %4435 = vmatprep.subr.mxu0 %v3230
        %4436 = vmatpush1.msra.mxu0 %v3229
        %4437 = vmatprep.subr.mxu0 %v3238
        %4438 = vmatpush1.msra.mxu0 %v3237
        %4439 = vmatprep.subr.mxu0 %v3246
        %4440 = vmatpush1.msra.mxu0 %v3245
        %4441 = vmatprep.subr.mxu0 %v3254
        %4442 = vmatpush1.msra.mxu0 %v3253
        %4443 = vmatprep.subr.mxu0 %v3262
        %4444 = vmatpush1.msra.mxu0 %v3261
        %4445 = vmatprep.subr.mxu0 %v3270
        %4446 = vmatpush1.msra.mxu0 %v3269
        %4447 = vmatprep.subr.mxu0 %v3278
        %4448 = vmatpush1.msra.mxu0 %v3277
        %4449 = vmatprep.subr.mxu0 %v3286
        %4450 = vmatpush1.msra.mxu0 %v3285
        %4451 = vmatprep.subr.mxu0 %v3294
        %4452 = vmatpush1.msra.mxu0 %v3293
        %4453 = vmatprep.subr.mxu0 %v3302
        %4454 = vmatpush1.msra.mxu0 %v3301
        %4455 = vmatprep.subr.mxu0 %v3310
        %4456 = vmatpush1.msra.mxu0 %v3309
        %4457 = vmatprep.subr.mxu0 %v3318
        %4458 = vmatpush1.msra.mxu0 %v3317
        %4459 = vmatprep.subr.mxu0 %v3326
        %4460 = vmatpush1.msra.mxu0 %v3325
        %4461 = vmatprep.subr.mxu0 %v3334
        %4462 = vmatpush1.msra.mxu0 %v3333
        %4463 = vmatprep.subr.mxu0 %v3342
        %4464 = vmatpush1.msra.mxu0 %v3341
        %4465 = vmatprep.subr.mxu0 %v3350
        %4466 = vmatpush1.msra.mxu0 %v3349
        %4467 = vmatprep.subr.mxu0 %v3358
        %4468 = vmatpush1.msra.mxu0 %v3357
        %4469 = vmatprep.subr.mxu0 %v3366
        %4470 = vmatpush1.msra.mxu0 %v3365
        %4471 = vmatprep.subr.mxu0 %v3374
        %4472 = vmatpush1.msra.mxu0 %v3373
        %4473 = vmatprep.subr.mxu0 %v3382
        %4474 = vmatpush1.msra.mxu0 %v3381
        %4475 = vmatprep.subr.mxu0 %v3390
        %4476 = vmatpush1.msra.mxu0 %v3389
        %4477 = vmatprep.subr.mxu0 %v3398
        %4478 = vmatpush1.msra.mxu0 %v3397
        %4479 = vmatprep.subr.mxu0 %v3406
        %4480 = vmatpush1.msra.mxu0 %v3405
        %4481 = vmatprep.subr.mxu0 %v3414
        %4482 = vmatpush1.msra.mxu0 %v3413
        %4483 = vmatprep.subr.mxu0 %v3422
        %4484 = vmatpush1.msra.mxu0 %v3421
        %4485 = vmatprep.subr.mxu0 %v3430
        %4486 = vmatpush1.msra.mxu0 %v3429
        %4487 = vmatprep.subr.mxu0 %v3438
        %4488 = vmatpush1.msra.mxu0 %v3437
        %4489 = vmatprep.subr.mxu0 %v3446
        %4490 = vmatpush1.msra.mxu0 %v3445
        %4491 = vmatprep.subr.mxu0 %v3454
        %4492 = vmatpush1.msra.mxu0 %v3453
        %4493 = vmatprep.subr.mxu0 %v3462
        %4494 = vmatpush1.msra.mxu0 %v3461
        %4495 = vmatprep.mubr.f32.mxu0 %v2686
        %4496 = vmatmul.mubr.f32.gmra.mrb[0].mxu0 %v2685
        %v4497 = vpop.f32.mrb[0].mxu0
        %v4498 = vadd.f32 %v4427, %v4497
        %v4499 = vpop.f32.mrb[0].mxu0
        %v4500 = vadd.f32 %v4429, %v4499
        %4501 = vdwg.mxu0
        %4502 = vmatprep.subr.mxu0 %v3470
        %4503 = vmatpush1.msra.mxu0 %v3469
        %4504 = vmatprep.subr.mxu0 %v3478
        %4505 = vmatpush1.msra.mxu0 %v3477
        %4506 = vmatprep.subr.mxu0 %v3486
        %4507 = vmatpush1.msra.mxu0 %v3485
        %4508 = vmatprep.subr.mxu0 %v3494
        %4509 = vmatpush1.msra.mxu0 %v3493
        %4510 = vmatprep.subr.mxu0 %v3502
        %4511 = vmatpush1.msra.mxu0 %v3501
        %4512 = vmatprep.subr.mxu0 %v3510
        %4513 = vmatpush1.msra.mxu0 %v3509
        %4514 = vmatprep.subr.mxu0 %v3518
        %4515 = vmatpush1.msra.mxu0 %v3517
        %4516 = vmatprep.subr.mxu0 %v3526
        %4517 = vmatpush1.msra.mxu0 %v3525
        %4518 = vmatprep.subr.mxu0 %v3534
        %4519 = vmatpush1.msra.mxu0 %v3533
        %4520 = vmatprep.subr.mxu0 %v3542
        %4521 = vmatpush1.msra.mxu0 %v3541
        %4522 = vmatprep.subr.mxu0 %v3550
        %4523 = vmatpush1.msra.mxu0 %v3549
        %4524 = vmatprep.subr.mxu0 %v3558
        %4525 = vmatpush1.msra.mxu0 %v3557
        %4526 = vmatprep.subr.mxu0 %v3566
        %4527 = vmatpush1.msra.mxu0 %v3565
        %4528 = vmatprep.subr.mxu0 %v3574
        %4529 = vmatpush1.msra.mxu0 %v3573
        %4530 = vmatprep.subr.mxu0 %v3582
        %4531 = vmatpush1.msra.mxu0 %v3581
        %4532 = vmatprep.subr.mxu0 %v3590
        %4533 = vmatpush1.msra.mxu0 %v3589
        %4534 = vmatprep.subr.mxu0 %v3598
        %4535 = vmatpush1.msra.mxu0 %v3597
        %4536 = vmatprep.subr.mxu0 %v3606
        %4537 = vmatpush1.msra.mxu0 %v3605
        %4538 = vmatprep.subr.mxu0 %v3614
        %4539 = vmatpush1.msra.mxu0 %v3613
        %4540 = vmatprep.subr.mxu0 %v3622
        %4541 = vmatpush1.msra.mxu0 %v3621
        %4542 = vmatprep.subr.mxu0 %v3630
        %4543 = vmatpush1.msra.mxu0 %v3629
        %4544 = vmatprep.subr.mxu0 %v3638
        %4545 = vmatpush1.msra.mxu0 %v3637
        %4546 = vmatprep.subr.mxu0 %v3646
        %4547 = vmatpush1.msra.mxu0 %v3645
        %4548 = vmatprep.subr.mxu0 %v3654
        %4549 = vmatpush1.msra.mxu0 %v3653
        %4550 = vmatprep.subr.mxu0 %v3662
        %4551 = vmatpush1.msra.mxu0 %v3661
        %4552 = vmatprep.subr.mxu0 %v3670
        %4553 = vmatpush1.msra.mxu0 %v3669
        %4554 = vmatprep.subr.mxu0 %v3678
        %4555 = vmatpush1.msra.mxu0 %v3677
        %4556 = vmatprep.subr.mxu0 %v3686
        %4557 = vmatpush1.msra.mxu0 %v3685
        %4558 = vmatprep.subr.mxu0 %v3694
        %4559 = vmatpush1.msra.mxu0 %v3693
        %4560 = vmatprep.subr.mxu0 %v3702
        %4561 = vmatpush1.msra.mxu0 %v3701
        %4562 = vmatprep.subr.mxu0 %v3710
        %4563 = vmatpush1.msra.mxu0 %v3709
        %4564 = vmatprep.subr.mxu0 %v3718
        %4565 = vmatpush1.msra.mxu0 %v3717
        %4566 = vmatprep.mubr.f32.mxu0 %v2688
        %4567 = vmatmul.mubr.f32.gmra.mrb[0].mxu0 %v2687
        %v4568 = vpop.f32.mrb[0].mxu0
        %v4569 = vadd.f32 %v4498, %v4568
        %v4570 = vpop.f32.mrb[0].mxu0
        %v4571 = vadd.f32 %v4500, %v4570
        %4572 = vdwg.mxu0
        %4573 = vmatprep.subr.mxu0 %v2704
        %4574 = vmatpush1.msra.mxu0 %v2703
        %4575 = vmatprep.subr.mxu0 %v2712
        %4576 = vmatpush1.msra.mxu0 %v2711
        %4577 = vmatprep.subr.mxu0 %v2720
        %4578 = vmatpush1.msra.mxu0 %v2719
        %4579 = vmatprep.subr.mxu0 %v2728
        %4580 = vmatpush1.msra.mxu0 %v2727
        %4581 = vmatprep.subr.mxu0 %v2736
        %4582 = vmatpush1.msra.mxu0 %v2735
        %4583 = vmatprep.subr.mxu0 %v2744
        %4584 = vmatpush1.msra.mxu0 %v2743
        %4585 = vmatprep.subr.mxu0 %v2752
        %4586 = vmatpush1.msra.mxu0 %v2751
        %4587 = vmatprep.subr.mxu0 %v2760
        %4588 = vmatpush1.msra.mxu0 %v2759
        %4589 = vmatprep.subr.mxu0 %v2768
        %4590 = vmatpush1.msra.mxu0 %v2767
        %4591 = vmatprep.subr.mxu0 %v2776
        %4592 = vmatpush1.msra.mxu0 %v2775
        %4593 = vmatprep.subr.mxu0 %v2784
        %4594 = vmatpush1.msra.mxu0 %v2783
        %4595 = vmatprep.subr.mxu0 %v2792
        %4596 = vmatpush1.msra.mxu0 %v2791
        %4597 = vmatprep.subr.mxu0 %v2800
        %4598 = vmatpush1.msra.mxu0 %v2799
        %4599 = vmatprep.subr.mxu0 %v2808
        %4600 = vmatpush1.msra.mxu0 %v2807
        %4601 = vmatprep.subr.mxu0 %v2816
        %4602 = vmatpush1.msra.mxu0 %v2815
        %4603 = vmatprep.subr.mxu0 %v2824
        %4604 = vmatpush1.msra.mxu0 %v2823
        %4605 = vmatprep.subr.mxu0 %v2832
        %4606 = vmatpush1.msra.mxu0 %v2831
        %4607 = vmatprep.subr.mxu0 %v2840
        %4608 = vmatpush1.msra.mxu0 %v2839
        %4609 = vmatprep.subr.mxu0 %v2848
        %4610 = vmatpush1.msra.mxu0 %v2847
        %4611 = vmatprep.subr.mxu0 %v2856
        %4612 = vmatpush1.msra.mxu0 %v2855
        %4613 = vmatprep.subr.mxu0 %v2864
        %4614 = vmatpush1.msra.mxu0 %v2863
        %4615 = vmatprep.subr.mxu0 %v2872
        %4616 = vmatpush1.msra.mxu0 %v2871
        %4617 = vmatprep.subr.mxu0 %v2880
        %4618 = vmatpush1.msra.mxu0 %v2879
        %4619 = vmatprep.subr.mxu0 %v2888
        %4620 = vmatpush1.msra.mxu0 %v2887
        %4621 = vmatprep.subr.mxu0 %v2896
        %4622 = vmatpush1.msra.mxu0 %v2895
        %4623 = vmatprep.subr.mxu0 %v2904
        %4624 = vmatpush1.msra.mxu0 %v2903
        %4625 = vmatprep.subr.mxu0 %v2912
        %4626 = vmatpush1.msra.mxu0 %v2911
        %4627 = vmatprep.subr.mxu0 %v2920
        %4628 = vmatpush1.msra.mxu0 %v2919
        %4629 = vmatprep.subr.mxu0 %v2928
        %4630 = vmatpush1.msra.mxu0 %v2927
        %4631 = vmatprep.subr.mxu0 %v2936
        %4632 = vmatpush1.msra.mxu0 %v2935
        %4633 = vmatprep.subr.mxu0 %v2944
        %4634 = vmatpush1.msra.mxu0 %v2943
        %4635 = vmatprep.subr.mxu0 %v2952
        %4636 = vmatpush1.msra.mxu0 %v2951
        %4637 = vmatprep.mubr.f32.mxu0 %v2682
        %4638 = vmatmul.mubr.f32.gmra.mrb[0].mxu0 %v2681
        %v4639 = vpop.f32.mrb[0].mxu0
        %v4640 = vadd.f32 0.0, %v4639
        %v4641 = vpop.f32.mrb[0].mxu0
        %v4642 = vadd.f32 0.0, %v4641
        %4643 = vdwg.mxu0
        %4644 = vmatprep.subr.mxu0 %v2960
        %4645 = vmatpush1.msra.mxu0 %v2959
        %4646 = vmatprep.subr.mxu0 %v2968
        %4647 = vmatpush1.msra.mxu0 %v2967
        %4648 = vmatprep.subr.mxu0 %v2976
        %4649 = vmatpush1.msra.mxu0 %v2975
        %4650 = vmatprep.subr.mxu0 %v2984
        %4651 = vmatpush1.msra.mxu0 %v2983
        %4652 = vmatprep.subr.mxu0 %v2992
        %4653 = vmatpush1.msra.mxu0 %v2991
        %4654 = vmatprep.subr.mxu0 %v3000
        %4655 = vmatpush1.msra.mxu0 %v2999
        %4656 = vmatprep.subr.mxu0 %v3008
        %4657 = vmatpush1.msra.mxu0 %v3007
        %4658 = vmatprep.subr.mxu0 %v3016
        %4659 = vmatpush1.msra.mxu0 %v3015
        %4660 = vmatprep.subr.mxu0 %v3024
        %4661 = vmatpush1.msra.mxu0 %v3023
        %4662 = vmatprep.subr.mxu0 %v3032
        %4663 = vmatpush1.msra.mxu0 %v3031
        %4664 = vmatprep.subr.mxu0 %v3040
        %4665 = vmatpush1.msra.mxu0 %v3039
        %4666 = vmatprep.subr.mxu0 %v3048
        %4667 = vmatpush1.msra.mxu0 %v3047
        %4668 = vmatprep.subr.mxu0 %v3056
        %4669 = vmatpush1.msra.mxu0 %v3055
        %4670 = vmatprep.subr.mxu0 %v3064
        %4671 = vmatpush1.msra.mxu0 %v3063
        %4672 = vmatprep.subr.mxu0 %v3072
        %4673 = vmatpush1.msra.mxu0 %v3071
        %4674 = vmatprep.subr.mxu0 %v3080
        %4675 = vmatpush1.msra.mxu0 %v3079
        %4676 = vmatprep.subr.mxu0 %v3088
        %4677 = vmatpush1.msra.mxu0 %v3087
        %4678 = vmatprep.subr.mxu0 %v3096
        %4679 = vmatpush1.msra.mxu0 %v3095
        %4680 = vmatprep.subr.mxu0 %v3104
        %4681 = vmatpush1.msra.mxu0 %v3103
        %4682 = vmatprep.subr.mxu0 %v3112
        %4683 = vmatpush1.msra.mxu0 %v3111
        %4684 = vmatprep.subr.mxu0 %v3120
        %4685 = vmatpush1.msra.mxu0 %v3119
        %4686 = vmatprep.subr.mxu0 %v3128
        %4687 = vmatpush1.msra.mxu0 %v3127
        %4688 = vmatprep.subr.mxu0 %v3136
        %4689 = vmatpush1.msra.mxu0 %v3135
        %4690 = vmatprep.subr.mxu0 %v3144
        %4691 = vmatpush1.msra.mxu0 %v3143
        %4692 = vmatprep.subr.mxu0 %v3152
        %4693 = vmatpush1.msra.mxu0 %v3151
        %4694 = vmatprep.subr.mxu0 %v3160
        %4695 = vmatpush1.msra.mxu0 %v3159
        %4696 = vmatprep.subr.mxu0 %v3168
        %4697 = vmatpush1.msra.mxu0 %v3167
        %4698 = vmatprep.subr.mxu0 %v3176
        %4699 = vmatpush1.msra.mxu0 %v3175
        %4700 = vmatprep.subr.mxu0 %v3184
        %4701 = vmatpush1.msra.mxu0 %v3183
        %4702 = vmatprep.subr.mxu0 %v3192
        %4703 = vmatpush1.msra.mxu0 %v3191
        %4704 = vmatprep.subr.mxu0 %v3200
        %4705 = vmatpush1.msra.mxu0 %v3199
        %4706 = vmatprep.subr.mxu0 %v3208
        %4707 = vmatpush1.msra.mxu0 %v3207
        %4708 = vmatprep.mubr.f32.mxu0 %v2684
        %4709 = vmatmul.mubr.f32.gmra.mrb[0].mxu0 %v2683
        %v4710 = vpop.f32.mrb[0].mxu0
        %v4711 = vadd.f32 %v4640, %v4710
        %v4712 = vpop.f32.mrb[0].mxu0
        %v4713 = vadd.f32 %v4642, %v4712
        %4714 = vdwg.mxu0
        %4715 = vmatprep.subr.mxu0 %v3216
        %4716 = vmatpush1.msra.mxu0 %v3215
        %4717 = vmatprep.subr.mxu0 %v3224
        %4718 = vmatpush1.msra.mxu0 %v3223
        %4719 = vmatprep.subr.mxu0 %v3232
        %4720 = vmatpush1.msra.mxu0 %v3231
        %4721 = vmatprep.subr.mxu0 %v3240
        %4722 = vmatpush1.msra.mxu0 %v3239
        %4723 = vmatprep.subr.mxu0 %v3248
        %4724 = vmatpush1.msra.mxu0 %v3247
        %4725 = vmatprep.subr.mxu0 %v3256
        %4726 = vmatpush1.msra.mxu0 %v3255
        %4727 = vmatprep.subr.mxu0 %v3264
        %4728 = vmatpush1.msra.mxu0 %v3263
        %4729 = vmatprep.subr.mxu0 %v3272
        %4730 = vmatpush1.msra.mxu0 %v3271
        %4731 = vmatprep.subr.mxu0 %v3280
        %4732 = vmatpush1.msra.mxu0 %v3279
        %4733 = vmatprep.subr.mxu0 %v3288
        %4734 = vmatpush1.msra.mxu0 %v3287
        %4735 = vmatprep.subr.mxu0 %v3296
        %4736 = vmatpush1.msra.mxu0 %v3295
        %4737 = vmatprep.subr.mxu0 %v3304
        %4738 = vmatpush1.msra.mxu0 %v3303
        %4739 = vmatprep.subr.mxu0 %v3312
        %4740 = vmatpush1.msra.mxu0 %v3311
        %4741 = vmatprep.subr.mxu0 %v3320
        %4742 = vmatpush1.msra.mxu0 %v3319
        %4743 = vmatprep.subr.mxu0 %v3328
        %4744 = vmatpush1.msra.mxu0 %v3327
        %4745 = vmatprep.subr.mxu0 %v3336
        %4746 = vmatpush1.msra.mxu0 %v3335
        %4747 = vmatprep.subr.mxu0 %v3344
        %4748 = vmatpush1.msra.mxu0 %v3343
        %4749 = vmatprep.subr.mxu0 %v3352
        %4750 = vmatpush1.msra.mxu0 %v3351
        %4751 = vmatprep.subr.mxu0 %v3360
        %4752 = vmatpush1.msra.mxu0 %v3359
        %4753 = vmatprep.subr.mxu0 %v3368
        %4754 = vmatpush1.msra.mxu0 %v3367
        %4755 = vmatprep.subr.mxu0 %v3376
        %4756 = vmatpush1.msra.mxu0 %v3375
        %4757 = vmatprep.subr.mxu0 %v3384
        %4758 = vmatpush1.msra.mxu0 %v3383
        %4759 = vmatprep.subr.mxu0 %v3392
        %4760 = vmatpush1.msra.mxu0 %v3391
        %4761 = vmatprep.subr.mxu0 %v3400
        %4762 = vmatpush1.msra.mxu0 %v3399
        %4763 = vmatprep.subr.mxu0 %v3408
        %4764 = vmatpush1.msra.mxu0 %v3407
        %4765 = vmatprep.subr.mxu0 %v3416
        %4766 = vmatpush1.msra.mxu0 %v3415
        %4767 = vmatprep.subr.mxu0 %v3424
        %4768 = vmatpush1.msra.mxu0 %v3423
        %4769 = vmatprep.subr.mxu0 %v3432
        %4770 = vmatpush1.msra.mxu0 %v3431
        %4771 = vmatprep.subr.mxu0 %v3440
        %4772 = vmatpush1.msra.mxu0 %v3439
        %4773 = vmatprep.subr.mxu0 %v3448
        %4774 = vmatpush1.msra.mxu0 %v3447
        %4775 = vmatprep.subr.mxu0 %v3456
        %4776 = vmatpush1.msra.mxu0 %v3455
        %4777 = vmatprep.subr.mxu0 %v3464
        %4778 = vmatpush1.msra.mxu0 %v3463
        %4779 = vmatprep.mubr.f32.mxu0 %v2686
        %4780 = vmatmul.mubr.f32.gmra.mrb[0].mxu0 %v2685
        %v4781 = vpop.f32.mrb[0].mxu0
        %v4782 = vadd.f32 %v4711, %v4781
        %v4783 = vpop.f32.mrb[0].mxu0
        %v4784 = vadd.f32 %v4713, %v4783
        %4785 = vdwg.mxu0
        %4786 = vmatprep.subr.mxu0 %v3472
        %4787 = vmatpush1.msra.mxu0 %v3471
        %4788 = vmatprep.subr.mxu0 %v3480
        %4789 = vmatpush1.msra.mxu0 %v3479
        %4790 = vmatprep.subr.mxu0 %v3488
        %4791 = vmatpush1.msra.mxu0 %v3487
        %4792 = vmatprep.subr.mxu0 %v3496
        %4793 = vmatpush1.msra.mxu0 %v3495
        %4794 = vmatprep.subr.mxu0 %v3504
        %4795 = vmatpush1.msra.mxu0 %v3503
        %4796 = vmatprep.subr.mxu0 %v3512
        %4797 = vmatpush1.msra.mxu0 %v3511
        %4798 = vmatprep.subr.mxu0 %v3520
        %4799 = vmatpush1.msra.mxu0 %v3519
        %4800 = vmatprep.subr.mxu0 %v3528
        %4801 = vmatpush1.msra.mxu0 %v3527
        %4802 = vmatprep.subr.mxu0 %v3536
        %4803 = vmatpush1.msra.mxu0 %v3535
        %4804 = vmatprep.subr.mxu0 %v3544
        %4805 = vmatpush1.msra.mxu0 %v3543
        %4806 = vmatprep.subr.mxu0 %v3552
        %4807 = vmatpush1.msra.mxu0 %v3551
        %4808 = vmatprep.subr.mxu0 %v3560
        %4809 = vmatpush1.msra.mxu0 %v3559
        %4810 = vmatprep.subr.mxu0 %v3568
        %4811 = vmatpush1.msra.mxu0 %v3567
        %4812 = vmatprep.subr.mxu0 %v3576
        %4813 = vmatpush1.msra.mxu0 %v3575
        %4814 = vmatprep.subr.mxu0 %v3584
        %4815 = vmatpush1.msra.mxu0 %v3583
        %4816 = vmatprep.subr.mxu0 %v3592
        %4817 = vmatpush1.msra.mxu0 %v3591
        %4818 = vmatprep.subr.mxu0 %v3600
        %4819 = vmatpush1.msra.mxu0 %v3599
        %4820 = vmatprep.subr.mxu0 %v3608
        %4821 = vmatpush1.msra.mxu0 %v3607
        %4822 = vmatprep.subr.mxu0 %v3616
        %4823 = vmatpush1.msra.mxu0 %v3615
        %4824 = vmatprep.subr.mxu0 %v3624
        %4825 = vmatpush1.msra.mxu0 %v3623
        %4826 = vmatprep.subr.mxu0 %v3632
        %4827 = vmatpush1.msra.mxu0 %v3631
        %4828 = vmatprep.subr.mxu0 %v3640
        %4829 = vmatpush1.msra.mxu0 %v3639
        %4830 = vmatprep.subr.mxu0 %v3648
        %4831 = vmatpush1.msra.mxu0 %v3647
        %4832 = vmatprep.subr.mxu0 %v3656
        %4833 = vmatpush1.msra.mxu0 %v3655
        %4834 = vmatprep.subr.mxu0 %v3664
        %4835 = vmatpush1.msra.mxu0 %v3663
        %4836 = vmatprep.subr.mxu0 %v3672
        %4837 = vmatpush1.msra.mxu0 %v3671
        %4838 = vmatprep.subr.mxu0 %v3680
        %4839 = vmatpush1.msra.mxu0 %v3679
        %4840 = vmatprep.subr.mxu0 %v3688
        %4841 = vmatpush1.msra.mxu0 %v3687
        %4842 = vmatprep.subr.mxu0 %v3696
        %4843 = vmatpush1.msra.mxu0 %v3695
        %4844 = vmatprep.subr.mxu0 %v3704
        %4845 = vmatpush1.msra.mxu0 %v3703
        %4846 = vmatprep.subr.mxu0 %v3712
        %4847 = vmatpush1.msra.mxu0 %v3711
        %4848 = vmatprep.subr.mxu0 %v3720
        %4849 = vmatpush1.msra.mxu0 %v3719
        %4850 = vmatprep.mubr.f32.mxu0 %v2688
        %4851 = vmatmul.mubr.f32.gmra.mrb[0].mxu0 %v2687
        %v4852 = vpop.f32.mrb[0].mxu0
        %v4853 = vadd.f32 %v4782, %v4852
        %v4854 = vpop.f32.mrb[0].mxu0
        %v4855 = vadd.f32 %v4784, %v4854
        %4856 = vdwg.mxu0
        %v4857 = vadd.f32 %v2689, %v4001
        %v4858 = vadd.f32 %v2690, %v4003
        %v4859 = vadd.f32 %v2691, %v4285
        %v4860 = vadd.f32 %v2692, %v4287
        %v4861 = vadd.f32 %v2693, %v4569
        %v4862 = vadd.f32 %v2694, %v4571
        %v4863 = vadd.f32 %v2695, %v4853
        %v4864 = vadd.f32 %v2696, %v4855
        %4865 = vst [vmem:[#allocation3] sm:$0xff] %v4857
        %4866 = vst [vmem:[#allocation3 + $0x8] sm:$0xff] %v4858
        %4867 = vst [vmem:[#allocation3 + $0x10] sm:$0xff] %v4859
        %4868 = vst [vmem:[#allocation3 + $0x18] sm:$0xff] %v4860
        %4869 = vst [vmem:[#allocation3 + $0x20] sm:$0xff] %v4861
        %4870 = vst [vmem:[#allocation3 + $0x28] sm:$0xff] %v4862
        %4871 = vst [vmem:[#allocation3 + $0x30] sm:$0xff] %v4863
        %4872 = vst [vmem:[#allocation3 + $0x38] sm:$0xff] %v4864
        %p4873 = scmp.eq.s32.totalorder %s33, 1
        // Predicated region
        $region77: #{en_net_forward.3} parent=47 // pred_check
          %p4874 = pneg %p4873
        $region78: #{en_net_forward.3} parent=47 // pred_check_branch
          %4876 = sbr.rel (%p4874) target = $region80
        $region79: #{en_net_forward.3} parent=47 // pred_region
          %v4877 = vld [vmem:[#allocation3] sm:$0xff]
          %v4878 = vld [vmem:[#allocation3 + $0x8] sm:$0xff]
          %v4879 = vld [vmem:[#allocation3 + $0x10] sm:$0xff]
          %v4880 = vld [vmem:[#allocation3 + $0x18] sm:$0xff]
          %v4881 = vld [vmem:[#allocation3 + $0x20] sm:$0xff]
          %v4882 = vld [vmem:[#allocation3 + $0x28] sm:$0xff]
          %v4883 = vld [vmem:[#allocation3 + $0x30] sm:$0xff]
          %v4884 = vld [vmem:[#allocation3 + $0x38] sm:$0xff]
          %v4885 = vld [vmem:[%s390] sm:$0xff]
          %v4887 = vlaneseq
          %v4888 = vshrl.u32 %v4887, 7
          %v4889 = vsub.s32 0, %v4888
          %v4890 = vrot.slane %v4885, %v4889
          %v4891 = vlaneseq
          %v4892 = vshrl.u32 %v4891, 7
          %v4893 = vsub.s32 1, %v4892
          %v4894 = vrot.slane %v4885, %v4893
          %v4895 = vlaneseq
          %v4896 = vshrl.u32 %v4895, 7
          %v4897 = vsub.s32 2, %v4896
          %v4898 = vrot.slane %v4885, %v4897
          %v4899 = vlaneseq
          %v4900 = vshrl.u32 %v4899, 7
          %v4901 = vsub.s32 3, %v4900
          %v4902 = vrot.slane %v4885, %v4901
          %v4903 = vlaneseq
          %v4904 = vshrl.u32 %v4903, 7
          %v4905 = vsub.s32 4, %v4904
          %v4906 = vrot.slane %v4885, %v4905
          %v4907 = vlaneseq
          %v4908 = vshrl.u32 %v4907, 7
          %v4909 = vsub.s32 5, %v4908
          %v4910 = vrot.slane %v4885, %v4909
          %v4911 = vlaneseq
          %v4912 = vshrl.u32 %v4911, 7
          %v4913 = vsub.s32 6, %v4912
          %v4914 = vrot.slane %v4885, %v4913
          %v4915 = vlaneseq
          %v4916 = vshrl.u32 %v4915, 7
          %v4917 = vsub.s32 7, %v4916
          %v4918 = vrot.slane %v4885, %v4917
          %v4927 = vadd.f32 %v4877, %v4890
          %v4928 = vadd.f32 %v4878, %v4894
          %v4929 = vadd.f32 %v4879, %v4898
          %v4930 = vadd.f32 %v4880, %v4902
          %v4931 = vadd.f32 %v4881, %v4906
          %v4932 = vadd.f32 %v4882, %v4910
          %v4933 = vadd.f32 %v4883, %v4914
          %v4934 = vadd.f32 %v4884, %v4918
          %v4935 = vld [vmem:[#allocation2] sm:$0xff]
          %v4936 = vld [vmem:[#allocation2 + $0x8] sm:$0xff]
          %v4937 = vld [vmem:[#allocation2 + $0x10] sm:$0xff]
          %v4938 = vld [vmem:[#allocation2 + $0x18] sm:$0xff]
          %v4939 = vld [vmem:[#allocation2 + $0x20] sm:$0xff]
          %v4940 = vld [vmem:[#allocation2 + $0x28] sm:$0xff]
          %v4941 = vld [vmem:[#allocation2 + $0x30] sm:$0xff]
          %v4942 = vld [vmem:[#allocation2 + $0x38] sm:$0xff]
          %v4943 = vadd.f32 %v4927, %v4935
          %v4944 = vadd.f32 %v4928, %v4936
          %v4945 = vadd.f32 %v4929, %v4937
          %v4946 = vadd.f32 %v4930, %v4938
          %v4947 = vadd.f32 %v4931, %v4939
          %v4948 = vadd.f32 %v4932, %v4940
          %v4949 = vadd.f32 %v4933, %v4941
          %v4950 = vadd.f32 %v4934, %v4942
          %v4951 = vmax.f32 %v4943, 0.0
          %v4952 = vmax.f32 %v4944, 0.0
          %v4953 = vmax.f32 %v4945, 0.0
          %v4954 = vmax.f32 %v4946, 0.0
          %v4955 = vmax.f32 %v4947, 0.0
          %v4956 = vmax.f32 %v4948, 0.0
          %v4957 = vmax.f32 %v4949, 0.0
          %v4958 = vmax.f32 %v4950, 0.0
          %4959 = vst [vmem:[#allocation2] sm:$0xff] %v4951
          %4960 = vst [vmem:[#allocation2 + $0x8] sm:$0xff] %v4952
          %4961 = vst [vmem:[#allocation2 + $0x10] sm:$0xff] %v4953
          %4962 = vst [vmem:[#allocation2 + $0x18] sm:$0xff] %v4954
          %4963 = vst [vmem:[#allocation2 + $0x20] sm:$0xff] %v4955
          %4964 = vst [vmem:[#allocation2 + $0x28] sm:$0xff] %v4956
          %4965 = vst [vmem:[#allocation2 + $0x30] sm:$0xff] %v4957
          %4966 = vst [vmem:[#allocation2 + $0x38] sm:$0xff] %v4958
        $region80: #{en_net_forward.3} parent=47 // pred_fallthru
          _
        %p4967 = scmp.eq.s32.totalorder %s32, 3
        %p4968 = pnand %p4967, %p4873
        %p4969 = pneg %p4968
        // Predicated region
        $region81: #{en_net_forward.3} parent=47 // pred_check
          _
        $region82: #{en_net_forward.3} parent=47 // pred_check_branch
          %4971 = sbr.rel (%p4968) target = $region84
        $region83: #{en_net_forward.3} parent=47 // pred_region
          %v4972 = vld [vmem:[#allocation2] sm:$0xff]
          %v4973 = vld [vmem:[#allocation2 + $0x8] sm:$0xff]
          %v4974 = vld [vmem:[#allocation2 + $0x10] sm:$0xff]
          %v4975 = vld [vmem:[#allocation2 + $0x18] sm:$0xff]
          %v4976 = vld [vmem:[#allocation2 + $0x20] sm:$0xff]
          %v4977 = vld [vmem:[#allocation2 + $0x28] sm:$0xff]
          %v4978 = vld [vmem:[#allocation2 + $0x30] sm:$0xff]
          %v4979 = vld [vmem:[#allocation2 + $0x38] sm:$0xff]
          %v4980 = vld [vmem:[%s0] sm:$0xff]
          %v4981 = vld [vmem:[%s0 + $0x8] sm:$0xff]
          %v4982 = vld [vmem:[%s0 + $0x10] sm:$0xff]
          %v4983 = vld [vmem:[%s0 + $0x18] sm:$0xff]
          %v4984 = vld [vmem:[%s0 + $0x20] sm:$0xff]
          %v4985 = vld [vmem:[%s0 + $0x28] sm:$0xff]
          %v4986 = vld [vmem:[%s0 + $0x30] sm:$0xff]
          %v4987 = vld [vmem:[%s0 + $0x38] sm:$0xff]
          %v4988 = vadd.f32 %v4972, %v4980
          %v4989 = vadd.f32 %v4973, %v4981
          %v4990 = vadd.f32 %v4974, %v4982
          %v4991 = vadd.f32 %v4975, %v4983
          %v4992 = vadd.f32 %v4976, %v4984
          %v4993 = vadd.f32 %v4977, %v4985
          %v4994 = vadd.f32 %v4978, %v4986
          %v4995 = vadd.f32 %v4979, %v4987
          %v4996 = vmax.f32 %v4988, 0.0
          %v4997 = vmax.f32 %v4989, 0.0
          %v4998 = vmax.f32 %v4990, 0.0
          %v4999 = vmax.f32 %v4991, 0.0
          %v5000 = vmax.f32 %v4992, 0.0
          %v5001 = vmax.f32 %v4993, 0.0
          %v5002 = vmax.f32 %v4994, 0.0
          %v5003 = vmax.f32 %v4995, 0.0
          %v5004 = vld [vmem:[%s5] sm:$0xff]
          %v5005 = vld [vmem:[%s5 + $0x8] sm:$0xff]
          %v5006 = vld [vmem:[%s5 + $0x10] sm:$0xff]
          %v5007 = vld [vmem:[%s5 + $0x18] sm:$0xff]
          %v5008 = vld [vmem:[%s5 + $0x20] sm:$0xff]
          %v5009 = vld [vmem:[%s5 + $0x28] sm:$0xff]
          %v5010 = vld [vmem:[%s5 + $0x30] sm:$0xff]
          %v5011 = vld [vmem:[%s5 + $0x38] sm:$0xff]
          %v5012 = vld [vmem:[%s5 + $0x40] sm:$0xff]
          %v5013 = vld [vmem:[%s5 + $0x48] sm:$0xff]
          %v5014 = vld [vmem:[%s5 + $0x50] sm:$0xff]
          %v5015 = vld [vmem:[%s5 + $0x58] sm:$0xff]
          %v5016 = vld [vmem:[%s5 + $0x60] sm:$0xff]
          %v5017 = vld [vmem:[%s5 + $0x68] sm:$0xff]
          %v5018 = vld [vmem:[%s5 + $0x70] sm:$0xff]
          %v5019 = vld [vmem:[%s5 + $0x78] sm:$0xff]
          %v5020 = vld [vmem:[%s5 + $0x80] sm:$0xff]
          %v5021 = vld [vmem:[%s5 + $0x88] sm:$0xff]
          %v5022 = vld [vmem:[%s5 + $0x90] sm:$0xff]
          %v5023 = vld [vmem:[%s5 + $0x98] sm:$0xff]
          %v5024 = vld [vmem:[%s5 + $0xa0] sm:$0xff]
          %v5025 = vld [vmem:[%s5 + $0xa8] sm:$0xff]
          %v5026 = vld [vmem:[%s5 + $0xb0] sm:$0xff]
          %v5027 = vld [vmem:[%s5 + $0xb8] sm:$0xff]
          %v5028 = vld [vmem:[%s5 + $0xc0] sm:$0xff]
          %v5029 = vld [vmem:[%s5 + $0xc8] sm:$0xff]
          %v5030 = vld [vmem:[%s5 + $0xd0] sm:$0xff]
          %v5031 = vld [vmem:[%s5 + $0xd8] sm:$0xff]
          %v5032 = vld [vmem:[%s5 + $0xe0] sm:$0xff]
          %v5033 = vld [vmem:[%s5 + $0xe8] sm:$0xff]
          %v5034 = vld [vmem:[%s5 + $0xf0] sm:$0xff]
          %v5035 = vld [vmem:[%s5 + $0xf8] sm:$0xff]
          %v5036 = vld [vmem:[%s5 + $0x100] sm:$0xff]
          %v5037 = vld [vmem:[%s5 + $0x108] sm:$0xff]
          %v5038 = vld [vmem:[%s5 + $0x110] sm:$0xff]
          %v5039 = vld [vmem:[%s5 + $0x118] sm:$0xff]
          %v5040 = vld [vmem:[%s5 + $0x120] sm:$0xff]
          %v5041 = vld [vmem:[%s5 + $0x128] sm:$0xff]
          %v5042 = vld [vmem:[%s5 + $0x130] sm:$0xff]
          %v5043 = vld [vmem:[%s5 + $0x138] sm:$0xff]
          %v5044 = vld [vmem:[%s5 + $0x140] sm:$0xff]
          %v5045 = vld [vmem:[%s5 + $0x148] sm:$0xff]
          %v5046 = vld [vmem:[%s5 + $0x150] sm:$0xff]
          %v5047 = vld [vmem:[%s5 + $0x158] sm:$0xff]
          %v5048 = vld [vmem:[%s5 + $0x160] sm:$0xff]
          %v5049 = vld [vmem:[%s5 + $0x168] sm:$0xff]
          %v5050 = vld [vmem:[%s5 + $0x170] sm:$0xff]
          %v5051 = vld [vmem:[%s5 + $0x178] sm:$0xff]
          %v5052 = vld [vmem:[%s5 + $0x180] sm:$0xff]
          %v5053 = vld [vmem:[%s5 + $0x188] sm:$0xff]
          %v5054 = vld [vmem:[%s5 + $0x190] sm:$0xff]
          %v5055 = vld [vmem:[%s5 + $0x198] sm:$0xff]
          %v5056 = vld [vmem:[%s5 + $0x1a0] sm:$0xff]
          %v5057 = vld [vmem:[%s5 + $0x1a8] sm:$0xff]
          %v5058 = vld [vmem:[%s5 + $0x1b0] sm:$0xff]
          %v5059 = vld [vmem:[%s5 + $0x1b8] sm:$0xff]
          %v5060 = vld [vmem:[%s5 + $0x1c0] sm:$0xff]
          %v5061 = vld [vmem:[%s5 + $0x1c8] sm:$0xff]
          %v5062 = vld [vmem:[%s5 + $0x1d0] sm:$0xff]
          %v5063 = vld [vmem:[%s5 + $0x1d8] sm:$0xff]
          %v5064 = vld [vmem:[%s5 + $0x1e0] sm:$0xff]
          %v5065 = vld [vmem:[%s5 + $0x1e8] sm:$0xff]
          %v5066 = vld [vmem:[%s5 + $0x1f0] sm:$0xff]
          %v5067 = vld [vmem:[%s5 + $0x1f8] sm:$0xff]
          %v5068 = vld [vmem:[%s5 + $0x200] sm:$0xff]
          %v5069 = vld [vmem:[%s5 + $0x208] sm:$0xff]
          %v5070 = vld [vmem:[%s5 + $0x210] sm:$0xff]
          %v5071 = vld [vmem:[%s5 + $0x218] sm:$0xff]
          %v5072 = vld [vmem:[%s5 + $0x220] sm:$0xff]
          %v5073 = vld [vmem:[%s5 + $0x228] sm:$0xff]
          %v5074 = vld [vmem:[%s5 + $0x230] sm:$0xff]
          %v5075 = vld [vmem:[%s5 + $0x238] sm:$0xff]
          %v5076 = vld [vmem:[%s5 + $0x240] sm:$0xff]
          %v5077 = vld [vmem:[%s5 + $0x248] sm:$0xff]
          %v5078 = vld [vmem:[%s5 + $0x250] sm:$0xff]
          %v5079 = vld [vmem:[%s5 + $0x258] sm:$0xff]
          %v5080 = vld [vmem:[%s5 + $0x260] sm:$0xff]
          %v5081 = vld [vmem:[%s5 + $0x268] sm:$0xff]
          %v5082 = vld [vmem:[%s5 + $0x270] sm:$0xff]
          %v5083 = vld [vmem:[%s5 + $0x278] sm:$0xff]
          %v5084 = vld [vmem:[%s5 + $0x280] sm:$0xff]
          %v5085 = vld [vmem:[%s5 + $0x288] sm:$0xff]
          %v5086 = vld [vmem:[%s5 + $0x290] sm:$0xff]
          %v5087 = vld [vmem:[%s5 + $0x298] sm:$0xff]
          %v5088 = vld [vmem:[%s5 + $0x2a0] sm:$0xff]
          %v5089 = vld [vmem:[%s5 + $0x2a8] sm:$0xff]
          %v5090 = vld [vmem:[%s5 + $0x2b0] sm:$0xff]
          %v5091 = vld [vmem:[%s5 + $0x2b8] sm:$0xff]
          %v5092 = vld [vmem:[%s5 + $0x2c0] sm:$0xff]
          %v5093 = vld [vmem:[%s5 + $0x2c8] sm:$0xff]
          %v5094 = vld [vmem:[%s5 + $0x2d0] sm:$0xff]
          %v5095 = vld [vmem:[%s5 + $0x2d8] sm:$0xff]
          %v5096 = vld [vmem:[%s5 + $0x2e0] sm:$0xff]
          %v5097 = vld [vmem:[%s5 + $0x2e8] sm:$0xff]
          %v5098 = vld [vmem:[%s5 + $0x2f0] sm:$0xff]
          %v5099 = vld [vmem:[%s5 + $0x2f8] sm:$0xff]
          %v5100 = vld [vmem:[%s5 + $0x300] sm:$0xff]
          %v5101 = vld [vmem:[%s5 + $0x308] sm:$0xff]
          %v5102 = vld [vmem:[%s5 + $0x310] sm:$0xff]
          %v5103 = vld [vmem:[%s5 + $0x318] sm:$0xff]
          %v5104 = vld [vmem:[%s5 + $0x320] sm:$0xff]
          %v5105 = vld [vmem:[%s5 + $0x328] sm:$0xff]
          %v5106 = vld [vmem:[%s5 + $0x330] sm:$0xff]
          %v5107 = vld [vmem:[%s5 + $0x338] sm:$0xff]
          %v5108 = vld [vmem:[%s5 + $0x340] sm:$0xff]
          %v5109 = vld [vmem:[%s5 + $0x348] sm:$0xff]
          %v5110 = vld [vmem:[%s5 + $0x350] sm:$0xff]
          %v5111 = vld [vmem:[%s5 + $0x358] sm:$0xff]
          %v5112 = vld [vmem:[%s5 + $0x360] sm:$0xff]
          %v5113 = vld [vmem:[%s5 + $0x368] sm:$0xff]
          %v5114 = vld [vmem:[%s5 + $0x370] sm:$0xff]
          %v5115 = vld [vmem:[%s5 + $0x378] sm:$0xff]
          %v5116 = vld [vmem:[%s5 + $0x380] sm:$0xff]
          %v5117 = vld [vmem:[%s5 + $0x388] sm:$0xff]
          %v5118 = vld [vmem:[%s5 + $0x390] sm:$0xff]
          %v5119 = vld [vmem:[%s5 + $0x398] sm:$0xff]
          %v5120 = vld [vmem:[%s5 + $0x3a0] sm:$0xff]
          %v5121 = vld [vmem:[%s5 + $0x3a8] sm:$0xff]
          %v5122 = vld [vmem:[%s5 + $0x3b0] sm:$0xff]
          %v5123 = vld [vmem:[%s5 + $0x3b8] sm:$0xff]
          %v5124 = vld [vmem:[%s5 + $0x3c0] sm:$0xff]
          %v5125 = vld [vmem:[%s5 + $0x3c8] sm:$0xff]
          %v5126 = vld [vmem:[%s5 + $0x3d0] sm:$0xff]
          %v5127 = vld [vmem:[%s5 + $0x3d8] sm:$0xff]
          %v5128 = vld [vmem:[%s5 + $0x3e0] sm:$0xff]
          %v5129 = vld [vmem:[%s5 + $0x3e8] sm:$0xff]
          %v5130 = vld [vmem:[%s5 + $0x3f0] sm:$0xff]
          %v5131 = vld [vmem:[%s5 + $0x3f8] sm:$0xff]
          %v5132 = vld [vmem:[#allocation12] sm:$0x1]
          %v5134 = vlaneseq
          %v5135 = vshrl.u32 %v5134, 7
          %v5136 = vsub.s32 0, %v5135
          %v5137 = vrot.slane %v5132, %v5136
          %5139 = vmatprep.subr.mxu0 0.0
          %5140 = vmatpush1.msra.mxu0 %v5004
          %5141 = vmatprep.subr.mxu0 0.0
          %5142 = vmatpush1.msra.mxu0 %v5005
          %5143 = vmatprep.subr.mxu0 0.0
          %5144 = vmatpush1.msra.mxu0 %v5006
          %5145 = vmatprep.subr.mxu0 0.0
          %5146 = vmatpush1.msra.mxu0 %v5007
          %5147 = vmatprep.subr.mxu0 0.0
          %5148 = vmatpush1.msra.mxu0 %v5008
          %5149 = vmatprep.subr.mxu0 0.0
          %5150 = vmatpush1.msra.mxu0 %v5009
          %5151 = vmatprep.subr.mxu0 0.0
          %5152 = vmatpush1.msra.mxu0 %v5010
          %5153 = vmatprep.subr.mxu0 0.0
          %5154 = vmatpush1.msra.mxu0 %v5011
          %5155 = vmatprep.subr.mxu0 0.0
          %5156 = vmatpush1.msra.mxu0 %v5012
          %5157 = vmatprep.subr.mxu0 0.0
          %5158 = vmatpush1.msra.mxu0 %v5013
          %5159 = vmatprep.subr.mxu0 0.0
          %5160 = vmatpush1.msra.mxu0 %v5014
          %5161 = vmatprep.subr.mxu0 0.0
          %5162 = vmatpush1.msra.mxu0 %v5015
          %5163 = vmatprep.subr.mxu0 0.0
          %5164 = vmatpush1.msra.mxu0 %v5016
          %5165 = vmatprep.subr.mxu0 0.0
          %5166 = vmatpush1.msra.mxu0 %v5017
          %5167 = vmatprep.subr.mxu0 0.0
          %5168 = vmatpush1.msra.mxu0 %v5018
          %5169 = vmatprep.subr.mxu0 0.0
          %5170 = vmatpush1.msra.mxu0 %v5019
          %5171 = vmatprep.subr.mxu0 0.0
          %5172 = vmatpush1.msra.mxu0 %v5020
          %5173 = vmatprep.subr.mxu0 0.0
          %5174 = vmatpush1.msra.mxu0 %v5021
          %5175 = vmatprep.subr.mxu0 0.0
          %5176 = vmatpush1.msra.mxu0 %v5022
          %5177 = vmatprep.subr.mxu0 0.0
          %5178 = vmatpush1.msra.mxu0 %v5023
          %5179 = vmatprep.subr.mxu0 0.0
          %5180 = vmatpush1.msra.mxu0 %v5024
          %5181 = vmatprep.subr.mxu0 0.0
          %5182 = vmatpush1.msra.mxu0 %v5025
          %5183 = vmatprep.subr.mxu0 0.0
          %5184 = vmatpush1.msra.mxu0 %v5026
          %5185 = vmatprep.subr.mxu0 0.0
          %5186 = vmatpush1.msra.mxu0 %v5027
          %5187 = vmatprep.subr.mxu0 0.0
          %5188 = vmatpush1.msra.mxu0 %v5028
          %5189 = vmatprep.subr.mxu0 0.0
          %5190 = vmatpush1.msra.mxu0 %v5029
          %5191 = vmatprep.subr.mxu0 0.0
          %5192 = vmatpush1.msra.mxu0 %v5030
          %5193 = vmatprep.subr.mxu0 0.0
          %5194 = vmatpush1.msra.mxu0 %v5031
          %5195 = vmatprep.subr.mxu0 0.0
          %5196 = vmatpush1.msra.mxu0 %v5032
          %5197 = vmatprep.subr.mxu0 0.0
          %5198 = vmatpush1.msra.mxu0 %v5033
          %5199 = vmatprep.subr.mxu0 0.0
          %5200 = vmatpush1.msra.mxu0 %v5034
          %5201 = vmatprep.subr.mxu0 0.0
          %5202 = vmatpush1.msra.mxu0 %v5035
          %5203 = vmatprep.mubr.f32.mxu0 %v4997
          %5204 = vmatmul.mubr.f32.gmra.mrb[0].mxu0 %v4996
          %v5205 = vpop.f32.mrb[0].mxu0
          %v5206 = vadd.f32 %v5137, %v5205
          %v5207 = vpop.f32.mrb[0].mxu0
          %5208 = vdwg.mxu0
          %5209 = vmatprep.subr.mxu0 0.0
          %5210 = vmatpush1.msra.mxu0 %v5036
          %5211 = vmatprep.subr.mxu0 0.0
          %5212 = vmatpush1.msra.mxu0 %v5037
          %5213 = vmatprep.subr.mxu0 0.0
          %5214 = vmatpush1.msra.mxu0 %v5038
          %5215 = vmatprep.subr.mxu0 0.0
          %5216 = vmatpush1.msra.mxu0 %v5039
          %5217 = vmatprep.subr.mxu0 0.0
          %5218 = vmatpush1.msra.mxu0 %v5040
          %5219 = vmatprep.subr.mxu0 0.0
          %5220 = vmatpush1.msra.mxu0 %v5041
          %5221 = vmatprep.subr.mxu0 0.0
          %5222 = vmatpush1.msra.mxu0 %v5042
          %5223 = vmatprep.subr.mxu0 0.0
          %5224 = vmatpush1.msra.mxu0 %v5043
          %5225 = vmatprep.subr.mxu0 0.0
          %5226 = vmatpush1.msra.mxu0 %v5044
          %5227 = vmatprep.subr.mxu0 0.0
          %5228 = vmatpush1.msra.mxu0 %v5045
          %5229 = vmatprep.subr.mxu0 0.0
          %5230 = vmatpush1.msra.mxu0 %v5046
          %5231 = vmatprep.subr.mxu0 0.0
          %5232 = vmatpush1.msra.mxu0 %v5047
          %5233 = vmatprep.subr.mxu0 0.0
          %5234 = vmatpush1.msra.mxu0 %v5048
          %5235 = vmatprep.subr.mxu0 0.0
          %5236 = vmatpush1.msra.mxu0 %v5049
          %5237 = vmatprep.subr.mxu0 0.0
          %5238 = vmatpush1.msra.mxu0 %v5050
          %5239 = vmatprep.subr.mxu0 0.0
          %5240 = vmatpush1.msra.mxu0 %v5051
          %5241 = vmatprep.subr.mxu0 0.0
          %5242 = vmatpush1.msra.mxu0 %v5052
          %5243 = vmatprep.subr.mxu0 0.0
          %5244 = vmatpush1.msra.mxu0 %v5053
          %5245 = vmatprep.subr.mxu0 0.0
          %5246 = vmatpush1.msra.mxu0 %v5054
          %5247 = vmatprep.subr.mxu0 0.0
          %5248 = vmatpush1.msra.mxu0 %v5055
          %5249 = vmatprep.subr.mxu0 0.0
          %5250 = vmatpush1.msra.mxu0 %v5056
          %5251 = vmatprep.subr.mxu0 0.0
          %5252 = vmatpush1.msra.mxu0 %v5057
          %5253 = vmatprep.subr.mxu0 0.0
          %5254 = vmatpush1.msra.mxu0 %v5058
          %5255 = vmatprep.subr.mxu0 0.0
          %5256 = vmatpush1.msra.mxu0 %v5059
          %5257 = vmatprep.subr.mxu0 0.0
          %5258 = vmatpush1.msra.mxu0 %v5060
          %5259 = vmatprep.subr.mxu0 0.0
          %5260 = vmatpush1.msra.mxu0 %v5061
          %5261 = vmatprep.subr.mxu0 0.0
          %5262 = vmatpush1.msra.mxu0 %v5062
          %5263 = vmatprep.subr.mxu0 0.0
          %5264 = vmatpush1.msra.mxu0 %v5063
          %5265 = vmatprep.subr.mxu0 0.0
          %5266 = vmatpush1.msra.mxu0 %v5064
          %5267 = vmatprep.subr.mxu0 0.0
          %5268 = vmatpush1.msra.mxu0 %v5065
          %5269 = vmatprep.subr.mxu0 0.0
          %5270 = vmatpush1.msra.mxu0 %v5066
          %5271 = vmatprep.subr.mxu0 0.0
          %5272 = vmatpush1.msra.mxu0 %v5067
          %5273 = vmatprep.mubr.f32.mxu0 %v4999
          %5274 = vmatmul.mubr.f32.gmra.mrb[0].mxu0 %v4998
          %v5275 = vpop.f32.mrb[0].mxu0
          %v5276 = vadd.f32 %v5206, %v5275
          %v5277 = vpop.f32.mrb[0].mxu0
          %5278 = vdwg.mxu0
          %5279 = vmatprep.subr.mxu0 0.0
          %5280 = vmatpush1.msra.mxu0 %v5068
          %5281 = vmatprep.subr.mxu0 0.0
          %5282 = vmatpush1.msra.mxu0 %v5069
          %5283 = vmatprep.subr.mxu0 0.0
          %5284 = vmatpush1.msra.mxu0 %v5070
          %5285 = vmatprep.subr.mxu0 0.0
          %5286 = vmatpush1.msra.mxu0 %v5071
          %5287 = vmatprep.subr.mxu0 0.0
          %5288 = vmatpush1.msra.mxu0 %v5072
          %5289 = vmatprep.subr.mxu0 0.0
          %5290 = vmatpush1.msra.mxu0 %v5073
          %5291 = vmatprep.subr.mxu0 0.0
          %5292 = vmatpush1.msra.mxu0 %v5074
          %5293 = vmatprep.subr.mxu0 0.0
          %5294 = vmatpush1.msra.mxu0 %v5075
          %5295 = vmatprep.subr.mxu0 0.0
          %5296 = vmatpush1.msra.mxu0 %v5076
          %5297 = vmatprep.subr.mxu0 0.0
          %5298 = vmatpush1.msra.mxu0 %v5077
          %5299 = vmatprep.subr.mxu0 0.0
          %5300 = vmatpush1.msra.mxu0 %v5078
          %5301 = vmatprep.subr.mxu0 0.0
          %5302 = vmatpush1.msra.mxu0 %v5079
          %5303 = vmatprep.subr.mxu0 0.0
          %5304 = vmatpush1.msra.mxu0 %v5080
          %5305 = vmatprep.subr.mxu0 0.0
          %5306 = vmatpush1.msra.mxu0 %v5081
          %5307 = vmatprep.subr.mxu0 0.0
          %5308 = vmatpush1.msra.mxu0 %v5082
          %5309 = vmatprep.subr.mxu0 0.0
          %5310 = vmatpush1.msra.mxu0 %v5083
          %5311 = vmatprep.subr.mxu0 0.0
          %5312 = vmatpush1.msra.mxu0 %v5084
          %5313 = vmatprep.subr.mxu0 0.0
          %5314 = vmatpush1.msra.mxu0 %v5085
          %5315 = vmatprep.subr.mxu0 0.0
          %5316 = vmatpush1.msra.mxu0 %v5086
          %5317 = vmatprep.subr.mxu0 0.0
          %5318 = vmatpush1.msra.mxu0 %v5087
          %5319 = vmatprep.subr.mxu0 0.0
          %5320 = vmatpush1.msra.mxu0 %v5088
          %5321 = vmatprep.subr.mxu0 0.0
          %5322 = vmatpush1.msra.mxu0 %v5089
          %5323 = vmatprep.subr.mxu0 0.0
          %5324 = vmatpush1.msra.mxu0 %v5090
          %5325 = vmatprep.subr.mxu0 0.0
          %5326 = vmatpush1.msra.mxu0 %v5091
          %5327 = vmatprep.subr.mxu0 0.0
          %5328 = vmatpush1.msra.mxu0 %v5092
          %5329 = vmatprep.subr.mxu0 0.0
          %5330 = vmatpush1.msra.mxu0 %v5093
          %5331 = vmatprep.subr.mxu0 0.0
          %5332 = vmatpush1.msra.mxu0 %v5094
          %5333 = vmatprep.subr.mxu0 0.0
          %5334 = vmatpush1.msra.mxu0 %v5095
          %5335 = vmatprep.subr.mxu0 0.0
          %5336 = vmatpush1.msra.mxu0 %v5096
          %5337 = vmatprep.subr.mxu0 0.0
          %5338 = vmatpush1.msra.mxu0 %v5097
          %5339 = vmatprep.subr.mxu0 0.0
          %5340 = vmatpush1.msra.mxu0 %v5098
          %5341 = vmatprep.subr.mxu0 0.0
          %5342 = vmatpush1.msra.mxu0 %v5099
          %5343 = vmatprep.mubr.f32.mxu0 %v5001
          %5344 = vmatmul.mubr.f32.gmra.mrb[0].mxu0 %v5000
          %v5345 = vpop.f32.mrb[0].mxu0
          %v5346 = vadd.f32 %v5276, %v5345
          %v5347 = vpop.f32.mrb[0].mxu0
          %5348 = vdwg.mxu0
          %5349 = vmatprep.subr.mxu0 0.0
          %5350 = vmatpush1.msra.mxu0 %v5100
          %5351 = vmatprep.subr.mxu0 0.0
          %5352 = vmatpush1.msra.mxu0 %v5101
          %5353 = vmatprep.subr.mxu0 0.0
          %5354 = vmatpush1.msra.mxu0 %v5102
          %5355 = vmatprep.subr.mxu0 0.0
          %5356 = vmatpush1.msra.mxu0 %v5103
          %5357 = vmatprep.subr.mxu0 0.0
          %5358 = vmatpush1.msra.mxu0 %v5104
          %5359 = vmatprep.subr.mxu0 0.0
          %5360 = vmatpush1.msra.mxu0 %v5105
          %5361 = vmatprep.subr.mxu0 0.0
          %5362 = vmatpush1.msra.mxu0 %v5106
          %5363 = vmatprep.subr.mxu0 0.0
          %5364 = vmatpush1.msra.mxu0 %v5107
          %5365 = vmatprep.subr.mxu0 0.0
          %5366 = vmatpush1.msra.mxu0 %v5108
          %5367 = vmatprep.subr.mxu0 0.0
          %5368 = vmatpush1.msra.mxu0 %v5109
          %5369 = vmatprep.subr.mxu0 0.0
          %5370 = vmatpush1.msra.mxu0 %v5110
          %5371 = vmatprep.subr.mxu0 0.0
          %5372 = vmatpush1.msra.mxu0 %v5111
          %5373 = vmatprep.subr.mxu0 0.0
          %5374 = vmatpush1.msra.mxu0 %v5112
          %5375 = vmatprep.subr.mxu0 0.0
          %5376 = vmatpush1.msra.mxu0 %v5113
          %5377 = vmatprep.subr.mxu0 0.0
          %5378 = vmatpush1.msra.mxu0 %v5114
          %5379 = vmatprep.subr.mxu0 0.0
          %5380 = vmatpush1.msra.mxu0 %v5115
          %5381 = vmatprep.subr.mxu0 0.0
          %5382 = vmatpush1.msra.mxu0 %v5116
          %5383 = vmatprep.subr.mxu0 0.0
          %5384 = vmatpush1.msra.mxu0 %v5117
          %5385 = vmatprep.subr.mxu0 0.0
          %5386 = vmatpush1.msra.mxu0 %v5118
          %5387 = vmatprep.subr.mxu0 0.0
          %5388 = vmatpush1.msra.mxu0 %v5119
          %5389 = vmatprep.subr.mxu0 0.0
          %5390 = vmatpush1.msra.mxu0 %v5120
          %5391 = vmatprep.subr.mxu0 0.0
          %5392 = vmatpush1.msra.mxu0 %v5121
          %5393 = vmatprep.subr.mxu0 0.0
          %5394 = vmatpush1.msra.mxu0 %v5122
          %5395 = vmatprep.subr.mxu0 0.0
          %5396 = vmatpush1.msra.mxu0 %v5123
          %5397 = vmatprep.subr.mxu0 0.0
          %5398 = vmatpush1.msra.mxu0 %v5124
          %5399 = vmatprep.subr.mxu0 0.0
          %5400 = vmatpush1.msra.mxu0 %v5125
          %5401 = vmatprep.subr.mxu0 0.0
          %5402 = vmatpush1.msra.mxu0 %v5126
          %5403 = vmatprep.subr.mxu0 0.0
          %5404 = vmatpush1.msra.mxu0 %v5127
          %5405 = vmatprep.subr.mxu0 0.0
          %5406 = vmatpush1.msra.mxu0 %v5128
          %5407 = vmatprep.subr.mxu0 0.0
          %5408 = vmatpush1.msra.mxu0 %v5129
          %5409 = vmatprep.subr.mxu0 0.0
          %5410 = vmatpush1.msra.mxu0 %v5130
          %5411 = vmatprep.subr.mxu0 0.0
          %5412 = vmatpush1.msra.mxu0 %v5131
          %5413 = vmatprep.mubr.f32.mxu0 %v5003
          %5414 = vmatmul.mubr.f32.gmra.mrb[0].mxu0 %v5002
          %v5415 = vpop.f32.mrb[0].mxu0
          %v5416 = vadd.f32 %v5346, %v5415
          %v5417 = vpop.f32.mrb[0].mxu0
          %5418 = vdwg.mxu0
          %v5419 = vtanh.pop %v5416
          %vm5420 = vcmask 523264
          %5421 = vst.msk [vmem:[#allocation13] sm:$0xff] %vm5420, %v5419
        $region84: #{en_net_forward.3} parent=47 // pred_fallthru
          _
        // Predicated region
        $region85: #{en_net_forward.3} parent=47 // pred_check
          %p5422 = pneg %p226
        $region86: #{en_net_forward.3} parent=47 // pred_check_branch
          %5424 = sbr.rel (%p5422) target = $region88
        $region87: #{en_net_forward.3} parent=47 // pred_region
          %s5426 = ssub.s32 128, 128
          %5427 = vsyncadd [#allocation6], %s5426
          %s5429 = sshll.u32 [#allocation13], 4
          %s5430 = int_to_ptr.vmem [resolvable:$true] %s5429
          %5432 = dma.vmem_to_hbm [thread:$0]  %s5430, 128, %s7, [#allocation6]
        $region88: #{en_net_forward.3} parent=47 // pred_fallthru
          _
        // Predicated region
        $region89: #{en_net_forward.3} parent=47 // pred_check
          %p5433 = pneg %p226
        $region90: #{en_net_forward.3} parent=47 // pred_check_branch
          %5435 = sbr.rel (%p5433) target = $region92
        $region91: #{en_net_forward.3} parent=47 // pred_region
          %5436 = dma.done [#allocation6], 128
        $region92: #{en_net_forward.3} parent=47 // pred_fallthru
          _
      $region48: #{en_net_forward.3} parent=5 // pred_fallthru
        _
      %p5437 = scmp.le.s32.totalorder 2, %s23
      // Predicated region
      $region93: #{en_net_forward.3} parent=5 // pred_check
        %p5438 = pneg %p5437
      $region94: #{en_net_forward.3} parent=5 // pred_check_branch
        %5440 = sbr.rel (%p5438) target = $region96
      $region95: #{en_net_forward.3} parent=5 // pred_region
        %s5441 = ssub.s32 %s23, 2
      $region96: #{en_net_forward.3} parent=5 // pred_fallthru
        _
    $region6: #{en_net_forward.3} parent=1 // loop_footer
      %s27 = sadd.s32 1, %s23
    $region7: #{en_net_forward.3} parent=1 // loop_footer_branch
      %22 = sbr.rel target = $region3
    $region8: #{en_net_forward.3} parent=1 // loop_exit
      _
    %5442 = vsyncpa [#allocation5], 1
    %s5443 = scalar_lea.sflag [#allocation5], 1
    %5444 = vsyncpa %s5443, 1
    %5445 = vsyncpa [#allocation8], 1
    %s5446 = scalar_lea.sflag [#allocation8], 1
    %5447 = vsyncpa %s5446, 1
    %5448 = vsyncpa [#allocation11], 1
    %s5449 = scalar_lea.sflag [#allocation11], 1
    %5450 = vsyncpa %s5449, 1
    %5451 = vsyncpa [#allocation6], 1
    %s5452 = scalar_lea.sflag [#allocation6], 1
    %5453 = vsyncpa %s5452, 1

</llo_original>
